<compile_context>
chip_gen: v5e
topology: v5e:2x2
jax: 0.10.0
libtpu: 0.0.40
codegen_flags: <defaults>
</compile_context>

<pallas_src>
import jax
import jax.numpy as jnp
from jax.experimental import pallas as pl
from jax.experimental.pallas import tpu as pltpu

EPS = 1e-5
VMEM_LIMIT = 32 * 1024 * 1024  # explicit, safe on v5e/v6e/v7x


# ------------------------------ kernel helpers ------------------------------


def _zero_halo_border(pad_ref):
    """Zero only the 1-wide border of the (h+2, w+2, c) halo scratch."""
    hp, wp, c = pad_ref.shape
    z_row = jnp.zeros((1, wp, c), jnp.float32)
    z_col = jnp.zeros((hp, 1, c), jnp.float32)
    pad_ref[0:1, :, :] = z_row
    pad_ref[hp - 1:hp, :, :] = z_row
    pad_ref[:, 0:1, :] = z_col
    pad_ref[:, wp - 1:wp, :] = z_col


def _im2col_into(pad_ref, patch_ref):
    """Fill the (h*w, 9*c_in) bf16 im2col patch from the padded halo tile."""
    hp, wp, c_in = pad_ref.shape
    h, w = hp - 2, wp - 2
    for t, (dy, dx) in enumerate((dy, dx) for dy in range(3) for dx in range(3)):
        tap = pad_ref[dy:dy + h, dx:dx + w, :].reshape(h * w, c_in)
        patch_ref[:, t * c_in:(t + 1) * c_in] = tap.astype(patch_ref.dtype)


def _stats_rows(acc):
    """Stack [sum; sum_sq] over the spatial axis into one (2, C) store."""
    return jnp.concatenate(
        [jnp.sum(acc, axis=0, keepdims=True),
         jnp.sum(acc * acc, axis=0, keepdims=True)], axis=0)


# --------------------------------- kernels ----------------------------------


def conv1_stats_kernel(x_ref, w_ref, y_ref, s_ref, pad_ref, patch_ref):
    # conv1 on one image (padding done in-kernel) + partial BN statistics.
    _, h, w, _ = x_ref.shape
    _zero_halo_border(pad_ref)
    pad_ref[1:1 + h, 1:1 + w, :] = x_ref[0]
    _im2col_into(pad_ref, patch_ref)
    acc = jnp.dot(patch_ref[...], w_ref[...],
                  preferred_element_type=jnp.float32)          # (h*w, c_out) f32
    y_ref[0] = acc
    s_ref[0] = _stats_rows(acc)


def bnrelu_conv2_stats_kernel(y1_ref, a_ref, b_ref, w_ref, y2_ref, s_ref,
                              pad_ref, patch_ref):
    # bn1 (folded a*y+b) + ReLU written straight into the halo interior,
    # then conv2 via one im2col matmul + partial BN statistics.
    hp, wp, c_mid = pad_ref.shape
    h, w = hp - 2, wp - 2
    _zero_halo_border(pad_ref)
    out1 = jnp.maximum(y1_ref[0] * a_ref[...] + b_ref[...], 0.0)   # (h*w, c) f32
    pad_ref[1:1 + h, 1:1 + w, :] = out1.reshape(h, w, c_mid)
    _im2col_into(pad_ref, patch_ref)
    acc = jnp.dot(patch_ref[...], w_ref[...],
                  preferred_element_type=jnp.float32)
    y2_ref[0] = acc
    s_ref[0] = _stats_rows(acc)


def bn2_add_relu_kernel(y2_ref, x_ref, a_ref, b_ref, o_ref):
    # bn2 (folded) + identity residual + ReLU.
    o_ref[0] = jnp.maximum(y2_ref[0] * a_ref[...] + b_ref[...] + x_ref[0], 0.0)


# --------------------------- pallas_call wrappers ----------------------------


def _conv1_call(x_nhwc, w2d):
    n, h, w, c_in = x_nhwc.shape
    c_out = w2d.shape[-1]
    hw = h * w
    flops = 2 * n * hw * 9 * c_in * c_out
    bytes_accessed = (4 * x_nhwc.size + 2 * w2d.size
                      + 4 * n * hw * c_out + 4 * n * 2 * c_out)
    return pl.pallas_call(
        conv1_stats_kernel,
        out_shape=(jax.ShapeDtypeStruct((n, hw, c_out), jnp.float32),
                   jax.ShapeDtypeStruct((n, 2, c_out), jnp.float32)),
        grid_spec=pltpu.PrefetchScalarGridSpec(
            num_scalar_prefetch=0,
            grid=(n,),
            in_specs=[
                pl.BlockSpec((1, h, w, c_in), lambda i: (i, 0, 0, 0)),
                pl.BlockSpec((9 * c_in, c_out), lambda i: (0, 0)),
            ],
            out_specs=[
                pl.BlockSpec((1, hw, c_out), lambda i: (i, 0, 0)),
                pl.BlockSpec((1, 2, c_out), lambda i: (i, 0, 0)),
            ],
            scratch_shapes=[
                pltpu.VMEM((h + 2, w + 2, c_in), jnp.float32),   # halo tile
                pltpu.VMEM((hw, 9 * c_in), jnp.bfloat16),        # im2col patch
            ]),
        compiler_params=pltpu.CompilerParams(
            dimension_semantics=("parallel",),
            vmem_limit_bytes=VMEM_LIMIT),
        cost_estimate=pl.CostEstimate(flops=flops, transcendentals=0,
                                      bytes_accessed=bytes_accessed),
    )(x_nhwc, w2d)


def _conv2_call(y1, a, b, w2d, h, w):
    n, hw, c_mid = y1.shape
    c_out = w2d.shape[-1]
    flops = 2 * n * hw * 9 * c_mid * c_out + 3 * n * hw * c_mid
    bytes_accessed = (4 * y1.size + 4 * a.size + 4 * b.size + 2 * w2d.size
                      + 4 * n * hw * c_out + 4 * n * 2 * c_out)
    return pl.pallas_call(
        bnrelu_conv2_stats_kernel,
        out_shape=(jax.ShapeDtypeStruct((n, hw, c_out), jnp.float32),
                   jax.ShapeDtypeStruct((n, 2, c_out), jnp.float32)),
        grid_spec=pltpu.PrefetchScalarGridSpec(
            num_scalar_prefetch=0,
            grid=(n,),
            in_specs=[
                pl.BlockSpec((1, hw, c_mid), lambda i: (i, 0, 0)),
                pl.BlockSpec((1, c_mid), lambda i: (0, 0)),
                pl.BlockSpec((1, c_mid), lambda i: (0, 0)),
                pl.BlockSpec((9 * c_mid, c_out), lambda i: (0, 0)),
            ],
            out_specs=[
                pl.BlockSpec((1, hw, c_out), lambda i: (i, 0, 0)),
                pl.BlockSpec((1, 2, c_out), lambda i: (i, 0, 0)),
            ],
            scratch_shapes=[
                pltpu.VMEM((h + 2, w + 2, c_mid), jnp.float32),
                pltpu.VMEM((hw, 9 * c_mid), jnp.bfloat16),
            ]),
        compiler_params=pltpu.CompilerParams(
            dimension_semantics=("parallel",),
            vmem_limit_bytes=VMEM_LIMIT),
        cost_estimate=pl.CostEstimate(flops=flops, transcendentals=0,
                                      bytes_accessed=bytes_accessed),
    )(y1, a, b, w2d)


def _bn_add_relu_call(y2, x_flat, a, b):
    n, hw, c = y2.shape
    flops = 4 * n * hw * c
    bytes_accessed = 4 * (y2.size + x_flat.size + a.size + b.size + y2.size)
    return pl.pallas_call(
        bn2_add_relu_kernel,
        out_shape=jax.ShapeDtypeStruct((n, hw, c), jnp.float32),
        grid_spec=pltpu.PrefetchScalarGridSpec(
            num_scalar_prefetch=0,
            grid=(n,),
            in_specs=[
                pl.BlockSpec((1, hw, c), lambda i: (i, 0, 0)),
                pl.BlockSpec((1, hw, c), lambda i: (i, 0, 0)),
                pl.BlockSpec((1, c), lambda i: (0, 0)),
                pl.BlockSpec((1, c), lambda i: (0, 0)),
            ],
            out_specs=pl.BlockSpec((1, hw, c), lambda i: (i, 0, 0)),
        ),
        compiler_params=pltpu.CompilerParams(
            dimension_semantics=("parallel",),
            vmem_limit_bytes=VMEM_LIMIT),
        cost_estimate=pl.CostEstimate(flops=flops, transcendentals=0,
                                      bytes_accessed=bytes_accessed),
    )(y2, x_flat, a, b)


# ------------------------------- JAX-side glue -------------------------------


def _bn_affine(stats, gamma, beta, m):
    """Fold train-mode BN (biased var, eps=1e-5) into per-channel a*y + b."""
    s = jnp.sum(stats, axis=0)                   # (2, C): [sum; sum_sq]
    mean = s[0] / m
    var = s[1] / m - mean * mean                 # biased variance
    a = gamma * jax.lax.rsqrt(var + EPS)
    b = beta - a * mean
    return a.reshape(1, -1), b.reshape(1, -1)


@jax.jit
def basic_block_forward(x_nchw, w1_oihw, g1, b1, w2_oihw, g2, b2):
    n, c_in, h, w = x_nchw.shape
    c_out = w1_oihw.shape[0]

    x_nhwc = jnp.transpose(x_nchw, (0, 2, 3, 1)).astype(jnp.float32)
    x_flat = x_nhwc.reshape(n, h * w, c_in)      # free metadata reshape

    # OIHW -> (dy, dx, Cin, Cout) -> (9*Cin, Cout), bf16 once for the MXU.
    w1_2d = jnp.transpose(w1_oihw, (2, 3, 1, 0)).reshape(9 * c_in, c_out)
    w2_2d = jnp.transpose(w2_oihw, (2, 3, 1, 0)).reshape(9 * c_out, c_out)
    w1_2d = w1_2d.astype(jnp.bfloat16)
    w2_2d = w2_2d.astype(jnp.bfloat16)

    m = n * h * w

    # conv1 (+ padding fused in-kernel) + partial stats
    y1, s1 = _conv1_call(x_nhwc, w1_2d)
    a1, bb1 = _bn_affine(s1, g1, b1, m)

    # bn1+relu fused into conv2 (out1 stays in VMEM) + partial stats
    y2, s2 = _conv2_call(y1, a1, bb1, w2_2d, h, w)
    a2, bb2 = _bn_affine(s2, g2, b2, m)

    # bn2 + identity + relu
    out_flat = _bn_add_relu_call(y2, x_flat, a2, bb2)
    out_nhwc = out_flat.reshape(n, h, w, c_out)  # free metadata reshape
    return jnp.transpose(out_nhwc, (0, 3, 1, 2))  # back to NCHW


# --------------------------------- reference ---------------------------------


def reference_forward(x_nchw, w1_oihw, g1, b1, w2_oihw, g2, b2,
                      matmul_dtype=jnp.float32):
    """Pure-JAX reference. matmul_dtype=bf16 mirrors the kernel's MXU inputs
    (f32 accumulation) so the comparison isolates kernel correctness."""
    x = jnp.transpose(x_nchw, (0, 2, 3, 1)).astype(jnp.float32)
    w1 = jnp.transpose(w1_oihw, (2, 3, 1, 0))
    w2 = jnp.transpose(w2_oihw, (2, 3, 1, 0))

    def conv(inp, wgt):
        return jax.lax.conv_general_dilated(
            inp.astype(matmul_dtype), wgt.astype(matmul_dtype), (1, 1), "SAME",
            dimension_numbers=("NHWC", "HWIO", "NHWC"),
            preferred_element_type=jnp.float32)

    def bn(y, g, b):
        mean = jnp.mean(y, axis=(0, 1, 2), keepdims=True)
        var = jnp.mean((y - mean) ** 2, axis=(0, 1, 2), keepdims=True)
        return (g.reshape(1, 1, 1, -1) * (y - mean) * jax.lax.rsqrt(var + EPS)
                + b.reshape(1, 1, 1, -1))

    out = jax.nn.relu(bn(conv(x, w1), g1, b1))
    out = bn(conv(out, w2), g2, b2)
    out = jax.nn.relu(out + x)
    return jnp.transpose(out, (0, 3, 1, 2))


# ----------------------------------- main ------------------------------------


if __name__ == "__main__":
    N, C, H, W = 2, 4, 16, 16  # c1 == c2 == 4, stride 1, downsample=None

    key = jax.random.PRNGKey(0)
    kx, kw1, kw2 = jax.random.split(key, 3)

    x = jax.random.normal(kx, (N, C, H, W), dtype=jnp.float32)
    w1_oihw = 0.1 * jax.random.normal(kw1, (C, C, 3, 3), dtype=jnp.float32)
    w2_oihw = 0.1 * jax.random.normal(kw2, (C, C, 3, 3), dtype=jnp.float32)

    # BatchNorm affine params at nn.BatchNorm2d init values.
    g1 = jnp.ones((C,), jnp.float32)
    b1 = jnp.zeros((C,), jnp.float32)
    g2 = jnp.ones((C,), jnp.float32)
    b2 = jnp.zeros((C,), jnp.float32)

    out = basic_block_forward(x, w1_oihw, g1, b1, w2_oihw, g2, b2)
    out = jax.block_until_ready(out)

    # Reference with bf16 matmul inputs / f32 accumulation (matches the
    # kernel's MXU precision model recommended by the perf review).
    ref = reference_forward(x, w1_oihw, g1, b1, w2_oihw, g2, b2,
                            matmul_dtype=jnp.bfloat16)
    ref = jax.block_until_ready(ref)

    assert out.shape == (N, C, H, W), out.shape
    assert jnp.allclose(out, ref, rtol=5e-3, atol=5e-3), (
        float(jnp.max(jnp.abs(out - ref))))

    print("KERNEL_OK")
</pallas_src>

<mosaic_0001>
module attributes {stable_mosaic.version = 11 : i64} {
  func.func @conv1_stats_kernel(%arg0: i32, %arg1: memref<1x16x16x4xf32, #tpu.memory_space<vmem>>, %arg2: memref<36x4xbf16, #tpu.memory_space<vmem>>, %arg3: memref<1x256x4xf32, #tpu.memory_space<vmem>>, %arg4: memref<1x2x4xf32, #tpu.memory_space<vmem>>, %arg5: memref<18x18x4xf32, #tpu.memory_space<vmem>>, %arg6: memref<256x36xbf16, #tpu.memory_space<vmem>>) attributes {dimension_semantics = [#tpu.dimension_semantics<parallel>], iteration_bounds = array<i64: 2>, scalar_prefetch = 0 : i64, scratch_operands = 2 : i64, tpu.core_type = #tpu.core_type<tc>, window_params = [{transform_indices = @transform_0, window_bounds = array<i64: 1, 16, 16, 4>}, {pipeline_mode = #tpu.pipeline_mode<synchronous>, transform_indices = @transform_1, window_bounds = array<i64: 36, 4>}, {transform_indices = @transform_2, window_bounds = array<i64: 1, 256, 4>}, {transform_indices = @transform_3, window_bounds = array<i64: 1, 2, 4>}]} {
    %cst = arith.constant 0.000000e+00 : f32
    %0 = vector.broadcast %cst : f32 to vector<1x18x4xf32>
    %cst_0 = arith.constant 0.000000e+00 : f32
    %1 = vector.broadcast %cst_0 : f32 to vector<18x1x4xf32>
    %c0 = arith.constant 0 : index
    %c0_1 = arith.constant 0 : index
    %c0_2 = arith.constant 0 : index
    %2 = vector.load %arg5[%c0, %c0_1, %c0_2] : memref<18x18x4xf32, #tpu.memory_space<vmem>>, vector<1x18x4xf32>
    tpu.vector_store %arg5[%c0, %c0_1, %c0_2], %0 {strides = array<i32>} : memref<18x18x4xf32, #tpu.memory_space<vmem>>, vector<1x18x4xf32>,
    %c17 = arith.constant 17 : index
    %c0_3 = arith.constant 0 : index
    %c0_4 = arith.constant 0 : index
    %3 = vector.load %arg5[%c17, %c0_3, %c0_4] : memref<18x18x4xf32, #tpu.memory_space<vmem>>, vector<1x18x4xf32>
    tpu.vector_store %arg5[%c17, %c0_3, %c0_4], %0 {strides = array<i32>} : memref<18x18x4xf32, #tpu.memory_space<vmem>>, vector<1x18x4xf32>,
    %c0_5 = arith.constant 0 : index
    %c0_6 = arith.constant 0 : index
    %c0_7 = arith.constant 0 : index
    %4 = vector.load %arg5[%c0_5, %c0_6, %c0_7] : memref<18x18x4xf32, #tpu.memory_space<vmem>>, vector<18x1x4xf32>
    tpu.vector_store %arg5[%c0_5, %c0_6, %c0_7], %1 {strides = array<i32>} : memref<18x18x4xf32, #tpu.memory_space<vmem>>, vector<18x1x4xf32>,
    %c0_8 = arith.constant 0 : index
    %c17_9 = arith.constant 17 : index
    %c0_10 = arith.constant 0 : index
    %5 = vector.load %arg5[%c0_8, %c17_9, %c0_10] : memref<18x18x4xf32, #tpu.memory_space<vmem>>, vector<18x1x4xf32>
    tpu.vector_store %arg5[%c0_8, %c17_9, %c0_10], %1 {strides = array<i32>} : memref<18x18x4xf32, #tpu.memory_space<vmem>>, vector<18x1x4xf32>,
    %c0_11 = arith.constant 0 : index
    %c0_12 = arith.constant 0 : index
    %c0_13 = arith.constant 0 : index
    %c0_14 = arith.constant 0 : index
    %6 = vector.load %arg1[%c0_11, %c0_12, %c0_13, %c0_14] : memref<1x16x16x4xf32, #tpu.memory_space<vmem>>, vector<1x16x16x4xf32>
    %7 = vector.shape_cast %6 : vector<1x16x16x4xf32> to vector<16x16x4xf32>
    %c1 = arith.constant 1 : index
    %c1_15 = arith.constant 1 : index
    %c0_16 = arith.constant 0 : index
    %8 = vector.load %arg5[%c1, %c1_15, %c0_16] : memref<18x18x4xf32, #tpu.memory_space<vmem>>, vector<16x16x4xf32>
    tpu.vector_store %arg5[%c1, %c1_15, %c0_16], %7 {strides = array<i32>} : memref<18x18x4xf32, #tpu.memory_space<vmem>>, vector<16x16x4xf32>,
    %c0_17 = arith.constant 0 : index
    %c0_18 = arith.constant 0 : index
    %c0_19 = arith.constant 0 : index
    %9 = vector.load %arg5[%c0_17, %c0_18, %c0_19] : memref<18x18x4xf32, #tpu.memory_space<vmem>>, vector<16x16x4xf32>
    %10 = vector.shape_cast %9 : vector<16x16x4xf32> to vector<256x4xf32>
    %11 = arith.truncf %10 : vector<256x4xf32> to vector<256x4xbf16>
    %c0_20 = arith.constant 0 : index
    %c0_21 = arith.constant 0 : index
    %12 = vector.load %arg6[%c0_20, %c0_21] : memref<256x36xbf16, #tpu.memory_space<vmem>>, vector<256x4xbf16>
    tpu.vector_store %arg6[%c0_20, %c0_21], %11 {strides = array<i32>} : memref<256x36xbf16, #tpu.memory_space<vmem>>, vector<256x4xbf16>,
    %c0_22 = arith.constant 0 : index
    %c1_23 = arith.constant 1 : index
    %c0_24 = arith.constant 0 : index
    %13 = vector.load %arg5[%c0_22, %c1_23, %c0_24] : memref<18x18x4xf32, #tpu.memory_space<vmem>>, vector<16x16x4xf32>
    %14 = vector.shape_cast %13 : vector<16x16x4xf32> to vector<256x4xf32>
    %15 = arith.truncf %14 : vector<256x4xf32> to vector<256x4xbf16>
    %c0_25 = arith.constant 0 : index
    %c4 = arith.constant 4 : index
    %16 = vector.load %arg6[%c0_25, %c4] : memref<256x36xbf16, #tpu.memory_space<vmem>>, vector<256x4xbf16>
    tpu.vector_store %arg6[%c0_25, %c4], %15 {strides = array<i32>} : memref<256x36xbf16, #tpu.memory_space<vmem>>, vector<256x4xbf16>,
    %c0_26 = arith.constant 0 : index
    %c2 = arith.constant 2 : index
    %c0_27 = arith.constant 0 : index
    %17 = vector.load %arg5[%c0_26, %c2, %c0_27] : memref<18x18x4xf32, #tpu.memory_space<vmem>>, vector<16x16x4xf32>
    %18 = vector.shape_cast %17 : vector<16x16x4xf32> to vector<256x4xf32>
    %19 = arith.truncf %18 : vector<256x4xf32> to vector<256x4xbf16>
    %c0_28 = arith.constant 0 : index
    %c8 = arith.constant 8 : index
    %20 = vector.load %arg6[%c0_28, %c8] : memref<256x36xbf16, #tpu.memory_space<vmem>>, vector<256x4xbf16>
    tpu.vector_store %arg6[%c0_28, %c8], %19 {strides = array<i32>} : memref<256x36xbf16, #tpu.memory_space<vmem>>, vector<256x4xbf16>,
    %c1_29 = arith.constant 1 : index
    %c0_30 = arith.constant 0 : index
    %c0_31 = arith.constant 0 : index
    %21 = vector.load %arg5[%c1_29, %c0_30, %c0_31] : memref<18x18x4xf32, #tpu.memory_space<vmem>>, vector<16x16x4xf32>
    %22 = vector.shape_cast %21 : vector<16x16x4xf32> to vector<256x4xf32>
    %23 = arith.truncf %22 : vector<256x4xf32> to vector<256x4xbf16>
    %c0_32 = arith.constant 0 : index
    %c12 = arith.constant 12 : index
    %24 = vector.load %arg6[%c0_32, %c12] : memref<256x36xbf16, #tpu.memory_space<vmem>>, vector<256x4xbf16>
    tpu.vector_store %arg6[%c0_32, %c12], %23 {strides = array<i32>} : memref<256x36xbf16, #tpu.memory_space<vmem>>, vector<256x4xbf16>,
    %c1_33 = arith.constant 1 : index
    %c1_34 = arith.constant 1 : index
    %c0_35 = arith.constant 0 : index
    %25 = vector.load %arg5[%c1_33, %c1_34, %c0_35] : memref<18x18x4xf32, #tpu.memory_space<vmem>>, vector<16x16x4xf32>
    %26 = vector.shape_cast %25 : vector<16x16x4xf32> to vector<256x4xf32>
    %27 = arith.truncf %26 : vector<256x4xf32> to vector<256x4xbf16>
    %c0_36 = arith.constant 0 : index
    %c16 = arith.constant 16 : index
    %28 = vector.load %arg6[%c0_36, %c16] : memref<256x36xbf16, #tpu.memory_space<vmem>>, vector<256x4xbf16>
    tpu.vector_store %arg6[%c0_36, %c16], %27 {strides = array<i32>} : memref<256x36xbf16, #tpu.memory_space<vmem>>, vector<256x4xbf16>,
    %c1_37 = arith.constant 1 : index
    %c2_38 = arith.constant 2 : index
    %c0_39 = arith.constant 0 : index
    %29 = vector.load %arg5[%c1_37, %c2_38, %c0_39] : memref<18x18x4xf32, #tpu.memory_space<vmem>>, vector<16x16x4xf32>
    %30 = vector.shape_cast %29 : vector<16x16x4xf32> to vector<256x4xf32>
    %31 = arith.truncf %30 : vector<256x4xf32> to vector<256x4xbf16>
    %c0_40 = arith.constant 0 : index
    %c20 = arith.constant 20 : index
    %32 = vector.load %arg6[%c0_40, %c20] : memref<256x36xbf16, #tpu.memory_space<vmem>>, vector<256x4xbf16>
    tpu.vector_store %arg6[%c0_40, %c20], %31 {strides = array<i32>} : memref<256x36xbf16, #tpu.memory_space<vmem>>, vector<256x4xbf16>,
    %c2_41 = arith.constant 2 : index
    %c0_42 = arith.constant 0 : index
    %c0_43 = arith.constant 0 : index
    %33 = vector.load %arg5[%c2_41, %c0_42, %c0_43] : memref<18x18x4xf32, #tpu.memory_space<vmem>>, vector<16x16x4xf32>
    %34 = vector.shape_cast %33 : vector<16x16x4xf32> to vector<256x4xf32>
    %35 = arith.truncf %34 : vector<256x4xf32> to vector<256x4xbf16>
    %c0_44 = arith.constant 0 : index
    %c24 = arith.constant 24 : index
    %36 = vector.load %arg6[%c0_44, %c24] : memref<256x36xbf16, #tpu.memory_space<vmem>>, vector<256x4xbf16>
    tpu.vector_store %arg6[%c0_44, %c24], %35 {strides = array<i32>} : memref<256x36xbf16, #tpu.memory_space<vmem>>, vector<256x4xbf16>,
    %c2_45 = arith.constant 2 : index
    %c1_46 = arith.constant 1 : index
    %c0_47 = arith.constant 0 : index
    %37 = vector.load %arg5[%c2_45, %c1_46, %c0_47] : memref<18x18x4xf32, #tpu.memory_space<vmem>>, vector<16x16x4xf32>
    %38 = vector.shape_cast %37 : vector<16x16x4xf32> to vector<256x4xf32>
    %39 = arith.truncf %38 : vector<256x4xf32> to vector<256x4xbf16>
    %c0_48 = arith.constant 0 : index
    %c28 = arith.constant 28 : index
    %40 = vector.load %arg6[%c0_48, %c28] : memref<256x36xbf16, #tpu.memory_space<vmem>>, vector<256x4xbf16>
    tpu.vector_store %arg6[%c0_48, %c28], %39 {strides = array<i32>} : memref<256x36xbf16, #tpu.memory_space<vmem>>, vector<256x4xbf16>,
    %c2_49 = arith.constant 2 : index
    %c2_50 = arith.constant 2 : index
    %c0_51 = arith.constant 0 : index
    %41 = vector.load %arg5[%c2_49, %c2_50, %c0_51] : memref<18x18x4xf32, #tpu.memory_space<vmem>>, vector<16x16x4xf32>
    %42 = vector.shape_cast %41 : vector<16x16x4xf32> to vector<256x4xf32>
    %43 = arith.truncf %42 : vector<256x4xf32> to vector<256x4xbf16>
    %c0_52 = arith.constant 0 : index
    %c32 = arith.constant 32 : index
    %44 = vector.load %arg6[%c0_52, %c32] : memref<256x36xbf16, #tpu.memory_space<vmem>>, vector<256x4xbf16>
    tpu.vector_store %arg6[%c0_52, %c32], %43 {strides = array<i32>} : memref<256x36xbf16, #tpu.memory_space<vmem>>, vector<256x4xbf16>,
    %c0_53 = arith.constant 0 : index
    %c0_54 = arith.constant 0 : index
    %45 = vector.load %arg6[%c0_53, %c0_54] : memref<256x36xbf16, #tpu.memory_space<vmem>>, vector<256x36xbf16>
    %c0_55 = arith.constant 0 : index
    %c0_56 = arith.constant 0 : index
    %46 = vector.load %arg2[%c0_55, %c0_56] : memref<36x4xbf16, #tpu.memory_space<vmem>>, vector<36x4xbf16>
    %cst_57 = arith.constant dense<0.000000e+00> : vector<256x4xf32>
    %47 = tpu.matmul %45, %46, %cst_57 {dimension_numbers = #tpu.dot_dimension_numbers<[1], [0], [0], [1], [0, 0, 1, 1], [], []>} : vector<256x36xbf16>, vector<36x4xbf16>, vector<256x4xf32> -> vector<256x4xf32>
    %c0_58 = arith.constant 0 : index
    %c0_59 = arith.constant 0 : index
    %c0_60 = arith.constant 0 : index
    %48 = vector.load %arg3[%c0_58, %c0_59, %c0_60] : memref<1x256x4xf32, #tpu.memory_space<vmem>>, vector<1x256x4xf32>
    %49 = vector.shape_cast %48 : vector<1x256x4xf32> to vector<256x4xf32>
    %50 = vector.shape_cast %47 : vector<256x4xf32> to vector<1x256x4xf32>
    tpu.vector_store %arg3[%c0_58, %c0_59, %c0_60], %50 {strides = array<i32>} : memref<1x256x4xf32, #tpu.memory_space<vmem>>, vector<1x256x4xf32>,
    %cst_61 = arith.constant dense<0.000000e+00> : vector<4xf32>
    %51 = vector.multi_reduction <add>, %47, %cst_61 [0] : vector<256x4xf32> to vector<4xf32>
    %52 = vector.shape_cast %51 : vector<4xf32> to vector<1x4xf32>
    %53 = arith.mulf %47, %47 : vector<256x4xf32>
    %cst_62 = arith.constant dense<0.000000e+00> : vector<4xf32>
    %54 = vector.multi_reduction <add>, %53, %cst_62 [0] : vector<256x4xf32> to vector<4xf32>
    %55 = vector.shape_cast %54 : vector<4xf32> to vector<1x4xf32>
    %56 = tpu.concatenate %52, %55 in 0 : vector<1x4xf32>, vector<1x4xf32> -> vector<2x4xf32>
    %c0_63 = arith.constant 0 : index
    %c0_64 = arith.constant 0 : index
    %c0_65 = arith.constant 0 : index
    %57 = vector.load %arg4[%c0_63, %c0_64, %c0_65] : memref<1x2x4xf32, #tpu.memory_space<vmem>>, vector<1x2x4xf32>
    %58 = vector.shape_cast %57 : vector<1x2x4xf32> to vector<2x4xf32>
    %59 = vector.shape_cast %56 : vector<2x4xf32> to vector<1x2x4xf32>
    tpu.vector_store %arg4[%c0_63, %c0_64, %c0_65], %59 {strides = array<i32>} : memref<1x2x4xf32, #tpu.memory_space<vmem>>, vector<1x2x4xf32>,
    return
  }
  func.func @transform_0(%arg0: i32) -> (i32, i32, i32, i32) {
    %c0_i32 = arith.constant 0 : i32
    %c0_i32_0 = arith.constant 0 : i32
    %c0_i32_1 = arith.constant 0 : i32
    %c0_i32_2 = arith.constant 0 : i32
    return %arg0, %c0_i32, %c0_i32_0, %c0_i32_1 : i32, i32, i32, i32
  }
  func.func @transform_1(%arg0: i32) -> (i32, i32) {
    %c0_i32 = arith.constant 0 : i32
    %c0_i32_0 = arith.constant 0 : i32
    %c0_i32_1 = arith.constant 0 : i32
    return %c0_i32, %c0_i32_0 : i32, i32
  }
  func.func @transform_2(%arg0: i32) -> (i32, i32, i32) {
    %c0_i32 = arith.constant 0 : i32
    %c0_i32_0 = arith.constant 0 : i32
    %c0_i32_1 = arith.constant 0 : i32
    return %arg0, %c0_i32, %c0_i32_0 : i32, i32, i32
  }
  func.func @transform_3(%arg0: i32) -> (i32, i32, i32) {
    %c0_i32 = arith.constant 0 : i32
    %c0_i32_0 = arith.constant 0 : i32
    %c0_i32_1 = arith.constant 0 : i32
    return %arg0, %c0_i32, %c0_i32_0 : i32, i32, i32
  }
}

module attributes {stable_mosaic.version = 11 : i64} {
  func.func @bnrelu_conv2_stats_kernel(%arg0: i32, %arg1: memref<1x256x4xf32, #tpu.memory_space<vmem>>, %arg2: memref<1x4xf32, #tpu.memory_space<vmem>>, %arg3: memref<1x4xf32, #tpu.memory_space<vmem>>, %arg4: memref<36x4xbf16, #tpu.memory_space<vmem>>, %arg5: memref<1x256x4xf32, #tpu.memory_space<vmem>>, %arg6: memref<1x2x4xf32, #tpu.memory_space<vmem>>, %arg7: memref<18x18x4xf32, #tpu.memory_space<vmem>>, %arg8: memref<256x36xbf16, #tpu.memory_space<vmem>>) attributes {dimension_semantics = [#tpu.dimension_semantics<parallel>], iteration_bounds = array<i64: 2>, scalar_prefetch = 0 : i64, scratch_operands = 2 : i64, tpu.core_type = #tpu.core_type<tc>, window_params = [{transform_indices = @transform_0, window_bounds = array<i64: 1, 256, 4>}, {pipeline_mode = #tpu.pipeline_mode<synchronous>, transform_indices = @transform_1, window_bounds = array<i64: 1, 4>}, {pipeline_mode = #tpu.pipeline_mode<synchronous>, transform_indices = @transform_2, window_bounds = array<i64: 1, 4>}, {pipeline_mode = #tpu.pipeline_mode<synchronous>, transform_indices = @transform_3, window_bounds = array<i64: 36, 4>}, {transform_indices = @transform_4, window_bounds = array<i64: 1, 256, 4>}, {transform_indices = @transform_5, window_bounds = array<i64: 1, 2, 4>}]} {
    %cst = arith.constant 0.000000e+00 : f32
    %0 = vector.broadcast %cst : f32 to vector<1x18x4xf32>
    %cst_0 = arith.constant 0.000000e+00 : f32
    %1 = vector.broadcast %cst_0 : f32 to vector<18x1x4xf32>
    %c0 = arith.constant 0 : index
    %c0_1 = arith.constant 0 : index
    %c0_2 = arith.constant 0 : index
    %2 = vector.load %arg7[%c0, %c0_1, %c0_2] : memref<18x18x4xf32, #tpu.memory_space<vmem>>, vector<1x18x4xf32>
    tpu.vector_store %arg7[%c0, %c0_1, %c0_2], %0 {strides = array<i32>} : memref<18x18x4xf32, #tpu.memory_space<vmem>>, vector<1x18x4xf32>,
    %c17 = arith.constant 17 : index
    %c0_3 = arith.constant 0 : index
    %c0_4 = arith.constant 0 : index
    %3 = vector.load %arg7[%c17, %c0_3, %c0_4] : memref<18x18x4xf32, #tpu.memory_space<vmem>>, vector<1x18x4xf32>
    tpu.vector_store %arg7[%c17, %c0_3, %c0_4], %0 {strides = array<i32>} : memref<18x18x4xf32, #tpu.memory_space<vmem>>, vector<1x18x4xf32>,
    %c0_5 = arith.constant 0 : index
    %c0_6 = arith.constant 0 : index
    %c0_7 = arith.constant 0 : index
    %4 = vector.load %arg7[%c0_5, %c0_6, %c0_7] : memref<18x18x4xf32, #tpu.memory_space<vmem>>, vector<18x1x4xf32>
    tpu.vector_store %arg7[%c0_5, %c0_6, %c0_7], %1 {strides = array<i32>} : memref<18x18x4xf32, #tpu.memory_space<vmem>>, vector<18x1x4xf32>,
    %c0_8 = arith.constant 0 : index
    %c17_9 = arith.constant 17 : index
    %c0_10 = arith.constant 0 : index
    %5 = vector.load %arg7[%c0_8, %c17_9, %c0_10] : memref<18x18x4xf32, #tpu.memory_space<vmem>>, vector<18x1x4xf32>
    tpu.vector_store %arg7[%c0_8, %c17_9, %c0_10], %1 {strides = array<i32>} : memref<18x18x4xf32, #tpu.memory_space<vmem>>, vector<18x1x4xf32>,
    %c0_11 = arith.constant 0 : index
    %c0_12 = arith.constant 0 : index
    %c0_13 = arith.constant 0 : index
    %6 = vector.load %arg1[%c0_11, %c0_12, %c0_13] : memref<1x256x4xf32, #tpu.memory_space<vmem>>, vector<1x256x4xf32>
    %7 = vector.shape_cast %6 : vector<1x256x4xf32> to vector<256x4xf32>
    %c0_14 = arith.constant 0 : index
    %c0_15 = arith.constant 0 : index
    %8 = vector.load %arg2[%c0_14, %c0_15] : memref<1x4xf32, #tpu.memory_space<vmem>>, vector<1x4xf32>
    %9 = vector.broadcast %8 : vector<1x4xf32> to vector<256x4xf32>
    %10 = arith.mulf %7, %9 : vector<256x4xf32>
    %c0_16 = arith.constant 0 : index
    %c0_17 = arith.constant 0 : index
    %11 = vector.load %arg3[%c0_16, %c0_17] : memref<1x4xf32, #tpu.memory_space<vmem>>, vector<1x4xf32>
    %12 = vector.broadcast %11 : vector<1x4xf32> to vector<256x4xf32>
    %13 = arith.addf %10, %12 : vector<256x4xf32>
    %cst_18 = arith.constant 0.000000e+00 : f32
    %14 = vector.broadcast %cst_18 : f32 to vector<256x4xf32>
    %15 = arith.maximumf %13, %14 : vector<256x4xf32>
    %16 = vector.shape_cast %15 : vector<256x4xf32> to vector<16x16x4xf32>
    %c1 = arith.constant 1 : index
    %c1_19 = arith.constant 1 : index
    %c0_20 = arith.constant 0 : index
    %17 = vector.load %arg7[%c1, %c1_19, %c0_20] : memref<18x18x4xf32, #tpu.memory_space<vmem>>, vector<16x16x4xf32>
    tpu.vector_store %arg7[%c1, %c1_19, %c0_20], %16 {strides = array<i32>} : memref<18x18x4xf32, #tpu.memory_space<vmem>>, vector<16x16x4xf32>,
    %c0_21 = arith.constant 0 : index
    %c0_22 = arith.constant 0 : index
    %c0_23 = arith.constant 0 : index
    %18 = vector.load %arg7[%c0_21, %c0_22, %c0_23] : memref<18x18x4xf32, #tpu.memory_space<vmem>>, vector<16x16x4xf32>
    %19 = vector.shape_cast %18 : vector<16x16x4xf32> to vector<256x4xf32>
    %20 = arith.truncf %19 : vector<256x4xf32> to vector<256x4xbf16>
    %c0_24 = arith.constant 0 : index
    %c0_25 = arith.constant 0 : index
    %21 = vector.load %arg8[%c0_24, %c0_25] : memref<256x36xbf16, #tpu.memory_space<vmem>>, vector<256x4xbf16>
    tpu.vector_store %arg8[%c0_24, %c0_25], %20 {strides = array<i32>} : memref<256x36xbf16, #tpu.memory_space<vmem>>, vector<256x4xbf16>,
    %c0_26 = arith.constant 0 : index
    %c1_27 = arith.constant 1 : index
    %c0_28 = arith.constant 0 : index
    %22 = vector.load %arg7[%c0_26, %c1_27, %c0_28] : memref<18x18x4xf32, #tpu.memory_space<vmem>>, vector<16x16x4xf32>
    %23 = vector.shape_cast %22 : vector<16x16x4xf32> to vector<256x4xf32>
    %24 = arith.truncf %23 : vector<256x4xf32> to vector<256x4xbf16>
    %c0_29 = arith.constant 0 : index
    %c4 = arith.constant 4 : index
    %25 = vector.load %arg8[%c0_29, %c4] : memref<256x36xbf16, #tpu.memory_space<vmem>>, vector<256x4xbf16>
    tpu.vector_store %arg8[%c0_29, %c4], %24 {strides = array<i32>} : memref<256x36xbf16, #tpu.memory_space<vmem>>, vector<256x4xbf16>,
    %c0_30 = arith.constant 0 : index
    %c2 = arith.constant 2 : index
    %c0_31 = arith.constant 0 : index
    %26 = vector.load %arg7[%c0_30, %c2, %c0_31] : memref<18x18x4xf32, #tpu.memory_space<vmem>>, vector<16x16x4xf32>
    %27 = vector.shape_cast %26 : vector<16x16x4xf32> to vector<256x4xf32>
    %28 = arith.truncf %27 : vector<256x4xf32> to vector<256x4xbf16>
    %c0_32 = arith.constant 0 : index
    %c8 = arith.constant 8 : index
    %29 = vector.load %arg8[%c0_32, %c8] : memref<256x36xbf16, #tpu.memory_space<vmem>>, vector<256x4xbf16>
    tpu.vector_store %arg8[%c0_32, %c8], %28 {strides = array<i32>} : memref<256x36xbf16, #tpu.memory_space<vmem>>, vector<256x4xbf16>,
    %c1_33 = arith.constant 1 : index
    %c0_34 = arith.constant 0 : index
    %c0_35 = arith.constant 0 : index
    %30 = vector.load %arg7[%c1_33, %c0_34, %c0_35] : memref<18x18x4xf32, #tpu.memory_space<vmem>>, vector<16x16x4xf32>
    %31 = vector.shape_cast %30 : vector<16x16x4xf32> to vector<256x4xf32>
    %32 = arith.truncf %31 : vector<256x4xf32> to vector<256x4xbf16>
    %c0_36 = arith.constant 0 : index
    %c12 = arith.constant 12 : index
    %33 = vector.load %arg8[%c0_36, %c12] : memref<256x36xbf16, #tpu.memory_space<vmem>>, vector<256x4xbf16>
    tpu.vector_store %arg8[%c0_36, %c12], %32 {strides = array<i32>} : memref<256x36xbf16, #tpu.memory_space<vmem>>, vector<256x4xbf16>,
    %c1_37 = arith.constant 1 : index
    %c1_38 = arith.constant 1 : index
    %c0_39 = arith.constant 0 : index
    %34 = vector.load %arg7[%c1_37, %c1_38, %c0_39] : memref<18x18x4xf32, #tpu.memory_space<vmem>>, vector<16x16x4xf32>
    %35 = vector.shape_cast %34 : vector<16x16x4xf32> to vector<256x4xf32>
    %36 = arith.truncf %35 : vector<256x4xf32> to vector<256x4xbf16>
    %c0_40 = arith.constant 0 : index
    %c16 = arith.constant 16 : index
    %37 = vector.load %arg8[%c0_40, %c16] : memref<256x36xbf16, #tpu.memory_space<vmem>>, vector<256x4xbf16>
    tpu.vector_store %arg8[%c0_40, %c16], %36 {strides = array<i32>} : memref<256x36xbf16, #tpu.memory_space<vmem>>, vector<256x4xbf16>,
    %c1_41 = arith.constant 1 : index
    %c2_42 = arith.constant 2 : index
    %c0_43 = arith.constant 0 : index
    %38 = vector.load %arg7[%c1_41, %c2_42, %c0_43] : memref<18x18x4xf32, #tpu.memory_space<vmem>>, vector<16x16x4xf32>
    %39 = vector.shape_cast %38 : vector<16x16x4xf32> to vector<256x4xf32>
    %40 = arith.truncf %39 : vector<256x4xf32> to vector<256x4xbf16>
    %c0_44 = arith.constant 0 : index
    %c20 = arith.constant 20 : index
    %41 = vector.load %arg8[%c0_44, %c20] : memref<256x36xbf16, #tpu.memory_space<vmem>>, vector<256x4xbf16>
    tpu.vector_store %arg8[%c0_44, %c20], %40 {strides = array<i32>} : memref<256x36xbf16, #tpu.memory_space<vmem>>, vector<256x4xbf16>,
    %c2_45 = arith.constant 2 : index
    %c0_46 = arith.constant 0 : index
    %c0_47 = arith.constant 0 : index
    %42 = vector.load %arg7[%c2_45, %c0_46, %c0_47] : memref<18x18x4xf32, #tpu.memory_space<vmem>>, vector<16x16x4xf32>
    %43 = vector.shape_cast %42 : vector<16x16x4xf32> to vector<256x4xf32>
    %44 = arith.truncf %43 : vector<256x4xf32> to vector<256x4xbf16>
    %c0_48 = arith.constant 0 : index
    %c24 = arith.constant 24 : index
    %45 = vector.load %arg8[%c0_48, %c24] : memref<256x36xbf16, #tpu.memory_space<vmem>>, vector<256x4xbf16>
    tpu.vector_store %arg8[%c0_48, %c24], %44 {strides = array<i32>} : memref<256x36xbf16, #tpu.memory_space<vmem>>, vector<256x4xbf16>,
    %c2_49 = arith.constant 2 : index
    %c1_50 = arith.constant 1 : index
    %c0_51 = arith.constant 0 : index
    %46 = vector.load %arg7[%c2_49, %c1_50, %c0_51] : memref<18x18x4xf32, #tpu.memory_space<vmem>>, vector<16x16x4xf32>
    %47 = vector.shape_cast %46 : vector<16x16x4xf32> to vector<256x4xf32>
    %48 = arith.truncf %47 : vector<256x4xf32> to vector<256x4xbf16>
    %c0_52 = arith.constant 0 : index
    %c28 = arith.constant 28 : index
    %49 = vector.load %arg8[%c0_52, %c28] : memref<256x36xbf16, #tpu.memory_space<vmem>>, vector<256x4xbf16>
    tpu.vector_store %arg8[%c0_52, %c28], %48 {strides = array<i32>} : memref<256x36xbf16, #tpu.memory_space<vmem>>, vector<256x4xbf16>,
    %c2_53 = arith.constant 2 : index
    %c2_54 = arith.constant 2 : index
    %c0_55 = arith.constant 0 : index
    %50 = vector.load %arg7[%c2_53, %c2_54, %c0_55] : memref<18x18x4xf32, #tpu.memory_space<vmem>>, vector<16x16x4xf32>
    %51 = vector.shape_cast %50 : vector<16x16x4xf32> to vector<256x4xf32>
    %52 = arith.truncf %51 : vector<256x4xf32> to vector<256x4xbf16>
    %c0_56 = arith.constant 0 : index
    %c32 = arith.constant 32 : index
    %53 = vector.load %arg8[%c0_56, %c32] : memref<256x36xbf16, #tpu.memory_space<vmem>>, vector<256x4xbf16>
    tpu.vector_store %arg8[%c0_56, %c32], %52 {strides = array<i32>} : memref<256x36xbf16, #tpu.memory_space<vmem>>, vector<256x4xbf16>,
    %c0_57 = arith.constant 0 : index
    %c0_58 = arith.constant 0 : index
    %54 = vector.load %arg8[%c0_57, %c0_58] : memref<256x36xbf16, #tpu.memory_space<vmem>>, vector<256x36xbf16>
    %c0_59 = arith.constant 0 : index
    %c0_60 = arith.constant 0 : index
    %55 = vector.load %arg4[%c0_59, %c0_60] : memref<36x4xbf16, #tpu.memory_space<vmem>>, vector<36x4xbf16>
    %cst_61 = arith.constant dense<0.000000e+00> : vector<256x4xf32>
    %56 = tpu.matmul %54, %55, %cst_61 {dimension_numbers = #tpu.dot_dimension_numbers<[1], [0], [0], [1], [0, 0, 1, 1], [], []>} : vector<256x36xbf16>, vector<36x4xbf16>, vector<256x4xf32> -> vector<256x4xf32>
    %c0_62 = arith.constant 0 : index
    %c0_63 = arith.constant 0 : index
    %c0_64 = arith.constant 0 : index
    %57 = vector.load %arg5[%c0_62, %c0_63, %c0_64] : memref<1x256x4xf32, #tpu.memory_space<vmem>>, vector<1x256x4xf32>
    %58 = vector.shape_cast %57 : vector<1x256x4xf32> to vector<256x4xf32>
    %59 = vector.shape_cast %56 : vector<256x4xf32> to vector<1x256x4xf32>
    tpu.vector_store %arg5[%c0_62, %c0_63, %c0_64], %59 {strides = array<i32>} : memref<1x256x4xf32, #tpu.memory_space<vmem>>, vector<1x256x4xf32>,
    %cst_65 = arith.constant dense<0.000000e+00> : vector<4xf32>
    %60 = vector.multi_reduction <add>, %56, %cst_65 [0] : vector<256x4xf32> to vector<4xf32>
    %61 = vector.shape_cast %60 : vector<4xf32> to vector<1x4xf32>
    %62 = arith.mulf %56, %56 : vector<256x4xf32>
    %cst_66 = arith.constant dense<0.000000e+00> : vector<4xf32>
    %63 = vector.multi_reduction <add>, %62, %cst_66 [0] : vector<256x4xf32> to vector<4xf32>
    %64 = vector.shape_cast %63 : vector<4xf32> to vector<1x4xf32>
    %65 = tpu.concatenate %61, %64 in 0 : vector<1x4xf32>, vector<1x4xf32> -> vector<2x4xf32>
    %c0_67 = arith.constant 0 : index
    %c0_68 = arith.constant 0 : index
    %c0_69 = arith.constant 0 : index
    %66 = vector.load %arg6[%c0_67, %c0_68, %c0_69] : memref<1x2x4xf32, #tpu.memory_space<vmem>>, vector<1x2x4xf32>
    %67 = vector.shape_cast %66 : vector<1x2x4xf32> to vector<2x4xf32>
    %68 = vector.shape_cast %65 : vector<2x4xf32> to vector<1x2x4xf32>
    tpu.vector_store %arg6[%c0_67, %c0_68, %c0_69], %68 {strides = array<i32>} : memref<1x2x4xf32, #tpu.memory_space<vmem>>, vector<1x2x4xf32>,
    return
  }
  func.func @transform_0(%arg0: i32) -> (i32, i32, i32) {
    %c0_i32 = arith.constant 0 : i32
    %c0_i32_0 = arith.constant 0 : i32
    %c0_i32_1 = arith.constant 0 : i32
    return %arg0, %c0_i32, %c0_i32_0 : i32, i32, i32
  }
  func.func @transform_1(%arg0: i32) -> (i32, i32) {
    %c0_i32 = arith.constant 0 : i32
    %c0_i32_0 = arith.constant 0 : i32
    %c0_i32_1 = arith.constant 0 : i32
    return %c0_i32, %c0_i32_0 : i32, i32
  }
  func.func @transform_2(%arg0: i32) -> (i32, i32) {
    %c0_i32 = arith.constant 0 : i32
    %c0_i32_0 = arith.constant 0 : i32
    %c0_i32_1 = arith.constant 0 : i32
    return %c0_i32, %c0_i32_0 : i32, i32
  }
  func.func @transform_3(%arg0: i32) -> (i32, i32) {
    %c0_i32 = arith.constant 0 : i32
    %c0_i32_0 = arith.constant 0 : i32
    %c0_i32_1 = arith.constant 0 : i32
    return %c0_i32, %c0_i32_0 : i32, i32
  }
  func.func @transform_4(%arg0: i32) -> (i32, i32, i32) {
    %c0_i32 = arith.constant 0 : i32
    %c0_i32_0 = arith.constant 0 : i32
    %c0_i32_1 = arith.constant 0 : i32
    return %arg0, %c0_i32, %c0_i32_0 : i32, i32, i32
  }
  func.func @transform_5(%arg0: i32) -> (i32, i32, i32) {
    %c0_i32 = arith.constant 0 : i32
    %c0_i32_0 = arith.constant 0 : i32
    %c0_i32_1 = arith.constant 0 : i32
    return %arg0, %c0_i32, %c0_i32_0 : i32, i32, i32
  }
}

module attributes {stable_mosaic.version = 11 : i64} {
  func.func @bn2_add_relu_kernel(%arg0: i32, %arg1: memref<1x256x4xf32, #tpu.memory_space<vmem>>, %arg2: memref<1x256x4xf32, #tpu.memory_space<vmem>>, %arg3: memref<1x4xf32, #tpu.memory_space<vmem>>, %arg4: memref<1x4xf32, #tpu.memory_space<vmem>>, %arg5: memref<1x256x4xf32, #tpu.memory_space<vmem>>) attributes {dimension_semantics = [#tpu.dimension_semantics<parallel>], iteration_bounds = array<i64: 2>, scalar_prefetch = 0 : i64, scratch_operands = 0 : i64, tpu.core_type = #tpu.core_type<tc>, window_params = [{transform_indices = @transform_0, window_bounds = array<i64: 1, 256, 4>}, {transform_indices = @transform_1, window_bounds = array<i64: 1, 256, 4>}, {pipeline_mode = #tpu.pipeline_mode<synchronous>, transform_indices = @transform_2, window_bounds = array<i64: 1, 4>}, {pipeline_mode = #tpu.pipeline_mode<synchronous>, transform_indices = @transform_3, window_bounds = array<i64: 1, 4>}, {transform_indices = @transform_4, window_bounds = array<i64: 1, 256, 4>}]} {
    %c0 = arith.constant 0 : index
    %c0_0 = arith.constant 0 : index
    %c0_1 = arith.constant 0 : index
    %0 = vector.load %arg1[%c0, %c0_0, %c0_1] : memref<1x256x4xf32, #tpu.memory_space<vmem>>, vector<1x256x4xf32>
    %1 = vector.shape_cast %0 : vector<1x256x4xf32> to vector<256x4xf32>
    %c0_2 = arith.constant 0 : index
    %c0_3 = arith.constant 0 : index
    %2 = vector.load %arg3[%c0_2, %c0_3] : memref<1x4xf32, #tpu.memory_space<vmem>>, vector<1x4xf32>
    %3 = vector.broadcast %2 : vector<1x4xf32> to vector<256x4xf32>
    %4 = arith.mulf %1, %3 : vector<256x4xf32>
    %c0_4 = arith.constant 0 : index
    %c0_5 = arith.constant 0 : index
    %5 = vector.load %arg4[%c0_4, %c0_5] : memref<1x4xf32, #tpu.memory_space<vmem>>, vector<1x4xf32>
    %6 = vector.broadcast %5 : vector<1x4xf32> to vector<256x4xf32>
    %7 = arith.addf %4, %6 : vector<256x4xf32>
    %c0_6 = arith.constant 0 : index
    %c0_7 = arith.constant 0 : index
    %c0_8 = arith.constant 0 : index
    %8 = vector.load %arg2[%c0_6, %c0_7, %c0_8] : memref<1x256x4xf32, #tpu.memory_space<vmem>>, vector<1x256x4xf32>
    %9 = vector.shape_cast %8 : vector<1x256x4xf32> to vector<256x4xf32>
    %10 = arith.addf %7, %9 : vector<256x4xf32>
    %cst = arith.constant 0.000000e+00 : f32
    %11 = vector.broadcast %cst : f32 to vector<256x4xf32>
    %12 = arith.maximumf %10, %11 : vector<256x4xf32>
    %c0_9 = arith.constant 0 : index
    %c0_10 = arith.constant 0 : index
    %c0_11 = arith.constant 0 : index
    %13 = vector.load %arg5[%c0_9, %c0_10, %c0_11] : memref<1x256x4xf32, #tpu.memory_space<vmem>>, vector<1x256x4xf32>
    %14 = vector.shape_cast %13 : vector<1x256x4xf32> to vector<256x4xf32>
    %15 = vector.shape_cast %12 : vector<256x4xf32> to vector<1x256x4xf32>
    tpu.vector_store %arg5[%c0_9, %c0_10, %c0_11], %15 {strides = array<i32>} : memref<1x256x4xf32, #tpu.memory_space<vmem>>, vector<1x256x4xf32>,
    return
  }
  func.func @transform_0(%arg0: i32) -> (i32, i32, i32) {
    %c0_i32 = arith.constant 0 : i32
    %c0_i32_0 = arith.constant 0 : i32
    %c0_i32_1 = arith.constant 0 : i32
    return %arg0, %c0_i32, %c0_i32_0 : i32, i32, i32
  }
  func.func @transform_1(%arg0: i32) -> (i32, i32, i32) {
    %c0_i32 = arith.constant 0 : i32
    %c0_i32_0 = arith.constant 0 : i32
    %c0_i32_1 = arith.constant 0 : i32
    return %arg0, %c0_i32, %c0_i32_0 : i32, i32, i32
  }
  func.func @transform_2(%arg0: i32) -> (i32, i32) {
    %c0_i32 = arith.constant 0 : i32
    %c0_i32_0 = arith.constant 0 : i32
    %c0_i32_1 = arith.constant 0 : i32
    return %c0_i32, %c0_i32_0 : i32, i32
  }
  func.func @transform_3(%arg0: i32) -> (i32, i32) {
    %c0_i32 = arith.constant 0 : i32
    %c0_i32_0 = arith.constant 0 : i32
    %c0_i32_1 = arith.constant 0 : i32
    return %c0_i32, %c0_i32_0 : i32, i32
  }
  func.func @transform_4(%arg0: i32) -> (i32, i32, i32) {
    %c0_i32 = arith.constant 0 : i32
    %c0_i32_0 = arith.constant 0 : i32
    %c0_i32_1 = arith.constant 0 : i32
    return %arg0, %c0_i32, %c0_i32_0 : i32, i32, i32
  }
}

</mosaic_0001>

<llo_original>
// kernel: basic_block_forward.5
$region0: #{basic_block_forward.5}
  #allocation0 [shape = 'u32[]', space=smem, size = 0x4, offset = 0x4, fixed_abs, tag = 'smem constant byte address 0x4 - core index']
  #allocation1 [shape = 'u32[72,128]{1,0:T(1,128)}', space=vmem, size = 0x9000, scoped, tag = 'internal scratch']
  %s0 = inlined_call_operand.vmem [shape: f32[2,256,4], index: 0, kind: input, shape index: {}]
  %s1 = inlined_call_operand.vmem [shape: f32[2,256,4], index: 1, kind: input, shape index: {}]
  %s2 = inlined_call_operand.vmem [shape: f32[1,4], index: 2, kind: input, shape index: {}]
  %s3 = inlined_call_operand.vmem [shape: f32[1,4], index: 3, kind: input, shape index: {}]
  %s4 = inlined_call_operand.vmem [shape: f32[2,256,4], index: 4, kind: output, shape index: {}]
  %s5 = sld [smem:[#allocation0]]
  $region49: #{basic_block_forward.5} parent=0
    _
  %s7 = ssub.s32 1, %s5
  %s8 = scalar_select 0, %s7, %s5
  loop: start=0, step=1, limit=4
  $region2: #{basic_block_forward.5} parent=0 // loop_pre_header
    _
  $region3: #{basic_block_forward.5} parent=0 // loop_header
    %s10 = sphi 0, %s14
    %p11 = scmp.ge.s32.totalorder %s10, 4
    %s20 = sphi 0, %s22
    %s23 = sphi 0, %s20
    %s24 = sphi 0, %s23
    %s40 = sphi 0, %s24
    %s46 = sphi 0, %s48
    %s49 = sphi 0, %s46
    %s50 = sphi 0, %s49
    %s66 = sphi 0, %s50
    %s70 = sphi 0, %s70
    %s72 = sphi 0, %s70
    %s73 = sphi 0, %s72
    %s87 = sphi 0, %s73
    %s91 = sphi 0, %s91
    %s93 = sphi 0, %s91
    %s94 = sphi 0, %s93
    %s108 = sphi 0, %s94
    %s114 = sphi 0, %s116
    %s117 = sphi 0, %s114
    %s118 = sphi 0, %s117
    %s134 = sphi 0, %s118
  $region4: #{basic_block_forward.5} parent=0 // loop_header_branch
    %13 = sbr.rel (%p11) target = $region8
  $region5: #{basic_block_forward.5} parent=0 // loop_body
    %s15 = ssub.s32 %s10, 1
    %s16 = ssub.s32 %s10, 2
    %s17 = sadd.s32 %s10, 1
    %s18 = ssub.s32 %s10, %s17
    %p19 = scmp.eq.s32.totalorder %s18, 0
    %s21 = sadd.s32 %s20, 1
    %s22 = scalar_select %p19, %s20, %s21
    %p25 = pneg %p19
    %p26 = scmp.eq.s32.totalorder %s10, 1
    %p27 = por %p25, %p26
    %p28 = scmp.ne.s32.totalorder %s20, %s23
    %p29 = scmp.eq.s32.totalorder %s10, 0
    %p30 = por %p28, %p29
    %p31 = scmp.ne.s32.totalorder %s20, %s23
    %p32 = scmp.eq.s32.totalorder %s15, 1
    %p33 = por %p31, %p32
    %p34 = scmp.ne.s32.totalorder %s23, %s24
    %p35 = scmp.eq.s32.totalorder %s15, 0
    %p36 = por %p34, %p35
    %p37 = scmp.ne.s32.totalorder %s23, %s24
    %p38 = scmp.eq.s32.totalorder %s16, 1
    %p39 = por %p37, %p38
    %p41 = scmp.ne.s32.totalorder %s24, %s40
    %p42 = scmp.eq.s32.totalorder %s16, 0
    %p43 = por %p41, %p42
    %s44 = ssub.s32 %s10, %s17
    %p45 = scmp.eq.s32.totalorder %s44, 0
    %s47 = sadd.s32 %s46, 1
    %s48 = scalar_select %p45, %s46, %s47
    %p51 = pneg %p45
    %p52 = scmp.eq.s32.totalorder %s10, 1
    %p53 = por %p51, %p52
    %p54 = scmp.ne.s32.totalorder %s46, %s49
    %p55 = scmp.eq.s32.totalorder %s10, 0
    %p56 = por %p54, %p55
    %p57 = scmp.ne.s32.totalorder %s46, %s49
    %p58 = scmp.eq.s32.totalorder %s15, 1
    %p59 = por %p57, %p58
    %p60 = scmp.ne.s32.totalorder %s49, %s50
    %p61 = scmp.eq.s32.totalorder %s15, 0
    %p62 = por %p60, %p61
    %p63 = scmp.ne.s32.totalorder %s49, %s50
    %p64 = scmp.eq.s32.totalorder %s16, 1
    %p65 = por %p63, %p64
    %p67 = scmp.ne.s32.totalorder %s50, %s66
    %p68 = scmp.eq.s32.totalorder %s16, 0
    %p69 = por %p67, %p68
    %s71 = sadd.s32 %s70, 1
    %p74 = scmp.eq.s32.totalorder %s10, 1
    %p75 = scmp.ne.s32.totalorder %s70, %s72
    %p76 = scmp.eq.s32.totalorder %s10, 0
    %p77 = por %p75, %p76
    %p78 = scmp.ne.s32.totalorder %s70, %s72
    %p79 = scmp.eq.s32.totalorder %s15, 1
    %p80 = por %p78, %p79
    %p81 = scmp.ne.s32.totalorder %s72, %s73
    %p82 = scmp.eq.s32.totalorder %s15, 0
    %p83 = por %p81, %p82
    %p84 = scmp.ne.s32.totalorder %s72, %s73
    %p85 = scmp.eq.s32.totalorder %s16, 1
    %p86 = por %p84, %p85
    %p88 = scmp.ne.s32.totalorder %s73, %s87
    %p89 = scmp.eq.s32.totalorder %s16, 0
    %p90 = por %p88, %p89
    %s92 = sadd.s32 %s91, 1
    %p95 = scmp.eq.s32.totalorder %s10, 1
    %p96 = scmp.ne.s32.totalorder %s91, %s93
    %p97 = scmp.eq.s32.totalorder %s10, 0
    %p98 = por %p96, %p97
    %p99 = scmp.ne.s32.totalorder %s91, %s93
    %p100 = scmp.eq.s32.totalorder %s15, 1
    %p101 = por %p99, %p100
    %p102 = scmp.ne.s32.totalorder %s93, %s94
    %p103 = scmp.eq.s32.totalorder %s15, 0
    %p104 = por %p102, %p103
    %p105 = scmp.ne.s32.totalorder %s93, %s94
    %p106 = scmp.eq.s32.totalorder %s16, 1
    %p107 = por %p105, %p106
    %p109 = scmp.ne.s32.totalorder %s94, %s108
    %p110 = scmp.eq.s32.totalorder %s16, 0
    %p111 = por %p109, %p110
    %s112 = ssub.s32 %s10, %s17
    %p113 = scmp.eq.s32.totalorder %s112, 0
    %s115 = sadd.s32 %s114, 1
    %s116 = scalar_select %p113, %s114, %s115
    %p119 = pneg %p113
    %p120 = scmp.eq.s32.totalorder %s10, 1
    %p121 = por %p119, %p120
    %p122 = scmp.ne.s32.totalorder %s114, %s117
    %p123 = scmp.eq.s32.totalorder %s10, 0
    %p124 = por %p122, %p123
    %p125 = scmp.ne.s32.totalorder %s114, %s117
    %p126 = scmp.eq.s32.totalorder %s15, 1
    %p127 = por %p125, %p126
    %p128 = scmp.ne.s32.totalorder %s117, %s118
    %p129 = scmp.eq.s32.totalorder %s15, 0
    %p130 = por %p128, %p129
    %p131 = scmp.ne.s32.totalorder %s117, %s118
    %p132 = scmp.eq.s32.totalorder %s16, 1
    %p133 = por %p131, %p132
    %p135 = scmp.ne.s32.totalorder %s118, %s134
    %p136 = scmp.eq.s32.totalorder %s16, 0
    %p137 = por %p135, %p136
    %p138 = scmp.le.s32.totalorder 1, %s10
    %p139 = scmp.lt.s32.totalorder %s10, 3
    %p140 = pnand %p138, %p139
    %p141 = pneg %p140
    // Predicated region
    $region9: #{basic_block_forward.5} parent=5 // pred_check
      _
    $region10: #{basic_block_forward.5} parent=5 // pred_check_branch
      %143 = sbr.rel (%p140) target = $region12
    $region11: #{basic_block_forward.5} parent=5 // pred_region
      %s144 = ssub.s32 %s10, 1
      // Predicated region
      $region13: #{basic_block_forward.5} parent=11 // pred_check
        %p145 = pneg %p83
      $region14: #{basic_block_forward.5} parent=11 // pred_check_branch
        %147 = sbr.rel (%p145) target = $region16
      $region15: #{basic_block_forward.5} parent=11 // pred_region
        _
      $region16: #{basic_block_forward.5} parent=11 // pred_fallthru
        _
      // Predicated region
      $region17: #{basic_block_forward.5} parent=11 // pred_check
        %p148 = pneg %p104
      $region18: #{basic_block_forward.5} parent=11 // pred_check_branch
        %150 = sbr.rel (%p148) target = $region20
      $region19: #{basic_block_forward.5} parent=11 // pred_region
        _
      $region20: #{basic_block_forward.5} parent=11 // pred_fallthru
        _
    $region12: #{basic_block_forward.5} parent=5 // pred_fallthru
      _
    %p151 = scmp.lt.s32.totalorder %s10, 2
    // Predicated region
    $region21: #{basic_block_forward.5} parent=5 // pred_check
      %p152 = pneg %p151
    $region22: #{basic_block_forward.5} parent=5 // pred_check_branch
      %154 = sbr.rel (%p152) target = $region24
    $region23: #{basic_block_forward.5} parent=5 // pred_region
      // Predicated region
      $region25: #{basic_block_forward.5} parent=23 // pred_check
        %p155 = pneg %p30
      $region26: #{basic_block_forward.5} parent=23 // pred_check_branch
        %157 = sbr.rel (%p155) target = $region28
      $region27: #{basic_block_forward.5} parent=23 // pred_region
        %p158 = scmp.lt.s32.totalorder %s10, 1
        %s159 = scalar_select %p158, %s10, 1
        %s160 = smul.addr %s159, 32
        %s161 = smul.addr %s160, 8
        %s162 = scalar_lea.vmem %s0, %s161
      $region28: #{basic_block_forward.5} parent=23 // pred_fallthru
        _
      // Predicated region
      $region29: #{basic_block_forward.5} parent=23 // pred_check
        %p163 = pneg %p56
      $region30: #{basic_block_forward.5} parent=23 // pred_check_branch
        %165 = sbr.rel (%p163) target = $region32
      $region31: #{basic_block_forward.5} parent=23 // pred_region
        %p166 = scmp.lt.s32.totalorder %s10, 1
        %s167 = scalar_select %p166, %s10, 1
        %s168 = smul.addr %s167, 32
        %s169 = smul.addr %s168, 8
        %s170 = scalar_lea.vmem %s1, %s169
      $region32: #{basic_block_forward.5} parent=23 // pred_fallthru
        _
    $region24: #{basic_block_forward.5} parent=5 // pred_fallthru
      _
    %p171 = scmp.le.s32.totalorder 1, %s10
    %p172 = scmp.lt.s32.totalorder %s10, 3
    %p173 = pnand %p171, %p172
    %p174 = pneg %p173
    // Predicated region
    $region33: #{basic_block_forward.5} parent=5 // pred_check
      _
    $region34: #{basic_block_forward.5} parent=5 // pred_check_branch
      %176 = sbr.rel (%p173) target = $region36
    $region35: #{basic_block_forward.5} parent=5 // pred_region
      %s177 = ssub.s32 %s10, 1
      %p178 = scmp.lt.s32.totalorder %s15, 1
      %s179 = scalar_select %p178, %s15, 1
      %s180 = smul.addr %s179, 32
      %s181 = smul.addr %s180, 8
      %s182 = scalar_lea.vmem %s0, %s181
      %p183 = pneg %p36
      %p184 = pneg %p33
      %p185 = scmp.lt.s32.totalorder %s15, 1
      %s186 = scalar_select %p185, %s15, 1
      %s187 = smul.addr %s186, 32
      %s188 = smul.addr %s187, 8
      %s189 = scalar_lea.vmem %s1, %s188
      %p190 = pneg %p62
      %p191 = pneg %p59
      %p192 = pneg %p83
      %p193 = pneg %p80
      %p194 = pneg %p104
      %p195 = pneg %p101
      %p196 = pneg %p130
      %p197 = pneg %p127
      %p198 = scmp.lt.s32.totalorder %s15, 1
      %s199 = scalar_select %p198, %s15, 1
      %s200 = smul.addr %s199, 32
      %s201 = smul.addr %s200, 8
      %s202 = scalar_lea.vmem %s4, %s201
      %p203 = scmp.lt.s32.totalorder %s15, 1
      %s204 = scalar_select %p203, %s15, 1
      %s205 = smul.addr %s204, 32
      %s206 = smul.addr %s205, 8
      %s207 = scalar_lea.vmem %s0, %s206
      %p208 = scmp.lt.s32.totalorder %s15, 1
      %s209 = scalar_select %p208, %s15, 1
      %s210 = smul.addr %s209, 32
      %s211 = smul.addr %s210, 8
      %s212 = scalar_lea.vmem %s1, %s211
      %p213 = scmp.lt.s32.totalorder %s15, 1
      %s214 = scalar_select %p213, %s15, 1
      %s215 = smul.addr %s214, 32
      %s216 = smul.addr %s215, 8
      %s217 = scalar_lea.vmem %s4, %s216
      %v218 = vld [vmem:[%s207] sm:$0xff]
      %v219 = vld [vmem:[%s207 + $0x8] sm:$0xff]
      %v220 = vld [vmem:[%s207 + $0x10] sm:$0xff]
      %v221 = vld [vmem:[%s207 + $0x18] sm:$0xff]
      %v222 = vld [vmem:[%s207 + $0x20] sm:$0xff]
      %v223 = vld [vmem:[%s207 + $0x28] sm:$0xff]
      %v224 = vld [vmem:[%s207 + $0x30] sm:$0xff]
      %v225 = vld [vmem:[%s207 + $0x38] sm:$0xff]
      %v226 = vld [vmem:[%s207 + $0x40] sm:$0xff]
      %v227 = vld [vmem:[%s207 + $0x48] sm:$0xff]
      %v228 = vld [vmem:[%s207 + $0x50] sm:$0xff]
      %v229 = vld [vmem:[%s207 + $0x58] sm:$0xff]
      %v230 = vld [vmem:[%s207 + $0x60] sm:$0xff]
      %v231 = vld [vmem:[%s207 + $0x68] sm:$0xff]
      %v232 = vld [vmem:[%s207 + $0x70] sm:$0xff]
      %v233 = vld [vmem:[%s207 + $0x78] sm:$0xff]
      %v234 = vld [vmem:[%s207 + $0x80] sm:$0xff]
      %v235 = vld [vmem:[%s207 + $0x88] sm:$0xff]
      %v236 = vld [vmem:[%s207 + $0x90] sm:$0xff]
      %v237 = vld [vmem:[%s207 + $0x98] sm:$0xff]
      %v238 = vld [vmem:[%s207 + $0xa0] sm:$0xff]
      %v239 = vld [vmem:[%s207 + $0xa8] sm:$0xff]
      %v240 = vld [vmem:[%s207 + $0xb0] sm:$0xff]
      %v241 = vld [vmem:[%s207 + $0xb8] sm:$0xff]
      %v242 = vld [vmem:[%s207 + $0xc0] sm:$0xff]
      %v243 = vld [vmem:[%s207 + $0xc8] sm:$0xff]
      %v244 = vld [vmem:[%s207 + $0xd0] sm:$0xff]
      %v245 = vld [vmem:[%s207 + $0xd8] sm:$0xff]
      %v246 = vld [vmem:[%s207 + $0xe0] sm:$0xff]
      %v247 = vld [vmem:[%s207 + $0xe8] sm:$0xff]
      %v248 = vld [vmem:[%s207 + $0xf0] sm:$0xff]
      %v249 = vld [vmem:[%s207 + $0xf8] sm:$0xff]
      %v250 = vld [vmem:[%s2] sm:$0x1]
      %v252 = vperm.slane %v250, 0
      %v254 = vmul.f32 %v218, %v252
      %v255 = vmul.f32 %v219, %v252
      %v256 = vmul.f32 %v220, %v252
      %v257 = vmul.f32 %v221, %v252
      %v258 = vmul.f32 %v222, %v252
      %v259 = vmul.f32 %v223, %v252
      %v260 = vmul.f32 %v224, %v252
      %v261 = vmul.f32 %v225, %v252
      %v262 = vmul.f32 %v226, %v252
      %v263 = vmul.f32 %v227, %v252
      %v264 = vmul.f32 %v228, %v252
      %v265 = vmul.f32 %v229, %v252
      %v266 = vmul.f32 %v230, %v252
      %v267 = vmul.f32 %v231, %v252
      %v268 = vmul.f32 %v232, %v252
      %v269 = vmul.f32 %v233, %v252
      %v270 = vmul.f32 %v234, %v252
      %v271 = vmul.f32 %v235, %v252
      %v272 = vmul.f32 %v236, %v252
      %v273 = vmul.f32 %v237, %v252
      %v274 = vmul.f32 %v238, %v252
      %v275 = vmul.f32 %v239, %v252
      %v276 = vmul.f32 %v240, %v252
      %v277 = vmul.f32 %v241, %v252
      %v278 = vmul.f32 %v242, %v252
      %v279 = vmul.f32 %v243, %v252
      %v280 = vmul.f32 %v244, %v252
      %v281 = vmul.f32 %v245, %v252
      %v282 = vmul.f32 %v246, %v252
      %v283 = vmul.f32 %v247, %v252
      %v284 = vmul.f32 %v248, %v252
      %v285 = vmul.f32 %v249, %v252
      %v286 = vld [vmem:[%s3] sm:$0x1]
      %v288 = vperm.slane %v286, 0
      %v290 = vadd.f32 %v254, %v288
      %v291 = vadd.f32 %v255, %v288
      %v292 = vadd.f32 %v256, %v288
      %v293 = vadd.f32 %v257, %v288
      %v294 = vadd.f32 %v258, %v288
      %v295 = vadd.f32 %v259, %v288
      %v296 = vadd.f32 %v260, %v288
      %v297 = vadd.f32 %v261, %v288
      %v298 = vadd.f32 %v262, %v288
      %v299 = vadd.f32 %v263, %v288
      %v300 = vadd.f32 %v264, %v288
      %v301 = vadd.f32 %v265, %v288
      %v302 = vadd.f32 %v266, %v288
      %v303 = vadd.f32 %v267, %v288
      %v304 = vadd.f32 %v268, %v288
      %v305 = vadd.f32 %v269, %v288
      %v306 = vadd.f32 %v270, %v288
      %v307 = vadd.f32 %v271, %v288
      %v308 = vadd.f32 %v272, %v288
      %v309 = vadd.f32 %v273, %v288
      %v310 = vadd.f32 %v274, %v288
      %v311 = vadd.f32 %v275, %v288
      %v312 = vadd.f32 %v276, %v288
      %v313 = vadd.f32 %v277, %v288
      %v314 = vadd.f32 %v278, %v288
      %v315 = vadd.f32 %v279, %v288
      %v316 = vadd.f32 %v280, %v288
      %v317 = vadd.f32 %v281, %v288
      %v318 = vadd.f32 %v282, %v288
      %v319 = vadd.f32 %v283, %v288
      %v320 = vadd.f32 %v284, %v288
      %v321 = vadd.f32 %v285, %v288
      %v322 = vld [vmem:[%s212] sm:$0xff]
      %v323 = vld [vmem:[%s212 + $0x8] sm:$0xff]
      %v324 = vld [vmem:[%s212 + $0x10] sm:$0xff]
      %v325 = vld [vmem:[%s212 + $0x18] sm:$0xff]
      %v326 = vld [vmem:[%s212 + $0x20] sm:$0xff]
      %v327 = vld [vmem:[%s212 + $0x28] sm:$0xff]
      %v328 = vld [vmem:[%s212 + $0x30] sm:$0xff]
      %v329 = vld [vmem:[%s212 + $0x38] sm:$0xff]
      %v330 = vld [vmem:[%s212 + $0x40] sm:$0xff]
      %v331 = vld [vmem:[%s212 + $0x48] sm:$0xff]
      %v332 = vld [vmem:[%s212 + $0x50] sm:$0xff]
      %v333 = vld [vmem:[%s212 + $0x58] sm:$0xff]
      %v334 = vld [vmem:[%s212 + $0x60] sm:$0xff]
      %v335 = vld [vmem:[%s212 + $0x68] sm:$0xff]
      %v336 = vld [vmem:[%s212 + $0x70] sm:$0xff]
      %v337 = vld [vmem:[%s212 + $0x78] sm:$0xff]
      %v338 = vld [vmem:[%s212 + $0x80] sm:$0xff]
      %v339 = vld [vmem:[%s212 + $0x88] sm:$0xff]
      %v340 = vld [vmem:[%s212 + $0x90] sm:$0xff]
      %v341 = vld [vmem:[%s212 + $0x98] sm:$0xff]
      %v342 = vld [vmem:[%s212 + $0xa0] sm:$0xff]
      %v343 = vld [vmem:[%s212 + $0xa8] sm:$0xff]
      %v344 = vld [vmem:[%s212 + $0xb0] sm:$0xff]
      %v345 = vld [vmem:[%s212 + $0xb8] sm:$0xff]
      %v346 = vld [vmem:[%s212 + $0xc0] sm:$0xff]
      %v347 = vld [vmem:[%s212 + $0xc8] sm:$0xff]
      %v348 = vld [vmem:[%s212 + $0xd0] sm:$0xff]
      %v349 = vld [vmem:[%s212 + $0xd8] sm:$0xff]
      %v350 = vld [vmem:[%s212 + $0xe0] sm:$0xff]
      %v351 = vld [vmem:[%s212 + $0xe8] sm:$0xff]
      %v352 = vld [vmem:[%s212 + $0xf0] sm:$0xff]
      %v353 = vld [vmem:[%s212 + $0xf8] sm:$0xff]
      %v354 = vadd.f32 %v290, %v322
      %v355 = vadd.f32 %v291, %v323
      %v356 = vadd.f32 %v292, %v324
      %v357 = vadd.f32 %v293, %v325
      %v358 = vadd.f32 %v294, %v326
      %v359 = vadd.f32 %v295, %v327
      %v360 = vadd.f32 %v296, %v328
      %v361 = vadd.f32 %v297, %v329
      %v362 = vadd.f32 %v298, %v330
      %v363 = vadd.f32 %v299, %v331
      %v364 = vadd.f32 %v300, %v332
      %v365 = vadd.f32 %v301, %v333
      %v366 = vadd.f32 %v302, %v334
      %v367 = vadd.f32 %v303, %v335
      %v368 = vadd.f32 %v304, %v336
      %v369 = vadd.f32 %v305, %v337
      %v370 = vadd.f32 %v306, %v338
      %v371 = vadd.f32 %v307, %v339
      %v372 = vadd.f32 %v308, %v340
      %v373 = vadd.f32 %v309, %v341
      %v374 = vadd.f32 %v310, %v342
      %v375 = vadd.f32 %v311, %v343
      %v376 = vadd.f32 %v312, %v344
      %v377 = vadd.f32 %v313, %v345
      %v378 = vadd.f32 %v314, %v346
      %v379 = vadd.f32 %v315, %v347
      %v380 = vadd.f32 %v316, %v348
      %v381 = vadd.f32 %v317, %v349
      %v382 = vadd.f32 %v318, %v350
      %v383 = vadd.f32 %v319, %v351
      %v384 = vadd.f32 %v320, %v352
      %v385 = vadd.f32 %v321, %v353
      %v386 = vmax.f32 %v354, 0.0
      %v387 = vmax.f32 %v355, 0.0
      %v388 = vmax.f32 %v356, 0.0
      %v389 = vmax.f32 %v357, 0.0
      %v390 = vmax.f32 %v358, 0.0
      %v391 = vmax.f32 %v359, 0.0
      %v392 = vmax.f32 %v360, 0.0
      %v393 = vmax.f32 %v361, 0.0
      %v394 = vmax.f32 %v362, 0.0
      %v395 = vmax.f32 %v363, 0.0
      %v396 = vmax.f32 %v364, 0.0
      %v397 = vmax.f32 %v365, 0.0
      %v398 = vmax.f32 %v366, 0.0
      %v399 = vmax.f32 %v367, 0.0
      %v400 = vmax.f32 %v368, 0.0
      %v401 = vmax.f32 %v369, 0.0
      %v402 = vmax.f32 %v370, 0.0
      %v403 = vmax.f32 %v371, 0.0
      %v404 = vmax.f32 %v372, 0.0
      %v405 = vmax.f32 %v373, 0.0
      %v406 = vmax.f32 %v374, 0.0
      %v407 = vmax.f32 %v375, 0.0
      %v408 = vmax.f32 %v376, 0.0
      %v409 = vmax.f32 %v377, 0.0
      %v410 = vmax.f32 %v378, 0.0
      %v411 = vmax.f32 %v379, 0.0
      %v412 = vmax.f32 %v380, 0.0
      %v413 = vmax.f32 %v381, 0.0
      %v414 = vmax.f32 %v382, 0.0
      %v415 = vmax.f32 %v383, 0.0
      %v416 = vmax.f32 %v384, 0.0
      %v417 = vmax.f32 %v385, 0.0
      %vm418 = vcmask 31744
      %419 = vst.msk [vmem:[%s217] sm:$0xff] %vm418, %v386
      %420 = vst.msk [vmem:[%s217 + $0x8] sm:$0xff] %vm418, %v387
      %421 = vst.msk [vmem:[%s217 + $0x10] sm:$0xff] %vm418, %v388
      %422 = vst.msk [vmem:[%s217 + $0x18] sm:$0xff] %vm418, %v389
      %423 = vst.msk [vmem:[%s217 + $0x20] sm:$0xff] %vm418, %v390
      %424 = vst.msk [vmem:[%s217 + $0x28] sm:$0xff] %vm418, %v391
      %425 = vst.msk [vmem:[%s217 + $0x30] sm:$0xff] %vm418, %v392
      %426 = vst.msk [vmem:[%s217 + $0x38] sm:$0xff] %vm418, %v393
      %427 = vst.msk [vmem:[%s217 + $0x40] sm:$0xff] %vm418, %v394
      %428 = vst.msk [vmem:[%s217 + $0x48] sm:$0xff] %vm418, %v395
      %429 = vst.msk [vmem:[%s217 + $0x50] sm:$0xff] %vm418, %v396
      %430 = vst.msk [vmem:[%s217 + $0x58] sm:$0xff] %vm418, %v397
      %431 = vst.msk [vmem:[%s217 + $0x60] sm:$0xff] %vm418, %v398
      %432 = vst.msk [vmem:[%s217 + $0x68] sm:$0xff] %vm418, %v399
      %433 = vst.msk [vmem:[%s217 + $0x70] sm:$0xff] %vm418, %v400
      %434 = vst.msk [vmem:[%s217 + $0x78] sm:$0xff] %vm418, %v401
      %435 = vst.msk [vmem:[%s217 + $0x80] sm:$0xff] %vm418, %v402
      %436 = vst.msk [vmem:[%s217 + $0x88] sm:$0xff] %vm418, %v403
      %437 = vst.msk [vmem:[%s217 + $0x90] sm:$0xff] %vm418, %v404
      %438 = vst.msk [vmem:[%s217 + $0x98] sm:$0xff] %vm418, %v405
      %439 = vst.msk [vmem:[%s217 + $0xa0] sm:$0xff] %vm418, %v406
      %440 = vst.msk [vmem:[%s217 + $0xa8] sm:$0xff] %vm418, %v407
      %441 = vst.msk [vmem:[%s217 + $0xb0] sm:$0xff] %vm418, %v408
      %442 = vst.msk [vmem:[%s217 + $0xb8] sm:$0xff] %vm418, %v409
      %443 = vst.msk [vmem:[%s217 + $0xc0] sm:$0xff] %vm418, %v410
      %444 = vst.msk [vmem:[%s217 + $0xc8] sm:$0xff] %vm418, %v411
      %445 = vst.msk [vmem:[%s217 + $0xd0] sm:$0xff] %vm418, %v412
      %446 = vst.msk [vmem:[%s217 + $0xd8] sm:$0xff] %vm418, %v413
      %447 = vst.msk [vmem:[%s217 + $0xe0] sm:$0xff] %vm418, %v414
      %448 = vst.msk [vmem:[%s217 + $0xe8] sm:$0xff] %vm418, %v415
      %449 = vst.msk [vmem:[%s217 + $0xf0] sm:$0xff] %vm418, %v416
      %450 = vst.msk [vmem:[%s217 + $0xf8] sm:$0xff] %vm418, %v417
      %p451 = scmp.lt.s32.totalorder %s15, 1
      %s452 = scalar_select %p451, %s15, 1
      %s453 = smul.addr %s452, 32
      %s454 = smul.addr %s453, 8
      %s455 = scalar_lea.vmem %s4, %s454
      // Predicated region
      $region37: #{basic_block_forward.5} parent=35 // pred_check
        %p456 = pneg %p127
      $region38: #{basic_block_forward.5} parent=35 // pred_check_branch
        %458 = sbr.rel (%p456) target = $region40
      $region39: #{basic_block_forward.5} parent=35 // pred_region
        _
      $region40: #{basic_block_forward.5} parent=35 // pred_fallthru
        _
    $region36: #{basic_block_forward.5} parent=5 // pred_fallthru
      _
    %p459 = scmp.le.s32.totalorder 2, %s10
    // Predicated region
    $region41: #{basic_block_forward.5} parent=5 // pred_check
      %p460 = pneg %p459
    $region42: #{basic_block_forward.5} parent=5 // pred_check_branch
      %462 = sbr.rel (%p460) target = $region44
    $region43: #{basic_block_forward.5} parent=5 // pred_region
      %s463 = ssub.s32 %s10, 2
      // Predicated region
      $region45: #{basic_block_forward.5} parent=43 // pred_check
        %p464 = pneg %p133
      $region46: #{basic_block_forward.5} parent=43 // pred_check_branch
        %466 = sbr.rel (%p464) target = $region48
      $region47: #{basic_block_forward.5} parent=43 // pred_region
        %p467 = scmp.lt.s32.totalorder %s16, 1
        %s468 = scalar_select %p467, %s16, 1
        %s469 = smul.addr %s468, 32
        %s470 = smul.addr %s469, 8
        %s471 = scalar_lea.vmem %s4, %s470
      $region48: #{basic_block_forward.5} parent=43 // pred_fallthru
        _
    $region44: #{basic_block_forward.5} parent=5 // pred_fallthru
      _
  $region6: #{basic_block_forward.5} parent=0 // loop_footer
    %s14 = sadd.s32 1, %s10
  $region7: #{basic_block_forward.5} parent=0 // loop_footer_branch
    %9 = sbr.rel target = $region3
  $region8: #{basic_block_forward.5} parent=0 // loop_exit
    _

// kernel: basic_block_forward.3
$region0: #{basic_block_forward.3}
  #allocation0 [shape = 'u32[]', space=smem, size = 0x4, offset = 0x4, fixed_abs, tag = 'smem constant byte address 0x4 - core index']
  #allocation1 [shape = 'u32[72,128]{1,0:T(1,128)}', space=vmem, size = 0x9000, scoped, tag = 'internal scratch']
  #allocation2 [shape = 'f32[18,18,4]{2,1,0:T(8,128)}', space=vmem, size = 0x36000, scoped, tag = 'scratch operand']
  #allocation3 [shape = 'bf16[256,36]{1,0:T(8,128)(2,1)}', space=vmem, size = 0x10000, scoped, tag = 'scratch operand']
  %s0 = inlined_call_operand.vmem [shape: f32[2,16,16,4], index: 0, kind: input, shape index: {}]
  %s1 = inlined_call_operand.vmem [shape: bf16[36,4], index: 1, kind: input, shape index: {}]
  %s2 = inlined_call_operand.vmem [shape: f32[2,256,4], index: 2, kind: output, shape index: {0}]
  %s3 = inlined_call_operand.vmem [shape: f32[2,2,4], index: 3, kind: output, shape index: {1}]
  %4 = xla_tuple %s2, %s3
  %s5 = sld [smem:[#allocation0]]
  $region49: #{basic_block_forward.3} parent=0
    _
  %s7 = ssub.s32 1, %s5
  %s8 = scalar_select 0, %s7, %s5
  loop: start=0, step=1, limit=4
  $region2: #{basic_block_forward.3} parent=0 // loop_pre_header
    _
  $region3: #{basic_block_forward.3} parent=0 // loop_header
    %s10 = sphi 0, %s14
    %p11 = scmp.ge.s32.totalorder %s10, 4
    %s20 = sphi 0, %s22
    %s23 = sphi 0, %s20
    %s24 = sphi 0, %s23
    %s40 = sphi 0, %s24
    %s44 = sphi 0, %s44
    %s46 = sphi 0, %s44
    %s47 = sphi 0, %s46
    %s61 = sphi 0, %s47
    %s67 = sphi 0, %s69
    %s70 = sphi 0, %s67
    %s71 = sphi 0, %s70
    %s87 = sphi 0, %s71
    %s93 = sphi 0, %s95
    %s96 = sphi 0, %s93
    %s97 = sphi 0, %s96
    %s113 = sphi 0, %s97
  $region4: #{basic_block_forward.3} parent=0 // loop_header_branch
    %13 = sbr.rel (%p11) target = $region8
  $region5: #{basic_block_forward.3} parent=0 // loop_body
    %s15 = ssub.s32 %s10, 1
    %s16 = ssub.s32 %s10, 2
    %s17 = sadd.s32 %s10, 1
    %s18 = ssub.s32 %s10, %s17
    %p19 = scmp.eq.s32.totalorder %s18, 0
    %s21 = sadd.s32 %s20, 1
    %s22 = scalar_select %p19, %s20, %s21
    %p25 = pneg %p19
    %p26 = scmp.eq.s32.totalorder %s10, 1
    %p27 = por %p25, %p26
    %p28 = scmp.ne.s32.totalorder %s20, %s23
    %p29 = scmp.eq.s32.totalorder %s10, 0
    %p30 = por %p28, %p29
    %p31 = scmp.ne.s32.totalorder %s20, %s23
    %p32 = scmp.eq.s32.totalorder %s15, 1
    %p33 = por %p31, %p32
    %p34 = scmp.ne.s32.totalorder %s23, %s24
    %p35 = scmp.eq.s32.totalorder %s15, 0
    %p36 = por %p34, %p35
    %p37 = scmp.ne.s32.totalorder %s23, %s24
    %p38 = scmp.eq.s32.totalorder %s16, 1
    %p39 = por %p37, %p38
    %p41 = scmp.ne.s32.totalorder %s24, %s40
    %p42 = scmp.eq.s32.totalorder %s16, 0
    %p43 = por %p41, %p42
    %s45 = sadd.s32 %s44, 1
    %p48 = scmp.eq.s32.totalorder %s10, 1
    %p49 = scmp.ne.s32.totalorder %s44, %s46
    %p50 = scmp.eq.s32.totalorder %s10, 0
    %p51 = por %p49, %p50
    %p52 = scmp.ne.s32.totalorder %s44, %s46
    %p53 = scmp.eq.s32.totalorder %s15, 1
    %p54 = por %p52, %p53
    %p55 = scmp.ne.s32.totalorder %s46, %s47
    %p56 = scmp.eq.s32.totalorder %s15, 0
    %p57 = por %p55, %p56
    %p58 = scmp.ne.s32.totalorder %s46, %s47
    %p59 = scmp.eq.s32.totalorder %s16, 1
    %p60 = por %p58, %p59
    %p62 = scmp.ne.s32.totalorder %s47, %s61
    %p63 = scmp.eq.s32.totalorder %s16, 0
    %p64 = por %p62, %p63
    %s65 = ssub.s32 %s10, %s17
    %p66 = scmp.eq.s32.totalorder %s65, 0
    %s68 = sadd.s32 %s67, 1
    %s69 = scalar_select %p66, %s67, %s68
    %p72 = pneg %p66
    %p73 = scmp.eq.s32.totalorder %s10, 1
    %p74 = por %p72, %p73
    %p75 = scmp.ne.s32.totalorder %s67, %s70
    %p76 = scmp.eq.s32.totalorder %s10, 0
    %p77 = por %p75, %p76
    %p78 = scmp.ne.s32.totalorder %s67, %s70
    %p79 = scmp.eq.s32.totalorder %s15, 1
    %p80 = por %p78, %p79
    %p81 = scmp.ne.s32.totalorder %s70, %s71
    %p82 = scmp.eq.s32.totalorder %s15, 0
    %p83 = por %p81, %p82
    %p84 = scmp.ne.s32.totalorder %s70, %s71
    %p85 = scmp.eq.s32.totalorder %s16, 1
    %p86 = por %p84, %p85
    %p88 = scmp.ne.s32.totalorder %s71, %s87
    %p89 = scmp.eq.s32.totalorder %s16, 0
    %p90 = por %p88, %p89
    %s91 = ssub.s32 %s10, %s17
    %p92 = scmp.eq.s32.totalorder %s91, 0
    %s94 = sadd.s32 %s93, 1
    %s95 = scalar_select %p92, %s93, %s94
    %p98 = pneg %p92
    %p99 = scmp.eq.s32.totalorder %s10, 1
    %p100 = por %p98, %p99
    %p101 = scmp.ne.s32.totalorder %s93, %s96
    %p102 = scmp.eq.s32.totalorder %s10, 0
    %p103 = por %p101, %p102
    %p104 = scmp.ne.s32.totalorder %s93, %s96
    %p105 = scmp.eq.s32.totalorder %s15, 1
    %p106 = por %p104, %p105
    %p107 = scmp.ne.s32.totalorder %s96, %s97
    %p108 = scmp.eq.s32.totalorder %s15, 0
    %p109 = por %p107, %p108
    %p110 = scmp.ne.s32.totalorder %s96, %s97
    %p111 = scmp.eq.s32.totalorder %s16, 1
    %p112 = por %p110, %p111
    %p114 = scmp.ne.s32.totalorder %s97, %s113
    %p115 = scmp.eq.s32.totalorder %s16, 0
    %p116 = por %p114, %p115
    %p117 = scmp.le.s32.totalorder 1, %s10
    %p118 = scmp.lt.s32.totalorder %s10, 3
    %p119 = pnand %p117, %p118
    %p120 = pneg %p119
    // Predicated region
    $region9: #{basic_block_forward.3} parent=5 // pred_check
      _
    $region10: #{basic_block_forward.3} parent=5 // pred_check_branch
      %122 = sbr.rel (%p119) target = $region12
    $region11: #{basic_block_forward.3} parent=5 // pred_region
      %s123 = ssub.s32 %s10, 1
      // Predicated region
      $region13: #{basic_block_forward.3} parent=11 // pred_check
        %p124 = pneg %p57
      $region14: #{basic_block_forward.3} parent=11 // pred_check_branch
        %126 = sbr.rel (%p124) target = $region16
      $region15: #{basic_block_forward.3} parent=11 // pred_region
        _
      $region16: #{basic_block_forward.3} parent=11 // pred_fallthru
        _
    $region12: #{basic_block_forward.3} parent=5 // pred_fallthru
      _
    %p127 = scmp.lt.s32.totalorder %s10, 2
    // Predicated region
    $region17: #{basic_block_forward.3} parent=5 // pred_check
      %p128 = pneg %p127
    $region18: #{basic_block_forward.3} parent=5 // pred_check_branch
      %130 = sbr.rel (%p128) target = $region20
    $region19: #{basic_block_forward.3} parent=5 // pred_region
      // Predicated region
      $region21: #{basic_block_forward.3} parent=19 // pred_check
        %p131 = pneg %p30
      $region22: #{basic_block_forward.3} parent=19 // pred_check_branch
        %133 = sbr.rel (%p131) target = $region24
      $region23: #{basic_block_forward.3} parent=19 // pred_region
        %p134 = scmp.lt.s32.totalorder %s10, 1
        %s135 = scalar_select %p134, %s10, 1
        %s136 = smul.addr %s135, 32
        %s137 = smul.addr %s136, 8
        %s138 = scalar_lea.vmem %s0, %s137
      $region24: #{basic_block_forward.3} parent=19 // pred_fallthru
        _
    $region20: #{basic_block_forward.3} parent=5 // pred_fallthru
      _
    %p139 = scmp.le.s32.totalorder 1, %s10
    %p140 = scmp.lt.s32.totalorder %s10, 3
    %p141 = pnand %p139, %p140
    %p142 = pneg %p141
    // Predicated region
    $region25: #{basic_block_forward.3} parent=5 // pred_check
      _
    $region26: #{basic_block_forward.3} parent=5 // pred_check_branch
      %144 = sbr.rel (%p141) target = $region28
    $region27: #{basic_block_forward.3} parent=5 // pred_region
      %s145 = ssub.s32 %s10, 1
      %p146 = scmp.lt.s32.totalorder %s15, 1
      %s147 = scalar_select %p146, %s15, 1
      %s148 = smul.addr %s147, 32
      %s149 = smul.addr %s148, 8
      %s150 = scalar_lea.vmem %s0, %s149
      %p151 = pneg %p36
      %p152 = pneg %p33
      %p153 = pneg %p57
      %p154 = pneg %p54
      %p155 = pneg %p83
      %p156 = pneg %p80
      %p157 = scmp.lt.s32.totalorder %s15, 1
      %s158 = scalar_select %p157, %s15, 1
      %s159 = smul.addr %s158, 32
      %s160 = smul.addr %s159, 8
      %s161 = scalar_lea.vmem %s2, %s160
      %p162 = pneg %p109
      %p163 = pneg %p106
      %p164 = scmp.lt.s32.totalorder %s15, 1
      %s165 = scalar_select %p164, %s15, 1
      %s166 = smul.addr %s165, 2
      %s167 = scalar_lea.vmem %s3, %s166
      %p168 = scmp.lt.s32.totalorder %s15, 1
      %s169 = scalar_select %p168, %s15, 1
      %s170 = smul.addr %s169, 32
      %s171 = smul.addr %s170, 8
      %s172 = scalar_lea.vmem %s0, %s171
      %p173 = scmp.lt.s32.totalorder %s15, 1
      %s174 = scalar_select %p173, %s15, 1
      %s175 = smul.addr %s174, 32
      %s176 = smul.addr %s175, 8
      %s177 = scalar_lea.vmem %s2, %s176
      %p178 = scmp.lt.s32.totalorder %s15, 1
      %s179 = scalar_select %p178, %s15, 1
      %s180 = smul.addr %s179, 2
      %s181 = scalar_lea.vmem %s3, %s180
      %vm183 = vcmask 31744
      %184 = vst.msk [vmem:[#allocation2] sm:$0xff] %vm183, 0.0
      %185 = vst.msk [vmem:[#allocation2 + $0x8] sm:$0xff] %vm183, 0.0
      %vm186 = vcmask 25600
      %187 = vst.msk [vmem:[#allocation2 + $0x10] sm:$0x3] %vm186, 0.0
      %s188 = scalar_lea.vmem [#allocation2], 408
      %189 = vst.msk [vmem:[%s188] sm:$0xff] %vm183, 0.0
      %190 = vst.msk [vmem:[%s188 + $0x8] sm:$0xff] %vm183, 0.0
      %191 = vst.msk [vmem:[%s188 + $0x10] sm:$0x3] %vm186, 0.0
      %vm192 = vcmask 24576
      %193 = vst.msk [vmem:[#allocation2] sm:$0x1] %vm192, 0.0
      %194 = vst.msk [vmem:[#allocation2 + $0x18] sm:$0x1] %vm192, 0.0
      %195 = vst.msk [vmem:[#allocation2 + $0x30] sm:$0x1] %vm192, 0.0
      %196 = vst.msk [vmem:[#allocation2 + $0x48] sm:$0x1] %vm192, 0.0
      %197 = vst.msk [vmem:[#allocation2 + $0x60] sm:$0x1] %vm192, 0.0
      %198 = vst.msk [vmem:[#allocation2 + $0x78] sm:$0x1] %vm192, 0.0
      %199 = vst.msk [vmem:[#allocation2 + $0x90] sm:$0x1] %vm192, 0.0
      %200 = vst.msk [vmem:[#allocation2 + $0xa8] sm:$0x1] %vm192, 0.0
      %201 = vst.msk [vmem:[#allocation2 + $0xc0] sm:$0x1] %vm192, 0.0
      %202 = vst.msk [vmem:[#allocation2 + $0xd8] sm:$0x1] %vm192, 0.0
      %203 = vst.msk [vmem:[#allocation2 + $0xf0] sm:$0x1] %vm192, 0.0
      %204 = vst.msk [vmem:[#allocation2 + $0x108] sm:$0x1] %vm192, 0.0
      %205 = vst.msk [vmem:[#allocation2 + $0x120] sm:$0x1] %vm192, 0.0
      %206 = vst.msk [vmem:[#allocation2 + $0x138] sm:$0x1] %vm192, 0.0
      %207 = vst.msk [vmem:[#allocation2 + $0x150] sm:$0x1] %vm192, 0.0
      %208 = vst.msk [vmem:[#allocation2 + $0x168] sm:$0x1] %vm192, 0.0
      %209 = vst.msk [vmem:[#allocation2 + $0x180] sm:$0x1] %vm192, 0.0
      %210 = vst.msk [vmem:[#allocation2 + $0x198] sm:$0x1] %vm192, 0.0
      %211 = vst.msk [vmem:[#allocation2 + $0x11] sm:$0x1] %vm192, 0.0
      %212 = vst.msk [vmem:[#allocation2 + $0x29] sm:$0x1] %vm192, 0.0
      %213 = vst.msk [vmem:[#allocation2 + $0x41] sm:$0x1] %vm192, 0.0
      %214 = vst.msk [vmem:[#allocation2 + $0x59] sm:$0x1] %vm192, 0.0
      %215 = vst.msk [vmem:[#allocation2 + $0x71] sm:$0x1] %vm192, 0.0
      %216 = vst.msk [vmem:[#allocation2 + $0x89] sm:$0x1] %vm192, 0.0
      %217 = vst.msk [vmem:[#allocation2 + $0xa1] sm:$0x1] %vm192, 0.0
      %218 = vst.msk [vmem:[#allocation2 + $0xb9] sm:$0x1] %vm192, 0.0
      %219 = vst.msk [vmem:[#allocation2 + $0xd1] sm:$0x1] %vm192, 0.0
      %220 = vst.msk [vmem:[#allocation2 + $0xe9] sm:$0x1] %vm192, 0.0
      %221 = vst.msk [vmem:[#allocation2 + $0x101] sm:$0x1] %vm192, 0.0
      %222 = vst.msk [vmem:[#allocation2 + $0x119] sm:$0x1] %vm192, 0.0
      %223 = vst.msk [vmem:[#allocation2 + $0x131] sm:$0x1] %vm192, 0.0
      %224 = vst.msk [vmem:[#allocation2 + $0x149] sm:$0x1] %vm192, 0.0
      %225 = vst.msk [vmem:[#allocation2 + $0x161] sm:$0x1] %vm192, 0.0
      %226 = vst.msk [vmem:[#allocation2 + $0x179] sm:$0x1] %vm192, 0.0
      %227 = vst.msk [vmem:[#allocation2 + $0x191] sm:$0x1] %vm192, 0.0
      %228 = vst.msk [vmem:[#allocation2 + $0x1a9] sm:$0x1] %vm192, 0.0
      %v229 = vld [vmem:[%s172] sm:$0xff]
      %v230 = vld [vmem:[%s172 + $0x8] sm:$0xff]
      %v231 = vld [vmem:[%s172 + $0x10] sm:$0xff]
      %v232 = vld [vmem:[%s172 + $0x18] sm:$0xff]
      %v233 = vld [vmem:[%s172 + $0x20] sm:$0xff]
      %v234 = vld [vmem:[%s172 + $0x28] sm:$0xff]
      %v235 = vld [vmem:[%s172 + $0x30] sm:$0xff]
      %v236 = vld [vmem:[%s172 + $0x38] sm:$0xff]
      %v237 = vld [vmem:[%s172 + $0x40] sm:$0xff]
      %v238 = vld [vmem:[%s172 + $0x48] sm:$0xff]
      %v239 = vld [vmem:[%s172 + $0x50] sm:$0xff]
      %v240 = vld [vmem:[%s172 + $0x58] sm:$0xff]
      %v241 = vld [vmem:[%s172 + $0x60] sm:$0xff]
      %v242 = vld [vmem:[%s172 + $0x68] sm:$0xff]
      %v243 = vld [vmem:[%s172 + $0x70] sm:$0xff]
      %v244 = vld [vmem:[%s172 + $0x78] sm:$0xff]
      %v245 = vld [vmem:[%s172 + $0x80] sm:$0xff]
      %v246 = vld [vmem:[%s172 + $0x88] sm:$0xff]
      %v247 = vld [vmem:[%s172 + $0x90] sm:$0xff]
      %v248 = vld [vmem:[%s172 + $0x98] sm:$0xff]
      %v249 = vld [vmem:[%s172 + $0xa0] sm:$0xff]
      %v250 = vld [vmem:[%s172 + $0xa8] sm:$0xff]
      %v251 = vld [vmem:[%s172 + $0xb0] sm:$0xff]
      %v252 = vld [vmem:[%s172 + $0xb8] sm:$0xff]
      %v253 = vld [vmem:[%s172 + $0xc0] sm:$0xff]
      %v254 = vld [vmem:[%s172 + $0xc8] sm:$0xff]
      %v255 = vld [vmem:[%s172 + $0xd0] sm:$0xff]
      %v256 = vld [vmem:[%s172 + $0xd8] sm:$0xff]
      %v257 = vld [vmem:[%s172 + $0xe0] sm:$0xff]
      %v258 = vld [vmem:[%s172 + $0xe8] sm:$0xff]
      %v259 = vld [vmem:[%s172 + $0xf0] sm:$0xff]
      %v260 = vld [vmem:[%s172 + $0xf8] sm:$0xff]
      %s261 = scalar_lea.vmem [#allocation2], 24
      %262 = vst.msk [vmem:[%s261 + $0x1] sm:$0xff] %vm183, %v229
      %263 = vst.msk [vmem:[%s261 + $0x9] sm:$0xff] %vm183, %v230
      %264 = vst.msk [vmem:[%s261 + $0x19] sm:$0xff] %vm183, %v231
      %265 = vst.msk [vmem:[%s261 + $0x21] sm:$0xff] %vm183, %v232
      %266 = vst.msk [vmem:[%s261 + $0x31] sm:$0xff] %vm183, %v233
      %267 = vst.msk [vmem:[%s261 + $0x39] sm:$0xff] %vm183, %v234
      %268 = vst.msk [vmem:[%s261 + $0x49] sm:$0xff] %vm183, %v235
      %269 = vst.msk [vmem:[%s261 + $0x51] sm:$0xff] %vm183, %v236
      %270 = vst.msk [vmem:[%s261 + $0x61] sm:$0xff] %vm183, %v237
      %271 = vst.msk [vmem:[%s261 + $0x69] sm:$0xff] %vm183, %v238
      %272 = vst.msk [vmem:[%s261 + $0x79] sm:$0xff] %vm183, %v239
      %273 = vst.msk [vmem:[%s261 + $0x81] sm:$0xff] %vm183, %v240
      %274 = vst.msk [vmem:[%s261 + $0x91] sm:$0xff] %vm183, %v241
      %275 = vst.msk [vmem:[%s261 + $0x99] sm:$0xff] %vm183, %v242
      %276 = vst.msk [vmem:[%s261 + $0xa9] sm:$0xff] %vm183, %v243
      %277 = vst.msk [vmem:[%s261 + $0xb1] sm:$0xff] %vm183, %v244
      %278 = vst.msk [vmem:[%s261 + $0xc1] sm:$0xff] %vm183, %v245
      %279 = vst.msk [vmem:[%s261 + $0xc9] sm:$0xff] %vm183, %v246
      %280 = vst.msk [vmem:[%s261 + $0xd9] sm:$0xff] %vm183, %v247
      %281 = vst.msk [vmem:[%s261 + $0xe1] sm:$0xff] %vm183, %v248
      %282 = vst.msk [vmem:[%s261 + $0xf1] sm:$0xff] %vm183, %v249
      %283 = vst.msk [vmem:[%s261 + $0xf9] sm:$0xff] %vm183, %v250
      %284 = vst.msk [vmem:[%s261 + $0x109] sm:$0xff] %vm183, %v251
      %285 = vst.msk [vmem:[%s261 + $0x111] sm:$0xff] %vm183, %v252
      %286 = vst.msk [vmem:[%s261 + $0x121] sm:$0xff] %vm183, %v253
      %287 = vst.msk [vmem:[%s261 + $0x129] sm:$0xff] %vm183, %v254
      %288 = vst.msk [vmem:[%s261 + $0x139] sm:$0xff] %vm183, %v255
      %289 = vst.msk [vmem:[%s261 + $0x141] sm:$0xff] %vm183, %v256
      %290 = vst.msk [vmem:[%s261 + $0x151] sm:$0xff] %vm183, %v257
      %291 = vst.msk [vmem:[%s261 + $0x159] sm:$0xff] %vm183, %v258
      %292 = vst.msk [vmem:[%s261 + $0x169] sm:$0xff] %vm183, %v259
      %293 = vst.msk [vmem:[%s261 + $0x171] sm:$0xff] %vm183, %v260
      %v294 = vld [vmem:[#allocation2] sm:$0xff]
      %v295 = vld [vmem:[#allocation2 + $0x8] sm:$0xff]
      %v296 = vld [vmem:[#allocation2 + $0x18] sm:$0xff]
      %v297 = vld [vmem:[#allocation2 + $0x20] sm:$0xff]
      %v298 = vld [vmem:[#allocation2 + $0x30] sm:$0xff]
      %v299 = vld [vmem:[#allocation2 + $0x38] sm:$0xff]
      %v300 = vld [vmem:[#allocation2 + $0x48] sm:$0xff]
      %v301 = vld [vmem:[#allocation2 + $0x50] sm:$0xff]
      %v302 = vld [vmem:[#allocation2 + $0x60] sm:$0xff]
      %v303 = vld [vmem:[#allocation2 + $0x68] sm:$0xff]
      %v304 = vld [vmem:[#allocation2 + $0x78] sm:$0xff]
      %v305 = vld [vmem:[#allocation2 + $0x80] sm:$0xff]
      %v306 = vld [vmem:[#allocation2 + $0x90] sm:$0xff]
      %v307 = vld [vmem:[#allocation2 + $0x98] sm:$0xff]
      %v308 = vld [vmem:[#allocation2 + $0xa8] sm:$0xff]
      %v309 = vld [vmem:[#allocation2 + $0xb0] sm:$0xff]
      %v310 = vld [vmem:[#allocation2 + $0xc0] sm:$0xff]
      %v311 = vld [vmem:[#allocation2 + $0xc8] sm:$0xff]
      %v312 = vld [vmem:[#allocation2 + $0xd8] sm:$0xff]
      %v313 = vld [vmem:[#allocation2 + $0xe0] sm:$0xff]
      %v314 = vld [vmem:[#allocation2 + $0xf0] sm:$0xff]
      %v315 = vld [vmem:[#allocation2 + $0xf8] sm:$0xff]
      %v316 = vld [vmem:[#allocation2 + $0x108] sm:$0xff]
      %v317 = vld [vmem:[#allocation2 + $0x110] sm:$0xff]
      %v318 = vld [vmem:[#allocation2 + $0x120] sm:$0xff]
      %v319 = vld [vmem:[#allocation2 + $0x128] sm:$0xff]
      %v320 = vld [vmem:[#allocation2 + $0x138] sm:$0xff]
      %v321 = vld [vmem:[#allocation2 + $0x140] sm:$0xff]
      %v322 = vld [vmem:[#allocation2 + $0x150] sm:$0xff]
      %v323 = vld [vmem:[#allocation2 + $0x158] sm:$0xff]
      %v324 = vld [vmem:[#allocation2 + $0x168] sm:$0xff]
      %v325 = vld [vmem:[#allocation2 + $0x170] sm:$0xff]
      %v326 = vpack.c.bf16 %v294, %v294
      %v327 = vpack.c.bf16 %v295, %v295
      %v328 = vpack.c.bf16 %v296, %v296
      %v329 = vpack.c.bf16 %v297, %v297
      %v330 = vpack.c.bf16 %v298, %v298
      %v331 = vpack.c.bf16 %v299, %v299
      %v332 = vpack.c.bf16 %v300, %v300
      %v333 = vpack.c.bf16 %v301, %v301
      %v334 = vpack.c.bf16 %v302, %v302
      %v335 = vpack.c.bf16 %v303, %v303
      %v336 = vpack.c.bf16 %v304, %v304
      %v337 = vpack.c.bf16 %v305, %v305
      %v338 = vpack.c.bf16 %v306, %v306
      %v339 = vpack.c.bf16 %v307, %v307
      %v340 = vpack.c.bf16 %v308, %v308
      %v341 = vpack.c.bf16 %v309, %v309
      %v342 = vpack.c.bf16 %v310, %v310
      %v343 = vpack.c.bf16 %v311, %v311
      %v344 = vpack.c.bf16 %v312, %v312
      %v345 = vpack.c.bf16 %v313, %v313
      %v346 = vpack.c.bf16 %v314, %v314
      %v347 = vpack.c.bf16 %v315, %v315
      %v348 = vpack.c.bf16 %v316, %v316
      %v349 = vpack.c.bf16 %v317, %v317
      %v350 = vpack.c.bf16 %v318, %v318
      %v351 = vpack.c.bf16 %v319, %v319
      %v352 = vpack.c.bf16 %v320, %v320
      %v353 = vpack.c.bf16 %v321, %v321
      %v354 = vpack.c.bf16 %v322, %v322
      %v355 = vpack.c.bf16 %v323, %v323
      %v356 = vpack.c.bf16 %v324, %v324
      %v357 = vpack.c.bf16 %v325, %v325
      %vm358 = vcmask 27648
      %359 = vst.msk [vmem:[#allocation3] sm:$0xf] %vm358, %v326
      %360 = vst.msk [vmem:[#allocation3 + $0x4] sm:$0xf] %vm358, %v327
      %361 = vst.msk [vmem:[#allocation3 + $0x8] sm:$0xf] %vm358, %v328
      %362 = vst.msk [vmem:[#allocation3 + $0xc] sm:$0xf] %vm358, %v329
      %363 = vst.msk [vmem:[#allocation3 + $0x10] sm:$0xf] %vm358, %v330
      %364 = vst.msk [vmem:[#allocation3 + $0x14] sm:$0xf] %vm358, %v331
      %365 = vst.msk [vmem:[#allocation3 + $0x18] sm:$0xf] %vm358, %v332
      %366 = vst.msk [vmem:[#allocation3 + $0x1c] sm:$0xf] %vm358, %v333
      %367 = vst.msk [vmem:[#allocation3 + $0x20] sm:$0xf] %vm358, %v334
      %368 = vst.msk [vmem:[#allocation3 + $0x24] sm:$0xf] %vm358, %v335
      %369 = vst.msk [vmem:[#allocation3 + $0x28] sm:$0xf] %vm358, %v336
      %370 = vst.msk [vmem:[#allocation3 + $0x2c] sm:$0xf] %vm358, %v337
      %371 = vst.msk [vmem:[#allocation3 + $0x30] sm:$0xf] %vm358, %v338
      %372 = vst.msk [vmem:[#allocation3 + $0x34] sm:$0xf] %vm358, %v339
      %373 = vst.msk [vmem:[#allocation3 + $0x38] sm:$0xf] %vm358, %v340
      %374 = vst.msk [vmem:[#allocation3 + $0x3c] sm:$0xf] %vm358, %v341
      %375 = vst.msk [vmem:[#allocation3 + $0x40] sm:$0xf] %vm358, %v342
      %376 = vst.msk [vmem:[#allocation3 + $0x44] sm:$0xf] %vm358, %v343
      %377 = vst.msk [vmem:[#allocation3 + $0x48] sm:$0xf] %vm358, %v344
      %378 = vst.msk [vmem:[#allocation3 + $0x4c] sm:$0xf] %vm358, %v345
      %379 = vst.msk [vmem:[#allocation3 + $0x50] sm:$0xf] %vm358, %v346
      %380 = vst.msk [vmem:[#allocation3 + $0x54] sm:$0xf] %vm358, %v347
      %381 = vst.msk [vmem:[#allocation3 + $0x58] sm:$0xf] %vm358, %v348
      %382 = vst.msk [vmem:[#allocation3 + $0x5c] sm:$0xf] %vm358, %v349
      %383 = vst.msk [vmem:[#allocation3 + $0x60] sm:$0xf] %vm358, %v350
      %384 = vst.msk [vmem:[#allocation3 + $0x64] sm:$0xf] %vm358, %v351
      %385 = vst.msk [vmem:[#allocation3 + $0x68] sm:$0xf] %vm358, %v352
      %386 = vst.msk [vmem:[#allocation3 + $0x6c] sm:$0xf] %vm358, %v353
      %387 = vst.msk [vmem:[#allocation3 + $0x70] sm:$0xf] %vm358, %v354
      %388 = vst.msk [vmem:[#allocation3 + $0x74] sm:$0xf] %vm358, %v355
      %389 = vst.msk [vmem:[#allocation3 + $0x78] sm:$0xf] %vm358, %v356
      %390 = vst.msk [vmem:[#allocation3 + $0x7c] sm:$0xf] %vm358, %v357
      %v391 = vld [vmem:[#allocation2 + $0x1] sm:$0xff]
      %v392 = vld [vmem:[#allocation2 + $0x9] sm:$0xff]
      %v393 = vld [vmem:[#allocation2 + $0x19] sm:$0xff]
      %v394 = vld [vmem:[#allocation2 + $0x21] sm:$0xff]
      %v395 = vld [vmem:[#allocation2 + $0x31] sm:$0xff]
      %v396 = vld [vmem:[#allocation2 + $0x39] sm:$0xff]
      %v397 = vld [vmem:[#allocation2 + $0x49] sm:$0xff]
      %v398 = vld [vmem:[#allocation2 + $0x51] sm:$0xff]
      %v399 = vld [vmem:[#allocation2 + $0x61] sm:$0xff]
      %v400 = vld [vmem:[#allocation2 + $0x69] sm:$0xff]
      %v401 = vld [vmem:[#allocation2 + $0x79] sm:$0xff]
      %v402 = vld [vmem:[#allocation2 + $0x81] sm:$0xff]
      %v403 = vld [vmem:[#allocation2 + $0x91] sm:$0xff]
      %v404 = vld [vmem:[#allocation2 + $0x99] sm:$0xff]
      %v405 = vld [vmem:[#allocation2 + $0xa9] sm:$0xff]
      %v406 = vld [vmem:[#allocation2 + $0xb1] sm:$0xff]
      %v407 = vld [vmem:[#allocation2 + $0xc1] sm:$0xff]
      %v408 = vld [vmem:[#allocation2 + $0xc9] sm:$0xff]
      %v409 = vld [vmem:[#allocation2 + $0xd9] sm:$0xff]
      %v410 = vld [vmem:[#allocation2 + $0xe1] sm:$0xff]
      %v411 = vld [vmem:[#allocation2 + $0xf1] sm:$0xff]
      %v412 = vld [vmem:[#allocation2 + $0xf9] sm:$0xff]
      %v413 = vld [vmem:[#allocation2 + $0x109] sm:$0xff]
      %v414 = vld [vmem:[#allocation2 + $0x111] sm:$0xff]
      %v415 = vld [vmem:[#allocation2 + $0x121] sm:$0xff]
      %v416 = vld [vmem:[#allocation2 + $0x129] sm:$0xff]
      %v417 = vld [vmem:[#allocation2 + $0x139] sm:$0xff]
      %v418 = vld [vmem:[#allocation2 + $0x141] sm:$0xff]
      %v419 = vld [vmem:[#allocation2 + $0x151] sm:$0xff]
      %v420 = vld [vmem:[#allocation2 + $0x159] sm:$0xff]
      %v421 = vld [vmem:[#allocation2 + $0x169] sm:$0xff]
      %v422 = vld [vmem:[#allocation2 + $0x171] sm:$0xff]
      %v423 = vpack.c.bf16 %v391, %v391
      %v424 = vpack.c.bf16 %v392, %v392
      %v425 = vpack.c.bf16 %v393, %v393
      %v426 = vpack.c.bf16 %v394, %v394
      %v427 = vpack.c.bf16 %v395, %v395
      %v428 = vpack.c.bf16 %v396, %v396
      %v429 = vpack.c.bf16 %v397, %v397
      %v430 = vpack.c.bf16 %v398, %v398
      %v431 = vpack.c.bf16 %v399, %v399
      %v432 = vpack.c.bf16 %v400, %v400
      %v433 = vpack.c.bf16 %v401, %v401
      %v434 = vpack.c.bf16 %v402, %v402
      %v435 = vpack.c.bf16 %v403, %v403
      %v436 = vpack.c.bf16 %v404, %v404
      %v437 = vpack.c.bf16 %v405, %v405
      %v438 = vpack.c.bf16 %v406, %v406
      %v439 = vpack.c.bf16 %v407, %v407
      %v440 = vpack.c.bf16 %v408, %v408
      %v441 = vpack.c.bf16 %v409, %v409
      %v442 = vpack.c.bf16 %v410, %v410
      %v443 = vpack.c.bf16 %v411, %v411
      %v444 = vpack.c.bf16 %v412, %v412
      %v445 = vpack.c.bf16 %v413, %v413
      %v446 = vpack.c.bf16 %v414, %v414
      %v447 = vpack.c.bf16 %v415, %v415
      %v448 = vpack.c.bf16 %v416, %v416
      %v449 = vpack.c.bf16 %v417, %v417
      %v450 = vpack.c.bf16 %v418, %v418
      %v451 = vpack.c.bf16 %v419, %v419
      %v452 = vpack.c.bf16 %v420, %v420
      %v453 = vpack.c.bf16 %v421, %v421
      %v454 = vpack.c.bf16 %v422, %v422
      %487 = vrot.lane.b32.xlu0 %v423, 4
      %v488 = vpop.permute.xlu0 %487
      %489 = vrot.lane.b32.xlu0 %v424, 4
      %v490 = vpop.permute.xlu0 %489
      %491 = vrot.lane.b32.xlu0 %v425, 4
      %v492 = vpop.permute.xlu0 %491
      %493 = vrot.lane.b32.xlu0 %v426, 4
      %v494 = vpop.permute.xlu0 %493
      %495 = vrot.lane.b32.xlu0 %v427, 4
      %v496 = vpop.permute.xlu0 %495
      %497 = vrot.lane.b32.xlu0 %v428, 4
      %v498 = vpop.permute.xlu0 %497
      %499 = vrot.lane.b32.xlu0 %v429, 4
      %v500 = vpop.permute.xlu0 %499
      %501 = vrot.lane.b32.xlu0 %v430, 4
      %v502 = vpop.permute.xlu0 %501
      %503 = vrot.lane.b32.xlu0 %v431, 4
      %v504 = vpop.permute.xlu0 %503
      %505 = vrot.lane.b32.xlu0 %v432, 4
      %v506 = vpop.permute.xlu0 %505
      %507 = vrot.lane.b32.xlu0 %v433, 4
      %v508 = vpop.permute.xlu0 %507
      %509 = vrot.lane.b32.xlu0 %v434, 4
      %v510 = vpop.permute.xlu0 %509
      %511 = vrot.lane.b32.xlu0 %v435, 4
      %v512 = vpop.permute.xlu0 %511
      %513 = vrot.lane.b32.xlu0 %v436, 4
      %v514 = vpop.permute.xlu0 %513
      %515 = vrot.lane.b32.xlu0 %v437, 4
      %v516 = vpop.permute.xlu0 %515
      %517 = vrot.lane.b32.xlu0 %v438, 4
      %v518 = vpop.permute.xlu0 %517
      %519 = vrot.lane.b32.xlu0 %v439, 4
      %v520 = vpop.permute.xlu0 %519
      %521 = vrot.lane.b32.xlu0 %v440, 4
      %v522 = vpop.permute.xlu0 %521
      %523 = vrot.lane.b32.xlu0 %v441, 4
      %v524 = vpop.permute.xlu0 %523
      %525 = vrot.lane.b32.xlu0 %v442, 4
      %v526 = vpop.permute.xlu0 %525
      %527 = vrot.lane.b32.xlu0 %v443, 4
      %v528 = vpop.permute.xlu0 %527
      %529 = vrot.lane.b32.xlu0 %v444, 4
      %v530 = vpop.permute.xlu0 %529
      %531 = vrot.lane.b32.xlu0 %v445, 4
      %v532 = vpop.permute.xlu0 %531
      %533 = vrot.lane.b32.xlu0 %v446, 4
      %v534 = vpop.permute.xlu0 %533
      %535 = vrot.lane.b32.xlu0 %v447, 4
      %v536 = vpop.permute.xlu0 %535
      %537 = vrot.lane.b32.xlu0 %v448, 4
      %v538 = vpop.permute.xlu0 %537
      %539 = vrot.lane.b32.xlu0 %v449, 4
      %v540 = vpop.permute.xlu0 %539
      %541 = vrot.lane.b32.xlu0 %v450, 4
      %v542 = vpop.permute.xlu0 %541
      %543 = vrot.lane.b32.xlu0 %v451, 4
      %v544 = vpop.permute.xlu0 %543
      %545 = vrot.lane.b32.xlu0 %v452, 4
      %v546 = vpop.permute.xlu0 %545
      %547 = vrot.lane.b32.xlu0 %v453, 4
      %v548 = vpop.permute.xlu0 %547
      %549 = vrot.lane.b32.xlu0 %v454, 4
      %v550 = vpop.permute.xlu0 %549
      %vm583 = vcmask 60448
      %584 = vst.msk [vmem:[#allocation3] sm:$0xf] %vm583, %v488
      %585 = vst.msk [vmem:[#allocation3 + $0x4] sm:$0xf] %vm583, %v490
      %586 = vst.msk [vmem:[#allocation3 + $0x8] sm:$0xf] %vm583, %v492
      %587 = vst.msk [vmem:[#allocation3 + $0xc] sm:$0xf] %vm583, %v494
      %588 = vst.msk [vmem:[#allocation3 + $0x10] sm:$0xf] %vm583, %v496
      %589 = vst.msk [vmem:[#allocation3 + $0x14] sm:$0xf] %vm583, %v498
      %590 = vst.msk [vmem:[#allocation3 + $0x18] sm:$0xf] %vm583, %v500
      %591 = vst.msk [vmem:[#allocation3 + $0x1c] sm:$0xf] %vm583, %v502
      %592 = vst.msk [vmem:[#allocation3 + $0x20] sm:$0xf] %vm583, %v504
      %593 = vst.msk [vmem:[#allocation3 + $0x24] sm:$0xf] %vm583, %v506
      %594 = vst.msk [vmem:[#allocation3 + $0x28] sm:$0xf] %vm583, %v508
      %595 = vst.msk [vmem:[#allocation3 + $0x2c] sm:$0xf] %vm583, %v510
      %596 = vst.msk [vmem:[#allocation3 + $0x30] sm:$0xf] %vm583, %v512
      %597 = vst.msk [vmem:[#allocation3 + $0x34] sm:$0xf] %vm583, %v514
      %598 = vst.msk [vmem:[#allocation3 + $0x38] sm:$0xf] %vm583, %v516
      %599 = vst.msk [vmem:[#allocation3 + $0x3c] sm:$0xf] %vm583, %v518
      %600 = vst.msk [vmem:[#allocation3 + $0x40] sm:$0xf] %vm583, %v520
      %601 = vst.msk [vmem:[#allocation3 + $0x44] sm:$0xf] %vm583, %v522
      %602 = vst.msk [vmem:[#allocation3 + $0x48] sm:$0xf] %vm583, %v524
      %603 = vst.msk [vmem:[#allocation3 + $0x4c] sm:$0xf] %vm583, %v526
      %604 = vst.msk [vmem:[#allocation3 + $0x50] sm:$0xf] %vm583, %v528
      %605 = vst.msk [vmem:[#allocation3 + $0x54] sm:$0xf] %vm583, %v530
      %606 = vst.msk [vmem:[#allocation3 + $0x58] sm:$0xf] %vm583, %v532
      %607 = vst.msk [vmem:[#allocation3 + $0x5c] sm:$0xf] %vm583, %v534
      %608 = vst.msk [vmem:[#allocation3 + $0x60] sm:$0xf] %vm583, %v536
      %609 = vst.msk [vmem:[#allocation3 + $0x64] sm:$0xf] %vm583, %v538
      %610 = vst.msk [vmem:[#allocation3 + $0x68] sm:$0xf] %vm583, %v540
      %611 = vst.msk [vmem:[#allocation3 + $0x6c] sm:$0xf] %vm583, %v542
      %612 = vst.msk [vmem:[#allocation3 + $0x70] sm:$0xf] %vm583, %v544
      %613 = vst.msk [vmem:[#allocation3 + $0x74] sm:$0xf] %vm583, %v546
      %614 = vst.msk [vmem:[#allocation3 + $0x78] sm:$0xf] %vm583, %v548
      %615 = vst.msk [vmem:[#allocation3 + $0x7c] sm:$0xf] %vm583, %v550
      %v616 = vld [vmem:[#allocation2 + $0x2] sm:$0xff]
      %v617 = vld [vmem:[#allocation2 + $0xa] sm:$0xff]
      %v618 = vld [vmem:[#allocation2 + $0x1a] sm:$0xff]
      %v619 = vld [vmem:[#allocation2 + $0x22] sm:$0xff]
      %v620 = vld [vmem:[#allocation2 + $0x32] sm:$0xff]
      %v621 = vld [vmem:[#allocation2 + $0x3a] sm:$0xff]
      %v622 = vld [vmem:[#allocation2 + $0x4a] sm:$0xff]
      %v623 = vld [vmem:[#allocation2 + $0x52] sm:$0xff]
      %v624 = vld [vmem:[#allocation2 + $0x62] sm:$0xff]
      %v625 = vld [vmem:[#allocation2 + $0x6a] sm:$0xff]
      %v626 = vld [vmem:[#allocation2 + $0x7a] sm:$0xff]
      %v627 = vld [vmem:[#allocation2 + $0x82] sm:$0xff]
      %v628 = vld [vmem:[#allocation2 + $0x92] sm:$0xff]
      %v629 = vld [vmem:[#allocation2 + $0x9a] sm:$0xff]
      %v630 = vld [vmem:[#allocation2 + $0xaa] sm:$0xff]
      %v631 = vld [vmem:[#allocation2 + $0xb2] sm:$0xff]
      %v632 = vld [vmem:[#allocation2 + $0xc2] sm:$0xff]
      %v633 = vld [vmem:[#allocation2 + $0xca] sm:$0xff]
      %v634 = vld [vmem:[#allocation2 + $0xda] sm:$0xff]
      %v635 = vld [vmem:[#allocation2 + $0xe2] sm:$0xff]
      %v636 = vld [vmem:[#allocation2 + $0xf2] sm:$0xff]
      %v637 = vld [vmem:[#allocation2 + $0xfa] sm:$0xff]
      %v638 = vld [vmem:[#allocation2 + $0x10a] sm:$0xff]
      %v639 = vld [vmem:[#allocation2 + $0x112] sm:$0xff]
      %v640 = vld [vmem:[#allocation2 + $0x122] sm:$0xff]
      %v641 = vld [vmem:[#allocation2 + $0x12a] sm:$0xff]
      %v642 = vld [vmem:[#allocation2 + $0x13a] sm:$0xff]
      %v643 = vld [vmem:[#allocation2 + $0x142] sm:$0xff]
      %v644 = vld [vmem:[#allocation2 + $0x152] sm:$0xff]
      %v645 = vld [vmem:[#allocation2 + $0x15a] sm:$0xff]
      %v646 = vld [vmem:[#allocation2 + $0x16a] sm:$0xff]
      %v647 = vld [vmem:[#allocation2 + $0x172] sm:$0xff]
      %v648 = vpack.c.bf16 %v616, %v616
      %v649 = vpack.c.bf16 %v617, %v617
      %v650 = vpack.c.bf16 %v618, %v618
      %v651 = vpack.c.bf16 %v619, %v619
      %v652 = vpack.c.bf16 %v620, %v620
      %v653 = vpack.c.bf16 %v621, %v621
      %v654 = vpack.c.bf16 %v622, %v622
      %v655 = vpack.c.bf16 %v623, %v623
      %v656 = vpack.c.bf16 %v624, %v624
      %v657 = vpack.c.bf16 %v625, %v625
      %v658 = vpack.c.bf16 %v626, %v626
      %v659 = vpack.c.bf16 %v627, %v627
      %v660 = vpack.c.bf16 %v628, %v628
      %v661 = vpack.c.bf16 %v629, %v629
      %v662 = vpack.c.bf16 %v630, %v630
      %v663 = vpack.c.bf16 %v631, %v631
      %v664 = vpack.c.bf16 %v632, %v632
      %v665 = vpack.c.bf16 %v633, %v633
      %v666 = vpack.c.bf16 %v634, %v634
      %v667 = vpack.c.bf16 %v635, %v635
      %v668 = vpack.c.bf16 %v636, %v636
      %v669 = vpack.c.bf16 %v637, %v637
      %v670 = vpack.c.bf16 %v638, %v638
      %v671 = vpack.c.bf16 %v639, %v639
      %v672 = vpack.c.bf16 %v640, %v640
      %v673 = vpack.c.bf16 %v641, %v641
      %v674 = vpack.c.bf16 %v642, %v642
      %v675 = vpack.c.bf16 %v643, %v643
      %v676 = vpack.c.bf16 %v644, %v644
      %v677 = vpack.c.bf16 %v645, %v645
      %v678 = vpack.c.bf16 %v646, %v646
      %v679 = vpack.c.bf16 %v647, %v647
      %712 = vrot.lane.b32.xlu0 %v648, 8
      %v713 = vpop.permute.xlu0 %712
      %714 = vrot.lane.b32.xlu0 %v649, 8
      %v715 = vpop.permute.xlu0 %714
      %716 = vrot.lane.b32.xlu0 %v650, 8
      %v717 = vpop.permute.xlu0 %716
      %718 = vrot.lane.b32.xlu0 %v651, 8
      %v719 = vpop.permute.xlu0 %718
      %720 = vrot.lane.b32.xlu0 %v652, 8
      %v721 = vpop.permute.xlu0 %720
      %722 = vrot.lane.b32.xlu0 %v653, 8
      %v723 = vpop.permute.xlu0 %722
      %724 = vrot.lane.b32.xlu0 %v654, 8
      %v725 = vpop.permute.xlu0 %724
      %726 = vrot.lane.b32.xlu0 %v655, 8
      %v727 = vpop.permute.xlu0 %726
      %728 = vrot.lane.b32.xlu0 %v656, 8
      %v729 = vpop.permute.xlu0 %728
      %730 = vrot.lane.b32.xlu0 %v657, 8
      %v731 = vpop.permute.xlu0 %730
      %732 = vrot.lane.b32.xlu0 %v658, 8
      %v733 = vpop.permute.xlu0 %732
      %734 = vrot.lane.b32.xlu0 %v659, 8
      %v735 = vpop.permute.xlu0 %734
      %736 = vrot.lane.b32.xlu0 %v660, 8
      %v737 = vpop.permute.xlu0 %736
      %738 = vrot.lane.b32.xlu0 %v661, 8
      %v739 = vpop.permute.xlu0 %738
      %740 = vrot.lane.b32.xlu0 %v662, 8
      %v741 = vpop.permute.xlu0 %740
      %742 = vrot.lane.b32.xlu0 %v663, 8
      %v743 = vpop.permute.xlu0 %742
      %744 = vrot.lane.b32.xlu0 %v664, 8
      %v745 = vpop.permute.xlu0 %744
      %746 = vrot.lane.b32.xlu0 %v665, 8
      %v747 = vpop.permute.xlu0 %746
      %748 = vrot.lane.b32.xlu0 %v666, 8
      %v749 = vpop.permute.xlu0 %748
      %750 = vrot.lane.b32.xlu0 %v667, 8
      %v751 = vpop.permute.xlu0 %750
      %752 = vrot.lane.b32.xlu0 %v668, 8
      %v753 = vpop.permute.xlu0 %752
      %754 = vrot.lane.b32.xlu0 %v669, 8
      %v755 = vpop.permute.xlu0 %754
      %756 = vrot.lane.b32.xlu0 %v670, 8
      %v757 = vpop.permute.xlu0 %756
      %758 = vrot.lane.b32.xlu0 %v671, 8
      %v759 = vpop.permute.xlu0 %758
      %760 = vrot.lane.b32.xlu0 %v672, 8
      %v761 = vpop.permute.xlu0 %760
      %762 = vrot.lane.b32.xlu0 %v673, 8
      %v763 = vpop.permute.xlu0 %762
      %764 = vrot.lane.b32.xlu0 %v674, 8
      %v765 = vpop.permute.xlu0 %764
      %766 = vrot.lane.b32.xlu0 %v675, 8
      %v767 = vpop.permute.xlu0 %766
      %768 = vrot.lane.b32.xlu0 %v676, 8
      %v769 = vpop.permute.xlu0 %768
      %770 = vrot.lane.b32.xlu0 %v677, 8
      %v771 = vpop.permute.xlu0 %770
      %772 = vrot.lane.b32.xlu0 %v678, 8
      %v773 = vpop.permute.xlu0 %772
      %774 = vrot.lane.b32.xlu0 %v679, 8
      %v775 = vpop.permute.xlu0 %774
      %vm808 = vcmask 93248
      %809 = vst.msk [vmem:[#allocation3] sm:$0xf] %vm808, %v713
      %810 = vst.msk [vmem:[#allocation3 + $0x4] sm:$0xf] %vm808, %v715
      %811 = vst.msk [vmem:[#allocation3 + $0x8] sm:$0xf] %vm808, %v717
      %812 = vst.msk [vmem:[#allocation3 + $0xc] sm:$0xf] %vm808, %v719
      %813 = vst.msk [vmem:[#allocation3 + $0x10] sm:$0xf] %vm808, %v721
      %814 = vst.msk [vmem:[#allocation3 + $0x14] sm:$0xf] %vm808, %v723
      %815 = vst.msk [vmem:[#allocation3 + $0x18] sm:$0xf] %vm808, %v725
      %816 = vst.msk [vmem:[#allocation3 + $0x1c] sm:$0xf] %vm808, %v727
      %817 = vst.msk [vmem:[#allocation3 + $0x20] sm:$0xf] %vm808, %v729
      %818 = vst.msk [vmem:[#allocation3 + $0x24] sm:$0xf] %vm808, %v731
      %819 = vst.msk [vmem:[#allocation3 + $0x28] sm:$0xf] %vm808, %v733
      %820 = vst.msk [vmem:[#allocation3 + $0x2c] sm:$0xf] %vm808, %v735
      %821 = vst.msk [vmem:[#allocation3 + $0x30] sm:$0xf] %vm808, %v737
      %822 = vst.msk [vmem:[#allocation3 + $0x34] sm:$0xf] %vm808, %v739
      %823 = vst.msk [vmem:[#allocation3 + $0x38] sm:$0xf] %vm808, %v741
      %824 = vst.msk [vmem:[#allocation3 + $0x3c] sm:$0xf] %vm808, %v743
      %825 = vst.msk [vmem:[#allocation3 + $0x40] sm:$0xf] %vm808, %v745
      %826 = vst.msk [vmem:[#allocation3 + $0x44] sm:$0xf] %vm808, %v747
      %827 = vst.msk [vmem:[#allocation3 + $0x48] sm:$0xf] %vm808, %v749
      %828 = vst.msk [vmem:[#allocation3 + $0x4c] sm:$0xf] %vm808, %v751
      %829 = vst.msk [vmem:[#allocation3 + $0x50] sm:$0xf] %vm808, %v753
      %830 = vst.msk [vmem:[#allocation3 + $0x54] sm:$0xf] %vm808, %v755
      %831 = vst.msk [vmem:[#allocation3 + $0x58] sm:$0xf] %vm808, %v757
      %832 = vst.msk [vmem:[#allocation3 + $0x5c] sm:$0xf] %vm808, %v759
      %833 = vst.msk [vmem:[#allocation3 + $0x60] sm:$0xf] %vm808, %v761
      %834 = vst.msk [vmem:[#allocation3 + $0x64] sm:$0xf] %vm808, %v763
      %835 = vst.msk [vmem:[#allocation3 + $0x68] sm:$0xf] %vm808, %v765
      %836 = vst.msk [vmem:[#allocation3 + $0x6c] sm:$0xf] %vm808, %v767
      %837 = vst.msk [vmem:[#allocation3 + $0x70] sm:$0xf] %vm808, %v769
      %838 = vst.msk [vmem:[#allocation3 + $0x74] sm:$0xf] %vm808, %v771
      %839 = vst.msk [vmem:[#allocation3 + $0x78] sm:$0xf] %vm808, %v773
      %840 = vst.msk [vmem:[#allocation3 + $0x7c] sm:$0xf] %vm808, %v775
      %v841 = vld [vmem:[%s261] sm:$0xff]
      %v842 = vld [vmem:[%s261 + $0x8] sm:$0xff]
      %v843 = vld [vmem:[%s261 + $0x18] sm:$0xff]
      %v844 = vld [vmem:[%s261 + $0x20] sm:$0xff]
      %v845 = vld [vmem:[%s261 + $0x30] sm:$0xff]
      %v846 = vld [vmem:[%s261 + $0x38] sm:$0xff]
      %v847 = vld [vmem:[%s261 + $0x48] sm:$0xff]
      %v848 = vld [vmem:[%s261 + $0x50] sm:$0xff]
      %v849 = vld [vmem:[%s261 + $0x60] sm:$0xff]
      %v850 = vld [vmem:[%s261 + $0x68] sm:$0xff]
      %v851 = vld [vmem:[%s261 + $0x78] sm:$0xff]
      %v852 = vld [vmem:[%s261 + $0x80] sm:$0xff]
      %v853 = vld [vmem:[%s261 + $0x90] sm:$0xff]
      %v854 = vld [vmem:[%s261 + $0x98] sm:$0xff]
      %v855 = vld [vmem:[%s261 + $0xa8] sm:$0xff]
      %v856 = vld [vmem:[%s261 + $0xb0] sm:$0xff]
      %v857 = vld [vmem:[%s261 + $0xc0] sm:$0xff]
      %v858 = vld [vmem:[%s261 + $0xc8] sm:$0xff]
      %v859 = vld [vmem:[%s261 + $0xd8] sm:$0xff]
      %v860 = vld [vmem:[%s261 + $0xe0] sm:$0xff]
      %v861 = vld [vmem:[%s261 + $0xf0] sm:$0xff]
      %v862 = vld [vmem:[%s261 + $0xf8] sm:$0xff]
      %v863 = vld [vmem:[%s261 + $0x108] sm:$0xff]
      %v864 = vld [vmem:[%s261 + $0x110] sm:$0xff]
      %v865 = vld [vmem:[%s261 + $0x120] sm:$0xff]
      %v866 = vld [vmem:[%s261 + $0x128] sm:$0xff]
      %v867 = vld [vmem:[%s261 + $0x138] sm:$0xff]
      %v868 = vld [vmem:[%s261 + $0x140] sm:$0xff]
      %v869 = vld [vmem:[%s261 + $0x150] sm:$0xff]
      %v870 = vld [vmem:[%s261 + $0x158] sm:$0xff]
      %v871 = vld [vmem:[%s261 + $0x168] sm:$0xff]
      %v872 = vld [vmem:[%s261 + $0x170] sm:$0xff]
      %v873 = vpack.c.bf16 %v841, %v841
      %v874 = vpack.c.bf16 %v842, %v842
      %v875 = vpack.c.bf16 %v843, %v843
      %v876 = vpack.c.bf16 %v844, %v844
      %v877 = vpack.c.bf16 %v845, %v845
      %v878 = vpack.c.bf16 %v846, %v846
      %v879 = vpack.c.bf16 %v847, %v847
      %v880 = vpack.c.bf16 %v848, %v848
      %v881 = vpack.c.bf16 %v849, %v849
      %v882 = vpack.c.bf16 %v850, %v850
      %v883 = vpack.c.bf16 %v851, %v851
      %v884 = vpack.c.bf16 %v852, %v852
      %v885 = vpack.c.bf16 %v853, %v853
      %v886 = vpack.c.bf16 %v854, %v854
      %v887 = vpack.c.bf16 %v855, %v855
      %v888 = vpack.c.bf16 %v856, %v856
      %v889 = vpack.c.bf16 %v857, %v857
      %v890 = vpack.c.bf16 %v858, %v858
      %v891 = vpack.c.bf16 %v859, %v859
      %v892 = vpack.c.bf16 %v860, %v860
      %v893 = vpack.c.bf16 %v861, %v861
      %v894 = vpack.c.bf16 %v862, %v862
      %v895 = vpack.c.bf16 %v863, %v863
      %v896 = vpack.c.bf16 %v864, %v864
      %v897 = vpack.c.bf16 %v865, %v865
      %v898 = vpack.c.bf16 %v866, %v866
      %v899 = vpack.c.bf16 %v867, %v867
      %v900 = vpack.c.bf16 %v868, %v868
      %v901 = vpack.c.bf16 %v869, %v869
      %v902 = vpack.c.bf16 %v870, %v870
      %v903 = vpack.c.bf16 %v871, %v871
      %v904 = vpack.c.bf16 %v872, %v872
      %937 = vrot.lane.b32.xlu0 %v873, 12
      %v938 = vpop.permute.xlu0 %937
      %939 = vrot.lane.b32.xlu0 %v874, 12
      %v940 = vpop.permute.xlu0 %939
      %941 = vrot.lane.b32.xlu0 %v875, 12
      %v942 = vpop.permute.xlu0 %941
      %943 = vrot.lane.b32.xlu0 %v876, 12
      %v944 = vpop.permute.xlu0 %943
      %945 = vrot.lane.b32.xlu0 %v877, 12
      %v946 = vpop.permute.xlu0 %945
      %947 = vrot.lane.b32.xlu0 %v878, 12
      %v948 = vpop.permute.xlu0 %947
      %949 = vrot.lane.b32.xlu0 %v879, 12
      %v950 = vpop.permute.xlu0 %949
      %951 = vrot.lane.b32.xlu0 %v880, 12
      %v952 = vpop.permute.xlu0 %951
      %953 = vrot.lane.b32.xlu0 %v881, 12
      %v954 = vpop.permute.xlu0 %953
      %955 = vrot.lane.b32.xlu0 %v882, 12
      %v956 = vpop.permute.xlu0 %955
      %957 = vrot.lane.b32.xlu0 %v883, 12
      %v958 = vpop.permute.xlu0 %957
      %959 = vrot.lane.b32.xlu0 %v884, 12
      %v960 = vpop.permute.xlu0 %959
      %961 = vrot.lane.b32.xlu0 %v885, 12
      %v962 = vpop.permute.xlu0 %961
      %963 = vrot.lane.b32.xlu0 %v886, 12
      %v964 = vpop.permute.xlu0 %963
      %965 = vrot.lane.b32.xlu0 %v887, 12
      %v966 = vpop.permute.xlu0 %965
      %967 = vrot.lane.b32.xlu0 %v888, 12
      %v968 = vpop.permute.xlu0 %967
      %969 = vrot.lane.b32.xlu0 %v889, 12
      %v970 = vpop.permute.xlu0 %969
      %971 = vrot.lane.b32.xlu0 %v890, 12
      %v972 = vpop.permute.xlu0 %971
      %973 = vrot.lane.b32.xlu0 %v891, 12
      %v974 = vpop.permute.xlu0 %973
      %975 = vrot.lane.b32.xlu0 %v892, 12
      %v976 = vpop.permute.xlu0 %975
      %977 = vrot.lane.b32.xlu0 %v893, 12
      %v978 = vpop.permute.xlu0 %977
      %979 = vrot.lane.b32.xlu0 %v894, 12
      %v980 = vpop.permute.xlu0 %979
      %981 = vrot.lane.b32.xlu0 %v895, 12
      %v982 = vpop.permute.xlu0 %981
      %983 = vrot.lane.b32.xlu0 %v896, 12
      %v984 = vpop.permute.xlu0 %983
      %985 = vrot.lane.b32.xlu0 %v897, 12
      %v986 = vpop.permute.xlu0 %985
      %987 = vrot.lane.b32.xlu0 %v898, 12
      %v988 = vpop.permute.xlu0 %987
      %989 = vrot.lane.b32.xlu0 %v899, 12
      %v990 = vpop.permute.xlu0 %989
      %991 = vrot.lane.b32.xlu0 %v900, 12
      %v992 = vpop.permute.xlu0 %991
      %993 = vrot.lane.b32.xlu0 %v901, 12
      %v994 = vpop.permute.xlu0 %993
      %995 = vrot.lane.b32.xlu0 %v902, 12
      %v996 = vpop.permute.xlu0 %995
      %997 = vrot.lane.b32.xlu0 %v903, 12
      %v998 = vpop.permute.xlu0 %997
      %999 = vrot.lane.b32.xlu0 %v904, 12
      %v1000 = vpop.permute.xlu0 %999
      %vm1033 = vcmask 126048
      %1034 = vst.msk [vmem:[#allocation3] sm:$0xf] %vm1033, %v938
      %1035 = vst.msk [vmem:[#allocation3 + $0x4] sm:$0xf] %vm1033, %v940
      %1036 = vst.msk [vmem:[#allocation3 + $0x8] sm:$0xf] %vm1033, %v942
      %1037 = vst.msk [vmem:[#allocation3 + $0xc] sm:$0xf] %vm1033, %v944
      %1038 = vst.msk [vmem:[#allocation3 + $0x10] sm:$0xf] %vm1033, %v946
      %1039 = vst.msk [vmem:[#allocation3 + $0x14] sm:$0xf] %vm1033, %v948
      %1040 = vst.msk [vmem:[#allocation3 + $0x18] sm:$0xf] %vm1033, %v950
      %1041 = vst.msk [vmem:[#allocation3 + $0x1c] sm:$0xf] %vm1033, %v952
      %1042 = vst.msk [vmem:[#allocation3 + $0x20] sm:$0xf] %vm1033, %v954
      %1043 = vst.msk [vmem:[#allocation3 + $0x24] sm:$0xf] %vm1033, %v956
      %1044 = vst.msk [vmem:[#allocation3 + $0x28] sm:$0xf] %vm1033, %v958
      %1045 = vst.msk [vmem:[#allocation3 + $0x2c] sm:$0xf] %vm1033, %v960
      %1046 = vst.msk [vmem:[#allocation3 + $0x30] sm:$0xf] %vm1033, %v962
      %1047 = vst.msk [vmem:[#allocation3 + $0x34] sm:$0xf] %vm1033, %v964
      %1048 = vst.msk [vmem:[#allocation3 + $0x38] sm:$0xf] %vm1033, %v966
      %1049 = vst.msk [vmem:[#allocation3 + $0x3c] sm:$0xf] %vm1033, %v968
      %1050 = vst.msk [vmem:[#allocation3 + $0x40] sm:$0xf] %vm1033, %v970
      %1051 = vst.msk [vmem:[#allocation3 + $0x44] sm:$0xf] %vm1033, %v972
      %1052 = vst.msk [vmem:[#allocation3 + $0x48] sm:$0xf] %vm1033, %v974
      %1053 = vst.msk [vmem:[#allocation3 + $0x4c] sm:$0xf] %vm1033, %v976
      %1054 = vst.msk [vmem:[#allocation3 + $0x50] sm:$0xf] %vm1033, %v978
      %1055 = vst.msk [vmem:[#allocation3 + $0x54] sm:$0xf] %vm1033, %v980
      %1056 = vst.msk [vmem:[#allocation3 + $0x58] sm:$0xf] %vm1033, %v982
      %1057 = vst.msk [vmem:[#allocation3 + $0x5c] sm:$0xf] %vm1033, %v984
      %1058 = vst.msk [vmem:[#allocation3 + $0x60] sm:$0xf] %vm1033, %v986
      %1059 = vst.msk [vmem:[#allocation3 + $0x64] sm:$0xf] %vm1033, %v988
      %1060 = vst.msk [vmem:[#allocation3 + $0x68] sm:$0xf] %vm1033, %v990
      %1061 = vst.msk [vmem:[#allocation3 + $0x6c] sm:$0xf] %vm1033, %v992
      %1062 = vst.msk [vmem:[#allocation3 + $0x70] sm:$0xf] %vm1033, %v994
      %1063 = vst.msk [vmem:[#allocation3 + $0x74] sm:$0xf] %vm1033, %v996
      %1064 = vst.msk [vmem:[#allocation3 + $0x78] sm:$0xf] %vm1033, %v998
      %1065 = vst.msk [vmem:[#allocation3 + $0x7c] sm:$0xf] %vm1033, %v1000
      %v1066 = vld [vmem:[%s261 + $0x1] sm:$0xff]
      %v1067 = vld [vmem:[%s261 + $0x9] sm:$0xff]
      %v1068 = vld [vmem:[%s261 + $0x19] sm:$0xff]
      %v1069 = vld [vmem:[%s261 + $0x21] sm:$0xff]
      %v1070 = vld [vmem:[%s261 + $0x31] sm:$0xff]
      %v1071 = vld [vmem:[%s261 + $0x39] sm:$0xff]
      %v1072 = vld [vmem:[%s261 + $0x49] sm:$0xff]
      %v1073 = vld [vmem:[%s261 + $0x51] sm:$0xff]
      %v1074 = vld [vmem:[%s261 + $0x61] sm:$0xff]
      %v1075 = vld [vmem:[%s261 + $0x69] sm:$0xff]
      %v1076 = vld [vmem:[%s261 + $0x79] sm:$0xff]
      %v1077 = vld [vmem:[%s261 + $0x81] sm:$0xff]
      %v1078 = vld [vmem:[%s261 + $0x91] sm:$0xff]
      %v1079 = vld [vmem:[%s261 + $0x99] sm:$0xff]
      %v1080 = vld [vmem:[%s261 + $0xa9] sm:$0xff]
      %v1081 = vld [vmem:[%s261 + $0xb1] sm:$0xff]
      %v1082 = vld [vmem:[%s261 + $0xc1] sm:$0xff]
      %v1083 = vld [vmem:[%s261 + $0xc9] sm:$0xff]
      %v1084 = vld [vmem:[%s261 + $0xd9] sm:$0xff]
      %v1085 = vld [vmem:[%s261 + $0xe1] sm:$0xff]
      %v1086 = vld [vmem:[%s261 + $0xf1] sm:$0xff]
      %v1087 = vld [vmem:[%s261 + $0xf9] sm:$0xff]
      %v1088 = vld [vmem:[%s261 + $0x109] sm:$0xff]
      %v1089 = vld [vmem:[%s261 + $0x111] sm:$0xff]
      %v1090 = vld [vmem:[%s261 + $0x121] sm:$0xff]
      %v1091 = vld [vmem:[%s261 + $0x129] sm:$0xff]
      %v1092 = vld [vmem:[%s261 + $0x139] sm:$0xff]
      %v1093 = vld [vmem:[%s261 + $0x141] sm:$0xff]
      %v1094 = vld [vmem:[%s261 + $0x151] sm:$0xff]
      %v1095 = vld [vmem:[%s261 + $0x159] sm:$0xff]
      %v1096 = vld [vmem:[%s261 + $0x169] sm:$0xff]
      %v1097 = vld [vmem:[%s261 + $0x171] sm:$0xff]
      %v1098 = vpack.c.bf16 %v1066, %v1066
      %v1099 = vpack.c.bf16 %v1067, %v1067
      %v1100 = vpack.c.bf16 %v1068, %v1068
      %v1101 = vpack.c.bf16 %v1069, %v1069
      %v1102 = vpack.c.bf16 %v1070, %v1070
      %v1103 = vpack.c.bf16 %v1071, %v1071
      %v1104 = vpack.c.bf16 %v1072, %v1072
      %v1105 = vpack.c.bf16 %v1073, %v1073
      %v1106 = vpack.c.bf16 %v1074, %v1074
      %v1107 = vpack.c.bf16 %v1075, %v1075
      %v1108 = vpack.c.bf16 %v1076, %v1076
      %v1109 = vpack.c.bf16 %v1077, %v1077
      %v1110 = vpack.c.bf16 %v1078, %v1078
      %v1111 = vpack.c.bf16 %v1079, %v1079
      %v1112 = vpack.c.bf16 %v1080, %v1080
      %v1113 = vpack.c.bf16 %v1081, %v1081
      %v1114 = vpack.c.bf16 %v1082, %v1082
      %v1115 = vpack.c.bf16 %v1083, %v1083
      %v1116 = vpack.c.bf16 %v1084, %v1084
      %v1117 = vpack.c.bf16 %v1085, %v1085
      %v1118 = vpack.c.bf16 %v1086, %v1086
      %v1119 = vpack.c.bf16 %v1087, %v1087
      %v1120 = vpack.c.bf16 %v1088, %v1088
      %v1121 = vpack.c.bf16 %v1089, %v1089
      %v1122 = vpack.c.bf16 %v1090, %v1090
      %v1123 = vpack.c.bf16 %v1091, %v1091
      %v1124 = vpack.c.bf16 %v1092, %v1092
      %v1125 = vpack.c.bf16 %v1093, %v1093
      %v1126 = vpack.c.bf16 %v1094, %v1094
      %v1127 = vpack.c.bf16 %v1095, %v1095
      %v1128 = vpack.c.bf16 %v1096, %v1096
      %v1129 = vpack.c.bf16 %v1097, %v1097
      %1162 = vrot.lane.b32.xlu0 %v1098, 16
      %v1163 = vpop.permute.xlu0 %1162
      %1164 = vrot.lane.b32.xlu0 %v1099, 16
      %v1165 = vpop.permute.xlu0 %1164
      %1166 = vrot.lane.b32.xlu0 %v1100, 16
      %v1167 = vpop.permute.xlu0 %1166
      %1168 = vrot.lane.b32.xlu0 %v1101, 16
      %v1169 = vpop.permute.xlu0 %1168
      %1170 = vrot.lane.b32.xlu0 %v1102, 16
      %v1171 = vpop.permute.xlu0 %1170
      %1172 = vrot.lane.b32.xlu0 %v1103, 16
      %v1173 = vpop.permute.xlu0 %1172
      %1174 = vrot.lane.b32.xlu0 %v1104, 16
      %v1175 = vpop.permute.xlu0 %1174
      %1176 = vrot.lane.b32.xlu0 %v1105, 16
      %v1177 = vpop.permute.xlu0 %1176
      %1178 = vrot.lane.b32.xlu0 %v1106, 16
      %v1179 = vpop.permute.xlu0 %1178
      %1180 = vrot.lane.b32.xlu0 %v1107, 16
      %v1181 = vpop.permute.xlu0 %1180
      %1182 = vrot.lane.b32.xlu0 %v1108, 16
      %v1183 = vpop.permute.xlu0 %1182
      %1184 = vrot.lane.b32.xlu0 %v1109, 16
      %v1185 = vpop.permute.xlu0 %1184
      %1186 = vrot.lane.b32.xlu0 %v1110, 16
      %v1187 = vpop.permute.xlu0 %1186
      %1188 = vrot.lane.b32.xlu0 %v1111, 16
      %v1189 = vpop.permute.xlu0 %1188
      %1190 = vrot.lane.b32.xlu0 %v1112, 16
      %v1191 = vpop.permute.xlu0 %1190
      %1192 = vrot.lane.b32.xlu0 %v1113, 16
      %v1193 = vpop.permute.xlu0 %1192
      %1194 = vrot.lane.b32.xlu0 %v1114, 16
      %v1195 = vpop.permute.xlu0 %1194
      %1196 = vrot.lane.b32.xlu0 %v1115, 16
      %v1197 = vpop.permute.xlu0 %1196
      %1198 = vrot.lane.b32.xlu0 %v1116, 16
      %v1199 = vpop.permute.xlu0 %1198
      %1200 = vrot.lane.b32.xlu0 %v1117, 16
      %v1201 = vpop.permute.xlu0 %1200
      %1202 = vrot.lane.b32.xlu0 %v1118, 16
      %v1203 = vpop.permute.xlu0 %1202
      %1204 = vrot.lane.b32.xlu0 %v1119, 16
      %v1205 = vpop.permute.xlu0 %1204
      %1206 = vrot.lane.b32.xlu0 %v1120, 16
      %v1207 = vpop.permute.xlu0 %1206
      %1208 = vrot.lane.b32.xlu0 %v1121, 16
      %v1209 = vpop.permute.xlu0 %1208
      %1210 = vrot.lane.b32.xlu0 %v1122, 16
      %v1211 = vpop.permute.xlu0 %1210
      %1212 = vrot.lane.b32.xlu0 %v1123, 16
      %v1213 = vpop.permute.xlu0 %1212
      %1214 = vrot.lane.b32.xlu0 %v1124, 16
      %v1215 = vpop.permute.xlu0 %1214
      %1216 = vrot.lane.b32.xlu0 %v1125, 16
      %v1217 = vpop.permute.xlu0 %1216
      %1218 = vrot.lane.b32.xlu0 %v1126, 16
      %v1219 = vpop.permute.xlu0 %1218
      %1220 = vrot.lane.b32.xlu0 %v1127, 16
      %v1221 = vpop.permute.xlu0 %1220
      %1222 = vrot.lane.b32.xlu0 %v1128, 16
      %v1223 = vpop.permute.xlu0 %1222
      %1224 = vrot.lane.b32.xlu0 %v1129, 16
      %v1225 = vpop.permute.xlu0 %1224
      %vm1258 = vcmask 158848
      %1259 = vst.msk [vmem:[#allocation3] sm:$0xf] %vm1258, %v1163
      %1260 = vst.msk [vmem:[#allocation3 + $0x4] sm:$0xf] %vm1258, %v1165
      %1261 = vst.msk [vmem:[#allocation3 + $0x8] sm:$0xf] %vm1258, %v1167
      %1262 = vst.msk [vmem:[#allocation3 + $0xc] sm:$0xf] %vm1258, %v1169
      %1263 = vst.msk [vmem:[#allocation3 + $0x10] sm:$0xf] %vm1258, %v1171
      %1264 = vst.msk [vmem:[#allocation3 + $0x14] sm:$0xf] %vm1258, %v1173
      %1265 = vst.msk [vmem:[#allocation3 + $0x18] sm:$0xf] %vm1258, %v1175
      %1266 = vst.msk [vmem:[#allocation3 + $0x1c] sm:$0xf] %vm1258, %v1177
      %1267 = vst.msk [vmem:[#allocation3 + $0x20] sm:$0xf] %vm1258, %v1179
      %1268 = vst.msk [vmem:[#allocation3 + $0x24] sm:$0xf] %vm1258, %v1181
      %1269 = vst.msk [vmem:[#allocation3 + $0x28] sm:$0xf] %vm1258, %v1183
      %1270 = vst.msk [vmem:[#allocation3 + $0x2c] sm:$0xf] %vm1258, %v1185
      %1271 = vst.msk [vmem:[#allocation3 + $0x30] sm:$0xf] %vm1258, %v1187
      %1272 = vst.msk [vmem:[#allocation3 + $0x34] sm:$0xf] %vm1258, %v1189
      %1273 = vst.msk [vmem:[#allocation3 + $0x38] sm:$0xf] %vm1258, %v1191
      %1274 = vst.msk [vmem:[#allocation3 + $0x3c] sm:$0xf] %vm1258, %v1193
      %1275 = vst.msk [vmem:[#allocation3 + $0x40] sm:$0xf] %vm1258, %v1195
      %1276 = vst.msk [vmem:[#allocation3 + $0x44] sm:$0xf] %vm1258, %v1197
      %1277 = vst.msk [vmem:[#allocation3 + $0x48] sm:$0xf] %vm1258, %v1199
      %1278 = vst.msk [vmem:[#allocation3 + $0x4c] sm:$0xf] %vm1258, %v1201
      %1279 = vst.msk [vmem:[#allocation3 + $0x50] sm:$0xf] %vm1258, %v1203
      %1280 = vst.msk [vmem:[#allocation3 + $0x54] sm:$0xf] %vm1258, %v1205
      %1281 = vst.msk [vmem:[#allocation3 + $0x58] sm:$0xf] %vm1258, %v1207
      %1282 = vst.msk [vmem:[#allocation3 + $0x5c] sm:$0xf] %vm1258, %v1209
      %1283 = vst.msk [vmem:[#allocation3 + $0x60] sm:$0xf] %vm1258, %v1211
      %1284 = vst.msk [vmem:[#allocation3 + $0x64] sm:$0xf] %vm1258, %v1213
      %1285 = vst.msk [vmem:[#allocation3 + $0x68] sm:$0xf] %vm1258, %v1215
      %1286 = vst.msk [vmem:[#allocation3 + $0x6c] sm:$0xf] %vm1258, %v1217
      %1287 = vst.msk [vmem:[#allocation3 + $0x70] sm:$0xf] %vm1258, %v1219
      %1288 = vst.msk [vmem:[#allocation3 + $0x74] sm:$0xf] %vm1258, %v1221
      %1289 = vst.msk [vmem:[#allocation3 + $0x78] sm:$0xf] %vm1258, %v1223
      %1290 = vst.msk [vmem:[#allocation3 + $0x7c] sm:$0xf] %vm1258, %v1225
      %v1291 = vld [vmem:[%s261 + $0x2] sm:$0xff]
      %v1292 = vld [vmem:[%s261 + $0xa] sm:$0xff]
      %v1293 = vld [vmem:[%s261 + $0x1a] sm:$0xff]
      %v1294 = vld [vmem:[%s261 + $0x22] sm:$0xff]
      %v1295 = vld [vmem:[%s261 + $0x32] sm:$0xff]
      %v1296 = vld [vmem:[%s261 + $0x3a] sm:$0xff]
      %v1297 = vld [vmem:[%s261 + $0x4a] sm:$0xff]
      %v1298 = vld [vmem:[%s261 + $0x52] sm:$0xff]
      %v1299 = vld [vmem:[%s261 + $0x62] sm:$0xff]
      %v1300 = vld [vmem:[%s261 + $0x6a] sm:$0xff]
      %v1301 = vld [vmem:[%s261 + $0x7a] sm:$0xff]
      %v1302 = vld [vmem:[%s261 + $0x82] sm:$0xff]
      %v1303 = vld [vmem:[%s261 + $0x92] sm:$0xff]
      %v1304 = vld [vmem:[%s261 + $0x9a] sm:$0xff]
      %v1305 = vld [vmem:[%s261 + $0xaa] sm:$0xff]
      %v1306 = vld [vmem:[%s261 + $0xb2] sm:$0xff]
      %v1307 = vld [vmem:[%s261 + $0xc2] sm:$0xff]
      %v1308 = vld [vmem:[%s261 + $0xca] sm:$0xff]
      %v1309 = vld [vmem:[%s261 + $0xda] sm:$0xff]
      %v1310 = vld [vmem:[%s261 + $0xe2] sm:$0xff]
      %v1311 = vld [vmem:[%s261 + $0xf2] sm:$0xff]
      %v1312 = vld [vmem:[%s261 + $0xfa] sm:$0xff]
      %v1313 = vld [vmem:[%s261 + $0x10a] sm:$0xff]
      %v1314 = vld [vmem:[%s261 + $0x112] sm:$0xff]
      %v1315 = vld [vmem:[%s261 + $0x122] sm:$0xff]
      %v1316 = vld [vmem:[%s261 + $0x12a] sm:$0xff]
      %v1317 = vld [vmem:[%s261 + $0x13a] sm:$0xff]
      %v1318 = vld [vmem:[%s261 + $0x142] sm:$0xff]
      %v1319 = vld [vmem:[%s261 + $0x152] sm:$0xff]
      %v1320 = vld [vmem:[%s261 + $0x15a] sm:$0xff]
      %v1321 = vld [vmem:[%s261 + $0x16a] sm:$0xff]
      %v1322 = vld [vmem:[%s261 + $0x172] sm:$0xff]
      %v1323 = vpack.c.bf16 %v1291, %v1291
      %v1324 = vpack.c.bf16 %v1292, %v1292
      %v1325 = vpack.c.bf16 %v1293, %v1293
      %v1326 = vpack.c.bf16 %v1294, %v1294
      %v1327 = vpack.c.bf16 %v1295, %v1295
      %v1328 = vpack.c.bf16 %v1296, %v1296
      %v1329 = vpack.c.bf16 %v1297, %v1297
      %v1330 = vpack.c.bf16 %v1298, %v1298
      %v1331 = vpack.c.bf16 %v1299, %v1299
      %v1332 = vpack.c.bf16 %v1300, %v1300
      %v1333 = vpack.c.bf16 %v1301, %v1301
      %v1334 = vpack.c.bf16 %v1302, %v1302
      %v1335 = vpack.c.bf16 %v1303, %v1303
      %v1336 = vpack.c.bf16 %v1304, %v1304
      %v1337 = vpack.c.bf16 %v1305, %v1305
      %v1338 = vpack.c.bf16 %v1306, %v1306
      %v1339 = vpack.c.bf16 %v1307, %v1307
      %v1340 = vpack.c.bf16 %v1308, %v1308
      %v1341 = vpack.c.bf16 %v1309, %v1309
      %v1342 = vpack.c.bf16 %v1310, %v1310
      %v1343 = vpack.c.bf16 %v1311, %v1311
      %v1344 = vpack.c.bf16 %v1312, %v1312
      %v1345 = vpack.c.bf16 %v1313, %v1313
      %v1346 = vpack.c.bf16 %v1314, %v1314
      %v1347 = vpack.c.bf16 %v1315, %v1315
      %v1348 = vpack.c.bf16 %v1316, %v1316
      %v1349 = vpack.c.bf16 %v1317, %v1317
      %v1350 = vpack.c.bf16 %v1318, %v1318
      %v1351 = vpack.c.bf16 %v1319, %v1319
      %v1352 = vpack.c.bf16 %v1320, %v1320
      %v1353 = vpack.c.bf16 %v1321, %v1321
      %v1354 = vpack.c.bf16 %v1322, %v1322
      %1387 = vrot.lane.b32.xlu0 %v1323, 20
      %v1388 = vpop.permute.xlu0 %1387
      %1389 = vrot.lane.b32.xlu0 %v1324, 20
      %v1390 = vpop.permute.xlu0 %1389
      %1391 = vrot.lane.b32.xlu0 %v1325, 20
      %v1392 = vpop.permute.xlu0 %1391
      %1393 = vrot.lane.b32.xlu0 %v1326, 20
      %v1394 = vpop.permute.xlu0 %1393
      %1395 = vrot.lane.b32.xlu0 %v1327, 20
      %v1396 = vpop.permute.xlu0 %1395
      %1397 = vrot.lane.b32.xlu0 %v1328, 20
      %v1398 = vpop.permute.xlu0 %1397
      %1399 = vrot.lane.b32.xlu0 %v1329, 20
      %v1400 = vpop.permute.xlu0 %1399
      %1401 = vrot.lane.b32.xlu0 %v1330, 20
      %v1402 = vpop.permute.xlu0 %1401
      %1403 = vrot.lane.b32.xlu0 %v1331, 20
      %v1404 = vpop.permute.xlu0 %1403
      %1405 = vrot.lane.b32.xlu0 %v1332, 20
      %v1406 = vpop.permute.xlu0 %1405
      %1407 = vrot.lane.b32.xlu0 %v1333, 20
      %v1408 = vpop.permute.xlu0 %1407
      %1409 = vrot.lane.b32.xlu0 %v1334, 20
      %v1410 = vpop.permute.xlu0 %1409
      %1411 = vrot.lane.b32.xlu0 %v1335, 20
      %v1412 = vpop.permute.xlu0 %1411
      %1413 = vrot.lane.b32.xlu0 %v1336, 20
      %v1414 = vpop.permute.xlu0 %1413
      %1415 = vrot.lane.b32.xlu0 %v1337, 20
      %v1416 = vpop.permute.xlu0 %1415
      %1417 = vrot.lane.b32.xlu0 %v1338, 20
      %v1418 = vpop.permute.xlu0 %1417
      %1419 = vrot.lane.b32.xlu0 %v1339, 20
      %v1420 = vpop.permute.xlu0 %1419
      %1421 = vrot.lane.b32.xlu0 %v1340, 20
      %v1422 = vpop.permute.xlu0 %1421
      %1423 = vrot.lane.b32.xlu0 %v1341, 20
      %v1424 = vpop.permute.xlu0 %1423
      %1425 = vrot.lane.b32.xlu0 %v1342, 20
      %v1426 = vpop.permute.xlu0 %1425
      %1427 = vrot.lane.b32.xlu0 %v1343, 20
      %v1428 = vpop.permute.xlu0 %1427
      %1429 = vrot.lane.b32.xlu0 %v1344, 20
      %v1430 = vpop.permute.xlu0 %1429
      %1431 = vrot.lane.b32.xlu0 %v1345, 20
      %v1432 = vpop.permute.xlu0 %1431
      %1433 = vrot.lane.b32.xlu0 %v1346, 20
      %v1434 = vpop.permute.xlu0 %1433
      %1435 = vrot.lane.b32.xlu0 %v1347, 20
      %v1436 = vpop.permute.xlu0 %1435
      %1437 = vrot.lane.b32.xlu0 %v1348, 20
      %v1438 = vpop.permute.xlu0 %1437
      %1439 = vrot.lane.b32.xlu0 %v1349, 20
      %v1440 = vpop.permute.xlu0 %1439
      %1441 = vrot.lane.b32.xlu0 %v1350, 20
      %v1442 = vpop.permute.xlu0 %1441
      %1443 = vrot.lane.b32.xlu0 %v1351, 20
      %v1444 = vpop.permute.xlu0 %1443
      %1445 = vrot.lane.b32.xlu0 %v1352, 20
      %v1446 = vpop.permute.xlu0 %1445
      %1447 = vrot.lane.b32.xlu0 %v1353, 20
      %v1448 = vpop.permute.xlu0 %1447
      %1449 = vrot.lane.b32.xlu0 %v1354, 20
      %v1450 = vpop.permute.xlu0 %1449
      %vm1483 = vcmask 191648
      %1484 = vst.msk [vmem:[#allocation3] sm:$0xf] %vm1483, %v1388
      %1485 = vst.msk [vmem:[#allocation3 + $0x4] sm:$0xf] %vm1483, %v1390
      %1486 = vst.msk [vmem:[#allocation3 + $0x8] sm:$0xf] %vm1483, %v1392
      %1487 = vst.msk [vmem:[#allocation3 + $0xc] sm:$0xf] %vm1483, %v1394
      %1488 = vst.msk [vmem:[#allocation3 + $0x10] sm:$0xf] %vm1483, %v1396
      %1489 = vst.msk [vmem:[#allocation3 + $0x14] sm:$0xf] %vm1483, %v1398
      %1490 = vst.msk [vmem:[#allocation3 + $0x18] sm:$0xf] %vm1483, %v1400
      %1491 = vst.msk [vmem:[#allocation3 + $0x1c] sm:$0xf] %vm1483, %v1402
      %1492 = vst.msk [vmem:[#allocation3 + $0x20] sm:$0xf] %vm1483, %v1404
      %1493 = vst.msk [vmem:[#allocation3 + $0x24] sm:$0xf] %vm1483, %v1406
      %1494 = vst.msk [vmem:[#allocation3 + $0x28] sm:$0xf] %vm1483, %v1408
      %1495 = vst.msk [vmem:[#allocation3 + $0x2c] sm:$0xf] %vm1483, %v1410
      %1496 = vst.msk [vmem:[#allocation3 + $0x30] sm:$0xf] %vm1483, %v1412
      %1497 = vst.msk [vmem:[#allocation3 + $0x34] sm:$0xf] %vm1483, %v1414
      %1498 = vst.msk [vmem:[#allocation3 + $0x38] sm:$0xf] %vm1483, %v1416
      %1499 = vst.msk [vmem:[#allocation3 + $0x3c] sm:$0xf] %vm1483, %v1418
      %1500 = vst.msk [vmem:[#allocation3 + $0x40] sm:$0xf] %vm1483, %v1420
      %1501 = vst.msk [vmem:[#allocation3 + $0x44] sm:$0xf] %vm1483, %v1422
      %1502 = vst.msk [vmem:[#allocation3 + $0x48] sm:$0xf] %vm1483, %v1424
      %1503 = vst.msk [vmem:[#allocation3 + $0x4c] sm:$0xf] %vm1483, %v1426
      %1504 = vst.msk [vmem:[#allocation3 + $0x50] sm:$0xf] %vm1483, %v1428
      %1505 = vst.msk [vmem:[#allocation3 + $0x54] sm:$0xf] %vm1483, %v1430
      %1506 = vst.msk [vmem:[#allocation3 + $0x58] sm:$0xf] %vm1483, %v1432
      %1507 = vst.msk [vmem:[#allocation3 + $0x5c] sm:$0xf] %vm1483, %v1434
      %1508 = vst.msk [vmem:[#allocation3 + $0x60] sm:$0xf] %vm1483, %v1436
      %1509 = vst.msk [vmem:[#allocation3 + $0x64] sm:$0xf] %vm1483, %v1438
      %1510 = vst.msk [vmem:[#allocation3 + $0x68] sm:$0xf] %vm1483, %v1440
      %1511 = vst.msk [vmem:[#allocation3 + $0x6c] sm:$0xf] %vm1483, %v1442
      %1512 = vst.msk [vmem:[#allocation3 + $0x70] sm:$0xf] %vm1483, %v1444
      %1513 = vst.msk [vmem:[#allocation3 + $0x74] sm:$0xf] %vm1483, %v1446
      %1514 = vst.msk [vmem:[#allocation3 + $0x78] sm:$0xf] %vm1483, %v1448
      %1515 = vst.msk [vmem:[#allocation3 + $0x7c] sm:$0xf] %vm1483, %v1450
      %s1516 = scalar_lea.vmem [#allocation2], 48
      %v1517 = vld [vmem:[%s1516] sm:$0xff]
      %v1518 = vld [vmem:[%s1516 + $0x8] sm:$0xff]
      %v1519 = vld [vmem:[%s1516 + $0x18] sm:$0xff]
      %v1520 = vld [vmem:[%s1516 + $0x20] sm:$0xff]
      %v1521 = vld [vmem:[%s1516 + $0x30] sm:$0xff]
      %v1522 = vld [vmem:[%s1516 + $0x38] sm:$0xff]
      %v1523 = vld [vmem:[%s1516 + $0x48] sm:$0xff]
      %v1524 = vld [vmem:[%s1516 + $0x50] sm:$0xff]
      %v1525 = vld [vmem:[%s1516 + $0x60] sm:$0xff]
      %v1526 = vld [vmem:[%s1516 + $0x68] sm:$0xff]
      %v1527 = vld [vmem:[%s1516 + $0x78] sm:$0xff]
      %v1528 = vld [vmem:[%s1516 + $0x80] sm:$0xff]
      %v1529 = vld [vmem:[%s1516 + $0x90] sm:$0xff]
      %v1530 = vld [vmem:[%s1516 + $0x98] sm:$0xff]
      %v1531 = vld [vmem:[%s1516 + $0xa8] sm:$0xff]
      %v1532 = vld [vmem:[%s1516 + $0xb0] sm:$0xff]
      %v1533 = vld [vmem:[%s1516 + $0xc0] sm:$0xff]
      %v1534 = vld [vmem:[%s1516 + $0xc8] sm:$0xff]
      %v1535 = vld [vmem:[%s1516 + $0xd8] sm:$0xff]
      %v1536 = vld [vmem:[%s1516 + $0xe0] sm:$0xff]
      %v1537 = vld [vmem:[%s1516 + $0xf0] sm:$0xff]
      %v1538 = vld [vmem:[%s1516 + $0xf8] sm:$0xff]
      %v1539 = vld [vmem:[%s1516 + $0x108] sm:$0xff]
      %v1540 = vld [vmem:[%s1516 + $0x110] sm:$0xff]
      %v1541 = vld [vmem:[%s1516 + $0x120] sm:$0xff]
      %v1542 = vld [vmem:[%s1516 + $0x128] sm:$0xff]
      %v1543 = vld [vmem:[%s1516 + $0x138] sm:$0xff]
      %v1544 = vld [vmem:[%s1516 + $0x140] sm:$0xff]
      %v1545 = vld [vmem:[%s1516 + $0x150] sm:$0xff]
      %v1546 = vld [vmem:[%s1516 + $0x158] sm:$0xff]
      %v1547 = vld [vmem:[%s1516 + $0x168] sm:$0xff]
      %v1548 = vld [vmem:[%s1516 + $0x170] sm:$0xff]
      %v1549 = vpack.c.bf16 %v1517, %v1517
      %v1550 = vpack.c.bf16 %v1518, %v1518
      %v1551 = vpack.c.bf16 %v1519, %v1519
      %v1552 = vpack.c.bf16 %v1520, %v1520
      %v1553 = vpack.c.bf16 %v1521, %v1521
      %v1554 = vpack.c.bf16 %v1522, %v1522
      %v1555 = vpack.c.bf16 %v1523, %v1523
      %v1556 = vpack.c.bf16 %v1524, %v1524
      %v1557 = vpack.c.bf16 %v1525, %v1525
      %v1558 = vpack.c.bf16 %v1526, %v1526
      %v1559 = vpack.c.bf16 %v1527, %v1527
      %v1560 = vpack.c.bf16 %v1528, %v1528
      %v1561 = vpack.c.bf16 %v1529, %v1529
      %v1562 = vpack.c.bf16 %v1530, %v1530
      %v1563 = vpack.c.bf16 %v1531, %v1531
      %v1564 = vpack.c.bf16 %v1532, %v1532
      %v1565 = vpack.c.bf16 %v1533, %v1533
      %v1566 = vpack.c.bf16 %v1534, %v1534
      %v1567 = vpack.c.bf16 %v1535, %v1535
      %v1568 = vpack.c.bf16 %v1536, %v1536
      %v1569 = vpack.c.bf16 %v1537, %v1537
      %v1570 = vpack.c.bf16 %v1538, %v1538
      %v1571 = vpack.c.bf16 %v1539, %v1539
      %v1572 = vpack.c.bf16 %v1540, %v1540
      %v1573 = vpack.c.bf16 %v1541, %v1541
      %v1574 = vpack.c.bf16 %v1542, %v1542
      %v1575 = vpack.c.bf16 %v1543, %v1543
      %v1576 = vpack.c.bf16 %v1544, %v1544
      %v1577 = vpack.c.bf16 %v1545, %v1545
      %v1578 = vpack.c.bf16 %v1546, %v1546
      %v1579 = vpack.c.bf16 %v1547, %v1547
      %v1580 = vpack.c.bf16 %v1548, %v1548
      %1613 = vrot.lane.b32.xlu0 %v1549, 24
      %v1614 = vpop.permute.xlu0 %1613
      %1615 = vrot.lane.b32.xlu0 %v1550, 24
      %v1616 = vpop.permute.xlu0 %1615
      %1617 = vrot.lane.b32.xlu0 %v1551, 24
      %v1618 = vpop.permute.xlu0 %1617
      %1619 = vrot.lane.b32.xlu0 %v1552, 24
      %v1620 = vpop.permute.xlu0 %1619
      %1621 = vrot.lane.b32.xlu0 %v1553, 24
      %v1622 = vpop.permute.xlu0 %1621
      %1623 = vrot.lane.b32.xlu0 %v1554, 24
      %v1624 = vpop.permute.xlu0 %1623
      %1625 = vrot.lane.b32.xlu0 %v1555, 24
      %v1626 = vpop.permute.xlu0 %1625
      %1627 = vrot.lane.b32.xlu0 %v1556, 24
      %v1628 = vpop.permute.xlu0 %1627
      %1629 = vrot.lane.b32.xlu0 %v1557, 24
      %v1630 = vpop.permute.xlu0 %1629
      %1631 = vrot.lane.b32.xlu0 %v1558, 24
      %v1632 = vpop.permute.xlu0 %1631
      %1633 = vrot.lane.b32.xlu0 %v1559, 24
      %v1634 = vpop.permute.xlu0 %1633
      %1635 = vrot.lane.b32.xlu0 %v1560, 24
      %v1636 = vpop.permute.xlu0 %1635
      %1637 = vrot.lane.b32.xlu0 %v1561, 24
      %v1638 = vpop.permute.xlu0 %1637
      %1639 = vrot.lane.b32.xlu0 %v1562, 24
      %v1640 = vpop.permute.xlu0 %1639
      %1641 = vrot.lane.b32.xlu0 %v1563, 24
      %v1642 = vpop.permute.xlu0 %1641
      %1643 = vrot.lane.b32.xlu0 %v1564, 24
      %v1644 = vpop.permute.xlu0 %1643
      %1645 = vrot.lane.b32.xlu0 %v1565, 24
      %v1646 = vpop.permute.xlu0 %1645
      %1647 = vrot.lane.b32.xlu0 %v1566, 24
      %v1648 = vpop.permute.xlu0 %1647
      %1649 = vrot.lane.b32.xlu0 %v1567, 24
      %v1650 = vpop.permute.xlu0 %1649
      %1651 = vrot.lane.b32.xlu0 %v1568, 24
      %v1652 = vpop.permute.xlu0 %1651
      %1653 = vrot.lane.b32.xlu0 %v1569, 24
      %v1654 = vpop.permute.xlu0 %1653
      %1655 = vrot.lane.b32.xlu0 %v1570, 24
      %v1656 = vpop.permute.xlu0 %1655
      %1657 = vrot.lane.b32.xlu0 %v1571, 24
      %v1658 = vpop.permute.xlu0 %1657
      %1659 = vrot.lane.b32.xlu0 %v1572, 24
      %v1660 = vpop.permute.xlu0 %1659
      %1661 = vrot.lane.b32.xlu0 %v1573, 24
      %v1662 = vpop.permute.xlu0 %1661
      %1663 = vrot.lane.b32.xlu0 %v1574, 24
      %v1664 = vpop.permute.xlu0 %1663
      %1665 = vrot.lane.b32.xlu0 %v1575, 24
      %v1666 = vpop.permute.xlu0 %1665
      %1667 = vrot.lane.b32.xlu0 %v1576, 24
      %v1668 = vpop.permute.xlu0 %1667
      %1669 = vrot.lane.b32.xlu0 %v1577, 24
      %v1670 = vpop.permute.xlu0 %1669
      %1671 = vrot.lane.b32.xlu0 %v1578, 24
      %v1672 = vpop.permute.xlu0 %1671
      %1673 = vrot.lane.b32.xlu0 %v1579, 24
      %v1674 = vpop.permute.xlu0 %1673
      %1675 = vrot.lane.b32.xlu0 %v1580, 24
      %v1676 = vpop.permute.xlu0 %1675
      %vm1709 = vcmask 224448
      %1710 = vst.msk [vmem:[#allocation3] sm:$0xf] %vm1709, %v1614
      %1711 = vst.msk [vmem:[#allocation3 + $0x4] sm:$0xf] %vm1709, %v1616
      %1712 = vst.msk [vmem:[#allocation3 + $0x8] sm:$0xf] %vm1709, %v1618
      %1713 = vst.msk [vmem:[#allocation3 + $0xc] sm:$0xf] %vm1709, %v1620
      %1714 = vst.msk [vmem:[#allocation3 + $0x10] sm:$0xf] %vm1709, %v1622
      %1715 = vst.msk [vmem:[#allocation3 + $0x14] sm:$0xf] %vm1709, %v1624
      %1716 = vst.msk [vmem:[#allocation3 + $0x18] sm:$0xf] %vm1709, %v1626
      %1717 = vst.msk [vmem:[#allocation3 + $0x1c] sm:$0xf] %vm1709, %v1628
      %1718 = vst.msk [vmem:[#allocation3 + $0x20] sm:$0xf] %vm1709, %v1630
      %1719 = vst.msk [vmem:[#allocation3 + $0x24] sm:$0xf] %vm1709, %v1632
      %1720 = vst.msk [vmem:[#allocation3 + $0x28] sm:$0xf] %vm1709, %v1634
      %1721 = vst.msk [vmem:[#allocation3 + $0x2c] sm:$0xf] %vm1709, %v1636
      %1722 = vst.msk [vmem:[#allocation3 + $0x30] sm:$0xf] %vm1709, %v1638
      %1723 = vst.msk [vmem:[#allocation3 + $0x34] sm:$0xf] %vm1709, %v1640
      %1724 = vst.msk [vmem:[#allocation3 + $0x38] sm:$0xf] %vm1709, %v1642
      %1725 = vst.msk [vmem:[#allocation3 + $0x3c] sm:$0xf] %vm1709, %v1644
      %1726 = vst.msk [vmem:[#allocation3 + $0x40] sm:$0xf] %vm1709, %v1646
      %1727 = vst.msk [vmem:[#allocation3 + $0x44] sm:$0xf] %vm1709, %v1648
      %1728 = vst.msk [vmem:[#allocation3 + $0x48] sm:$0xf] %vm1709, %v1650
      %1729 = vst.msk [vmem:[#allocation3 + $0x4c] sm:$0xf] %vm1709, %v1652
      %1730 = vst.msk [vmem:[#allocation3 + $0x50] sm:$0xf] %vm1709, %v1654
      %1731 = vst.msk [vmem:[#allocation3 + $0x54] sm:$0xf] %vm1709, %v1656
      %1732 = vst.msk [vmem:[#allocation3 + $0x58] sm:$0xf] %vm1709, %v1658
      %1733 = vst.msk [vmem:[#allocation3 + $0x5c] sm:$0xf] %vm1709, %v1660
      %1734 = vst.msk [vmem:[#allocation3 + $0x60] sm:$0xf] %vm1709, %v1662
      %1735 = vst.msk [vmem:[#allocation3 + $0x64] sm:$0xf] %vm1709, %v1664
      %1736 = vst.msk [vmem:[#allocation3 + $0x68] sm:$0xf] %vm1709, %v1666
      %1737 = vst.msk [vmem:[#allocation3 + $0x6c] sm:$0xf] %vm1709, %v1668
      %1738 = vst.msk [vmem:[#allocation3 + $0x70] sm:$0xf] %vm1709, %v1670
      %1739 = vst.msk [vmem:[#allocation3 + $0x74] sm:$0xf] %vm1709, %v1672
      %1740 = vst.msk [vmem:[#allocation3 + $0x78] sm:$0xf] %vm1709, %v1674
      %1741 = vst.msk [vmem:[#allocation3 + $0x7c] sm:$0xf] %vm1709, %v1676
      %v1742 = vld [vmem:[%s1516 + $0x1] sm:$0xff]
      %v1743 = vld [vmem:[%s1516 + $0x9] sm:$0xff]
      %v1744 = vld [vmem:[%s1516 + $0x19] sm:$0xff]
      %v1745 = vld [vmem:[%s1516 + $0x21] sm:$0xff]
      %v1746 = vld [vmem:[%s1516 + $0x31] sm:$0xff]
      %v1747 = vld [vmem:[%s1516 + $0x39] sm:$0xff]
      %v1748 = vld [vmem:[%s1516 + $0x49] sm:$0xff]
      %v1749 = vld [vmem:[%s1516 + $0x51] sm:$0xff]
      %v1750 = vld [vmem:[%s1516 + $0x61] sm:$0xff]
      %v1751 = vld [vmem:[%s1516 + $0x69] sm:$0xff]
      %v1752 = vld [vmem:[%s1516 + $0x79] sm:$0xff]
      %v1753 = vld [vmem:[%s1516 + $0x81] sm:$0xff]
      %v1754 = vld [vmem:[%s1516 + $0x91] sm:$0xff]
      %v1755 = vld [vmem:[%s1516 + $0x99] sm:$0xff]
      %v1756 = vld [vmem:[%s1516 + $0xa9] sm:$0xff]
      %v1757 = vld [vmem:[%s1516 + $0xb1] sm:$0xff]
      %v1758 = vld [vmem:[%s1516 + $0xc1] sm:$0xff]
      %v1759 = vld [vmem:[%s1516 + $0xc9] sm:$0xff]
      %v1760 = vld [vmem:[%s1516 + $0xd9] sm:$0xff]
      %v1761 = vld [vmem:[%s1516 + $0xe1] sm:$0xff]
      %v1762 = vld [vmem:[%s1516 + $0xf1] sm:$0xff]
      %v1763 = vld [vmem:[%s1516 + $0xf9] sm:$0xff]
      %v1764 = vld [vmem:[%s1516 + $0x109] sm:$0xff]
      %v1765 = vld [vmem:[%s1516 + $0x111] sm:$0xff]
      %v1766 = vld [vmem:[%s1516 + $0x121] sm:$0xff]
      %v1767 = vld [vmem:[%s1516 + $0x129] sm:$0xff]
      %v1768 = vld [vmem:[%s1516 + $0x139] sm:$0xff]
      %v1769 = vld [vmem:[%s1516 + $0x141] sm:$0xff]
      %v1770 = vld [vmem:[%s1516 + $0x151] sm:$0xff]
      %v1771 = vld [vmem:[%s1516 + $0x159] sm:$0xff]
      %v1772 = vld [vmem:[%s1516 + $0x169] sm:$0xff]
      %v1773 = vld [vmem:[%s1516 + $0x171] sm:$0xff]
      %v1774 = vpack.c.bf16 %v1742, %v1742
      %v1775 = vpack.c.bf16 %v1743, %v1743
      %v1776 = vpack.c.bf16 %v1744, %v1744
      %v1777 = vpack.c.bf16 %v1745, %v1745
      %v1778 = vpack.c.bf16 %v1746, %v1746
      %v1779 = vpack.c.bf16 %v1747, %v1747
      %v1780 = vpack.c.bf16 %v1748, %v1748
      %v1781 = vpack.c.bf16 %v1749, %v1749
      %v1782 = vpack.c.bf16 %v1750, %v1750
      %v1783 = vpack.c.bf16 %v1751, %v1751
      %v1784 = vpack.c.bf16 %v1752, %v1752
      %v1785 = vpack.c.bf16 %v1753, %v1753
      %v1786 = vpack.c.bf16 %v1754, %v1754
      %v1787 = vpack.c.bf16 %v1755, %v1755
      %v1788 = vpack.c.bf16 %v1756, %v1756
      %v1789 = vpack.c.bf16 %v1757, %v1757
      %v1790 = vpack.c.bf16 %v1758, %v1758
      %v1791 = vpack.c.bf16 %v1759, %v1759
      %v1792 = vpack.c.bf16 %v1760, %v1760
      %v1793 = vpack.c.bf16 %v1761, %v1761
      %v1794 = vpack.c.bf16 %v1762, %v1762
      %v1795 = vpack.c.bf16 %v1763, %v1763
      %v1796 = vpack.c.bf16 %v1764, %v1764
      %v1797 = vpack.c.bf16 %v1765, %v1765
      %v1798 = vpack.c.bf16 %v1766, %v1766
      %v1799 = vpack.c.bf16 %v1767, %v1767
      %v1800 = vpack.c.bf16 %v1768, %v1768
      %v1801 = vpack.c.bf16 %v1769, %v1769
      %v1802 = vpack.c.bf16 %v1770, %v1770
      %v1803 = vpack.c.bf16 %v1771, %v1771
      %v1804 = vpack.c.bf16 %v1772, %v1772
      %v1805 = vpack.c.bf16 %v1773, %v1773
      %1838 = vrot.lane.b32.xlu0 %v1774, 28
      %v1839 = vpop.permute.xlu0 %1838
      %1840 = vrot.lane.b32.xlu0 %v1775, 28
      %v1841 = vpop.permute.xlu0 %1840
      %1842 = vrot.lane.b32.xlu0 %v1776, 28
      %v1843 = vpop.permute.xlu0 %1842
      %1844 = vrot.lane.b32.xlu0 %v1777, 28
      %v1845 = vpop.permute.xlu0 %1844
      %1846 = vrot.lane.b32.xlu0 %v1778, 28
      %v1847 = vpop.permute.xlu0 %1846
      %1848 = vrot.lane.b32.xlu0 %v1779, 28
      %v1849 = vpop.permute.xlu0 %1848
      %1850 = vrot.lane.b32.xlu0 %v1780, 28
      %v1851 = vpop.permute.xlu0 %1850
      %1852 = vrot.lane.b32.xlu0 %v1781, 28
      %v1853 = vpop.permute.xlu0 %1852
      %1854 = vrot.lane.b32.xlu0 %v1782, 28
      %v1855 = vpop.permute.xlu0 %1854
      %1856 = vrot.lane.b32.xlu0 %v1783, 28
      %v1857 = vpop.permute.xlu0 %1856
      %1858 = vrot.lane.b32.xlu0 %v1784, 28
      %v1859 = vpop.permute.xlu0 %1858
      %1860 = vrot.lane.b32.xlu0 %v1785, 28
      %v1861 = vpop.permute.xlu0 %1860
      %1862 = vrot.lane.b32.xlu0 %v1786, 28
      %v1863 = vpop.permute.xlu0 %1862
      %1864 = vrot.lane.b32.xlu0 %v1787, 28
      %v1865 = vpop.permute.xlu0 %1864
      %1866 = vrot.lane.b32.xlu0 %v1788, 28
      %v1867 = vpop.permute.xlu0 %1866
      %1868 = vrot.lane.b32.xlu0 %v1789, 28
      %v1869 = vpop.permute.xlu0 %1868
      %1870 = vrot.lane.b32.xlu0 %v1790, 28
      %v1871 = vpop.permute.xlu0 %1870
      %1872 = vrot.lane.b32.xlu0 %v1791, 28
      %v1873 = vpop.permute.xlu0 %1872
      %1874 = vrot.lane.b32.xlu0 %v1792, 28
      %v1875 = vpop.permute.xlu0 %1874
      %1876 = vrot.lane.b32.xlu0 %v1793, 28
      %v1877 = vpop.permute.xlu0 %1876
      %1878 = vrot.lane.b32.xlu0 %v1794, 28
      %v1879 = vpop.permute.xlu0 %1878
      %1880 = vrot.lane.b32.xlu0 %v1795, 28
      %v1881 = vpop.permute.xlu0 %1880
      %1882 = vrot.lane.b32.xlu0 %v1796, 28
      %v1883 = vpop.permute.xlu0 %1882
      %1884 = vrot.lane.b32.xlu0 %v1797, 28
      %v1885 = vpop.permute.xlu0 %1884
      %1886 = vrot.lane.b32.xlu0 %v1798, 28
      %v1887 = vpop.permute.xlu0 %1886
      %1888 = vrot.lane.b32.xlu0 %v1799, 28
      %v1889 = vpop.permute.xlu0 %1888
      %1890 = vrot.lane.b32.xlu0 %v1800, 28
      %v1891 = vpop.permute.xlu0 %1890
      %1892 = vrot.lane.b32.xlu0 %v1801, 28
      %v1893 = vpop.permute.xlu0 %1892
      %1894 = vrot.lane.b32.xlu0 %v1802, 28
      %v1895 = vpop.permute.xlu0 %1894
      %1896 = vrot.lane.b32.xlu0 %v1803, 28
      %v1897 = vpop.permute.xlu0 %1896
      %1898 = vrot.lane.b32.xlu0 %v1804, 28
      %v1899 = vpop.permute.xlu0 %1898
      %1900 = vrot.lane.b32.xlu0 %v1805, 28
      %v1901 = vpop.permute.xlu0 %1900
      %vm1934 = vcmask 257248
      %1935 = vst.msk [vmem:[#allocation3] sm:$0xf] %vm1934, %v1839
      %1936 = vst.msk [vmem:[#allocation3 + $0x4] sm:$0xf] %vm1934, %v1841
      %1937 = vst.msk [vmem:[#allocation3 + $0x8] sm:$0xf] %vm1934, %v1843
      %1938 = vst.msk [vmem:[#allocation3 + $0xc] sm:$0xf] %vm1934, %v1845
      %1939 = vst.msk [vmem:[#allocation3 + $0x10] sm:$0xf] %vm1934, %v1847
      %1940 = vst.msk [vmem:[#allocation3 + $0x14] sm:$0xf] %vm1934, %v1849
      %1941 = vst.msk [vmem:[#allocation3 + $0x18] sm:$0xf] %vm1934, %v1851
      %1942 = vst.msk [vmem:[#allocation3 + $0x1c] sm:$0xf] %vm1934, %v1853
      %1943 = vst.msk [vmem:[#allocation3 + $0x20] sm:$0xf] %vm1934, %v1855
      %1944 = vst.msk [vmem:[#allocation3 + $0x24] sm:$0xf] %vm1934, %v1857
      %1945 = vst.msk [vmem:[#allocation3 + $0x28] sm:$0xf] %vm1934, %v1859
      %1946 = vst.msk [vmem:[#allocation3 + $0x2c] sm:$0xf] %vm1934, %v1861
      %1947 = vst.msk [vmem:[#allocation3 + $0x30] sm:$0xf] %vm1934, %v1863
      %1948 = vst.msk [vmem:[#allocation3 + $0x34] sm:$0xf] %vm1934, %v1865
      %1949 = vst.msk [vmem:[#allocation3 + $0x38] sm:$0xf] %vm1934, %v1867
      %1950 = vst.msk [vmem:[#allocation3 + $0x3c] sm:$0xf] %vm1934, %v1869
      %1951 = vst.msk [vmem:[#allocation3 + $0x40] sm:$0xf] %vm1934, %v1871
      %1952 = vst.msk [vmem:[#allocation3 + $0x44] sm:$0xf] %vm1934, %v1873
      %1953 = vst.msk [vmem:[#allocation3 + $0x48] sm:$0xf] %vm1934, %v1875
      %1954 = vst.msk [vmem:[#allocation3 + $0x4c] sm:$0xf] %vm1934, %v1877
      %1955 = vst.msk [vmem:[#allocation3 + $0x50] sm:$0xf] %vm1934, %v1879
      %1956 = vst.msk [vmem:[#allocation3 + $0x54] sm:$0xf] %vm1934, %v1881
      %1957 = vst.msk [vmem:[#allocation3 + $0x58] sm:$0xf] %vm1934, %v1883
      %1958 = vst.msk [vmem:[#allocation3 + $0x5c] sm:$0xf] %vm1934, %v1885
      %1959 = vst.msk [vmem:[#allocation3 + $0x60] sm:$0xf] %vm1934, %v1887
      %1960 = vst.msk [vmem:[#allocation3 + $0x64] sm:$0xf] %vm1934, %v1889
      %1961 = vst.msk [vmem:[#allocation3 + $0x68] sm:$0xf] %vm1934, %v1891
      %1962 = vst.msk [vmem:[#allocation3 + $0x6c] sm:$0xf] %vm1934, %v1893
      %1963 = vst.msk [vmem:[#allocation3 + $0x70] sm:$0xf] %vm1934, %v1895
      %1964 = vst.msk [vmem:[#allocation3 + $0x74] sm:$0xf] %vm1934, %v1897
      %1965 = vst.msk [vmem:[#allocation3 + $0x78] sm:$0xf] %vm1934, %v1899
      %1966 = vst.msk [vmem:[#allocation3 + $0x7c] sm:$0xf] %vm1934, %v1901
      %v1967 = vld [vmem:[%s1516 + $0x2] sm:$0xff]
      %v1968 = vld [vmem:[%s1516 + $0xa] sm:$0xff]
      %v1969 = vld [vmem:[%s1516 + $0x1a] sm:$0xff]
      %v1970 = vld [vmem:[%s1516 + $0x22] sm:$0xff]
      %v1971 = vld [vmem:[%s1516 + $0x32] sm:$0xff]
      %v1972 = vld [vmem:[%s1516 + $0x3a] sm:$0xff]
      %v1973 = vld [vmem:[%s1516 + $0x4a] sm:$0xff]
      %v1974 = vld [vmem:[%s1516 + $0x52] sm:$0xff]
      %v1975 = vld [vmem:[%s1516 + $0x62] sm:$0xff]
      %v1976 = vld [vmem:[%s1516 + $0x6a] sm:$0xff]
      %v1977 = vld [vmem:[%s1516 + $0x7a] sm:$0xff]
      %v1978 = vld [vmem:[%s1516 + $0x82] sm:$0xff]
      %v1979 = vld [vmem:[%s1516 + $0x92] sm:$0xff]
      %v1980 = vld [vmem:[%s1516 + $0x9a] sm:$0xff]
      %v1981 = vld [vmem:[%s1516 + $0xaa] sm:$0xff]
      %v1982 = vld [vmem:[%s1516 + $0xb2] sm:$0xff]
      %v1983 = vld [vmem:[%s1516 + $0xc2] sm:$0xff]
      %v1984 = vld [vmem:[%s1516 + $0xca] sm:$0xff]
      %v1985 = vld [vmem:[%s1516 + $0xda] sm:$0xff]
      %v1986 = vld [vmem:[%s1516 + $0xe2] sm:$0xff]
      %v1987 = vld [vmem:[%s1516 + $0xf2] sm:$0xff]
      %v1988 = vld [vmem:[%s1516 + $0xfa] sm:$0xff]
      %v1989 = vld [vmem:[%s1516 + $0x10a] sm:$0xff]
      %v1990 = vld [vmem:[%s1516 + $0x112] sm:$0xff]
      %v1991 = vld [vmem:[%s1516 + $0x122] sm:$0xff]
      %v1992 = vld [vmem:[%s1516 + $0x12a] sm:$0xff]
      %v1993 = vld [vmem:[%s1516 + $0x13a] sm:$0xff]
      %v1994 = vld [vmem:[%s1516 + $0x142] sm:$0xff]
      %v1995 = vld [vmem:[%s1516 + $0x152] sm:$0xff]
      %v1996 = vld [vmem:[%s1516 + $0x15a] sm:$0xff]
      %v1997 = vld [vmem:[%s1516 + $0x16a] sm:$0xff]
      %v1998 = vld [vmem:[%s1516 + $0x172] sm:$0xff]
      %v1999 = vpack.c.bf16 %v1967, %v1967
      %v2000 = vpack.c.bf16 %v1968, %v1968
      %v2001 = vpack.c.bf16 %v1969, %v1969
      %v2002 = vpack.c.bf16 %v1970, %v1970
      %v2003 = vpack.c.bf16 %v1971, %v1971
      %v2004 = vpack.c.bf16 %v1972, %v1972
      %v2005 = vpack.c.bf16 %v1973, %v1973
      %v2006 = vpack.c.bf16 %v1974, %v1974
      %v2007 = vpack.c.bf16 %v1975, %v1975
      %v2008 = vpack.c.bf16 %v1976, %v1976
      %v2009 = vpack.c.bf16 %v1977, %v1977
      %v2010 = vpack.c.bf16 %v1978, %v1978
      %v2011 = vpack.c.bf16 %v1979, %v1979
      %v2012 = vpack.c.bf16 %v1980, %v1980
      %v2013 = vpack.c.bf16 %v1981, %v1981
      %v2014 = vpack.c.bf16 %v1982, %v1982
      %v2015 = vpack.c.bf16 %v1983, %v1983
      %v2016 = vpack.c.bf16 %v1984, %v1984
      %v2017 = vpack.c.bf16 %v1985, %v1985
      %v2018 = vpack.c.bf16 %v1986, %v1986
      %v2019 = vpack.c.bf16 %v1987, %v1987
      %v2020 = vpack.c.bf16 %v1988, %v1988
      %v2021 = vpack.c.bf16 %v1989, %v1989
      %v2022 = vpack.c.bf16 %v1990, %v1990
      %v2023 = vpack.c.bf16 %v1991, %v1991
      %v2024 = vpack.c.bf16 %v1992, %v1992
      %v2025 = vpack.c.bf16 %v1993, %v1993
      %v2026 = vpack.c.bf16 %v1994, %v1994
      %v2027 = vpack.c.bf16 %v1995, %v1995
      %v2028 = vpack.c.bf16 %v1996, %v1996
      %v2029 = vpack.c.bf16 %v1997, %v1997
      %v2030 = vpack.c.bf16 %v1998, %v1998
      %2063 = vrot.lane.b32.xlu0 %v1999, 32
      %v2064 = vpop.permute.xlu0 %2063
      %2065 = vrot.lane.b32.xlu0 %v2000, 32
      %v2066 = vpop.permute.xlu0 %2065
      %2067 = vrot.lane.b32.xlu0 %v2001, 32
      %v2068 = vpop.permute.xlu0 %2067
      %2069 = vrot.lane.b32.xlu0 %v2002, 32
      %v2070 = vpop.permute.xlu0 %2069
      %2071 = vrot.lane.b32.xlu0 %v2003, 32
      %v2072 = vpop.permute.xlu0 %2071
      %2073 = vrot.lane.b32.xlu0 %v2004, 32
      %v2074 = vpop.permute.xlu0 %2073
      %2075 = vrot.lane.b32.xlu0 %v2005, 32
      %v2076 = vpop.permute.xlu0 %2075
      %2077 = vrot.lane.b32.xlu0 %v2006, 32
      %v2078 = vpop.permute.xlu0 %2077
      %2079 = vrot.lane.b32.xlu0 %v2007, 32
      %v2080 = vpop.permute.xlu0 %2079
      %2081 = vrot.lane.b32.xlu0 %v2008, 32
      %v2082 = vpop.permute.xlu0 %2081
      %2083 = vrot.lane.b32.xlu0 %v2009, 32
      %v2084 = vpop.permute.xlu0 %2083
      %2085 = vrot.lane.b32.xlu0 %v2010, 32
      %v2086 = vpop.permute.xlu0 %2085
      %2087 = vrot.lane.b32.xlu0 %v2011, 32
      %v2088 = vpop.permute.xlu0 %2087
      %2089 = vrot.lane.b32.xlu0 %v2012, 32
      %v2090 = vpop.permute.xlu0 %2089
      %2091 = vrot.lane.b32.xlu0 %v2013, 32
      %v2092 = vpop.permute.xlu0 %2091
      %2093 = vrot.lane.b32.xlu0 %v2014, 32
      %v2094 = vpop.permute.xlu0 %2093
      %2095 = vrot.lane.b32.xlu0 %v2015, 32
      %v2096 = vpop.permute.xlu0 %2095
      %2097 = vrot.lane.b32.xlu0 %v2016, 32
      %v2098 = vpop.permute.xlu0 %2097
      %2099 = vrot.lane.b32.xlu0 %v2017, 32
      %v2100 = vpop.permute.xlu0 %2099
      %2101 = vrot.lane.b32.xlu0 %v2018, 32
      %v2102 = vpop.permute.xlu0 %2101
      %2103 = vrot.lane.b32.xlu0 %v2019, 32
      %v2104 = vpop.permute.xlu0 %2103
      %2105 = vrot.lane.b32.xlu0 %v2020, 32
      %v2106 = vpop.permute.xlu0 %2105
      %2107 = vrot.lane.b32.xlu0 %v2021, 32
      %v2108 = vpop.permute.xlu0 %2107
      %2109 = vrot.lane.b32.xlu0 %v2022, 32
      %v2110 = vpop.permute.xlu0 %2109
      %2111 = vrot.lane.b32.xlu0 %v2023, 32
      %v2112 = vpop.permute.xlu0 %2111
      %2113 = vrot.lane.b32.xlu0 %v2024, 32
      %v2114 = vpop.permute.xlu0 %2113
      %2115 = vrot.lane.b32.xlu0 %v2025, 32
      %v2116 = vpop.permute.xlu0 %2115
      %2117 = vrot.lane.b32.xlu0 %v2026, 32
      %v2118 = vpop.permute.xlu0 %2117
      %2119 = vrot.lane.b32.xlu0 %v2027, 32
      %v2120 = vpop.permute.xlu0 %2119
      %2121 = vrot.lane.b32.xlu0 %v2028, 32
      %v2122 = vpop.permute.xlu0 %2121
      %2123 = vrot.lane.b32.xlu0 %v2029, 32
      %v2124 = vpop.permute.xlu0 %2123
      %2125 = vrot.lane.b32.xlu0 %v2030, 32
      %v2126 = vpop.permute.xlu0 %2125
      %vm2159 = vcmask 290048
      %2160 = vst.msk [vmem:[#allocation3] sm:$0xf] %vm2159, %v2064
      %2161 = vst.msk [vmem:[#allocation3 + $0x4] sm:$0xf] %vm2159, %v2066
      %2162 = vst.msk [vmem:[#allocation3 + $0x8] sm:$0xf] %vm2159, %v2068
      %2163 = vst.msk [vmem:[#allocation3 + $0xc] sm:$0xf] %vm2159, %v2070
      %2164 = vst.msk [vmem:[#allocation3 + $0x10] sm:$0xf] %vm2159, %v2072
      %2165 = vst.msk [vmem:[#allocation3 + $0x14] sm:$0xf] %vm2159, %v2074
      %2166 = vst.msk [vmem:[#allocation3 + $0x18] sm:$0xf] %vm2159, %v2076
      %2167 = vst.msk [vmem:[#allocation3 + $0x1c] sm:$0xf] %vm2159, %v2078
      %2168 = vst.msk [vmem:[#allocation3 + $0x20] sm:$0xf] %vm2159, %v2080
      %2169 = vst.msk [vmem:[#allocation3 + $0x24] sm:$0xf] %vm2159, %v2082
      %2170 = vst.msk [vmem:[#allocation3 + $0x28] sm:$0xf] %vm2159, %v2084
      %2171 = vst.msk [vmem:[#allocation3 + $0x2c] sm:$0xf] %vm2159, %v2086
      %2172 = vst.msk [vmem:[#allocation3 + $0x30] sm:$0xf] %vm2159, %v2088
      %2173 = vst.msk [vmem:[#allocation3 + $0x34] sm:$0xf] %vm2159, %v2090
      %2174 = vst.msk [vmem:[#allocation3 + $0x38] sm:$0xf] %vm2159, %v2092
      %2175 = vst.msk [vmem:[#allocation3 + $0x3c] sm:$0xf] %vm2159, %v2094
      %2176 = vst.msk [vmem:[#allocation3 + $0x40] sm:$0xf] %vm2159, %v2096
      %2177 = vst.msk [vmem:[#allocation3 + $0x44] sm:$0xf] %vm2159, %v2098
      %2178 = vst.msk [vmem:[#allocation3 + $0x48] sm:$0xf] %vm2159, %v2100
      %2179 = vst.msk [vmem:[#allocation3 + $0x4c] sm:$0xf] %vm2159, %v2102
      %2180 = vst.msk [vmem:[#allocation3 + $0x50] sm:$0xf] %vm2159, %v2104
      %2181 = vst.msk [vmem:[#allocation3 + $0x54] sm:$0xf] %vm2159, %v2106
      %2182 = vst.msk [vmem:[#allocation3 + $0x58] sm:$0xf] %vm2159, %v2108
      %2183 = vst.msk [vmem:[#allocation3 + $0x5c] sm:$0xf] %vm2159, %v2110
      %2184 = vst.msk [vmem:[#allocation3 + $0x60] sm:$0xf] %vm2159, %v2112
      %2185 = vst.msk [vmem:[#allocation3 + $0x64] sm:$0xf] %vm2159, %v2114
      %2186 = vst.msk [vmem:[#allocation3 + $0x68] sm:$0xf] %vm2159, %v2116
      %2187 = vst.msk [vmem:[#allocation3 + $0x6c] sm:$0xf] %vm2159, %v2118
      %2188 = vst.msk [vmem:[#allocation3 + $0x70] sm:$0xf] %vm2159, %v2120
      %2189 = vst.msk [vmem:[#allocation3 + $0x74] sm:$0xf] %vm2159, %v2122
      %2190 = vst.msk [vmem:[#allocation3 + $0x78] sm:$0xf] %vm2159, %v2124
      %2191 = vst.msk [vmem:[#allocation3 + $0x7c] sm:$0xf] %vm2159, %v2126
      %v2192 = vld [vmem:[#allocation3] sm:$0xf]
      %v2193 = vld [vmem:[#allocation3 + $0x4] sm:$0xf]
      %v2194 = vld [vmem:[#allocation3 + $0x8] sm:$0xf]
      %v2195 = vld [vmem:[#allocation3 + $0xc] sm:$0xf]
      %v2196 = vld [vmem:[#allocation3 + $0x10] sm:$0xf]
      %v2197 = vld [vmem:[#allocation3 + $0x14] sm:$0xf]
      %v2198 = vld [vmem:[#allocation3 + $0x18] sm:$0xf]
      %v2199 = vld [vmem:[#allocation3 + $0x1c] sm:$0xf]
      %v2200 = vld [vmem:[#allocation3 + $0x20] sm:$0xf]
      %v2201 = vld [vmem:[#allocation3 + $0x24] sm:$0xf]
      %v2202 = vld [vmem:[#allocation3 + $0x28] sm:$0xf]
      %v2203 = vld [vmem:[#allocation3 + $0x2c] sm:$0xf]
      %v2204 = vld [vmem:[#allocation3 + $0x30] sm:$0xf]
      %v2205 = vld [vmem:[#allocation3 + $0x34] sm:$0xf]
      %v2206 = vld [vmem:[#allocation3 + $0x38] sm:$0xf]
      %v2207 = vld [vmem:[#allocation3 + $0x3c] sm:$0xf]
      %v2208 = vld [vmem:[#allocation3 + $0x40] sm:$0xf]
      %v2209 = vld [vmem:[#allocation3 + $0x44] sm:$0xf]
      %v2210 = vld [vmem:[#allocation3 + $0x48] sm:$0xf]
      %v2211 = vld [vmem:[#allocation3 + $0x4c] sm:$0xf]
      %v2212 = vld [vmem:[#allocation3 + $0x50] sm:$0xf]
      %v2213 = vld [vmem:[#allocation3 + $0x54] sm:$0xf]
      %v2214 = vld [vmem:[#allocation3 + $0x58] sm:$0xf]
      %v2215 = vld [vmem:[#allocation3 + $0x5c] sm:$0xf]
      %v2216 = vld [vmem:[#allocation3 + $0x60] sm:$0xf]
      %v2217 = vld [vmem:[#allocation3 + $0x64] sm:$0xf]
      %v2218 = vld [vmem:[#allocation3 + $0x68] sm:$0xf]
      %v2219 = vld [vmem:[#allocation3 + $0x6c] sm:$0xf]
      %v2220 = vld [vmem:[#allocation3 + $0x70] sm:$0xf]
      %v2221 = vld [vmem:[#allocation3 + $0x74] sm:$0xf]
      %v2222 = vld [vmem:[#allocation3 + $0x78] sm:$0xf]
      %v2223 = vld [vmem:[#allocation3 + $0x7c] sm:$0xf]
      %v2224 = vld [vmem:[%s1] sm:$0xf]
      %v2225 = vld [vmem:[%s1 + $0x4] sm:$0xf]
      %v2226 = vld [vmem:[%s1 + $0x8] sm:$0xf]
      %v2227 = vld [vmem:[%s1 + $0xc] sm:$0xf]
      %v2228 = vld [vmem:[%s1 + $0x10] sm:$0x3]
      %v2261 = vunpack.c.l.b16 %v2192
      %v2262 = vunpack.c.l.b16 %v2193
      %v2263 = vunpack.c.l.b16 %v2194
      %v2264 = vunpack.c.l.b16 %v2195
      %v2265 = vunpack.c.l.b16 %v2196
      %v2266 = vunpack.c.l.b16 %v2197
      %v2267 = vunpack.c.l.b16 %v2198
      %v2268 = vunpack.c.l.b16 %v2199
      %v2269 = vunpack.c.l.b16 %v2200
      %v2270 = vunpack.c.l.b16 %v2201
      %v2271 = vunpack.c.l.b16 %v2202
      %v2272 = vunpack.c.l.b16 %v2203
      %v2273 = vunpack.c.l.b16 %v2204
      %v2274 = vunpack.c.l.b16 %v2205
      %v2275 = vunpack.c.l.b16 %v2206
      %v2276 = vunpack.c.l.b16 %v2207
      %v2277 = vunpack.c.l.b16 %v2208
      %v2278 = vunpack.c.l.b16 %v2209
      %v2279 = vunpack.c.l.b16 %v2210
      %v2280 = vunpack.c.l.b16 %v2211
      %v2281 = vunpack.c.l.b16 %v2212
      %v2282 = vunpack.c.l.b16 %v2213
      %v2283 = vunpack.c.l.b16 %v2214
      %v2284 = vunpack.c.l.b16 %v2215
      %v2285 = vunpack.c.l.b16 %v2216
      %v2286 = vunpack.c.l.b16 %v2217
      %v2287 = vunpack.c.l.b16 %v2218
      %v2288 = vunpack.c.l.b16 %v2219
      %v2289 = vunpack.c.l.b16 %v2220
      %v2290 = vunpack.c.l.b16 %v2221
      %v2291 = vunpack.c.l.b16 %v2222
      %v2292 = vunpack.c.l.b16 %v2223
      %v2293 = vpack.c.b16 %v2262, %v2261
      %v2294 = vpack.c.b16 %v2264, %v2263
      %v2295 = vpack.c.b16 %v2266, %v2265
      %v2296 = vpack.c.b16 %v2268, %v2267
      %v2297 = vpack.c.b16 %v2270, %v2269
      %v2298 = vpack.c.b16 %v2272, %v2271
      %v2299 = vpack.c.b16 %v2274, %v2273
      %v2300 = vpack.c.b16 %v2276, %v2275
      %v2301 = vpack.c.b16 %v2278, %v2277
      %v2302 = vpack.c.b16 %v2280, %v2279
      %v2303 = vpack.c.b16 %v2282, %v2281
      %v2304 = vpack.c.b16 %v2284, %v2283
      %v2305 = vpack.c.b16 %v2286, %v2285
      %v2306 = vpack.c.b16 %v2288, %v2287
      %v2307 = vpack.c.b16 %v2290, %v2289
      %v2308 = vpack.c.b16 %v2292, %v2291
      %v2314 = vunpack.c.l.b16 %v2224
      %v2315 = vunpack.c.l.b16 %v2225
      %v2316 = vunpack.c.l.b16 %v2226
      %v2317 = vunpack.c.l.b16 %v2227
      %v2318 = vunpack.c.l.b16 %v2228
      %v2319 = vpack.c.b16 %v2315, %v2314
      %v2320 = vpack.c.b16 %v2317, %v2316
      %v2321 = vpack.c.b16 %v2318, %v2318
      %vm2324 = vcmask 293888
      %v2326 = vsel %vm2324, %v2293, 0
      %v2329 = vsel %vm2324, %v2294, 0
      %v2332 = vsel %vm2324, %v2295, 0
      %v2335 = vsel %vm2324, %v2296, 0
      %v2338 = vsel %vm2324, %v2297, 0
      %v2341 = vsel %vm2324, %v2298, 0
      %v2344 = vsel %vm2324, %v2299, 0
      %v2347 = vsel %vm2324, %v2300, 0
      %v2350 = vsel %vm2324, %v2301, 0
      %v2353 = vsel %vm2324, %v2302, 0
      %v2356 = vsel %vm2324, %v2303, 0
      %v2359 = vsel %vm2324, %v2304, 0
      %v2362 = vsel %vm2324, %v2305, 0
      %v2365 = vsel %vm2324, %v2306, 0
      %v2368 = vsel %vm2324, %v2307, 0
      %v2371 = vsel %vm2324, %v2308, 0
      %vm2373 = vcmask 1041408
      %v2375 = vsel %vm2373, %v2321, 0
      %2377 = vmatpush.bf16.msra.mxu0 0
      %2378 = vmatpush.bf16.msra.mxu0 0
      %2379 = vmatpush.bf16.msra.mxu0 0
      %2380 = vmatpush.bf16.msra.mxu0 0
      %2381 = vmatpush.bf16.msra.mxu0 0
      %2382 = vmatpush.bf16.msra.mxu0 %v2375
      %2383 = vmatpush.bf16.msra.mxu0 %v2320
      %2384 = vmatpush.bf16.msra.mxu0 %v2319
      %2385 = vmatmul.bf16.gmra.mxu0 %v2326
      %v2386 = vpop.f32.mrf.mxu0
      %v2387 = vadd.f32 0.0, %v2386
      %v2388 = vpop.f32.mrf.mxu0
      %v2389 = vadd.f32 0.0, %v2388
      %2390 = vmatmul.bf16.gmra.mxu0 %v2329
      %v2391 = vpop.f32.mrf.mxu0
      %v2392 = vadd.f32 0.0, %v2391
      %v2393 = vpop.f32.mrf.mxu0
      %v2394 = vadd.f32 0.0, %v2393
      %2395 = vmatmul.bf16.gmra.mxu0 %v2332
      %v2396 = vpop.f32.mrf.mxu0
      %v2397 = vadd.f32 0.0, %v2396
      %v2398 = vpop.f32.mrf.mxu0
      %v2399 = vadd.f32 0.0, %v2398
      %2400 = vmatmul.bf16.gmra.mxu0 %v2335
      %v2401 = vpop.f32.mrf.mxu0
      %v2402 = vadd.f32 0.0, %v2401
      %v2403 = vpop.f32.mrf.mxu0
      %v2404 = vadd.f32 0.0, %v2403
      %2405 = vmatmul.bf16.gmra.mxu0 %v2338
      %v2406 = vpop.f32.mrf.mxu0
      %v2407 = vadd.f32 0.0, %v2406
      %v2408 = vpop.f32.mrf.mxu0
      %v2409 = vadd.f32 0.0, %v2408
      %2410 = vmatmul.bf16.gmra.mxu0 %v2341
      %v2411 = vpop.f32.mrf.mxu0
      %v2412 = vadd.f32 0.0, %v2411
      %v2413 = vpop.f32.mrf.mxu0
      %v2414 = vadd.f32 0.0, %v2413
      %2415 = vmatmul.bf16.gmra.mxu0 %v2344
      %v2416 = vpop.f32.mrf.mxu0
      %v2417 = vadd.f32 0.0, %v2416
      %v2418 = vpop.f32.mrf.mxu0
      %v2419 = vadd.f32 0.0, %v2418
      %2420 = vmatmul.bf16.gmra.mxu0 %v2347
      %v2421 = vpop.f32.mrf.mxu0
      %v2422 = vadd.f32 0.0, %v2421
      %v2423 = vpop.f32.mrf.mxu0
      %v2424 = vadd.f32 0.0, %v2423
      %2425 = vmatmul.bf16.gmra.mxu0 %v2350
      %v2426 = vpop.f32.mrf.mxu0
      %v2427 = vadd.f32 0.0, %v2426
      %v2428 = vpop.f32.mrf.mxu0
      %v2429 = vadd.f32 0.0, %v2428
      %2430 = vmatmul.bf16.gmra.mxu0 %v2353
      %v2431 = vpop.f32.mrf.mxu0
      %v2432 = vadd.f32 0.0, %v2431
      %v2433 = vpop.f32.mrf.mxu0
      %v2434 = vadd.f32 0.0, %v2433
      %2435 = vmatmul.bf16.gmra.mxu0 %v2356
      %v2436 = vpop.f32.mrf.mxu0
      %v2437 = vadd.f32 0.0, %v2436
      %v2438 = vpop.f32.mrf.mxu0
      %v2439 = vadd.f32 0.0, %v2438
      %2440 = vmatmul.bf16.gmra.mxu0 %v2359
      %v2441 = vpop.f32.mrf.mxu0
      %v2442 = vadd.f32 0.0, %v2441
      %v2443 = vpop.f32.mrf.mxu0
      %v2444 = vadd.f32 0.0, %v2443
      %2445 = vmatmul.bf16.gmra.mxu0 %v2362
      %v2446 = vpop.f32.mrf.mxu0
      %v2447 = vadd.f32 0.0, %v2446
      %v2448 = vpop.f32.mrf.mxu0
      %v2449 = vadd.f32 0.0, %v2448
      %2450 = vmatmul.bf16.gmra.mxu0 %v2365
      %v2451 = vpop.f32.mrf.mxu0
      %v2452 = vadd.f32 0.0, %v2451
      %v2453 = vpop.f32.mrf.mxu0
      %v2454 = vadd.f32 0.0, %v2453
      %2455 = vmatmul.bf16.gmra.mxu0 %v2368
      %v2456 = vpop.f32.mrf.mxu0
      %v2457 = vadd.f32 0.0, %v2456
      %v2458 = vpop.f32.mrf.mxu0
      %v2459 = vadd.f32 0.0, %v2458
      %2460 = vmatmul.bf16.gmra.mxu0 %v2371
      %v2461 = vpop.f32.mrf.mxu0
      %v2462 = vadd.f32 0.0, %v2461
      %v2463 = vpop.f32.mrf.mxu0
      %v2464 = vadd.f32 0.0, %v2463
      %2465 = vdwg.mxu0
      %2466 = vst.msk [vmem:[%s177] sm:$0xff] %vm183, %v2387
      %2467 = vst.msk [vmem:[%s177 + $0x8] sm:$0xff] %vm183, %v2389
      %2468 = vst.msk [vmem:[%s177 + $0x10] sm:$0xff] %vm183, %v2392
      %2469 = vst.msk [vmem:[%s177 + $0x18] sm:$0xff] %vm183, %v2394
      %2470 = vst.msk [vmem:[%s177 + $0x20] sm:$0xff] %vm183, %v2397
      %2471 = vst.msk [vmem:[%s177 + $0x28] sm:$0xff] %vm183, %v2399
      %2472 = vst.msk [vmem:[%s177 + $0x30] sm:$0xff] %vm183, %v2402
      %2473 = vst.msk [vmem:[%s177 + $0x38] sm:$0xff] %vm183, %v2404
      %2474 = vst.msk [vmem:[%s177 + $0x40] sm:$0xff] %vm183, %v2407
      %2475 = vst.msk [vmem:[%s177 + $0x48] sm:$0xff] %vm183, %v2409
      %2476 = vst.msk [vmem:[%s177 + $0x50] sm:$0xff] %vm183, %v2412
      %2477 = vst.msk [vmem:[%s177 + $0x58] sm:$0xff] %vm183, %v2414
      %2478 = vst.msk [vmem:[%s177 + $0x60] sm:$0xff] %vm183, %v2417
      %2479 = vst.msk [vmem:[%s177 + $0x68] sm:$0xff] %vm183, %v2419
      %2480 = vst.msk [vmem:[%s177 + $0x70] sm:$0xff] %vm183, %v2422
      %2481 = vst.msk [vmem:[%s177 + $0x78] sm:$0xff] %vm183, %v2424
      %2482 = vst.msk [vmem:[%s177 + $0x80] sm:$0xff] %vm183, %v2427
      %2483 = vst.msk [vmem:[%s177 + $0x88] sm:$0xff] %vm183, %v2429
      %2484 = vst.msk [vmem:[%s177 + $0x90] sm:$0xff] %vm183, %v2432
      %2485 = vst.msk [vmem:[%s177 + $0x98] sm:$0xff] %vm183, %v2434
      %2486 = vst.msk [vmem:[%s177 + $0xa0] sm:$0xff] %vm183, %v2437
      %2487 = vst.msk [vmem:[%s177 + $0xa8] sm:$0xff] %vm183, %v2439
      %2488 = vst.msk [vmem:[%s177 + $0xb0] sm:$0xff] %vm183, %v2442
      %2489 = vst.msk [vmem:[%s177 + $0xb8] sm:$0xff] %vm183, %v2444
      %2490 = vst.msk [vmem:[%s177 + $0xc0] sm:$0xff] %vm183, %v2447
      %2491 = vst.msk [vmem:[%s177 + $0xc8] sm:$0xff] %vm183, %v2449
      %2492 = vst.msk [vmem:[%s177 + $0xd0] sm:$0xff] %vm183, %v2452
      %2493 = vst.msk [vmem:[%s177 + $0xd8] sm:$0xff] %vm183, %v2454
      %2494 = vst.msk [vmem:[%s177 + $0xe0] sm:$0xff] %vm183, %v2457
      %2495 = vst.msk [vmem:[%s177 + $0xe8] sm:$0xff] %vm183, %v2459
      %2496 = vst.msk [vmem:[%s177 + $0xf0] sm:$0xff] %vm183, %v2462
      %2497 = vst.msk [vmem:[%s177 + $0xf8] sm:$0xff] %vm183, %v2464
      %v2498 = vsel %vm183, %v2387, 0.0
      %v2499 = vsel %vm183, %v2389, 0.0
      %v2500 = vadd.f32 %v2498, %v2499
      %v2501 = vsel %vm183, %v2392, 0.0
      %v2502 = vadd.f32 %v2500, %v2501
      %v2503 = vsel %vm183, %v2394, 0.0
      %v2504 = vadd.f32 %v2502, %v2503
      %v2505 = vsel %vm183, %v2397, 0.0
      %v2506 = vadd.f32 %v2504, %v2505
      %v2507 = vsel %vm183, %v2399, 0.0
      %v2508 = vadd.f32 %v2506, %v2507
      %v2509 = vsel %vm183, %v2402, 0.0
      %v2510 = vadd.f32 %v2508, %v2509
      %v2511 = vsel %vm183, %v2404, 0.0
      %v2512 = vadd.f32 %v2510, %v2511
      %v2513 = vsel %vm183, %v2407, 0.0
      %v2514 = vadd.f32 %v2512, %v2513
      %v2515 = vsel %vm183, %v2409, 0.0
      %v2516 = vadd.f32 %v2514, %v2515
      %v2517 = vsel %vm183, %v2412, 0.0
      %v2518 = vadd.f32 %v2516, %v2517
      %v2519 = vsel %vm183, %v2414, 0.0
      %v2520 = vadd.f32 %v2518, %v2519
      %v2521 = vsel %vm183, %v2417, 0.0
      %v2522 = vadd.f32 %v2520, %v2521
      %v2523 = vsel %vm183, %v2419, 0.0
      %v2524 = vadd.f32 %v2522, %v2523
      %v2525 = vsel %vm183, %v2422, 0.0
      %v2526 = vadd.f32 %v2524, %v2525
      %v2527 = vsel %vm183, %v2424, 0.0
      %v2528 = vadd.f32 %v2526, %v2527
      %v2529 = vsel %vm183, %v2427, 0.0
      %v2530 = vadd.f32 %v2528, %v2529
      %v2531 = vsel %vm183, %v2429, 0.0
      %v2532 = vadd.f32 %v2530, %v2531
      %v2533 = vsel %vm183, %v2432, 0.0
      %v2534 = vadd.f32 %v2532, %v2533
      %v2535 = vsel %vm183, %v2434, 0.0
      %v2536 = vadd.f32 %v2534, %v2535
      %v2537 = vsel %vm183, %v2437, 0.0
      %v2538 = vadd.f32 %v2536, %v2537
      %v2539 = vsel %vm183, %v2439, 0.0
      %v2540 = vadd.f32 %v2538, %v2539
      %v2541 = vsel %vm183, %v2442, 0.0
      %v2542 = vadd.f32 %v2540, %v2541
      %v2543 = vsel %vm183, %v2444, 0.0
      %v2544 = vadd.f32 %v2542, %v2543
      %v2545 = vsel %vm183, %v2447, 0.0
      %v2546 = vadd.f32 %v2544, %v2545
      %v2547 = vsel %vm183, %v2449, 0.0
      %v2548 = vadd.f32 %v2546, %v2547
      %v2549 = vsel %vm183, %v2452, 0.0
      %v2550 = vadd.f32 %v2548, %v2549
      %v2551 = vsel %vm183, %v2454, 0.0
      %v2552 = vadd.f32 %v2550, %v2551
      %v2553 = vsel %vm183, %v2457, 0.0
      %v2554 = vadd.f32 %v2552, %v2553
      %v2555 = vsel %vm183, %v2459, 0.0
      %v2556 = vadd.f32 %v2554, %v2555
      %v2557 = vsel %vm183, %v2462, 0.0
      %v2558 = vadd.f32 %v2556, %v2557
      %v2559 = vsel %vm183, %v2464, 0.0
      %v2560 = vadd.f32 %v2558, %v2559
      %v2561 = vrot.slane %v2560, 4
      %v2562 = vadd.f32 %v2560, %v2561
      %v2563 = vrot.slane %v2562, 2
      %v2564 = vadd.f32 %v2562, %v2563
      %v2565 = vrot.slane %v2564, 1
      %v2566 = vadd.f32 %v2564, %v2565
      %v2567 = vmul.f32 %v2387, %v2387
      %v2568 = vmul.f32 %v2389, %v2389
      %v2569 = vmul.f32 %v2392, %v2392
      %v2570 = vmul.f32 %v2394, %v2394
      %v2571 = vmul.f32 %v2397, %v2397
      %v2572 = vmul.f32 %v2399, %v2399
      %v2573 = vmul.f32 %v2402, %v2402
      %v2574 = vmul.f32 %v2404, %v2404
      %v2575 = vmul.f32 %v2407, %v2407
      %v2576 = vmul.f32 %v2409, %v2409
      %v2577 = vmul.f32 %v2412, %v2412
      %v2578 = vmul.f32 %v2414, %v2414
      %v2579 = vmul.f32 %v2417, %v2417
      %v2580 = vmul.f32 %v2419, %v2419
      %v2581 = vmul.f32 %v2422, %v2422
      %v2582 = vmul.f32 %v2424, %v2424
      %v2583 = vmul.f32 %v2427, %v2427
      %v2584 = vmul.f32 %v2429, %v2429
      %v2585 = vmul.f32 %v2432, %v2432
      %v2586 = vmul.f32 %v2434, %v2434
      %v2587 = vmul.f32 %v2437, %v2437
      %v2588 = vmul.f32 %v2439, %v2439
      %v2589 = vmul.f32 %v2442, %v2442
      %v2590 = vmul.f32 %v2444, %v2444
      %v2591 = vmul.f32 %v2447, %v2447
      %v2592 = vmul.f32 %v2449, %v2449
      %v2593 = vmul.f32 %v2452, %v2452
      %v2594 = vmul.f32 %v2454, %v2454
      %v2595 = vmul.f32 %v2457, %v2457
      %v2596 = vmul.f32 %v2459, %v2459
      %v2597 = vmul.f32 %v2462, %v2462
      %v2598 = vmul.f32 %v2464, %v2464
      %v2599 = vsel %vm183, %v2567, 0.0
      %v2600 = vsel %vm183, %v2568, 0.0
      %v2601 = vadd.f32 %v2599, %v2600
      %v2602 = vsel %vm183, %v2569, 0.0
      %v2603 = vadd.f32 %v2601, %v2602
      %v2604 = vsel %vm183, %v2570, 0.0
      %v2605 = vadd.f32 %v2603, %v2604
      %v2606 = vsel %vm183, %v2571, 0.0
      %v2607 = vadd.f32 %v2605, %v2606
      %v2608 = vsel %vm183, %v2572, 0.0
      %v2609 = vadd.f32 %v2607, %v2608
      %v2610 = vsel %vm183, %v2573, 0.0
      %v2611 = vadd.f32 %v2609, %v2610
      %v2612 = vsel %vm183, %v2574, 0.0
      %v2613 = vadd.f32 %v2611, %v2612
      %v2614 = vsel %vm183, %v2575, 0.0
      %v2615 = vadd.f32 %v2613, %v2614
      %v2616 = vsel %vm183, %v2576, 0.0
      %v2617 = vadd.f32 %v2615, %v2616
      %v2618 = vsel %vm183, %v2577, 0.0
      %v2619 = vadd.f32 %v2617, %v2618
      %v2620 = vsel %vm183, %v2578, 0.0
      %v2621 = vadd.f32 %v2619, %v2620
      %v2622 = vsel %vm183, %v2579, 0.0
      %v2623 = vadd.f32 %v2621, %v2622
      %v2624 = vsel %vm183, %v2580, 0.0
      %v2625 = vadd.f32 %v2623, %v2624
      %v2626 = vsel %vm183, %v2581, 0.0
      %v2627 = vadd.f32 %v2625, %v2626
      %v2628 = vsel %vm183, %v2582, 0.0
      %v2629 = vadd.f32 %v2627, %v2628
      %v2630 = vsel %vm183, %v2583, 0.0
      %v2631 = vadd.f32 %v2629, %v2630
      %v2632 = vsel %vm183, %v2584, 0.0
      %v2633 = vadd.f32 %v2631, %v2632
      %v2634 = vsel %vm183, %v2585, 0.0
      %v2635 = vadd.f32 %v2633, %v2634
      %v2636 = vsel %vm183, %v2586, 0.0
      %v2637 = vadd.f32 %v2635, %v2636
      %v2638 = vsel %vm183, %v2587, 0.0
      %v2639 = vadd.f32 %v2637, %v2638
      %v2640 = vsel %vm183, %v2588, 0.0
      %v2641 = vadd.f32 %v2639, %v2640
      %v2642 = vsel %vm183, %v2589, 0.0
      %v2643 = vadd.f32 %v2641, %v2642
      %v2644 = vsel %vm183, %v2590, 0.0
      %v2645 = vadd.f32 %v2643, %v2644
      %v2646 = vsel %vm183, %v2591, 0.0
      %v2647 = vadd.f32 %v2645, %v2646
      %v2648 = vsel %vm183, %v2592, 0.0
      %v2649 = vadd.f32 %v2647, %v2648
      %v2650 = vsel %vm183, %v2593, 0.0
      %v2651 = vadd.f32 %v2649, %v2650
      %v2652 = vsel %vm183, %v2594, 0.0
      %v2653 = vadd.f32 %v2651, %v2652
      %v2654 = vsel %vm183, %v2595, 0.0
      %v2655 = vadd.f32 %v2653, %v2654
      %v2656 = vsel %vm183, %v2596, 0.0
      %v2657 = vadd.f32 %v2655, %v2656
      %v2658 = vsel %vm183, %v2597, 0.0
      %v2659 = vadd.f32 %v2657, %v2658
      %v2660 = vsel %vm183, %v2598, 0.0
      %v2661 = vadd.f32 %v2659, %v2660
      %v2662 = vrot.slane %v2661, 4
      %v2663 = vadd.f32 %v2661, %v2662
      %v2664 = vrot.slane %v2663, 2
      %v2665 = vadd.f32 %v2663, %v2664
      %v2666 = vrot.slane %v2665, 1
      %v2667 = vadd.f32 %v2665, %v2666
      %vm2668 = vcmask 1040384
      %v2669 = vsel %vm2668, %v2566, %v2667
      %2670 = vst.msk [vmem:[%s181] sm:$0x3] %vm186, %v2669
      %p2671 = scmp.lt.s32.totalorder %s15, 1
      %s2672 = scalar_select %p2671, %s15, 1
      %s2673 = smul.addr %s2672, 32
      %s2674 = smul.addr %s2673, 8
      %s2675 = scalar_lea.vmem %s2, %s2674
      %p2676 = scmp.lt.s32.totalorder %s15, 1
      %s2677 = scalar_select %p2676, %s15, 1
      %s2678 = smul.addr %s2677, 2
      %s2679 = scalar_lea.vmem %s3, %s2678
      // Predicated region
      $region29: #{basic_block_forward.3} parent=27 // pred_check
        %p2680 = pneg %p80
      $region30: #{basic_block_forward.3} parent=27 // pred_check_branch
        %2682 = sbr.rel (%p2680) target = $region32
      $region31: #{basic_block_forward.3} parent=27 // pred_region
        _
      $region32: #{basic_block_forward.3} parent=27 // pred_fallthru
        _
      // Predicated region
      $region33: #{basic_block_forward.3} parent=27 // pred_check
        %p2683 = pneg %p106
      $region34: #{basic_block_forward.3} parent=27 // pred_check_branch
        %2685 = sbr.rel (%p2683) target = $region36
      $region35: #{basic_block_forward.3} parent=27 // pred_region
        _
      $region36: #{basic_block_forward.3} parent=27 // pred_fallthru
        _
    $region28: #{basic_block_forward.3} parent=5 // pred_fallthru
      _
    %p2686 = scmp.le.s32.totalorder 2, %s10
    // Predicated region
    $region37: #{basic_block_forward.3} parent=5 // pred_check
      %p2687 = pneg %p2686
    $region38: #{basic_block_forward.3} parent=5 // pred_check_branch
      %2689 = sbr.rel (%p2687) target = $region40
    $region39: #{basic_block_forward.3} parent=5 // pred_region
      %s2690 = ssub.s32 %s10, 2
      // Predicated region
      $region41: #{basic_block_forward.3} parent=39 // pred_check
        %p2691 = pneg %p86
      $region42: #{basic_block_forward.3} parent=39 // pred_check_branch
        %2693 = sbr.rel (%p2691) target = $region44
      $region43: #{basic_block_forward.3} parent=39 // pred_region
        %p2694 = scmp.lt.s32.totalorder %s16, 1
        %s2695 = scalar_select %p2694, %s16, 1
        %s2696 = smul.addr %s2695, 32
        %s2697 = smul.addr %s2696, 8
        %s2698 = scalar_lea.vmem %s2, %s2697
      $region44: #{basic_block_forward.3} parent=39 // pred_fallthru
        _
      // Predicated region
      $region45: #{basic_block_forward.3} parent=39 // pred_check
        %p2699 = pneg %p112
      $region46: #{basic_block_forward.3} parent=39 // pred_check_branch
        %2701 = sbr.rel (%p2699) target = $region48
      $region47: #{basic_block_forward.3} parent=39 // pred_region
        %p2702 = scmp.lt.s32.totalorder %s16, 1
        %s2703 = scalar_select %p2702, %s16, 1
        %s2704 = smul.addr %s2703, 2
        %s2705 = scalar_lea.vmem %s3, %s2704
      $region48: #{basic_block_forward.3} parent=39 // pred_fallthru
        _
    $region40: #{basic_block_forward.3} parent=5 // pred_fallthru
      _
  $region6: #{basic_block_forward.3} parent=0 // loop_footer
    %s14 = sadd.s32 1, %s10
  $region7: #{basic_block_forward.3} parent=0 // loop_footer_branch
    %9 = sbr.rel target = $region3
  $region8: #{basic_block_forward.3} parent=0 // loop_exit
    _

// kernel: basic_block_forward.4
$region0: #{basic_block_forward.4}
  #allocation0 [shape = 'u32[]', space=smem, size = 0x4, offset = 0x4, fixed_abs, tag = 'smem constant byte address 0x4 - core index']
  #allocation1 [shape = 'u32[72,128]{1,0:T(1,128)}', space=vmem, size = 0x9000, scoped, tag = 'internal scratch']
  #allocation2 [shape = 'f32[18,18,4]{2,1,0:T(8,128)}', space=vmem, size = 0x36000, scoped, tag = 'scratch operand']
  #allocation3 [shape = 'bf16[256,36]{1,0:T(8,128)(2,1)}', space=vmem, size = 0x10000, scoped, tag = 'scratch operand']
  %s0 = inlined_call_operand.vmem [shape: f32[2,256,4], index: 0, kind: input, shape index: {}]
  %s1 = inlined_call_operand.vmem [shape: f32[1,4], index: 1, kind: input, shape index: {}]
  %s2 = inlined_call_operand.vmem [shape: f32[1,4], index: 2, kind: input, shape index: {}]
  %s3 = inlined_call_operand.vmem [shape: bf16[36,4], index: 3, kind: input, shape index: {}]
  %s4 = inlined_call_operand.vmem [shape: f32[2,256,4], index: 4, kind: output, shape index: {0}]
  %s5 = inlined_call_operand.vmem [shape: f32[2,2,4], index: 5, kind: output, shape index: {1}]
  %6 = xla_tuple %s4, %s5
  %s7 = sld [smem:[#allocation0]]
  $region57: #{basic_block_forward.4} parent=0
    _
  %s9 = ssub.s32 1, %s7
  %s10 = scalar_select 0, %s9, %s7
  loop: start=0, step=1, limit=4
  $region2: #{basic_block_forward.4} parent=0 // loop_pre_header
    _
  $region3: #{basic_block_forward.4} parent=0 // loop_header
    %s12 = sphi 0, %s16
    %p13 = scmp.ge.s32.totalorder %s12, 4
    %s22 = sphi 0, %s24
    %s25 = sphi 0, %s22
    %s26 = sphi 0, %s25
    %s42 = sphi 0, %s26
    %s46 = sphi 0, %s46
    %s48 = sphi 0, %s46
    %s49 = sphi 0, %s48
    %s63 = sphi 0, %s49
    %s67 = sphi 0, %s67
    %s69 = sphi 0, %s67
    %s70 = sphi 0, %s69
    %s84 = sphi 0, %s70
    %s88 = sphi 0, %s88
    %s90 = sphi 0, %s88
    %s91 = sphi 0, %s90
    %s105 = sphi 0, %s91
    %s111 = sphi 0, %s113
    %s114 = sphi 0, %s111
    %s115 = sphi 0, %s114
    %s131 = sphi 0, %s115
    %s137 = sphi 0, %s139
    %s140 = sphi 0, %s137
    %s141 = sphi 0, %s140
    %s157 = sphi 0, %s141
  $region4: #{basic_block_forward.4} parent=0 // loop_header_branch
    %15 = sbr.rel (%p13) target = $region8
  $region5: #{basic_block_forward.4} parent=0 // loop_body
    %s17 = ssub.s32 %s12, 1
    %s18 = ssub.s32 %s12, 2
    %s19 = sadd.s32 %s12, 1
    %s20 = ssub.s32 %s12, %s19
    %p21 = scmp.eq.s32.totalorder %s20, 0
    %s23 = sadd.s32 %s22, 1
    %s24 = scalar_select %p21, %s22, %s23
    %p27 = pneg %p21
    %p28 = scmp.eq.s32.totalorder %s12, 1
    %p29 = por %p27, %p28
    %p30 = scmp.ne.s32.totalorder %s22, %s25
    %p31 = scmp.eq.s32.totalorder %s12, 0
    %p32 = por %p30, %p31
    %p33 = scmp.ne.s32.totalorder %s22, %s25
    %p34 = scmp.eq.s32.totalorder %s17, 1
    %p35 = por %p33, %p34
    %p36 = scmp.ne.s32.totalorder %s25, %s26
    %p37 = scmp.eq.s32.totalorder %s17, 0
    %p38 = por %p36, %p37
    %p39 = scmp.ne.s32.totalorder %s25, %s26
    %p40 = scmp.eq.s32.totalorder %s18, 1
    %p41 = por %p39, %p40
    %p43 = scmp.ne.s32.totalorder %s26, %s42
    %p44 = scmp.eq.s32.totalorder %s18, 0
    %p45 = por %p43, %p44
    %s47 = sadd.s32 %s46, 1
    %p50 = scmp.eq.s32.totalorder %s12, 1
    %p51 = scmp.ne.s32.totalorder %s46, %s48
    %p52 = scmp.eq.s32.totalorder %s12, 0
    %p53 = por %p51, %p52
    %p54 = scmp.ne.s32.totalorder %s46, %s48
    %p55 = scmp.eq.s32.totalorder %s17, 1
    %p56 = por %p54, %p55
    %p57 = scmp.ne.s32.totalorder %s48, %s49
    %p58 = scmp.eq.s32.totalorder %s17, 0
    %p59 = por %p57, %p58
    %p60 = scmp.ne.s32.totalorder %s48, %s49
    %p61 = scmp.eq.s32.totalorder %s18, 1
    %p62 = por %p60, %p61
    %p64 = scmp.ne.s32.totalorder %s49, %s63
    %p65 = scmp.eq.s32.totalorder %s18, 0
    %p66 = por %p64, %p65
    %s68 = sadd.s32 %s67, 1
    %p71 = scmp.eq.s32.totalorder %s12, 1
    %p72 = scmp.ne.s32.totalorder %s67, %s69
    %p73 = scmp.eq.s32.totalorder %s12, 0
    %p74 = por %p72, %p73
    %p75 = scmp.ne.s32.totalorder %s67, %s69
    %p76 = scmp.eq.s32.totalorder %s17, 1
    %p77 = por %p75, %p76
    %p78 = scmp.ne.s32.totalorder %s69, %s70
    %p79 = scmp.eq.s32.totalorder %s17, 0
    %p80 = por %p78, %p79
    %p81 = scmp.ne.s32.totalorder %s69, %s70
    %p82 = scmp.eq.s32.totalorder %s18, 1
    %p83 = por %p81, %p82
    %p85 = scmp.ne.s32.totalorder %s70, %s84
    %p86 = scmp.eq.s32.totalorder %s18, 0
    %p87 = por %p85, %p86
    %s89 = sadd.s32 %s88, 1
    %p92 = scmp.eq.s32.totalorder %s12, 1
    %p93 = scmp.ne.s32.totalorder %s88, %s90
    %p94 = scmp.eq.s32.totalorder %s12, 0
    %p95 = por %p93, %p94
    %p96 = scmp.ne.s32.totalorder %s88, %s90
    %p97 = scmp.eq.s32.totalorder %s17, 1
    %p98 = por %p96, %p97
    %p99 = scmp.ne.s32.totalorder %s90, %s91
    %p100 = scmp.eq.s32.totalorder %s17, 0
    %p101 = por %p99, %p100
    %p102 = scmp.ne.s32.totalorder %s90, %s91
    %p103 = scmp.eq.s32.totalorder %s18, 1
    %p104 = por %p102, %p103
    %p106 = scmp.ne.s32.totalorder %s91, %s105
    %p107 = scmp.eq.s32.totalorder %s18, 0
    %p108 = por %p106, %p107
    %s109 = ssub.s32 %s12, %s19
    %p110 = scmp.eq.s32.totalorder %s109, 0
    %s112 = sadd.s32 %s111, 1
    %s113 = scalar_select %p110, %s111, %s112
    %p116 = pneg %p110
    %p117 = scmp.eq.s32.totalorder %s12, 1
    %p118 = por %p116, %p117
    %p119 = scmp.ne.s32.totalorder %s111, %s114
    %p120 = scmp.eq.s32.totalorder %s12, 0
    %p121 = por %p119, %p120
    %p122 = scmp.ne.s32.totalorder %s111, %s114
    %p123 = scmp.eq.s32.totalorder %s17, 1
    %p124 = por %p122, %p123
    %p125 = scmp.ne.s32.totalorder %s114, %s115
    %p126 = scmp.eq.s32.totalorder %s17, 0
    %p127 = por %p125, %p126
    %p128 = scmp.ne.s32.totalorder %s114, %s115
    %p129 = scmp.eq.s32.totalorder %s18, 1
    %p130 = por %p128, %p129
    %p132 = scmp.ne.s32.totalorder %s115, %s131
    %p133 = scmp.eq.s32.totalorder %s18, 0
    %p134 = por %p132, %p133
    %s135 = ssub.s32 %s12, %s19
    %p136 = scmp.eq.s32.totalorder %s135, 0
    %s138 = sadd.s32 %s137, 1
    %s139 = scalar_select %p136, %s137, %s138
    %p142 = pneg %p136
    %p143 = scmp.eq.s32.totalorder %s12, 1
    %p144 = por %p142, %p143
    %p145 = scmp.ne.s32.totalorder %s137, %s140
    %p146 = scmp.eq.s32.totalorder %s12, 0
    %p147 = por %p145, %p146
    %p148 = scmp.ne.s32.totalorder %s137, %s140
    %p149 = scmp.eq.s32.totalorder %s17, 1
    %p150 = por %p148, %p149
    %p151 = scmp.ne.s32.totalorder %s140, %s141
    %p152 = scmp.eq.s32.totalorder %s17, 0
    %p153 = por %p151, %p152
    %p154 = scmp.ne.s32.totalorder %s140, %s141
    %p155 = scmp.eq.s32.totalorder %s18, 1
    %p156 = por %p154, %p155
    %p158 = scmp.ne.s32.totalorder %s141, %s157
    %p159 = scmp.eq.s32.totalorder %s18, 0
    %p160 = por %p158, %p159
    %p161 = scmp.le.s32.totalorder 1, %s12
    %p162 = scmp.lt.s32.totalorder %s12, 3
    %p163 = pnand %p161, %p162
    %p164 = pneg %p163
    // Predicated region
    $region9: #{basic_block_forward.4} parent=5 // pred_check
      _
    $region10: #{basic_block_forward.4} parent=5 // pred_check_branch
      %166 = sbr.rel (%p163) target = $region12
    $region11: #{basic_block_forward.4} parent=5 // pred_region
      %s167 = ssub.s32 %s12, 1
      // Predicated region
      $region13: #{basic_block_forward.4} parent=11 // pred_check
        %p168 = pneg %p59
      $region14: #{basic_block_forward.4} parent=11 // pred_check_branch
        %170 = sbr.rel (%p168) target = $region16
      $region15: #{basic_block_forward.4} parent=11 // pred_region
        _
      $region16: #{basic_block_forward.4} parent=11 // pred_fallthru
        _
      // Predicated region
      $region17: #{basic_block_forward.4} parent=11 // pred_check
        %p171 = pneg %p80
      $region18: #{basic_block_forward.4} parent=11 // pred_check_branch
        %173 = sbr.rel (%p171) target = $region20
      $region19: #{basic_block_forward.4} parent=11 // pred_region
        _
      $region20: #{basic_block_forward.4} parent=11 // pred_fallthru
        _
      // Predicated region
      $region21: #{basic_block_forward.4} parent=11 // pred_check
        %p174 = pneg %p101
      $region22: #{basic_block_forward.4} parent=11 // pred_check_branch
        %176 = sbr.rel (%p174) target = $region24
      $region23: #{basic_block_forward.4} parent=11 // pred_region
        _
      $region24: #{basic_block_forward.4} parent=11 // pred_fallthru
        _
    $region12: #{basic_block_forward.4} parent=5 // pred_fallthru
      _
    %p177 = scmp.lt.s32.totalorder %s12, 2
    // Predicated region
    $region25: #{basic_block_forward.4} parent=5 // pred_check
      %p178 = pneg %p177
    $region26: #{basic_block_forward.4} parent=5 // pred_check_branch
      %180 = sbr.rel (%p178) target = $region28
    $region27: #{basic_block_forward.4} parent=5 // pred_region
      // Predicated region
      $region29: #{basic_block_forward.4} parent=27 // pred_check
        %p181 = pneg %p32
      $region30: #{basic_block_forward.4} parent=27 // pred_check_branch
        %183 = sbr.rel (%p181) target = $region32
      $region31: #{basic_block_forward.4} parent=27 // pred_region
        %p184 = scmp.lt.s32.totalorder %s12, 1
        %s185 = scalar_select %p184, %s12, 1
        %s186 = smul.addr %s185, 32
        %s187 = smul.addr %s186, 8
        %s188 = scalar_lea.vmem %s0, %s187
      $region32: #{basic_block_forward.4} parent=27 // pred_fallthru
        _
    $region28: #{basic_block_forward.4} parent=5 // pred_fallthru
      _
    %p189 = scmp.le.s32.totalorder 1, %s12
    %p190 = scmp.lt.s32.totalorder %s12, 3
    %p191 = pnand %p189, %p190
    %p192 = pneg %p191
    // Predicated region
    $region33: #{basic_block_forward.4} parent=5 // pred_check
      _
    $region34: #{basic_block_forward.4} parent=5 // pred_check_branch
      %194 = sbr.rel (%p191) target = $region36
    $region35: #{basic_block_forward.4} parent=5 // pred_region
      %s195 = ssub.s32 %s12, 1
      %p196 = scmp.lt.s32.totalorder %s17, 1
      %s197 = scalar_select %p196, %s17, 1
      %s198 = smul.addr %s197, 32
      %s199 = smul.addr %s198, 8
      %s200 = scalar_lea.vmem %s0, %s199
      %p201 = pneg %p38
      %p202 = pneg %p35
      %p203 = pneg %p59
      %p204 = pneg %p56
      %p205 = pneg %p80
      %p206 = pneg %p77
      %p207 = pneg %p101
      %p208 = pneg %p98
      %p209 = pneg %p127
      %p210 = pneg %p124
      %p211 = scmp.lt.s32.totalorder %s17, 1
      %s212 = scalar_select %p211, %s17, 1
      %s213 = smul.addr %s212, 32
      %s214 = smul.addr %s213, 8
      %s215 = scalar_lea.vmem %s4, %s214
      %p216 = pneg %p153
      %p217 = pneg %p150
      %p218 = scmp.lt.s32.totalorder %s17, 1
      %s219 = scalar_select %p218, %s17, 1
      %s220 = smul.addr %s219, 2
      %s221 = scalar_lea.vmem %s5, %s220
      %p222 = scmp.lt.s32.totalorder %s17, 1
      %s223 = scalar_select %p222, %s17, 1
      %s224 = smul.addr %s223, 32
      %s225 = smul.addr %s224, 8
      %s226 = scalar_lea.vmem %s0, %s225
      %p227 = scmp.lt.s32.totalorder %s17, 1
      %s228 = scalar_select %p227, %s17, 1
      %s229 = smul.addr %s228, 32
      %s230 = smul.addr %s229, 8
      %s231 = scalar_lea.vmem %s4, %s230
      %p232 = scmp.lt.s32.totalorder %s17, 1
      %s233 = scalar_select %p232, %s17, 1
      %s234 = smul.addr %s233, 2
      %s235 = scalar_lea.vmem %s5, %s234
      %vm237 = vcmask 31744
      %238 = vst.msk [vmem:[#allocation2] sm:$0xff] %vm237, 0.0
      %239 = vst.msk [vmem:[#allocation2 + $0x8] sm:$0xff] %vm237, 0.0
      %vm240 = vcmask 25600
      %241 = vst.msk [vmem:[#allocation2 + $0x10] sm:$0x3] %vm240, 0.0
      %s242 = scalar_lea.vmem [#allocation2], 408
      %243 = vst.msk [vmem:[%s242] sm:$0xff] %vm237, 0.0
      %244 = vst.msk [vmem:[%s242 + $0x8] sm:$0xff] %vm237, 0.0
      %245 = vst.msk [vmem:[%s242 + $0x10] sm:$0x3] %vm240, 0.0
      %vm246 = vcmask 24576
      %247 = vst.msk [vmem:[#allocation2] sm:$0x1] %vm246, 0.0
      %248 = vst.msk [vmem:[#allocation2 + $0x18] sm:$0x1] %vm246, 0.0
      %249 = vst.msk [vmem:[#allocation2 + $0x30] sm:$0x1] %vm246, 0.0
      %250 = vst.msk [vmem:[#allocation2 + $0x48] sm:$0x1] %vm246, 0.0
      %251 = vst.msk [vmem:[#allocation2 + $0x60] sm:$0x1] %vm246, 0.0
      %252 = vst.msk [vmem:[#allocation2 + $0x78] sm:$0x1] %vm246, 0.0
      %253 = vst.msk [vmem:[#allocation2 + $0x90] sm:$0x1] %vm246, 0.0
      %254 = vst.msk [vmem:[#allocation2 + $0xa8] sm:$0x1] %vm246, 0.0
      %255 = vst.msk [vmem:[#allocation2 + $0xc0] sm:$0x1] %vm246, 0.0
      %256 = vst.msk [vmem:[#allocation2 + $0xd8] sm:$0x1] %vm246, 0.0
      %257 = vst.msk [vmem:[#allocation2 + $0xf0] sm:$0x1] %vm246, 0.0
      %258 = vst.msk [vmem:[#allocation2 + $0x108] sm:$0x1] %vm246, 0.0
      %259 = vst.msk [vmem:[#allocation2 + $0x120] sm:$0x1] %vm246, 0.0
      %260 = vst.msk [vmem:[#allocation2 + $0x138] sm:$0x1] %vm246, 0.0
      %261 = vst.msk [vmem:[#allocation2 + $0x150] sm:$0x1] %vm246, 0.0
      %262 = vst.msk [vmem:[#allocation2 + $0x168] sm:$0x1] %vm246, 0.0
      %263 = vst.msk [vmem:[#allocation2 + $0x180] sm:$0x1] %vm246, 0.0
      %264 = vst.msk [vmem:[#allocation2 + $0x198] sm:$0x1] %vm246, 0.0
      %265 = vst.msk [vmem:[#allocation2 + $0x11] sm:$0x1] %vm246, 0.0
      %266 = vst.msk [vmem:[#allocation2 + $0x29] sm:$0x1] %vm246, 0.0
      %267 = vst.msk [vmem:[#allocation2 + $0x41] sm:$0x1] %vm246, 0.0
      %268 = vst.msk [vmem:[#allocation2 + $0x59] sm:$0x1] %vm246, 0.0
      %269 = vst.msk [vmem:[#allocation2 + $0x71] sm:$0x1] %vm246, 0.0
      %270 = vst.msk [vmem:[#allocation2 + $0x89] sm:$0x1] %vm246, 0.0
      %271 = vst.msk [vmem:[#allocation2 + $0xa1] sm:$0x1] %vm246, 0.0
      %272 = vst.msk [vmem:[#allocation2 + $0xb9] sm:$0x1] %vm246, 0.0
      %273 = vst.msk [vmem:[#allocation2 + $0xd1] sm:$0x1] %vm246, 0.0
      %274 = vst.msk [vmem:[#allocation2 + $0xe9] sm:$0x1] %vm246, 0.0
      %275 = vst.msk [vmem:[#allocation2 + $0x101] sm:$0x1] %vm246, 0.0
      %276 = vst.msk [vmem:[#allocation2 + $0x119] sm:$0x1] %vm246, 0.0
      %277 = vst.msk [vmem:[#allocation2 + $0x131] sm:$0x1] %vm246, 0.0
      %278 = vst.msk [vmem:[#allocation2 + $0x149] sm:$0x1] %vm246, 0.0
      %279 = vst.msk [vmem:[#allocation2 + $0x161] sm:$0x1] %vm246, 0.0
      %280 = vst.msk [vmem:[#allocation2 + $0x179] sm:$0x1] %vm246, 0.0
      %281 = vst.msk [vmem:[#allocation2 + $0x191] sm:$0x1] %vm246, 0.0
      %282 = vst.msk [vmem:[#allocation2 + $0x1a9] sm:$0x1] %vm246, 0.0
      %v283 = vld [vmem:[%s226] sm:$0xff]
      %v284 = vld [vmem:[%s226 + $0x8] sm:$0xff]
      %v285 = vld [vmem:[%s226 + $0x10] sm:$0xff]
      %v286 = vld [vmem:[%s226 + $0x18] sm:$0xff]
      %v287 = vld [vmem:[%s226 + $0x20] sm:$0xff]
      %v288 = vld [vmem:[%s226 + $0x28] sm:$0xff]
      %v289 = vld [vmem:[%s226 + $0x30] sm:$0xff]
      %v290 = vld [vmem:[%s226 + $0x38] sm:$0xff]
      %v291 = vld [vmem:[%s226 + $0x40] sm:$0xff]
      %v292 = vld [vmem:[%s226 + $0x48] sm:$0xff]
      %v293 = vld [vmem:[%s226 + $0x50] sm:$0xff]
      %v294 = vld [vmem:[%s226 + $0x58] sm:$0xff]
      %v295 = vld [vmem:[%s226 + $0x60] sm:$0xff]
      %v296 = vld [vmem:[%s226 + $0x68] sm:$0xff]
      %v297 = vld [vmem:[%s226 + $0x70] sm:$0xff]
      %v298 = vld [vmem:[%s226 + $0x78] sm:$0xff]
      %v299 = vld [vmem:[%s226 + $0x80] sm:$0xff]
      %v300 = vld [vmem:[%s226 + $0x88] sm:$0xff]
      %v301 = vld [vmem:[%s226 + $0x90] sm:$0xff]
      %v302 = vld [vmem:[%s226 + $0x98] sm:$0xff]
      %v303 = vld [vmem:[%s226 + $0xa0] sm:$0xff]
      %v304 = vld [vmem:[%s226 + $0xa8] sm:$0xff]
      %v305 = vld [vmem:[%s226 + $0xb0] sm:$0xff]
      %v306 = vld [vmem:[%s226 + $0xb8] sm:$0xff]
      %v307 = vld [vmem:[%s226 + $0xc0] sm:$0xff]
      %v308 = vld [vmem:[%s226 + $0xc8] sm:$0xff]
      %v309 = vld [vmem:[%s226 + $0xd0] sm:$0xff]
      %v310 = vld [vmem:[%s226 + $0xd8] sm:$0xff]
      %v311 = vld [vmem:[%s226 + $0xe0] sm:$0xff]
      %v312 = vld [vmem:[%s226 + $0xe8] sm:$0xff]
      %v313 = vld [vmem:[%s226 + $0xf0] sm:$0xff]
      %v314 = vld [vmem:[%s226 + $0xf8] sm:$0xff]
      %v315 = vld [vmem:[%s1] sm:$0x1]
      %v317 = vperm.slane %v315, 0
      %v319 = vmul.f32 %v283, %v317
      %v320 = vmul.f32 %v284, %v317
      %v321 = vmul.f32 %v285, %v317
      %v322 = vmul.f32 %v286, %v317
      %v323 = vmul.f32 %v287, %v317
      %v324 = vmul.f32 %v288, %v317
      %v325 = vmul.f32 %v289, %v317
      %v326 = vmul.f32 %v290, %v317
      %v327 = vmul.f32 %v291, %v317
      %v328 = vmul.f32 %v292, %v317
      %v329 = vmul.f32 %v293, %v317
      %v330 = vmul.f32 %v294, %v317
      %v331 = vmul.f32 %v295, %v317
      %v332 = vmul.f32 %v296, %v317
      %v333 = vmul.f32 %v297, %v317
      %v334 = vmul.f32 %v298, %v317
      %v335 = vmul.f32 %v299, %v317
      %v336 = vmul.f32 %v300, %v317
      %v337 = vmul.f32 %v301, %v317
      %v338 = vmul.f32 %v302, %v317
      %v339 = vmul.f32 %v303, %v317
      %v340 = vmul.f32 %v304, %v317
      %v341 = vmul.f32 %v305, %v317
      %v342 = vmul.f32 %v306, %v317
      %v343 = vmul.f32 %v307, %v317
      %v344 = vmul.f32 %v308, %v317
      %v345 = vmul.f32 %v309, %v317
      %v346 = vmul.f32 %v310, %v317
      %v347 = vmul.f32 %v311, %v317
      %v348 = vmul.f32 %v312, %v317
      %v349 = vmul.f32 %v313, %v317
      %v350 = vmul.f32 %v314, %v317
      %v351 = vld [vmem:[%s2] sm:$0x1]
      %v353 = vperm.slane %v351, 0
      %v355 = vadd.f32 %v319, %v353
      %v356 = vadd.f32 %v320, %v353
      %v357 = vadd.f32 %v321, %v353
      %v358 = vadd.f32 %v322, %v353
      %v359 = vadd.f32 %v323, %v353
      %v360 = vadd.f32 %v324, %v353
      %v361 = vadd.f32 %v325, %v353
      %v362 = vadd.f32 %v326, %v353
      %v363 = vadd.f32 %v327, %v353
      %v364 = vadd.f32 %v328, %v353
      %v365 = vadd.f32 %v329, %v353
      %v366 = vadd.f32 %v330, %v353
      %v367 = vadd.f32 %v331, %v353
      %v368 = vadd.f32 %v332, %v353
      %v369 = vadd.f32 %v333, %v353
      %v370 = vadd.f32 %v334, %v353
      %v371 = vadd.f32 %v335, %v353
      %v372 = vadd.f32 %v336, %v353
      %v373 = vadd.f32 %v337, %v353
      %v374 = vadd.f32 %v338, %v353
      %v375 = vadd.f32 %v339, %v353
      %v376 = vadd.f32 %v340, %v353
      %v377 = vadd.f32 %v341, %v353
      %v378 = vadd.f32 %v342, %v353
      %v379 = vadd.f32 %v343, %v353
      %v380 = vadd.f32 %v344, %v353
      %v381 = vadd.f32 %v345, %v353
      %v382 = vadd.f32 %v346, %v353
      %v383 = vadd.f32 %v347, %v353
      %v384 = vadd.f32 %v348, %v353
      %v385 = vadd.f32 %v349, %v353
      %v386 = vadd.f32 %v350, %v353
      %v387 = vmax.f32 %v355, 0.0
      %v388 = vmax.f32 %v356, 0.0
      %v389 = vmax.f32 %v357, 0.0
      %v390 = vmax.f32 %v358, 0.0
      %v391 = vmax.f32 %v359, 0.0
      %v392 = vmax.f32 %v360, 0.0
      %v393 = vmax.f32 %v361, 0.0
      %v394 = vmax.f32 %v362, 0.0
      %v395 = vmax.f32 %v363, 0.0
      %v396 = vmax.f32 %v364, 0.0
      %v397 = vmax.f32 %v365, 0.0
      %v398 = vmax.f32 %v366, 0.0
      %v399 = vmax.f32 %v367, 0.0
      %v400 = vmax.f32 %v368, 0.0
      %v401 = vmax.f32 %v369, 0.0
      %v402 = vmax.f32 %v370, 0.0
      %v403 = vmax.f32 %v371, 0.0
      %v404 = vmax.f32 %v372, 0.0
      %v405 = vmax.f32 %v373, 0.0
      %v406 = vmax.f32 %v374, 0.0
      %v407 = vmax.f32 %v375, 0.0
      %v408 = vmax.f32 %v376, 0.0
      %v409 = vmax.f32 %v377, 0.0
      %v410 = vmax.f32 %v378, 0.0
      %v411 = vmax.f32 %v379, 0.0
      %v412 = vmax.f32 %v380, 0.0
      %v413 = vmax.f32 %v381, 0.0
      %v414 = vmax.f32 %v382, 0.0
      %v415 = vmax.f32 %v383, 0.0
      %v416 = vmax.f32 %v384, 0.0
      %v417 = vmax.f32 %v385, 0.0
      %v418 = vmax.f32 %v386, 0.0
      %s419 = scalar_lea.vmem [#allocation2], 24
      %420 = vst.msk [vmem:[%s419 + $0x1] sm:$0xff] %vm237, %v387
      %421 = vst.msk [vmem:[%s419 + $0x9] sm:$0xff] %vm237, %v388
      %422 = vst.msk [vmem:[%s419 + $0x19] sm:$0xff] %vm237, %v389
      %423 = vst.msk [vmem:[%s419 + $0x21] sm:$0xff] %vm237, %v390
      %424 = vst.msk [vmem:[%s419 + $0x31] sm:$0xff] %vm237, %v391
      %425 = vst.msk [vmem:[%s419 + $0x39] sm:$0xff] %vm237, %v392
      %426 = vst.msk [vmem:[%s419 + $0x49] sm:$0xff] %vm237, %v393
      %427 = vst.msk [vmem:[%s419 + $0x51] sm:$0xff] %vm237, %v394
      %428 = vst.msk [vmem:[%s419 + $0x61] sm:$0xff] %vm237, %v395
      %429 = vst.msk [vmem:[%s419 + $0x69] sm:$0xff] %vm237, %v396
      %430 = vst.msk [vmem:[%s419 + $0x79] sm:$0xff] %vm237, %v397
      %431 = vst.msk [vmem:[%s419 + $0x81] sm:$0xff] %vm237, %v398
      %432 = vst.msk [vmem:[%s419 + $0x91] sm:$0xff] %vm237, %v399
      %433 = vst.msk [vmem:[%s419 + $0x99] sm:$0xff] %vm237, %v400
      %434 = vst.msk [vmem:[%s419 + $0xa9] sm:$0xff] %vm237, %v401
      %435 = vst.msk [vmem:[%s419 + $0xb1] sm:$0xff] %vm237, %v402
      %436 = vst.msk [vmem:[%s419 + $0xc1] sm:$0xff] %vm237, %v403
      %437 = vst.msk [vmem:[%s419 + $0xc9] sm:$0xff] %vm237, %v404
      %438 = vst.msk [vmem:[%s419 + $0xd9] sm:$0xff] %vm237, %v405
      %439 = vst.msk [vmem:[%s419 + $0xe1] sm:$0xff] %vm237, %v406
      %440 = vst.msk [vmem:[%s419 + $0xf1] sm:$0xff] %vm237, %v407
      %441 = vst.msk [vmem:[%s419 + $0xf9] sm:$0xff] %vm237, %v408
      %442 = vst.msk [vmem:[%s419 + $0x109] sm:$0xff] %vm237, %v409
      %443 = vst.msk [vmem:[%s419 + $0x111] sm:$0xff] %vm237, %v410
      %444 = vst.msk [vmem:[%s419 + $0x121] sm:$0xff] %vm237, %v411
      %445 = vst.msk [vmem:[%s419 + $0x129] sm:$0xff] %vm237, %v412
      %446 = vst.msk [vmem:[%s419 + $0x139] sm:$0xff] %vm237, %v413
      %447 = vst.msk [vmem:[%s419 + $0x141] sm:$0xff] %vm237, %v414
      %448 = vst.msk [vmem:[%s419 + $0x151] sm:$0xff] %vm237, %v415
      %449 = vst.msk [vmem:[%s419 + $0x159] sm:$0xff] %vm237, %v416
      %450 = vst.msk [vmem:[%s419 + $0x169] sm:$0xff] %vm237, %v417
      %451 = vst.msk [vmem:[%s419 + $0x171] sm:$0xff] %vm237, %v418
      %v452 = vld [vmem:[#allocation2] sm:$0xff]
      %v453 = vld [vmem:[#allocation2 + $0x8] sm:$0xff]
      %v454 = vld [vmem:[#allocation2 + $0x18] sm:$0xff]
      %v455 = vld [vmem:[#allocation2 + $0x20] sm:$0xff]
      %v456 = vld [vmem:[#allocation2 + $0x30] sm:$0xff]
      %v457 = vld [vmem:[#allocation2 + $0x38] sm:$0xff]
      %v458 = vld [vmem:[#allocation2 + $0x48] sm:$0xff]
      %v459 = vld [vmem:[#allocation2 + $0x50] sm:$0xff]
      %v460 = vld [vmem:[#allocation2 + $0x60] sm:$0xff]
      %v461 = vld [vmem:[#allocation2 + $0x68] sm:$0xff]
      %v462 = vld [vmem:[#allocation2 + $0x78] sm:$0xff]
      %v463 = vld [vmem:[#allocation2 + $0x80] sm:$0xff]
      %v464 = vld [vmem:[#allocation2 + $0x90] sm:$0xff]
      %v465 = vld [vmem:[#allocation2 + $0x98] sm:$0xff]
      %v466 = vld [vmem:[#allocation2 + $0xa8] sm:$0xff]
      %v467 = vld [vmem:[#allocation2 + $0xb0] sm:$0xff]
      %v468 = vld [vmem:[#allocation2 + $0xc0] sm:$0xff]
      %v469 = vld [vmem:[#allocation2 + $0xc8] sm:$0xff]
      %v470 = vld [vmem:[#allocation2 + $0xd8] sm:$0xff]
      %v471 = vld [vmem:[#allocation2 + $0xe0] sm:$0xff]
      %v472 = vld [vmem:[#allocation2 + $0xf0] sm:$0xff]
      %v473 = vld [vmem:[#allocation2 + $0xf8] sm:$0xff]
      %v474 = vld [vmem:[#allocation2 + $0x108] sm:$0xff]
      %v475 = vld [vmem:[#allocation2 + $0x110] sm:$0xff]
      %v476 = vld [vmem:[#allocation2 + $0x120] sm:$0xff]
      %v477 = vld [vmem:[#allocation2 + $0x128] sm:$0xff]
      %v478 = vld [vmem:[#allocation2 + $0x138] sm:$0xff]
      %v479 = vld [vmem:[#allocation2 + $0x140] sm:$0xff]
      %v480 = vld [vmem:[#allocation2 + $0x150] sm:$0xff]
      %v481 = vld [vmem:[#allocation2 + $0x158] sm:$0xff]
      %v482 = vld [vmem:[#allocation2 + $0x168] sm:$0xff]
      %v483 = vld [vmem:[#allocation2 + $0x170] sm:$0xff]
      %v484 = vpack.c.bf16 %v452, %v452
      %v485 = vpack.c.bf16 %v453, %v453
      %v486 = vpack.c.bf16 %v454, %v454
      %v487 = vpack.c.bf16 %v455, %v455
      %v488 = vpack.c.bf16 %v456, %v456
      %v489 = vpack.c.bf16 %v457, %v457
      %v490 = vpack.c.bf16 %v458, %v458
      %v491 = vpack.c.bf16 %v459, %v459
      %v492 = vpack.c.bf16 %v460, %v460
      %v493 = vpack.c.bf16 %v461, %v461
      %v494 = vpack.c.bf16 %v462, %v462
      %v495 = vpack.c.bf16 %v463, %v463
      %v496 = vpack.c.bf16 %v464, %v464
      %v497 = vpack.c.bf16 %v465, %v465
      %v498 = vpack.c.bf16 %v466, %v466
      %v499 = vpack.c.bf16 %v467, %v467
      %v500 = vpack.c.bf16 %v468, %v468
      %v501 = vpack.c.bf16 %v469, %v469
      %v502 = vpack.c.bf16 %v470, %v470
      %v503 = vpack.c.bf16 %v471, %v471
      %v504 = vpack.c.bf16 %v472, %v472
      %v505 = vpack.c.bf16 %v473, %v473
      %v506 = vpack.c.bf16 %v474, %v474
      %v507 = vpack.c.bf16 %v475, %v475
      %v508 = vpack.c.bf16 %v476, %v476
      %v509 = vpack.c.bf16 %v477, %v477
      %v510 = vpack.c.bf16 %v478, %v478
      %v511 = vpack.c.bf16 %v479, %v479
      %v512 = vpack.c.bf16 %v480, %v480
      %v513 = vpack.c.bf16 %v481, %v481
      %v514 = vpack.c.bf16 %v482, %v482
      %v515 = vpack.c.bf16 %v483, %v483
      %vm516 = vcmask 27648
      %517 = vst.msk [vmem:[#allocation3] sm:$0xf] %vm516, %v484
      %518 = vst.msk [vmem:[#allocation3 + $0x4] sm:$0xf] %vm516, %v485
      %519 = vst.msk [vmem:[#allocation3 + $0x8] sm:$0xf] %vm516, %v486
      %520 = vst.msk [vmem:[#allocation3 + $0xc] sm:$0xf] %vm516, %v487
      %521 = vst.msk [vmem:[#allocation3 + $0x10] sm:$0xf] %vm516, %v488
      %522 = vst.msk [vmem:[#allocation3 + $0x14] sm:$0xf] %vm516, %v489
      %523 = vst.msk [vmem:[#allocation3 + $0x18] sm:$0xf] %vm516, %v490
      %524 = vst.msk [vmem:[#allocation3 + $0x1c] sm:$0xf] %vm516, %v491
      %525 = vst.msk [vmem:[#allocation3 + $0x20] sm:$0xf] %vm516, %v492
      %526 = vst.msk [vmem:[#allocation3 + $0x24] sm:$0xf] %vm516, %v493
      %527 = vst.msk [vmem:[#allocation3 + $0x28] sm:$0xf] %vm516, %v494
      %528 = vst.msk [vmem:[#allocation3 + $0x2c] sm:$0xf] %vm516, %v495
      %529 = vst.msk [vmem:[#allocation3 + $0x30] sm:$0xf] %vm516, %v496
      %530 = vst.msk [vmem:[#allocation3 + $0x34] sm:$0xf] %vm516, %v497
      %531 = vst.msk [vmem:[#allocation3 + $0x38] sm:$0xf] %vm516, %v498
      %532 = vst.msk [vmem:[#allocation3 + $0x3c] sm:$0xf] %vm516, %v499
      %533 = vst.msk [vmem:[#allocation3 + $0x40] sm:$0xf] %vm516, %v500
      %534 = vst.msk [vmem:[#allocation3 + $0x44] sm:$0xf] %vm516, %v501
      %535 = vst.msk [vmem:[#allocation3 + $0x48] sm:$0xf] %vm516, %v502
      %536 = vst.msk [vmem:[#allocation3 + $0x4c] sm:$0xf] %vm516, %v503
      %537 = vst.msk [vmem:[#allocation3 + $0x50] sm:$0xf] %vm516, %v504
      %538 = vst.msk [vmem:[#allocation3 + $0x54] sm:$0xf] %vm516, %v505
      %539 = vst.msk [vmem:[#allocation3 + $0x58] sm:$0xf] %vm516, %v506
      %540 = vst.msk [vmem:[#allocation3 + $0x5c] sm:$0xf] %vm516, %v507
      %541 = vst.msk [vmem:[#allocation3 + $0x60] sm:$0xf] %vm516, %v508
      %542 = vst.msk [vmem:[#allocation3 + $0x64] sm:$0xf] %vm516, %v509
      %543 = vst.msk [vmem:[#allocation3 + $0x68] sm:$0xf] %vm516, %v510
      %544 = vst.msk [vmem:[#allocation3 + $0x6c] sm:$0xf] %vm516, %v511
      %545 = vst.msk [vmem:[#allocation3 + $0x70] sm:$0xf] %vm516, %v512
      %546 = vst.msk [vmem:[#allocation3 + $0x74] sm:$0xf] %vm516, %v513
      %547 = vst.msk [vmem:[#allocation3 + $0x78] sm:$0xf] %vm516, %v514
      %548 = vst.msk [vmem:[#allocation3 + $0x7c] sm:$0xf] %vm516, %v515
      %v549 = vld [vmem:[#allocation2 + $0x1] sm:$0xff]
      %v550 = vld [vmem:[#allocation2 + $0x9] sm:$0xff]
      %v551 = vld [vmem:[#allocation2 + $0x19] sm:$0xff]
      %v552 = vld [vmem:[#allocation2 + $0x21] sm:$0xff]
      %v553 = vld [vmem:[#allocation2 + $0x31] sm:$0xff]
      %v554 = vld [vmem:[#allocation2 + $0x39] sm:$0xff]
      %v555 = vld [vmem:[#allocation2 + $0x49] sm:$0xff]
      %v556 = vld [vmem:[#allocation2 + $0x51] sm:$0xff]
      %v557 = vld [vmem:[#allocation2 + $0x61] sm:$0xff]
      %v558 = vld [vmem:[#allocation2 + $0x69] sm:$0xff]
      %v559 = vld [vmem:[#allocation2 + $0x79] sm:$0xff]
      %v560 = vld [vmem:[#allocation2 + $0x81] sm:$0xff]
      %v561 = vld [vmem:[#allocation2 + $0x91] sm:$0xff]
      %v562 = vld [vmem:[#allocation2 + $0x99] sm:$0xff]
      %v563 = vld [vmem:[#allocation2 + $0xa9] sm:$0xff]
      %v564 = vld [vmem:[#allocation2 + $0xb1] sm:$0xff]
      %v565 = vld [vmem:[#allocation2 + $0xc1] sm:$0xff]
      %v566 = vld [vmem:[#allocation2 + $0xc9] sm:$0xff]
      %v567 = vld [vmem:[#allocation2 + $0xd9] sm:$0xff]
      %v568 = vld [vmem:[#allocation2 + $0xe1] sm:$0xff]
      %v569 = vld [vmem:[#allocation2 + $0xf1] sm:$0xff]
      %v570 = vld [vmem:[#allocation2 + $0xf9] sm:$0xff]
      %v571 = vld [vmem:[#allocation2 + $0x109] sm:$0xff]
      %v572 = vld [vmem:[#allocation2 + $0x111] sm:$0xff]
      %v573 = vld [vmem:[#allocation2 + $0x121] sm:$0xff]
      %v574 = vld [vmem:[#allocation2 + $0x129] sm:$0xff]
      %v575 = vld [vmem:[#allocation2 + $0x139] sm:$0xff]
      %v576 = vld [vmem:[#allocation2 + $0x141] sm:$0xff]
      %v577 = vld [vmem:[#allocation2 + $0x151] sm:$0xff]
      %v578 = vld [vmem:[#allocation2 + $0x159] sm:$0xff]
      %v579 = vld [vmem:[#allocation2 + $0x169] sm:$0xff]
      %v580 = vld [vmem:[#allocation2 + $0x171] sm:$0xff]
      %v581 = vpack.c.bf16 %v549, %v549
      %v582 = vpack.c.bf16 %v550, %v550
      %v583 = vpack.c.bf16 %v551, %v551
      %v584 = vpack.c.bf16 %v552, %v552
      %v585 = vpack.c.bf16 %v553, %v553
      %v586 = vpack.c.bf16 %v554, %v554
      %v587 = vpack.c.bf16 %v555, %v555
      %v588 = vpack.c.bf16 %v556, %v556
      %v589 = vpack.c.bf16 %v557, %v557
      %v590 = vpack.c.bf16 %v558, %v558
      %v591 = vpack.c.bf16 %v559, %v559
      %v592 = vpack.c.bf16 %v560, %v560
      %v593 = vpack.c.bf16 %v561, %v561
      %v594 = vpack.c.bf16 %v562, %v562
      %v595 = vpack.c.bf16 %v563, %v563
      %v596 = vpack.c.bf16 %v564, %v564
      %v597 = vpack.c.bf16 %v565, %v565
      %v598 = vpack.c.bf16 %v566, %v566
      %v599 = vpack.c.bf16 %v567, %v567
      %v600 = vpack.c.bf16 %v568, %v568
      %v601 = vpack.c.bf16 %v569, %v569
      %v602 = vpack.c.bf16 %v570, %v570
      %v603 = vpack.c.bf16 %v571, %v571
      %v604 = vpack.c.bf16 %v572, %v572
      %v605 = vpack.c.bf16 %v573, %v573
      %v606 = vpack.c.bf16 %v574, %v574
      %v607 = vpack.c.bf16 %v575, %v575
      %v608 = vpack.c.bf16 %v576, %v576
      %v609 = vpack.c.bf16 %v577, %v577
      %v610 = vpack.c.bf16 %v578, %v578
      %v611 = vpack.c.bf16 %v579, %v579
      %v612 = vpack.c.bf16 %v580, %v580
      %645 = vrot.lane.b32.xlu0 %v581, 4
      %v646 = vpop.permute.xlu0 %645
      %647 = vrot.lane.b32.xlu0 %v582, 4
      %v648 = vpop.permute.xlu0 %647
      %649 = vrot.lane.b32.xlu0 %v583, 4
      %v650 = vpop.permute.xlu0 %649
      %651 = vrot.lane.b32.xlu0 %v584, 4
      %v652 = vpop.permute.xlu0 %651
      %653 = vrot.lane.b32.xlu0 %v585, 4
      %v654 = vpop.permute.xlu0 %653
      %655 = vrot.lane.b32.xlu0 %v586, 4
      %v656 = vpop.permute.xlu0 %655
      %657 = vrot.lane.b32.xlu0 %v587, 4
      %v658 = vpop.permute.xlu0 %657
      %659 = vrot.lane.b32.xlu0 %v588, 4
      %v660 = vpop.permute.xlu0 %659
      %661 = vrot.lane.b32.xlu0 %v589, 4
      %v662 = vpop.permute.xlu0 %661
      %663 = vrot.lane.b32.xlu0 %v590, 4
      %v664 = vpop.permute.xlu0 %663
      %665 = vrot.lane.b32.xlu0 %v591, 4
      %v666 = vpop.permute.xlu0 %665
      %667 = vrot.lane.b32.xlu0 %v592, 4
      %v668 = vpop.permute.xlu0 %667
      %669 = vrot.lane.b32.xlu0 %v593, 4
      %v670 = vpop.permute.xlu0 %669
      %671 = vrot.lane.b32.xlu0 %v594, 4
      %v672 = vpop.permute.xlu0 %671
      %673 = vrot.lane.b32.xlu0 %v595, 4
      %v674 = vpop.permute.xlu0 %673
      %675 = vrot.lane.b32.xlu0 %v596, 4
      %v676 = vpop.permute.xlu0 %675
      %677 = vrot.lane.b32.xlu0 %v597, 4
      %v678 = vpop.permute.xlu0 %677
      %679 = vrot.lane.b32.xlu0 %v598, 4
      %v680 = vpop.permute.xlu0 %679
      %681 = vrot.lane.b32.xlu0 %v599, 4
      %v682 = vpop.permute.xlu0 %681
      %683 = vrot.lane.b32.xlu0 %v600, 4
      %v684 = vpop.permute.xlu0 %683
      %685 = vrot.lane.b32.xlu0 %v601, 4
      %v686 = vpop.permute.xlu0 %685
      %687 = vrot.lane.b32.xlu0 %v602, 4
      %v688 = vpop.permute.xlu0 %687
      %689 = vrot.lane.b32.xlu0 %v603, 4
      %v690 = vpop.permute.xlu0 %689
      %691 = vrot.lane.b32.xlu0 %v604, 4
      %v692 = vpop.permute.xlu0 %691
      %693 = vrot.lane.b32.xlu0 %v605, 4
      %v694 = vpop.permute.xlu0 %693
      %695 = vrot.lane.b32.xlu0 %v606, 4
      %v696 = vpop.permute.xlu0 %695
      %697 = vrot.lane.b32.xlu0 %v607, 4
      %v698 = vpop.permute.xlu0 %697
      %699 = vrot.lane.b32.xlu0 %v608, 4
      %v700 = vpop.permute.xlu0 %699
      %701 = vrot.lane.b32.xlu0 %v609, 4
      %v702 = vpop.permute.xlu0 %701
      %703 = vrot.lane.b32.xlu0 %v610, 4
      %v704 = vpop.permute.xlu0 %703
      %705 = vrot.lane.b32.xlu0 %v611, 4
      %v706 = vpop.permute.xlu0 %705
      %707 = vrot.lane.b32.xlu0 %v612, 4
      %v708 = vpop.permute.xlu0 %707
      %vm741 = vcmask 60448
      %742 = vst.msk [vmem:[#allocation3] sm:$0xf] %vm741, %v646
      %743 = vst.msk [vmem:[#allocation3 + $0x4] sm:$0xf] %vm741, %v648
      %744 = vst.msk [vmem:[#allocation3 + $0x8] sm:$0xf] %vm741, %v650
      %745 = vst.msk [vmem:[#allocation3 + $0xc] sm:$0xf] %vm741, %v652
      %746 = vst.msk [vmem:[#allocation3 + $0x10] sm:$0xf] %vm741, %v654
      %747 = vst.msk [vmem:[#allocation3 + $0x14] sm:$0xf] %vm741, %v656
      %748 = vst.msk [vmem:[#allocation3 + $0x18] sm:$0xf] %vm741, %v658
      %749 = vst.msk [vmem:[#allocation3 + $0x1c] sm:$0xf] %vm741, %v660
      %750 = vst.msk [vmem:[#allocation3 + $0x20] sm:$0xf] %vm741, %v662
      %751 = vst.msk [vmem:[#allocation3 + $0x24] sm:$0xf] %vm741, %v664
      %752 = vst.msk [vmem:[#allocation3 + $0x28] sm:$0xf] %vm741, %v666
      %753 = vst.msk [vmem:[#allocation3 + $0x2c] sm:$0xf] %vm741, %v668
      %754 = vst.msk [vmem:[#allocation3 + $0x30] sm:$0xf] %vm741, %v670
      %755 = vst.msk [vmem:[#allocation3 + $0x34] sm:$0xf] %vm741, %v672
      %756 = vst.msk [vmem:[#allocation3 + $0x38] sm:$0xf] %vm741, %v674
      %757 = vst.msk [vmem:[#allocation3 + $0x3c] sm:$0xf] %vm741, %v676
      %758 = vst.msk [vmem:[#allocation3 + $0x40] sm:$0xf] %vm741, %v678
      %759 = vst.msk [vmem:[#allocation3 + $0x44] sm:$0xf] %vm741, %v680
      %760 = vst.msk [vmem:[#allocation3 + $0x48] sm:$0xf] %vm741, %v682
      %761 = vst.msk [vmem:[#allocation3 + $0x4c] sm:$0xf] %vm741, %v684
      %762 = vst.msk [vmem:[#allocation3 + $0x50] sm:$0xf] %vm741, %v686
      %763 = vst.msk [vmem:[#allocation3 + $0x54] sm:$0xf] %vm741, %v688
      %764 = vst.msk [vmem:[#allocation3 + $0x58] sm:$0xf] %vm741, %v690
      %765 = vst.msk [vmem:[#allocation3 + $0x5c] sm:$0xf] %vm741, %v692
      %766 = vst.msk [vmem:[#allocation3 + $0x60] sm:$0xf] %vm741, %v694
      %767 = vst.msk [vmem:[#allocation3 + $0x64] sm:$0xf] %vm741, %v696
      %768 = vst.msk [vmem:[#allocation3 + $0x68] sm:$0xf] %vm741, %v698
      %769 = vst.msk [vmem:[#allocation3 + $0x6c] sm:$0xf] %vm741, %v700
      %770 = vst.msk [vmem:[#allocation3 + $0x70] sm:$0xf] %vm741, %v702
      %771 = vst.msk [vmem:[#allocation3 + $0x74] sm:$0xf] %vm741, %v704
      %772 = vst.msk [vmem:[#allocation3 + $0x78] sm:$0xf] %vm741, %v706
      %773 = vst.msk [vmem:[#allocation3 + $0x7c] sm:$0xf] %vm741, %v708
      %v774 = vld [vmem:[#allocation2 + $0x2] sm:$0xff]
      %v775 = vld [vmem:[#allocation2 + $0xa] sm:$0xff]
      %v776 = vld [vmem:[#allocation2 + $0x1a] sm:$0xff]
      %v777 = vld [vmem:[#allocation2 + $0x22] sm:$0xff]
      %v778 = vld [vmem:[#allocation2 + $0x32] sm:$0xff]
      %v779 = vld [vmem:[#allocation2 + $0x3a] sm:$0xff]
      %v780 = vld [vmem:[#allocation2 + $0x4a] sm:$0xff]
      %v781 = vld [vmem:[#allocation2 + $0x52] sm:$0xff]
      %v782 = vld [vmem:[#allocation2 + $0x62] sm:$0xff]
      %v783 = vld [vmem:[#allocation2 + $0x6a] sm:$0xff]
      %v784 = vld [vmem:[#allocation2 + $0x7a] sm:$0xff]
      %v785 = vld [vmem:[#allocation2 + $0x82] sm:$0xff]
      %v786 = vld [vmem:[#allocation2 + $0x92] sm:$0xff]
      %v787 = vld [vmem:[#allocation2 + $0x9a] sm:$0xff]
      %v788 = vld [vmem:[#allocation2 + $0xaa] sm:$0xff]
      %v789 = vld [vmem:[#allocation2 + $0xb2] sm:$0xff]
      %v790 = vld [vmem:[#allocation2 + $0xc2] sm:$0xff]
      %v791 = vld [vmem:[#allocation2 + $0xca] sm:$0xff]
      %v792 = vld [vmem:[#allocation2 + $0xda] sm:$0xff]
      %v793 = vld [vmem:[#allocation2 + $0xe2] sm:$0xff]
      %v794 = vld [vmem:[#allocation2 + $0xf2] sm:$0xff]
      %v795 = vld [vmem:[#allocation2 + $0xfa] sm:$0xff]
      %v796 = vld [vmem:[#allocation2 + $0x10a] sm:$0xff]
      %v797 = vld [vmem:[#allocation2 + $0x112] sm:$0xff]
      %v798 = vld [vmem:[#allocation2 + $0x122] sm:$0xff]
      %v799 = vld [vmem:[#allocation2 + $0x12a] sm:$0xff]
      %v800 = vld [vmem:[#allocation2 + $0x13a] sm:$0xff]
      %v801 = vld [vmem:[#allocation2 + $0x142] sm:$0xff]
      %v802 = vld [vmem:[#allocation2 + $0x152] sm:$0xff]
      %v803 = vld [vmem:[#allocation2 + $0x15a] sm:$0xff]
      %v804 = vld [vmem:[#allocation2 + $0x16a] sm:$0xff]
      %v805 = vld [vmem:[#allocation2 + $0x172] sm:$0xff]
      %v806 = vpack.c.bf16 %v774, %v774
      %v807 = vpack.c.bf16 %v775, %v775
      %v808 = vpack.c.bf16 %v776, %v776
      %v809 = vpack.c.bf16 %v777, %v777
      %v810 = vpack.c.bf16 %v778, %v778
      %v811 = vpack.c.bf16 %v779, %v779
      %v812 = vpack.c.bf16 %v780, %v780
      %v813 = vpack.c.bf16 %v781, %v781
      %v814 = vpack.c.bf16 %v782, %v782
      %v815 = vpack.c.bf16 %v783, %v783
      %v816 = vpack.c.bf16 %v784, %v784
      %v817 = vpack.c.bf16 %v785, %v785
      %v818 = vpack.c.bf16 %v786, %v786
      %v819 = vpack.c.bf16 %v787, %v787
      %v820 = vpack.c.bf16 %v788, %v788
      %v821 = vpack.c.bf16 %v789, %v789
      %v822 = vpack.c.bf16 %v790, %v790
      %v823 = vpack.c.bf16 %v791, %v791
      %v824 = vpack.c.bf16 %v792, %v792
      %v825 = vpack.c.bf16 %v793, %v793
      %v826 = vpack.c.bf16 %v794, %v794
      %v827 = vpack.c.bf16 %v795, %v795
      %v828 = vpack.c.bf16 %v796, %v796
      %v829 = vpack.c.bf16 %v797, %v797
      %v830 = vpack.c.bf16 %v798, %v798
      %v831 = vpack.c.bf16 %v799, %v799
      %v832 = vpack.c.bf16 %v800, %v800
      %v833 = vpack.c.bf16 %v801, %v801
      %v834 = vpack.c.bf16 %v802, %v802
      %v835 = vpack.c.bf16 %v803, %v803
      %v836 = vpack.c.bf16 %v804, %v804
      %v837 = vpack.c.bf16 %v805, %v805
      %870 = vrot.lane.b32.xlu0 %v806, 8
      %v871 = vpop.permute.xlu0 %870
      %872 = vrot.lane.b32.xlu0 %v807, 8
      %v873 = vpop.permute.xlu0 %872
      %874 = vrot.lane.b32.xlu0 %v808, 8
      %v875 = vpop.permute.xlu0 %874
      %876 = vrot.lane.b32.xlu0 %v809, 8
      %v877 = vpop.permute.xlu0 %876
      %878 = vrot.lane.b32.xlu0 %v810, 8
      %v879 = vpop.permute.xlu0 %878
      %880 = vrot.lane.b32.xlu0 %v811, 8
      %v881 = vpop.permute.xlu0 %880
      %882 = vrot.lane.b32.xlu0 %v812, 8
      %v883 = vpop.permute.xlu0 %882
      %884 = vrot.lane.b32.xlu0 %v813, 8
      %v885 = vpop.permute.xlu0 %884
      %886 = vrot.lane.b32.xlu0 %v814, 8
      %v887 = vpop.permute.xlu0 %886
      %888 = vrot.lane.b32.xlu0 %v815, 8
      %v889 = vpop.permute.xlu0 %888
      %890 = vrot.lane.b32.xlu0 %v816, 8
      %v891 = vpop.permute.xlu0 %890
      %892 = vrot.lane.b32.xlu0 %v817, 8
      %v893 = vpop.permute.xlu0 %892
      %894 = vrot.lane.b32.xlu0 %v818, 8
      %v895 = vpop.permute.xlu0 %894
      %896 = vrot.lane.b32.xlu0 %v819, 8
      %v897 = vpop.permute.xlu0 %896
      %898 = vrot.lane.b32.xlu0 %v820, 8
      %v899 = vpop.permute.xlu0 %898
      %900 = vrot.lane.b32.xlu0 %v821, 8
      %v901 = vpop.permute.xlu0 %900
      %902 = vrot.lane.b32.xlu0 %v822, 8
      %v903 = vpop.permute.xlu0 %902
      %904 = vrot.lane.b32.xlu0 %v823, 8
      %v905 = vpop.permute.xlu0 %904
      %906 = vrot.lane.b32.xlu0 %v824, 8
      %v907 = vpop.permute.xlu0 %906
      %908 = vrot.lane.b32.xlu0 %v825, 8
      %v909 = vpop.permute.xlu0 %908
      %910 = vrot.lane.b32.xlu0 %v826, 8
      %v911 = vpop.permute.xlu0 %910
      %912 = vrot.lane.b32.xlu0 %v827, 8
      %v913 = vpop.permute.xlu0 %912
      %914 = vrot.lane.b32.xlu0 %v828, 8
      %v915 = vpop.permute.xlu0 %914
      %916 = vrot.lane.b32.xlu0 %v829, 8
      %v917 = vpop.permute.xlu0 %916
      %918 = vrot.lane.b32.xlu0 %v830, 8
      %v919 = vpop.permute.xlu0 %918
      %920 = vrot.lane.b32.xlu0 %v831, 8
      %v921 = vpop.permute.xlu0 %920
      %922 = vrot.lane.b32.xlu0 %v832, 8
      %v923 = vpop.permute.xlu0 %922
      %924 = vrot.lane.b32.xlu0 %v833, 8
      %v925 = vpop.permute.xlu0 %924
      %926 = vrot.lane.b32.xlu0 %v834, 8
      %v927 = vpop.permute.xlu0 %926
      %928 = vrot.lane.b32.xlu0 %v835, 8
      %v929 = vpop.permute.xlu0 %928
      %930 = vrot.lane.b32.xlu0 %v836, 8
      %v931 = vpop.permute.xlu0 %930
      %932 = vrot.lane.b32.xlu0 %v837, 8
      %v933 = vpop.permute.xlu0 %932
      %vm966 = vcmask 93248
      %967 = vst.msk [vmem:[#allocation3] sm:$0xf] %vm966, %v871
      %968 = vst.msk [vmem:[#allocation3 + $0x4] sm:$0xf] %vm966, %v873
      %969 = vst.msk [vmem:[#allocation3 + $0x8] sm:$0xf] %vm966, %v875
      %970 = vst.msk [vmem:[#allocation3 + $0xc] sm:$0xf] %vm966, %v877
      %971 = vst.msk [vmem:[#allocation3 + $0x10] sm:$0xf] %vm966, %v879
      %972 = vst.msk [vmem:[#allocation3 + $0x14] sm:$0xf] %vm966, %v881
      %973 = vst.msk [vmem:[#allocation3 + $0x18] sm:$0xf] %vm966, %v883
      %974 = vst.msk [vmem:[#allocation3 + $0x1c] sm:$0xf] %vm966, %v885
      %975 = vst.msk [vmem:[#allocation3 + $0x20] sm:$0xf] %vm966, %v887
      %976 = vst.msk [vmem:[#allocation3 + $0x24] sm:$0xf] %vm966, %v889
      %977 = vst.msk [vmem:[#allocation3 + $0x28] sm:$0xf] %vm966, %v891
      %978 = vst.msk [vmem:[#allocation3 + $0x2c] sm:$0xf] %vm966, %v893
      %979 = vst.msk [vmem:[#allocation3 + $0x30] sm:$0xf] %vm966, %v895
      %980 = vst.msk [vmem:[#allocation3 + $0x34] sm:$0xf] %vm966, %v897
      %981 = vst.msk [vmem:[#allocation3 + $0x38] sm:$0xf] %vm966, %v899
      %982 = vst.msk [vmem:[#allocation3 + $0x3c] sm:$0xf] %vm966, %v901
      %983 = vst.msk [vmem:[#allocation3 + $0x40] sm:$0xf] %vm966, %v903
      %984 = vst.msk [vmem:[#allocation3 + $0x44] sm:$0xf] %vm966, %v905
      %985 = vst.msk [vmem:[#allocation3 + $0x48] sm:$0xf] %vm966, %v907
      %986 = vst.msk [vmem:[#allocation3 + $0x4c] sm:$0xf] %vm966, %v909
      %987 = vst.msk [vmem:[#allocation3 + $0x50] sm:$0xf] %vm966, %v911
      %988 = vst.msk [vmem:[#allocation3 + $0x54] sm:$0xf] %vm966, %v913
      %989 = vst.msk [vmem:[#allocation3 + $0x58] sm:$0xf] %vm966, %v915
      %990 = vst.msk [vmem:[#allocation3 + $0x5c] sm:$0xf] %vm966, %v917
      %991 = vst.msk [vmem:[#allocation3 + $0x60] sm:$0xf] %vm966, %v919
      %992 = vst.msk [vmem:[#allocation3 + $0x64] sm:$0xf] %vm966, %v921
      %993 = vst.msk [vmem:[#allocation3 + $0x68] sm:$0xf] %vm966, %v923
      %994 = vst.msk [vmem:[#allocation3 + $0x6c] sm:$0xf] %vm966, %v925
      %995 = vst.msk [vmem:[#allocation3 + $0x70] sm:$0xf] %vm966, %v927
      %996 = vst.msk [vmem:[#allocation3 + $0x74] sm:$0xf] %vm966, %v929
      %997 = vst.msk [vmem:[#allocation3 + $0x78] sm:$0xf] %vm966, %v931
      %998 = vst.msk [vmem:[#allocation3 + $0x7c] sm:$0xf] %vm966, %v933
      %v999 = vld [vmem:[%s419] sm:$0xff]
      %v1000 = vld [vmem:[%s419 + $0x8] sm:$0xff]
      %v1001 = vld [vmem:[%s419 + $0x18] sm:$0xff]
      %v1002 = vld [vmem:[%s419 + $0x20] sm:$0xff]
      %v1003 = vld [vmem:[%s419 + $0x30] sm:$0xff]
      %v1004 = vld [vmem:[%s419 + $0x38] sm:$0xff]
      %v1005 = vld [vmem:[%s419 + $0x48] sm:$0xff]
      %v1006 = vld [vmem:[%s419 + $0x50] sm:$0xff]
      %v1007 = vld [vmem:[%s419 + $0x60] sm:$0xff]
      %v1008 = vld [vmem:[%s419 + $0x68] sm:$0xff]
      %v1009 = vld [vmem:[%s419 + $0x78] sm:$0xff]
      %v1010 = vld [vmem:[%s419 + $0x80] sm:$0xff]
      %v1011 = vld [vmem:[%s419 + $0x90] sm:$0xff]
      %v1012 = vld [vmem:[%s419 + $0x98] sm:$0xff]
      %v1013 = vld [vmem:[%s419 + $0xa8] sm:$0xff]
      %v1014 = vld [vmem:[%s419 + $0xb0] sm:$0xff]
      %v1015 = vld [vmem:[%s419 + $0xc0] sm:$0xff]
      %v1016 = vld [vmem:[%s419 + $0xc8] sm:$0xff]
      %v1017 = vld [vmem:[%s419 + $0xd8] sm:$0xff]
      %v1018 = vld [vmem:[%s419 + $0xe0] sm:$0xff]
      %v1019 = vld [vmem:[%s419 + $0xf0] sm:$0xff]
      %v1020 = vld [vmem:[%s419 + $0xf8] sm:$0xff]
      %v1021 = vld [vmem:[%s419 + $0x108] sm:$0xff]
      %v1022 = vld [vmem:[%s419 + $0x110] sm:$0xff]
      %v1023 = vld [vmem:[%s419 + $0x120] sm:$0xff]
      %v1024 = vld [vmem:[%s419 + $0x128] sm:$0xff]
      %v1025 = vld [vmem:[%s419 + $0x138] sm:$0xff]
      %v1026 = vld [vmem:[%s419 + $0x140] sm:$0xff]
      %v1027 = vld [vmem:[%s419 + $0x150] sm:$0xff]
      %v1028 = vld [vmem:[%s419 + $0x158] sm:$0xff]
      %v1029 = vld [vmem:[%s419 + $0x168] sm:$0xff]
      %v1030 = vld [vmem:[%s419 + $0x170] sm:$0xff]
      %v1031 = vpack.c.bf16 %v999, %v999
      %v1032 = vpack.c.bf16 %v1000, %v1000
      %v1033 = vpack.c.bf16 %v1001, %v1001
      %v1034 = vpack.c.bf16 %v1002, %v1002
      %v1035 = vpack.c.bf16 %v1003, %v1003
      %v1036 = vpack.c.bf16 %v1004, %v1004
      %v1037 = vpack.c.bf16 %v1005, %v1005
      %v1038 = vpack.c.bf16 %v1006, %v1006
      %v1039 = vpack.c.bf16 %v1007, %v1007
      %v1040 = vpack.c.bf16 %v1008, %v1008
      %v1041 = vpack.c.bf16 %v1009, %v1009
      %v1042 = vpack.c.bf16 %v1010, %v1010
      %v1043 = vpack.c.bf16 %v1011, %v1011
      %v1044 = vpack.c.bf16 %v1012, %v1012
      %v1045 = vpack.c.bf16 %v1013, %v1013
      %v1046 = vpack.c.bf16 %v1014, %v1014
      %v1047 = vpack.c.bf16 %v1015, %v1015
      %v1048 = vpack.c.bf16 %v1016, %v1016
      %v1049 = vpack.c.bf16 %v1017, %v1017
      %v1050 = vpack.c.bf16 %v1018, %v1018
      %v1051 = vpack.c.bf16 %v1019, %v1019
      %v1052 = vpack.c.bf16 %v1020, %v1020
      %v1053 = vpack.c.bf16 %v1021, %v1021
      %v1054 = vpack.c.bf16 %v1022, %v1022
      %v1055 = vpack.c.bf16 %v1023, %v1023
      %v1056 = vpack.c.bf16 %v1024, %v1024
      %v1057 = vpack.c.bf16 %v1025, %v1025
      %v1058 = vpack.c.bf16 %v1026, %v1026
      %v1059 = vpack.c.bf16 %v1027, %v1027
      %v1060 = vpack.c.bf16 %v1028, %v1028
      %v1061 = vpack.c.bf16 %v1029, %v1029
      %v1062 = vpack.c.bf16 %v1030, %v1030
      %1095 = vrot.lane.b32.xlu0 %v1031, 12
      %v1096 = vpop.permute.xlu0 %1095
      %1097 = vrot.lane.b32.xlu0 %v1032, 12
      %v1098 = vpop.permute.xlu0 %1097
      %1099 = vrot.lane.b32.xlu0 %v1033, 12
      %v1100 = vpop.permute.xlu0 %1099
      %1101 = vrot.lane.b32.xlu0 %v1034, 12
      %v1102 = vpop.permute.xlu0 %1101
      %1103 = vrot.lane.b32.xlu0 %v1035, 12
      %v1104 = vpop.permute.xlu0 %1103
      %1105 = vrot.lane.b32.xlu0 %v1036, 12
      %v1106 = vpop.permute.xlu0 %1105
      %1107 = vrot.lane.b32.xlu0 %v1037, 12
      %v1108 = vpop.permute.xlu0 %1107
      %1109 = vrot.lane.b32.xlu0 %v1038, 12
      %v1110 = vpop.permute.xlu0 %1109
      %1111 = vrot.lane.b32.xlu0 %v1039, 12
      %v1112 = vpop.permute.xlu0 %1111
      %1113 = vrot.lane.b32.xlu0 %v1040, 12
      %v1114 = vpop.permute.xlu0 %1113
      %1115 = vrot.lane.b32.xlu0 %v1041, 12
      %v1116 = vpop.permute.xlu0 %1115
      %1117 = vrot.lane.b32.xlu0 %v1042, 12
      %v1118 = vpop.permute.xlu0 %1117
      %1119 = vrot.lane.b32.xlu0 %v1043, 12
      %v1120 = vpop.permute.xlu0 %1119
      %1121 = vrot.lane.b32.xlu0 %v1044, 12
      %v1122 = vpop.permute.xlu0 %1121
      %1123 = vrot.lane.b32.xlu0 %v1045, 12
      %v1124 = vpop.permute.xlu0 %1123
      %1125 = vrot.lane.b32.xlu0 %v1046, 12
      %v1126 = vpop.permute.xlu0 %1125
      %1127 = vrot.lane.b32.xlu0 %v1047, 12
      %v1128 = vpop.permute.xlu0 %1127
      %1129 = vrot.lane.b32.xlu0 %v1048, 12
      %v1130 = vpop.permute.xlu0 %1129
      %1131 = vrot.lane.b32.xlu0 %v1049, 12
      %v1132 = vpop.permute.xlu0 %1131
      %1133 = vrot.lane.b32.xlu0 %v1050, 12
      %v1134 = vpop.permute.xlu0 %1133
      %1135 = vrot.lane.b32.xlu0 %v1051, 12
      %v1136 = vpop.permute.xlu0 %1135
      %1137 = vrot.lane.b32.xlu0 %v1052, 12
      %v1138 = vpop.permute.xlu0 %1137
      %1139 = vrot.lane.b32.xlu0 %v1053, 12
      %v1140 = vpop.permute.xlu0 %1139
      %1141 = vrot.lane.b32.xlu0 %v1054, 12
      %v1142 = vpop.permute.xlu0 %1141
      %1143 = vrot.lane.b32.xlu0 %v1055, 12
      %v1144 = vpop.permute.xlu0 %1143
      %1145 = vrot.lane.b32.xlu0 %v1056, 12
      %v1146 = vpop.permute.xlu0 %1145
      %1147 = vrot.lane.b32.xlu0 %v1057, 12
      %v1148 = vpop.permute.xlu0 %1147
      %1149 = vrot.lane.b32.xlu0 %v1058, 12
      %v1150 = vpop.permute.xlu0 %1149
      %1151 = vrot.lane.b32.xlu0 %v1059, 12
      %v1152 = vpop.permute.xlu0 %1151
      %1153 = vrot.lane.b32.xlu0 %v1060, 12
      %v1154 = vpop.permute.xlu0 %1153
      %1155 = vrot.lane.b32.xlu0 %v1061, 12
      %v1156 = vpop.permute.xlu0 %1155
      %1157 = vrot.lane.b32.xlu0 %v1062, 12
      %v1158 = vpop.permute.xlu0 %1157
      %vm1191 = vcmask 126048
      %1192 = vst.msk [vmem:[#allocation3] sm:$0xf] %vm1191, %v1096
      %1193 = vst.msk [vmem:[#allocation3 + $0x4] sm:$0xf] %vm1191, %v1098
      %1194 = vst.msk [vmem:[#allocation3 + $0x8] sm:$0xf] %vm1191, %v1100
      %1195 = vst.msk [vmem:[#allocation3 + $0xc] sm:$0xf] %vm1191, %v1102
      %1196 = vst.msk [vmem:[#allocation3 + $0x10] sm:$0xf] %vm1191, %v1104
      %1197 = vst.msk [vmem:[#allocation3 + $0x14] sm:$0xf] %vm1191, %v1106
      %1198 = vst.msk [vmem:[#allocation3 + $0x18] sm:$0xf] %vm1191, %v1108
      %1199 = vst.msk [vmem:[#allocation3 + $0x1c] sm:$0xf] %vm1191, %v1110
      %1200 = vst.msk [vmem:[#allocation3 + $0x20] sm:$0xf] %vm1191, %v1112
      %1201 = vst.msk [vmem:[#allocation3 + $0x24] sm:$0xf] %vm1191, %v1114
      %1202 = vst.msk [vmem:[#allocation3 + $0x28] sm:$0xf] %vm1191, %v1116
      %1203 = vst.msk [vmem:[#allocation3 + $0x2c] sm:$0xf] %vm1191, %v1118
      %1204 = vst.msk [vmem:[#allocation3 + $0x30] sm:$0xf] %vm1191, %v1120
      %1205 = vst.msk [vmem:[#allocation3 + $0x34] sm:$0xf] %vm1191, %v1122
      %1206 = vst.msk [vmem:[#allocation3 + $0x38] sm:$0xf] %vm1191, %v1124
      %1207 = vst.msk [vmem:[#allocation3 + $0x3c] sm:$0xf] %vm1191, %v1126
      %1208 = vst.msk [vmem:[#allocation3 + $0x40] sm:$0xf] %vm1191, %v1128
      %1209 = vst.msk [vmem:[#allocation3 + $0x44] sm:$0xf] %vm1191, %v1130
      %1210 = vst.msk [vmem:[#allocation3 + $0x48] sm:$0xf] %vm1191, %v1132
      %1211 = vst.msk [vmem:[#allocation3 + $0x4c] sm:$0xf] %vm1191, %v1134
      %1212 = vst.msk [vmem:[#allocation3 + $0x50] sm:$0xf] %vm1191, %v1136
      %1213 = vst.msk [vmem:[#allocation3 + $0x54] sm:$0xf] %vm1191, %v1138
      %1214 = vst.msk [vmem:[#allocation3 + $0x58] sm:$0xf] %vm1191, %v1140
      %1215 = vst.msk [vmem:[#allocation3 + $0x5c] sm:$0xf] %vm1191, %v1142
      %1216 = vst.msk [vmem:[#allocation3 + $0x60] sm:$0xf] %vm1191, %v1144
      %1217 = vst.msk [vmem:[#allocation3 + $0x64] sm:$0xf] %vm1191, %v1146
      %1218 = vst.msk [vmem:[#allocation3 + $0x68] sm:$0xf] %vm1191, %v1148
      %1219 = vst.msk [vmem:[#allocation3 + $0x6c] sm:$0xf] %vm1191, %v1150
      %1220 = vst.msk [vmem:[#allocation3 + $0x70] sm:$0xf] %vm1191, %v1152
      %1221 = vst.msk [vmem:[#allocation3 + $0x74] sm:$0xf] %vm1191, %v1154
      %1222 = vst.msk [vmem:[#allocation3 + $0x78] sm:$0xf] %vm1191, %v1156
      %1223 = vst.msk [vmem:[#allocation3 + $0x7c] sm:$0xf] %vm1191, %v1158
      %v1224 = vld [vmem:[%s419 + $0x1] sm:$0xff]
      %v1225 = vld [vmem:[%s419 + $0x9] sm:$0xff]
      %v1226 = vld [vmem:[%s419 + $0x19] sm:$0xff]
      %v1227 = vld [vmem:[%s419 + $0x21] sm:$0xff]
      %v1228 = vld [vmem:[%s419 + $0x31] sm:$0xff]
      %v1229 = vld [vmem:[%s419 + $0x39] sm:$0xff]
      %v1230 = vld [vmem:[%s419 + $0x49] sm:$0xff]
      %v1231 = vld [vmem:[%s419 + $0x51] sm:$0xff]
      %v1232 = vld [vmem:[%s419 + $0x61] sm:$0xff]
      %v1233 = vld [vmem:[%s419 + $0x69] sm:$0xff]
      %v1234 = vld [vmem:[%s419 + $0x79] sm:$0xff]
      %v1235 = vld [vmem:[%s419 + $0x81] sm:$0xff]
      %v1236 = vld [vmem:[%s419 + $0x91] sm:$0xff]
      %v1237 = vld [vmem:[%s419 + $0x99] sm:$0xff]
      %v1238 = vld [vmem:[%s419 + $0xa9] sm:$0xff]
      %v1239 = vld [vmem:[%s419 + $0xb1] sm:$0xff]
      %v1240 = vld [vmem:[%s419 + $0xc1] sm:$0xff]
      %v1241 = vld [vmem:[%s419 + $0xc9] sm:$0xff]
      %v1242 = vld [vmem:[%s419 + $0xd9] sm:$0xff]
      %v1243 = vld [vmem:[%s419 + $0xe1] sm:$0xff]
      %v1244 = vld [vmem:[%s419 + $0xf1] sm:$0xff]
      %v1245 = vld [vmem:[%s419 + $0xf9] sm:$0xff]
      %v1246 = vld [vmem:[%s419 + $0x109] sm:$0xff]
      %v1247 = vld [vmem:[%s419 + $0x111] sm:$0xff]
      %v1248 = vld [vmem:[%s419 + $0x121] sm:$0xff]
      %v1249 = vld [vmem:[%s419 + $0x129] sm:$0xff]
      %v1250 = vld [vmem:[%s419 + $0x139] sm:$0xff]
      %v1251 = vld [vmem:[%s419 + $0x141] sm:$0xff]
      %v1252 = vld [vmem:[%s419 + $0x151] sm:$0xff]
      %v1253 = vld [vmem:[%s419 + $0x159] sm:$0xff]
      %v1254 = vld [vmem:[%s419 + $0x169] sm:$0xff]
      %v1255 = vld [vmem:[%s419 + $0x171] sm:$0xff]
      %v1256 = vpack.c.bf16 %v1224, %v1224
      %v1257 = vpack.c.bf16 %v1225, %v1225
      %v1258 = vpack.c.bf16 %v1226, %v1226
      %v1259 = vpack.c.bf16 %v1227, %v1227
      %v1260 = vpack.c.bf16 %v1228, %v1228
      %v1261 = vpack.c.bf16 %v1229, %v1229
      %v1262 = vpack.c.bf16 %v1230, %v1230
      %v1263 = vpack.c.bf16 %v1231, %v1231
      %v1264 = vpack.c.bf16 %v1232, %v1232
      %v1265 = vpack.c.bf16 %v1233, %v1233
      %v1266 = vpack.c.bf16 %v1234, %v1234
      %v1267 = vpack.c.bf16 %v1235, %v1235
      %v1268 = vpack.c.bf16 %v1236, %v1236
      %v1269 = vpack.c.bf16 %v1237, %v1237
      %v1270 = vpack.c.bf16 %v1238, %v1238
      %v1271 = vpack.c.bf16 %v1239, %v1239
      %v1272 = vpack.c.bf16 %v1240, %v1240
      %v1273 = vpack.c.bf16 %v1241, %v1241
      %v1274 = vpack.c.bf16 %v1242, %v1242
      %v1275 = vpack.c.bf16 %v1243, %v1243
      %v1276 = vpack.c.bf16 %v1244, %v1244
      %v1277 = vpack.c.bf16 %v1245, %v1245
      %v1278 = vpack.c.bf16 %v1246, %v1246
      %v1279 = vpack.c.bf16 %v1247, %v1247
      %v1280 = vpack.c.bf16 %v1248, %v1248
      %v1281 = vpack.c.bf16 %v1249, %v1249
      %v1282 = vpack.c.bf16 %v1250, %v1250
      %v1283 = vpack.c.bf16 %v1251, %v1251
      %v1284 = vpack.c.bf16 %v1252, %v1252
      %v1285 = vpack.c.bf16 %v1253, %v1253
      %v1286 = vpack.c.bf16 %v1254, %v1254
      %v1287 = vpack.c.bf16 %v1255, %v1255
      %1320 = vrot.lane.b32.xlu0 %v1256, 16
      %v1321 = vpop.permute.xlu0 %1320
      %1322 = vrot.lane.b32.xlu0 %v1257, 16
      %v1323 = vpop.permute.xlu0 %1322
      %1324 = vrot.lane.b32.xlu0 %v1258, 16
      %v1325 = vpop.permute.xlu0 %1324
      %1326 = vrot.lane.b32.xlu0 %v1259, 16
      %v1327 = vpop.permute.xlu0 %1326
      %1328 = vrot.lane.b32.xlu0 %v1260, 16
      %v1329 = vpop.permute.xlu0 %1328
      %1330 = vrot.lane.b32.xlu0 %v1261, 16
      %v1331 = vpop.permute.xlu0 %1330
      %1332 = vrot.lane.b32.xlu0 %v1262, 16
      %v1333 = vpop.permute.xlu0 %1332
      %1334 = vrot.lane.b32.xlu0 %v1263, 16
      %v1335 = vpop.permute.xlu0 %1334
      %1336 = vrot.lane.b32.xlu0 %v1264, 16
      %v1337 = vpop.permute.xlu0 %1336
      %1338 = vrot.lane.b32.xlu0 %v1265, 16
      %v1339 = vpop.permute.xlu0 %1338
      %1340 = vrot.lane.b32.xlu0 %v1266, 16
      %v1341 = vpop.permute.xlu0 %1340
      %1342 = vrot.lane.b32.xlu0 %v1267, 16
      %v1343 = vpop.permute.xlu0 %1342
      %1344 = vrot.lane.b32.xlu0 %v1268, 16
      %v1345 = vpop.permute.xlu0 %1344
      %1346 = vrot.lane.b32.xlu0 %v1269, 16
      %v1347 = vpop.permute.xlu0 %1346
      %1348 = vrot.lane.b32.xlu0 %v1270, 16
      %v1349 = vpop.permute.xlu0 %1348
      %1350 = vrot.lane.b32.xlu0 %v1271, 16
      %v1351 = vpop.permute.xlu0 %1350
      %1352 = vrot.lane.b32.xlu0 %v1272, 16
      %v1353 = vpop.permute.xlu0 %1352
      %1354 = vrot.lane.b32.xlu0 %v1273, 16
      %v1355 = vpop.permute.xlu0 %1354
      %1356 = vrot.lane.b32.xlu0 %v1274, 16
      %v1357 = vpop.permute.xlu0 %1356
      %1358 = vrot.lane.b32.xlu0 %v1275, 16
      %v1359 = vpop.permute.xlu0 %1358
      %1360 = vrot.lane.b32.xlu0 %v1276, 16
      %v1361 = vpop.permute.xlu0 %1360
      %1362 = vrot.lane.b32.xlu0 %v1277, 16
      %v1363 = vpop.permute.xlu0 %1362
      %1364 = vrot.lane.b32.xlu0 %v1278, 16
      %v1365 = vpop.permute.xlu0 %1364
      %1366 = vrot.lane.b32.xlu0 %v1279, 16
      %v1367 = vpop.permute.xlu0 %1366
      %1368 = vrot.lane.b32.xlu0 %v1280, 16
      %v1369 = vpop.permute.xlu0 %1368
      %1370 = vrot.lane.b32.xlu0 %v1281, 16
      %v1371 = vpop.permute.xlu0 %1370
      %1372 = vrot.lane.b32.xlu0 %v1282, 16
      %v1373 = vpop.permute.xlu0 %1372
      %1374 = vrot.lane.b32.xlu0 %v1283, 16
      %v1375 = vpop.permute.xlu0 %1374
      %1376 = vrot.lane.b32.xlu0 %v1284, 16
      %v1377 = vpop.permute.xlu0 %1376
      %1378 = vrot.lane.b32.xlu0 %v1285, 16
      %v1379 = vpop.permute.xlu0 %1378
      %1380 = vrot.lane.b32.xlu0 %v1286, 16
      %v1381 = vpop.permute.xlu0 %1380
      %1382 = vrot.lane.b32.xlu0 %v1287, 16
      %v1383 = vpop.permute.xlu0 %1382
      %vm1416 = vcmask 158848
      %1417 = vst.msk [vmem:[#allocation3] sm:$0xf] %vm1416, %v1321
      %1418 = vst.msk [vmem:[#allocation3 + $0x4] sm:$0xf] %vm1416, %v1323
      %1419 = vst.msk [vmem:[#allocation3 + $0x8] sm:$0xf] %vm1416, %v1325
      %1420 = vst.msk [vmem:[#allocation3 + $0xc] sm:$0xf] %vm1416, %v1327
      %1421 = vst.msk [vmem:[#allocation3 + $0x10] sm:$0xf] %vm1416, %v1329
      %1422 = vst.msk [vmem:[#allocation3 + $0x14] sm:$0xf] %vm1416, %v1331
      %1423 = vst.msk [vmem:[#allocation3 + $0x18] sm:$0xf] %vm1416, %v1333
      %1424 = vst.msk [vmem:[#allocation3 + $0x1c] sm:$0xf] %vm1416, %v1335
      %1425 = vst.msk [vmem:[#allocation3 + $0x20] sm:$0xf] %vm1416, %v1337
      %1426 = vst.msk [vmem:[#allocation3 + $0x24] sm:$0xf] %vm1416, %v1339
      %1427 = vst.msk [vmem:[#allocation3 + $0x28] sm:$0xf] %vm1416, %v1341
      %1428 = vst.msk [vmem:[#allocation3 + $0x2c] sm:$0xf] %vm1416, %v1343
      %1429 = vst.msk [vmem:[#allocation3 + $0x30] sm:$0xf] %vm1416, %v1345
      %1430 = vst.msk [vmem:[#allocation3 + $0x34] sm:$0xf] %vm1416, %v1347
      %1431 = vst.msk [vmem:[#allocation3 + $0x38] sm:$0xf] %vm1416, %v1349
      %1432 = vst.msk [vmem:[#allocation3 + $0x3c] sm:$0xf] %vm1416, %v1351
      %1433 = vst.msk [vmem:[#allocation3 + $0x40] sm:$0xf] %vm1416, %v1353
      %1434 = vst.msk [vmem:[#allocation3 + $0x44] sm:$0xf] %vm1416, %v1355
      %1435 = vst.msk [vmem:[#allocation3 + $0x48] sm:$0xf] %vm1416, %v1357
      %1436 = vst.msk [vmem:[#allocation3 + $0x4c] sm:$0xf] %vm1416, %v1359
      %1437 = vst.msk [vmem:[#allocation3 + $0x50] sm:$0xf] %vm1416, %v1361
      %1438 = vst.msk [vmem:[#allocation3 + $0x54] sm:$0xf] %vm1416, %v1363
      %1439 = vst.msk [vmem:[#allocation3 + $0x58] sm:$0xf] %vm1416, %v1365
      %1440 = vst.msk [vmem:[#allocation3 + $0x5c] sm:$0xf] %vm1416, %v1367
      %1441 = vst.msk [vmem:[#allocation3 + $0x60] sm:$0xf] %vm1416, %v1369
      %1442 = vst.msk [vmem:[#allocation3 + $0x64] sm:$0xf] %vm1416, %v1371
      %1443 = vst.msk [vmem:[#allocation3 + $0x68] sm:$0xf] %vm1416, %v1373
      %1444 = vst.msk [vmem:[#allocation3 + $0x6c] sm:$0xf] %vm1416, %v1375
      %1445 = vst.msk [vmem:[#allocation3 + $0x70] sm:$0xf] %vm1416, %v1377
      %1446 = vst.msk [vmem:[#allocation3 + $0x74] sm:$0xf] %vm1416, %v1379
      %1447 = vst.msk [vmem:[#allocation3 + $0x78] sm:$0xf] %vm1416, %v1381
      %1448 = vst.msk [vmem:[#allocation3 + $0x7c] sm:$0xf] %vm1416, %v1383
      %v1449 = vld [vmem:[%s419 + $0x2] sm:$0xff]
      %v1450 = vld [vmem:[%s419 + $0xa] sm:$0xff]
      %v1451 = vld [vmem:[%s419 + $0x1a] sm:$0xff]
      %v1452 = vld [vmem:[%s419 + $0x22] sm:$0xff]
      %v1453 = vld [vmem:[%s419 + $0x32] sm:$0xff]
      %v1454 = vld [vmem:[%s419 + $0x3a] sm:$0xff]
      %v1455 = vld [vmem:[%s419 + $0x4a] sm:$0xff]
      %v1456 = vld [vmem:[%s419 + $0x52] sm:$0xff]
      %v1457 = vld [vmem:[%s419 + $0x62] sm:$0xff]
      %v1458 = vld [vmem:[%s419 + $0x6a] sm:$0xff]
      %v1459 = vld [vmem:[%s419 + $0x7a] sm:$0xff]
      %v1460 = vld [vmem:[%s419 + $0x82] sm:$0xff]
      %v1461 = vld [vmem:[%s419 + $0x92] sm:$0xff]
      %v1462 = vld [vmem:[%s419 + $0x9a] sm:$0xff]
      %v1463 = vld [vmem:[%s419 + $0xaa] sm:$0xff]
      %v1464 = vld [vmem:[%s419 + $0xb2] sm:$0xff]
      %v1465 = vld [vmem:[%s419 + $0xc2] sm:$0xff]
      %v1466 = vld [vmem:[%s419 + $0xca] sm:$0xff]
      %v1467 = vld [vmem:[%s419 + $0xda] sm:$0xff]
      %v1468 = vld [vmem:[%s419 + $0xe2] sm:$0xff]
      %v1469 = vld [vmem:[%s419 + $0xf2] sm:$0xff]
      %v1470 = vld [vmem:[%s419 + $0xfa] sm:$0xff]
      %v1471 = vld [vmem:[%s419 + $0x10a] sm:$0xff]
      %v1472 = vld [vmem:[%s419 + $0x112] sm:$0xff]
      %v1473 = vld [vmem:[%s419 + $0x122] sm:$0xff]
      %v1474 = vld [vmem:[%s419 + $0x12a] sm:$0xff]
      %v1475 = vld [vmem:[%s419 + $0x13a] sm:$0xff]
      %v1476 = vld [vmem:[%s419 + $0x142] sm:$0xff]
      %v1477 = vld [vmem:[%s419 + $0x152] sm:$0xff]
      %v1478 = vld [vmem:[%s419 + $0x15a] sm:$0xff]
      %v1479 = vld [vmem:[%s419 + $0x16a] sm:$0xff]
      %v1480 = vld [vmem:[%s419 + $0x172] sm:$0xff]
      %v1481 = vpack.c.bf16 %v1449, %v1449
      %v1482 = vpack.c.bf16 %v1450, %v1450
      %v1483 = vpack.c.bf16 %v1451, %v1451
      %v1484 = vpack.c.bf16 %v1452, %v1452
      %v1485 = vpack.c.bf16 %v1453, %v1453
      %v1486 = vpack.c.bf16 %v1454, %v1454
      %v1487 = vpack.c.bf16 %v1455, %v1455
      %v1488 = vpack.c.bf16 %v1456, %v1456
      %v1489 = vpack.c.bf16 %v1457, %v1457
      %v1490 = vpack.c.bf16 %v1458, %v1458
      %v1491 = vpack.c.bf16 %v1459, %v1459
      %v1492 = vpack.c.bf16 %v1460, %v1460
      %v1493 = vpack.c.bf16 %v1461, %v1461
      %v1494 = vpack.c.bf16 %v1462, %v1462
      %v1495 = vpack.c.bf16 %v1463, %v1463
      %v1496 = vpack.c.bf16 %v1464, %v1464
      %v1497 = vpack.c.bf16 %v1465, %v1465
      %v1498 = vpack.c.bf16 %v1466, %v1466
      %v1499 = vpack.c.bf16 %v1467, %v1467
      %v1500 = vpack.c.bf16 %v1468, %v1468
      %v1501 = vpack.c.bf16 %v1469, %v1469
      %v1502 = vpack.c.bf16 %v1470, %v1470
      %v1503 = vpack.c.bf16 %v1471, %v1471
      %v1504 = vpack.c.bf16 %v1472, %v1472
      %v1505 = vpack.c.bf16 %v1473, %v1473
      %v1506 = vpack.c.bf16 %v1474, %v1474
      %v1507 = vpack.c.bf16 %v1475, %v1475
      %v1508 = vpack.c.bf16 %v1476, %v1476
      %v1509 = vpack.c.bf16 %v1477, %v1477
      %v1510 = vpack.c.bf16 %v1478, %v1478
      %v1511 = vpack.c.bf16 %v1479, %v1479
      %v1512 = vpack.c.bf16 %v1480, %v1480
      %1545 = vrot.lane.b32.xlu0 %v1481, 20
      %v1546 = vpop.permute.xlu0 %1545
      %1547 = vrot.lane.b32.xlu0 %v1482, 20
      %v1548 = vpop.permute.xlu0 %1547
      %1549 = vrot.lane.b32.xlu0 %v1483, 20
      %v1550 = vpop.permute.xlu0 %1549
      %1551 = vrot.lane.b32.xlu0 %v1484, 20
      %v1552 = vpop.permute.xlu0 %1551
      %1553 = vrot.lane.b32.xlu0 %v1485, 20
      %v1554 = vpop.permute.xlu0 %1553
      %1555 = vrot.lane.b32.xlu0 %v1486, 20
      %v1556 = vpop.permute.xlu0 %1555
      %1557 = vrot.lane.b32.xlu0 %v1487, 20
      %v1558 = vpop.permute.xlu0 %1557
      %1559 = vrot.lane.b32.xlu0 %v1488, 20
      %v1560 = vpop.permute.xlu0 %1559
      %1561 = vrot.lane.b32.xlu0 %v1489, 20
      %v1562 = vpop.permute.xlu0 %1561
      %1563 = vrot.lane.b32.xlu0 %v1490, 20
      %v1564 = vpop.permute.xlu0 %1563
      %1565 = vrot.lane.b32.xlu0 %v1491, 20
      %v1566 = vpop.permute.xlu0 %1565
      %1567 = vrot.lane.b32.xlu0 %v1492, 20
      %v1568 = vpop.permute.xlu0 %1567
      %1569 = vrot.lane.b32.xlu0 %v1493, 20
      %v1570 = vpop.permute.xlu0 %1569
      %1571 = vrot.lane.b32.xlu0 %v1494, 20
      %v1572 = vpop.permute.xlu0 %1571
      %1573 = vrot.lane.b32.xlu0 %v1495, 20
      %v1574 = vpop.permute.xlu0 %1573
      %1575 = vrot.lane.b32.xlu0 %v1496, 20
      %v1576 = vpop.permute.xlu0 %1575
      %1577 = vrot.lane.b32.xlu0 %v1497, 20
      %v1578 = vpop.permute.xlu0 %1577
      %1579 = vrot.lane.b32.xlu0 %v1498, 20
      %v1580 = vpop.permute.xlu0 %1579
      %1581 = vrot.lane.b32.xlu0 %v1499, 20
      %v1582 = vpop.permute.xlu0 %1581
      %1583 = vrot.lane.b32.xlu0 %v1500, 20
      %v1584 = vpop.permute.xlu0 %1583
      %1585 = vrot.lane.b32.xlu0 %v1501, 20
      %v1586 = vpop.permute.xlu0 %1585
      %1587 = vrot.lane.b32.xlu0 %v1502, 20
      %v1588 = vpop.permute.xlu0 %1587
      %1589 = vrot.lane.b32.xlu0 %v1503, 20
      %v1590 = vpop.permute.xlu0 %1589
      %1591 = vrot.lane.b32.xlu0 %v1504, 20
      %v1592 = vpop.permute.xlu0 %1591
      %1593 = vrot.lane.b32.xlu0 %v1505, 20
      %v1594 = vpop.permute.xlu0 %1593
      %1595 = vrot.lane.b32.xlu0 %v1506, 20
      %v1596 = vpop.permute.xlu0 %1595
      %1597 = vrot.lane.b32.xlu0 %v1507, 20
      %v1598 = vpop.permute.xlu0 %1597
      %1599 = vrot.lane.b32.xlu0 %v1508, 20
      %v1600 = vpop.permute.xlu0 %1599
      %1601 = vrot.lane.b32.xlu0 %v1509, 20
      %v1602 = vpop.permute.xlu0 %1601
      %1603 = vrot.lane.b32.xlu0 %v1510, 20
      %v1604 = vpop.permute.xlu0 %1603
      %1605 = vrot.lane.b32.xlu0 %v1511, 20
      %v1606 = vpop.permute.xlu0 %1605
      %1607 = vrot.lane.b32.xlu0 %v1512, 20
      %v1608 = vpop.permute.xlu0 %1607
      %vm1641 = vcmask 191648
      %1642 = vst.msk [vmem:[#allocation3] sm:$0xf] %vm1641, %v1546
      %1643 = vst.msk [vmem:[#allocation3 + $0x4] sm:$0xf] %vm1641, %v1548
      %1644 = vst.msk [vmem:[#allocation3 + $0x8] sm:$0xf] %vm1641, %v1550
      %1645 = vst.msk [vmem:[#allocation3 + $0xc] sm:$0xf] %vm1641, %v1552
      %1646 = vst.msk [vmem:[#allocation3 + $0x10] sm:$0xf] %vm1641, %v1554
      %1647 = vst.msk [vmem:[#allocation3 + $0x14] sm:$0xf] %vm1641, %v1556
      %1648 = vst.msk [vmem:[#allocation3 + $0x18] sm:$0xf] %vm1641, %v1558
      %1649 = vst.msk [vmem:[#allocation3 + $0x1c] sm:$0xf] %vm1641, %v1560
      %1650 = vst.msk [vmem:[#allocation3 + $0x20] sm:$0xf] %vm1641, %v1562
      %1651 = vst.msk [vmem:[#allocation3 + $0x24] sm:$0xf] %vm1641, %v1564
      %1652 = vst.msk [vmem:[#allocation3 + $0x28] sm:$0xf] %vm1641, %v1566
      %1653 = vst.msk [vmem:[#allocation3 + $0x2c] sm:$0xf] %vm1641, %v1568
      %1654 = vst.msk [vmem:[#allocation3 + $0x30] sm:$0xf] %vm1641, %v1570
      %1655 = vst.msk [vmem:[#allocation3 + $0x34] sm:$0xf] %vm1641, %v1572
      %1656 = vst.msk [vmem:[#allocation3 + $0x38] sm:$0xf] %vm1641, %v1574
      %1657 = vst.msk [vmem:[#allocation3 + $0x3c] sm:$0xf] %vm1641, %v1576
      %1658 = vst.msk [vmem:[#allocation3 + $0x40] sm:$0xf] %vm1641, %v1578
      %1659 = vst.msk [vmem:[#allocation3 + $0x44] sm:$0xf] %vm1641, %v1580
      %1660 = vst.msk [vmem:[#allocation3 + $0x48] sm:$0xf] %vm1641, %v1582
      %1661 = vst.msk [vmem:[#allocation3 + $0x4c] sm:$0xf] %vm1641, %v1584
      %1662 = vst.msk [vmem:[#allocation3 + $0x50] sm:$0xf] %vm1641, %v1586
      %1663 = vst.msk [vmem:[#allocation3 + $0x54] sm:$0xf] %vm1641, %v1588
      %1664 = vst.msk [vmem:[#allocation3 + $0x58] sm:$0xf] %vm1641, %v1590
      %1665 = vst.msk [vmem:[#allocation3 + $0x5c] sm:$0xf] %vm1641, %v1592
      %1666 = vst.msk [vmem:[#allocation3 + $0x60] sm:$0xf] %vm1641, %v1594
      %1667 = vst.msk [vmem:[#allocation3 + $0x64] sm:$0xf] %vm1641, %v1596
      %1668 = vst.msk [vmem:[#allocation3 + $0x68] sm:$0xf] %vm1641, %v1598
      %1669 = vst.msk [vmem:[#allocation3 + $0x6c] sm:$0xf] %vm1641, %v1600
      %1670 = vst.msk [vmem:[#allocation3 + $0x70] sm:$0xf] %vm1641, %v1602
      %1671 = vst.msk [vmem:[#allocation3 + $0x74] sm:$0xf] %vm1641, %v1604
      %1672 = vst.msk [vmem:[#allocation3 + $0x78] sm:$0xf] %vm1641, %v1606
      %1673 = vst.msk [vmem:[#allocation3 + $0x7c] sm:$0xf] %vm1641, %v1608
      %s1674 = scalar_lea.vmem [#allocation2], 48
      %v1675 = vld [vmem:[%s1674] sm:$0xff]
      %v1676 = vld [vmem:[%s1674 + $0x8] sm:$0xff]
      %v1677 = vld [vmem:[%s1674 + $0x18] sm:$0xff]
      %v1678 = vld [vmem:[%s1674 + $0x20] sm:$0xff]
      %v1679 = vld [vmem:[%s1674 + $0x30] sm:$0xff]
      %v1680 = vld [vmem:[%s1674 + $0x38] sm:$0xff]
      %v1681 = vld [vmem:[%s1674 + $0x48] sm:$0xff]
      %v1682 = vld [vmem:[%s1674 + $0x50] sm:$0xff]
      %v1683 = vld [vmem:[%s1674 + $0x60] sm:$0xff]
      %v1684 = vld [vmem:[%s1674 + $0x68] sm:$0xff]
      %v1685 = vld [vmem:[%s1674 + $0x78] sm:$0xff]
      %v1686 = vld [vmem:[%s1674 + $0x80] sm:$0xff]
      %v1687 = vld [vmem:[%s1674 + $0x90] sm:$0xff]
      %v1688 = vld [vmem:[%s1674 + $0x98] sm:$0xff]
      %v1689 = vld [vmem:[%s1674 + $0xa8] sm:$0xff]
      %v1690 = vld [vmem:[%s1674 + $0xb0] sm:$0xff]
      %v1691 = vld [vmem:[%s1674 + $0xc0] sm:$0xff]
      %v1692 = vld [vmem:[%s1674 + $0xc8] sm:$0xff]
      %v1693 = vld [vmem:[%s1674 + $0xd8] sm:$0xff]
      %v1694 = vld [vmem:[%s1674 + $0xe0] sm:$0xff]
      %v1695 = vld [vmem:[%s1674 + $0xf0] sm:$0xff]
      %v1696 = vld [vmem:[%s1674 + $0xf8] sm:$0xff]
      %v1697 = vld [vmem:[%s1674 + $0x108] sm:$0xff]
      %v1698 = vld [vmem:[%s1674 + $0x110] sm:$0xff]
      %v1699 = vld [vmem:[%s1674 + $0x120] sm:$0xff]
      %v1700 = vld [vmem:[%s1674 + $0x128] sm:$0xff]
      %v1701 = vld [vmem:[%s1674 + $0x138] sm:$0xff]
      %v1702 = vld [vmem:[%s1674 + $0x140] sm:$0xff]
      %v1703 = vld [vmem:[%s1674 + $0x150] sm:$0xff]
      %v1704 = vld [vmem:[%s1674 + $0x158] sm:$0xff]
      %v1705 = vld [vmem:[%s1674 + $0x168] sm:$0xff]
      %v1706 = vld [vmem:[%s1674 + $0x170] sm:$0xff]
      %v1707 = vpack.c.bf16 %v1675, %v1675
      %v1708 = vpack.c.bf16 %v1676, %v1676
      %v1709 = vpack.c.bf16 %v1677, %v1677
      %v1710 = vpack.c.bf16 %v1678, %v1678
      %v1711 = vpack.c.bf16 %v1679, %v1679
      %v1712 = vpack.c.bf16 %v1680, %v1680
      %v1713 = vpack.c.bf16 %v1681, %v1681
      %v1714 = vpack.c.bf16 %v1682, %v1682
      %v1715 = vpack.c.bf16 %v1683, %v1683
      %v1716 = vpack.c.bf16 %v1684, %v1684
      %v1717 = vpack.c.bf16 %v1685, %v1685
      %v1718 = vpack.c.bf16 %v1686, %v1686
      %v1719 = vpack.c.bf16 %v1687, %v1687
      %v1720 = vpack.c.bf16 %v1688, %v1688
      %v1721 = vpack.c.bf16 %v1689, %v1689
      %v1722 = vpack.c.bf16 %v1690, %v1690
      %v1723 = vpack.c.bf16 %v1691, %v1691
      %v1724 = vpack.c.bf16 %v1692, %v1692
      %v1725 = vpack.c.bf16 %v1693, %v1693
      %v1726 = vpack.c.bf16 %v1694, %v1694
      %v1727 = vpack.c.bf16 %v1695, %v1695
      %v1728 = vpack.c.bf16 %v1696, %v1696
      %v1729 = vpack.c.bf16 %v1697, %v1697
      %v1730 = vpack.c.bf16 %v1698, %v1698
      %v1731 = vpack.c.bf16 %v1699, %v1699
      %v1732 = vpack.c.bf16 %v1700, %v1700
      %v1733 = vpack.c.bf16 %v1701, %v1701
      %v1734 = vpack.c.bf16 %v1702, %v1702
      %v1735 = vpack.c.bf16 %v1703, %v1703
      %v1736 = vpack.c.bf16 %v1704, %v1704
      %v1737 = vpack.c.bf16 %v1705, %v1705
      %v1738 = vpack.c.bf16 %v1706, %v1706
      %1771 = vrot.lane.b32.xlu0 %v1707, 24
      %v1772 = vpop.permute.xlu0 %1771
      %1773 = vrot.lane.b32.xlu0 %v1708, 24
      %v1774 = vpop.permute.xlu0 %1773
      %1775 = vrot.lane.b32.xlu0 %v1709, 24
      %v1776 = vpop.permute.xlu0 %1775
      %1777 = vrot.lane.b32.xlu0 %v1710, 24
      %v1778 = vpop.permute.xlu0 %1777
      %1779 = vrot.lane.b32.xlu0 %v1711, 24
      %v1780 = vpop.permute.xlu0 %1779
      %1781 = vrot.lane.b32.xlu0 %v1712, 24
      %v1782 = vpop.permute.xlu0 %1781
      %1783 = vrot.lane.b32.xlu0 %v1713, 24
      %v1784 = vpop.permute.xlu0 %1783
      %1785 = vrot.lane.b32.xlu0 %v1714, 24
      %v1786 = vpop.permute.xlu0 %1785
      %1787 = vrot.lane.b32.xlu0 %v1715, 24
      %v1788 = vpop.permute.xlu0 %1787
      %1789 = vrot.lane.b32.xlu0 %v1716, 24
      %v1790 = vpop.permute.xlu0 %1789
      %1791 = vrot.lane.b32.xlu0 %v1717, 24
      %v1792 = vpop.permute.xlu0 %1791
      %1793 = vrot.lane.b32.xlu0 %v1718, 24
      %v1794 = vpop.permute.xlu0 %1793
      %1795 = vrot.lane.b32.xlu0 %v1719, 24
      %v1796 = vpop.permute.xlu0 %1795
      %1797 = vrot.lane.b32.xlu0 %v1720, 24
      %v1798 = vpop.permute.xlu0 %1797
      %1799 = vrot.lane.b32.xlu0 %v1721, 24
      %v1800 = vpop.permute.xlu0 %1799
      %1801 = vrot.lane.b32.xlu0 %v1722, 24
      %v1802 = vpop.permute.xlu0 %1801
      %1803 = vrot.lane.b32.xlu0 %v1723, 24
      %v1804 = vpop.permute.xlu0 %1803
      %1805 = vrot.lane.b32.xlu0 %v1724, 24
      %v1806 = vpop.permute.xlu0 %1805
      %1807 = vrot.lane.b32.xlu0 %v1725, 24
      %v1808 = vpop.permute.xlu0 %1807
      %1809 = vrot.lane.b32.xlu0 %v1726, 24
      %v1810 = vpop.permute.xlu0 %1809
      %1811 = vrot.lane.b32.xlu0 %v1727, 24
      %v1812 = vpop.permute.xlu0 %1811
      %1813 = vrot.lane.b32.xlu0 %v1728, 24
      %v1814 = vpop.permute.xlu0 %1813
      %1815 = vrot.lane.b32.xlu0 %v1729, 24
      %v1816 = vpop.permute.xlu0 %1815
      %1817 = vrot.lane.b32.xlu0 %v1730, 24
      %v1818 = vpop.permute.xlu0 %1817
      %1819 = vrot.lane.b32.xlu0 %v1731, 24
      %v1820 = vpop.permute.xlu0 %1819
      %1821 = vrot.lane.b32.xlu0 %v1732, 24
      %v1822 = vpop.permute.xlu0 %1821
      %1823 = vrot.lane.b32.xlu0 %v1733, 24
      %v1824 = vpop.permute.xlu0 %1823
      %1825 = vrot.lane.b32.xlu0 %v1734, 24
      %v1826 = vpop.permute.xlu0 %1825
      %1827 = vrot.lane.b32.xlu0 %v1735, 24
      %v1828 = vpop.permute.xlu0 %1827
      %1829 = vrot.lane.b32.xlu0 %v1736, 24
      %v1830 = vpop.permute.xlu0 %1829
      %1831 = vrot.lane.b32.xlu0 %v1737, 24
      %v1832 = vpop.permute.xlu0 %1831
      %1833 = vrot.lane.b32.xlu0 %v1738, 24
      %v1834 = vpop.permute.xlu0 %1833
      %vm1867 = vcmask 224448
      %1868 = vst.msk [vmem:[#allocation3] sm:$0xf] %vm1867, %v1772
      %1869 = vst.msk [vmem:[#allocation3 + $0x4] sm:$0xf] %vm1867, %v1774
      %1870 = vst.msk [vmem:[#allocation3 + $0x8] sm:$0xf] %vm1867, %v1776
      %1871 = vst.msk [vmem:[#allocation3 + $0xc] sm:$0xf] %vm1867, %v1778
      %1872 = vst.msk [vmem:[#allocation3 + $0x10] sm:$0xf] %vm1867, %v1780
      %1873 = vst.msk [vmem:[#allocation3 + $0x14] sm:$0xf] %vm1867, %v1782
      %1874 = vst.msk [vmem:[#allocation3 + $0x18] sm:$0xf] %vm1867, %v1784
      %1875 = vst.msk [vmem:[#allocation3 + $0x1c] sm:$0xf] %vm1867, %v1786
      %1876 = vst.msk [vmem:[#allocation3 + $0x20] sm:$0xf] %vm1867, %v1788
      %1877 = vst.msk [vmem:[#allocation3 + $0x24] sm:$0xf] %vm1867, %v1790
      %1878 = vst.msk [vmem:[#allocation3 + $0x28] sm:$0xf] %vm1867, %v1792
      %1879 = vst.msk [vmem:[#allocation3 + $0x2c] sm:$0xf] %vm1867, %v1794
      %1880 = vst.msk [vmem:[#allocation3 + $0x30] sm:$0xf] %vm1867, %v1796
      %1881 = vst.msk [vmem:[#allocation3 + $0x34] sm:$0xf] %vm1867, %v1798
      %1882 = vst.msk [vmem:[#allocation3 + $0x38] sm:$0xf] %vm1867, %v1800
      %1883 = vst.msk [vmem:[#allocation3 + $0x3c] sm:$0xf] %vm1867, %v1802
      %1884 = vst.msk [vmem:[#allocation3 + $0x40] sm:$0xf] %vm1867, %v1804
      %1885 = vst.msk [vmem:[#allocation3 + $0x44] sm:$0xf] %vm1867, %v1806
      %1886 = vst.msk [vmem:[#allocation3 + $0x48] sm:$0xf] %vm1867, %v1808
      %1887 = vst.msk [vmem:[#allocation3 + $0x4c] sm:$0xf] %vm1867, %v1810
      %1888 = vst.msk [vmem:[#allocation3 + $0x50] sm:$0xf] %vm1867, %v1812
      %1889 = vst.msk [vmem:[#allocation3 + $0x54] sm:$0xf] %vm1867, %v1814
      %1890 = vst.msk [vmem:[#allocation3 + $0x58] sm:$0xf] %vm1867, %v1816
      %1891 = vst.msk [vmem:[#allocation3 + $0x5c] sm:$0xf] %vm1867, %v1818
      %1892 = vst.msk [vmem:[#allocation3 + $0x60] sm:$0xf] %vm1867, %v1820
      %1893 = vst.msk [vmem:[#allocation3 + $0x64] sm:$0xf] %vm1867, %v1822
      %1894 = vst.msk [vmem:[#allocation3 + $0x68] sm:$0xf] %vm1867, %v1824
      %1895 = vst.msk [vmem:[#allocation3 + $0x6c] sm:$0xf] %vm1867, %v1826
      %1896 = vst.msk [vmem:[#allocation3 + $0x70] sm:$0xf] %vm1867, %v1828
      %1897 = vst.msk [vmem:[#allocation3 + $0x74] sm:$0xf] %vm1867, %v1830
      %1898 = vst.msk [vmem:[#allocation3 + $0x78] sm:$0xf] %vm1867, %v1832
      %1899 = vst.msk [vmem:[#allocation3 + $0x7c] sm:$0xf] %vm1867, %v1834
      %v1900 = vld [vmem:[%s1674 + $0x1] sm:$0xff]
      %v1901 = vld [vmem:[%s1674 + $0x9] sm:$0xff]
      %v1902 = vld [vmem:[%s1674 + $0x19] sm:$0xff]
      %v1903 = vld [vmem:[%s1674 + $0x21] sm:$0xff]
      %v1904 = vld [vmem:[%s1674 + $0x31] sm:$0xff]
      %v1905 = vld [vmem:[%s1674 + $0x39] sm:$0xff]
      %v1906 = vld [vmem:[%s1674 + $0x49] sm:$0xff]
      %v1907 = vld [vmem:[%s1674 + $0x51] sm:$0xff]
      %v1908 = vld [vmem:[%s1674 + $0x61] sm:$0xff]
      %v1909 = vld [vmem:[%s1674 + $0x69] sm:$0xff]
      %v1910 = vld [vmem:[%s1674 + $0x79] sm:$0xff]
      %v1911 = vld [vmem:[%s1674 + $0x81] sm:$0xff]
      %v1912 = vld [vmem:[%s1674 + $0x91] sm:$0xff]
      %v1913 = vld [vmem:[%s1674 + $0x99] sm:$0xff]
      %v1914 = vld [vmem:[%s1674 + $0xa9] sm:$0xff]
      %v1915 = vld [vmem:[%s1674 + $0xb1] sm:$0xff]
      %v1916 = vld [vmem:[%s1674 + $0xc1] sm:$0xff]
      %v1917 = vld [vmem:[%s1674 + $0xc9] sm:$0xff]
      %v1918 = vld [vmem:[%s1674 + $0xd9] sm:$0xff]
      %v1919 = vld [vmem:[%s1674 + $0xe1] sm:$0xff]
      %v1920 = vld [vmem:[%s1674 + $0xf1] sm:$0xff]
      %v1921 = vld [vmem:[%s1674 + $0xf9] sm:$0xff]
      %v1922 = vld [vmem:[%s1674 + $0x109] sm:$0xff]
      %v1923 = vld [vmem:[%s1674 + $0x111] sm:$0xff]
      %v1924 = vld [vmem:[%s1674 + $0x121] sm:$0xff]
      %v1925 = vld [vmem:[%s1674 + $0x129] sm:$0xff]
      %v1926 = vld [vmem:[%s1674 + $0x139] sm:$0xff]
      %v1927 = vld [vmem:[%s1674 + $0x141] sm:$0xff]
      %v1928 = vld [vmem:[%s1674 + $0x151] sm:$0xff]
      %v1929 = vld [vmem:[%s1674 + $0x159] sm:$0xff]
      %v1930 = vld [vmem:[%s1674 + $0x169] sm:$0xff]
      %v1931 = vld [vmem:[%s1674 + $0x171] sm:$0xff]
      %v1932 = vpack.c.bf16 %v1900, %v1900
      %v1933 = vpack.c.bf16 %v1901, %v1901
      %v1934 = vpack.c.bf16 %v1902, %v1902
      %v1935 = vpack.c.bf16 %v1903, %v1903
      %v1936 = vpack.c.bf16 %v1904, %v1904
      %v1937 = vpack.c.bf16 %v1905, %v1905
      %v1938 = vpack.c.bf16 %v1906, %v1906
      %v1939 = vpack.c.bf16 %v1907, %v1907
      %v1940 = vpack.c.bf16 %v1908, %v1908
      %v1941 = vpack.c.bf16 %v1909, %v1909
      %v1942 = vpack.c.bf16 %v1910, %v1910
      %v1943 = vpack.c.bf16 %v1911, %v1911
      %v1944 = vpack.c.bf16 %v1912, %v1912
      %v1945 = vpack.c.bf16 %v1913, %v1913
      %v1946 = vpack.c.bf16 %v1914, %v1914
      %v1947 = vpack.c.bf16 %v1915, %v1915
      %v1948 = vpack.c.bf16 %v1916, %v1916
      %v1949 = vpack.c.bf16 %v1917, %v1917
      %v1950 = vpack.c.bf16 %v1918, %v1918
      %v1951 = vpack.c.bf16 %v1919, %v1919
      %v1952 = vpack.c.bf16 %v1920, %v1920
      %v1953 = vpack.c.bf16 %v1921, %v1921
      %v1954 = vpack.c.bf16 %v1922, %v1922
      %v1955 = vpack.c.bf16 %v1923, %v1923
      %v1956 = vpack.c.bf16 %v1924, %v1924
      %v1957 = vpack.c.bf16 %v1925, %v1925
      %v1958 = vpack.c.bf16 %v1926, %v1926
      %v1959 = vpack.c.bf16 %v1927, %v1927
      %v1960 = vpack.c.bf16 %v1928, %v1928
      %v1961 = vpack.c.bf16 %v1929, %v1929
      %v1962 = vpack.c.bf16 %v1930, %v1930
      %v1963 = vpack.c.bf16 %v1931, %v1931
      %1996 = vrot.lane.b32.xlu0 %v1932, 28
      %v1997 = vpop.permute.xlu0 %1996
      %1998 = vrot.lane.b32.xlu0 %v1933, 28
      %v1999 = vpop.permute.xlu0 %1998
      %2000 = vrot.lane.b32.xlu0 %v1934, 28
      %v2001 = vpop.permute.xlu0 %2000
      %2002 = vrot.lane.b32.xlu0 %v1935, 28
      %v2003 = vpop.permute.xlu0 %2002
      %2004 = vrot.lane.b32.xlu0 %v1936, 28
      %v2005 = vpop.permute.xlu0 %2004
      %2006 = vrot.lane.b32.xlu0 %v1937, 28
      %v2007 = vpop.permute.xlu0 %2006
      %2008 = vrot.lane.b32.xlu0 %v1938, 28
      %v2009 = vpop.permute.xlu0 %2008
      %2010 = vrot.lane.b32.xlu0 %v1939, 28
      %v2011 = vpop.permute.xlu0 %2010
      %2012 = vrot.lane.b32.xlu0 %v1940, 28
      %v2013 = vpop.permute.xlu0 %2012
      %2014 = vrot.lane.b32.xlu0 %v1941, 28
      %v2015 = vpop.permute.xlu0 %2014
      %2016 = vrot.lane.b32.xlu0 %v1942, 28
      %v2017 = vpop.permute.xlu0 %2016
      %2018 = vrot.lane.b32.xlu0 %v1943, 28
      %v2019 = vpop.permute.xlu0 %2018
      %2020 = vrot.lane.b32.xlu0 %v1944, 28
      %v2021 = vpop.permute.xlu0 %2020
      %2022 = vrot.lane.b32.xlu0 %v1945, 28
      %v2023 = vpop.permute.xlu0 %2022
      %2024 = vrot.lane.b32.xlu0 %v1946, 28
      %v2025 = vpop.permute.xlu0 %2024
      %2026 = vrot.lane.b32.xlu0 %v1947, 28
      %v2027 = vpop.permute.xlu0 %2026
      %2028 = vrot.lane.b32.xlu0 %v1948, 28
      %v2029 = vpop.permute.xlu0 %2028
      %2030 = vrot.lane.b32.xlu0 %v1949, 28
      %v2031 = vpop.permute.xlu0 %2030
      %2032 = vrot.lane.b32.xlu0 %v1950, 28
      %v2033 = vpop.permute.xlu0 %2032
      %2034 = vrot.lane.b32.xlu0 %v1951, 28
      %v2035 = vpop.permute.xlu0 %2034
      %2036 = vrot.lane.b32.xlu0 %v1952, 28
      %v2037 = vpop.permute.xlu0 %2036
      %2038 = vrot.lane.b32.xlu0 %v1953, 28
      %v2039 = vpop.permute.xlu0 %2038
      %2040 = vrot.lane.b32.xlu0 %v1954, 28
      %v2041 = vpop.permute.xlu0 %2040
      %2042 = vrot.lane.b32.xlu0 %v1955, 28
      %v2043 = vpop.permute.xlu0 %2042
      %2044 = vrot.lane.b32.xlu0 %v1956, 28
      %v2045 = vpop.permute.xlu0 %2044
      %2046 = vrot.lane.b32.xlu0 %v1957, 28
      %v2047 = vpop.permute.xlu0 %2046
      %2048 = vrot.lane.b32.xlu0 %v1958, 28
      %v2049 = vpop.permute.xlu0 %2048
      %2050 = vrot.lane.b32.xlu0 %v1959, 28
      %v2051 = vpop.permute.xlu0 %2050
      %2052 = vrot.lane.b32.xlu0 %v1960, 28
      %v2053 = vpop.permute.xlu0 %2052
      %2054 = vrot.lane.b32.xlu0 %v1961, 28
      %v2055 = vpop.permute.xlu0 %2054
      %2056 = vrot.lane.b32.xlu0 %v1962, 28
      %v2057 = vpop.permute.xlu0 %2056
      %2058 = vrot.lane.b32.xlu0 %v1963, 28
      %v2059 = vpop.permute.xlu0 %2058
      %vm2092 = vcmask 257248
      %2093 = vst.msk [vmem:[#allocation3] sm:$0xf] %vm2092, %v1997
      %2094 = vst.msk [vmem:[#allocation3 + $0x4] sm:$0xf] %vm2092, %v1999
      %2095 = vst.msk [vmem:[#allocation3 + $0x8] sm:$0xf] %vm2092, %v2001
      %2096 = vst.msk [vmem:[#allocation3 + $0xc] sm:$0xf] %vm2092, %v2003
      %2097 = vst.msk [vmem:[#allocation3 + $0x10] sm:$0xf] %vm2092, %v2005
      %2098 = vst.msk [vmem:[#allocation3 + $0x14] sm:$0xf] %vm2092, %v2007
      %2099 = vst.msk [vmem:[#allocation3 + $0x18] sm:$0xf] %vm2092, %v2009
      %2100 = vst.msk [vmem:[#allocation3 + $0x1c] sm:$0xf] %vm2092, %v2011
      %2101 = vst.msk [vmem:[#allocation3 + $0x20] sm:$0xf] %vm2092, %v2013
      %2102 = vst.msk [vmem:[#allocation3 + $0x24] sm:$0xf] %vm2092, %v2015
      %2103 = vst.msk [vmem:[#allocation3 + $0x28] sm:$0xf] %vm2092, %v2017
      %2104 = vst.msk [vmem:[#allocation3 + $0x2c] sm:$0xf] %vm2092, %v2019
      %2105 = vst.msk [vmem:[#allocation3 + $0x30] sm:$0xf] %vm2092, %v2021
      %2106 = vst.msk [vmem:[#allocation3 + $0x34] sm:$0xf] %vm2092, %v2023
      %2107 = vst.msk [vmem:[#allocation3 + $0x38] sm:$0xf] %vm2092, %v2025
      %2108 = vst.msk [vmem:[#allocation3 + $0x3c] sm:$0xf] %vm2092, %v2027
      %2109 = vst.msk [vmem:[#allocation3 + $0x40] sm:$0xf] %vm2092, %v2029
      %2110 = vst.msk [vmem:[#allocation3 + $0x44] sm:$0xf] %vm2092, %v2031
      %2111 = vst.msk [vmem:[#allocation3 + $0x48] sm:$0xf] %vm2092, %v2033
      %2112 = vst.msk [vmem:[#allocation3 + $0x4c] sm:$0xf] %vm2092, %v2035
      %2113 = vst.msk [vmem:[#allocation3 + $0x50] sm:$0xf] %vm2092, %v2037
      %2114 = vst.msk [vmem:[#allocation3 + $0x54] sm:$0xf] %vm2092, %v2039
      %2115 = vst.msk [vmem:[#allocation3 + $0x58] sm:$0xf] %vm2092, %v2041
      %2116 = vst.msk [vmem:[#allocation3 + $0x5c] sm:$0xf] %vm2092, %v2043
      %2117 = vst.msk [vmem:[#allocation3 + $0x60] sm:$0xf] %vm2092, %v2045
      %2118 = vst.msk [vmem:[#allocation3 + $0x64] sm:$0xf] %vm2092, %v2047
      %2119 = vst.msk [vmem:[#allocation3 + $0x68] sm:$0xf] %vm2092, %v2049
      %2120 = vst.msk [vmem:[#allocation3 + $0x6c] sm:$0xf] %vm2092, %v2051
      %2121 = vst.msk [vmem:[#allocation3 + $0x70] sm:$0xf] %vm2092, %v2053
      %2122 = vst.msk [vmem:[#allocation3 + $0x74] sm:$0xf] %vm2092, %v2055
      %2123 = vst.msk [vmem:[#allocation3 + $0x78] sm:$0xf] %vm2092, %v2057
      %2124 = vst.msk [vmem:[#allocation3 + $0x7c] sm:$0xf] %vm2092, %v2059
      %v2125 = vld [vmem:[%s1674 + $0x2] sm:$0xff]
      %v2126 = vld [vmem:[%s1674 + $0xa] sm:$0xff]
      %v2127 = vld [vmem:[%s1674 + $0x1a] sm:$0xff]
      %v2128 = vld [vmem:[%s1674 + $0x22] sm:$0xff]
      %v2129 = vld [vmem:[%s1674 + $0x32] sm:$0xff]
      %v2130 = vld [vmem:[%s1674 + $0x3a] sm:$0xff]
      %v2131 = vld [vmem:[%s1674 + $0x4a] sm:$0xff]
      %v2132 = vld [vmem:[%s1674 + $0x52] sm:$0xff]
      %v2133 = vld [vmem:[%s1674 + $0x62] sm:$0xff]
      %v2134 = vld [vmem:[%s1674 + $0x6a] sm:$0xff]
      %v2135 = vld [vmem:[%s1674 + $0x7a] sm:$0xff]
      %v2136 = vld [vmem:[%s1674 + $0x82] sm:$0xff]
      %v2137 = vld [vmem:[%s1674 + $0x92] sm:$0xff]
      %v2138 = vld [vmem:[%s1674 + $0x9a] sm:$0xff]
      %v2139 = vld [vmem:[%s1674 + $0xaa] sm:$0xff]
      %v2140 = vld [vmem:[%s1674 + $0xb2] sm:$0xff]
      %v2141 = vld [vmem:[%s1674 + $0xc2] sm:$0xff]
      %v2142 = vld [vmem:[%s1674 + $0xca] sm:$0xff]
      %v2143 = vld [vmem:[%s1674 + $0xda] sm:$0xff]
      %v2144 = vld [vmem:[%s1674 + $0xe2] sm:$0xff]
      %v2145 = vld [vmem:[%s1674 + $0xf2] sm:$0xff]
      %v2146 = vld [vmem:[%s1674 + $0xfa] sm:$0xff]
      %v2147 = vld [vmem:[%s1674 + $0x10a] sm:$0xff]
      %v2148 = vld [vmem:[%s1674 + $0x112] sm:$0xff]
      %v2149 = vld [vmem:[%s1674 + $0x122] sm:$0xff]
      %v2150 = vld [vmem:[%s1674 + $0x12a] sm:$0xff]
      %v2151 = vld [vmem:[%s1674 + $0x13a] sm:$0xff]
      %v2152 = vld [vmem:[%s1674 + $0x142] sm:$0xff]
      %v2153 = vld [vmem:[%s1674 + $0x152] sm:$0xff]
      %v2154 = vld [vmem:[%s1674 + $0x15a] sm:$0xff]
      %v2155 = vld [vmem:[%s1674 + $0x16a] sm:$0xff]
      %v2156 = vld [vmem:[%s1674 + $0x172] sm:$0xff]
      %v2157 = vpack.c.bf16 %v2125, %v2125
      %v2158 = vpack.c.bf16 %v2126, %v2126
      %v2159 = vpack.c.bf16 %v2127, %v2127
      %v2160 = vpack.c.bf16 %v2128, %v2128
      %v2161 = vpack.c.bf16 %v2129, %v2129
      %v2162 = vpack.c.bf16 %v2130, %v2130
      %v2163 = vpack.c.bf16 %v2131, %v2131
      %v2164 = vpack.c.bf16 %v2132, %v2132
      %v2165 = vpack.c.bf16 %v2133, %v2133
      %v2166 = vpack.c.bf16 %v2134, %v2134
      %v2167 = vpack.c.bf16 %v2135, %v2135
      %v2168 = vpack.c.bf16 %v2136, %v2136
      %v2169 = vpack.c.bf16 %v2137, %v2137
      %v2170 = vpack.c.bf16 %v2138, %v2138
      %v2171 = vpack.c.bf16 %v2139, %v2139
      %v2172 = vpack.c.bf16 %v2140, %v2140
      %v2173 = vpack.c.bf16 %v2141, %v2141
      %v2174 = vpack.c.bf16 %v2142, %v2142
      %v2175 = vpack.c.bf16 %v2143, %v2143
      %v2176 = vpack.c.bf16 %v2144, %v2144
      %v2177 = vpack.c.bf16 %v2145, %v2145
      %v2178 = vpack.c.bf16 %v2146, %v2146
      %v2179 = vpack.c.bf16 %v2147, %v2147
      %v2180 = vpack.c.bf16 %v2148, %v2148
      %v2181 = vpack.c.bf16 %v2149, %v2149
      %v2182 = vpack.c.bf16 %v2150, %v2150
      %v2183 = vpack.c.bf16 %v2151, %v2151
      %v2184 = vpack.c.bf16 %v2152, %v2152
      %v2185 = vpack.c.bf16 %v2153, %v2153
      %v2186 = vpack.c.bf16 %v2154, %v2154
      %v2187 = vpack.c.bf16 %v2155, %v2155
      %v2188 = vpack.c.bf16 %v2156, %v2156
      %2221 = vrot.lane.b32.xlu0 %v2157, 32
      %v2222 = vpop.permute.xlu0 %2221
      %2223 = vrot.lane.b32.xlu0 %v2158, 32
      %v2224 = vpop.permute.xlu0 %2223
      %2225 = vrot.lane.b32.xlu0 %v2159, 32
      %v2226 = vpop.permute.xlu0 %2225
      %2227 = vrot.lane.b32.xlu0 %v2160, 32
      %v2228 = vpop.permute.xlu0 %2227
      %2229 = vrot.lane.b32.xlu0 %v2161, 32
      %v2230 = vpop.permute.xlu0 %2229
      %2231 = vrot.lane.b32.xlu0 %v2162, 32
      %v2232 = vpop.permute.xlu0 %2231
      %2233 = vrot.lane.b32.xlu0 %v2163, 32
      %v2234 = vpop.permute.xlu0 %2233
      %2235 = vrot.lane.b32.xlu0 %v2164, 32
      %v2236 = vpop.permute.xlu0 %2235
      %2237 = vrot.lane.b32.xlu0 %v2165, 32
      %v2238 = vpop.permute.xlu0 %2237
      %2239 = vrot.lane.b32.xlu0 %v2166, 32
      %v2240 = vpop.permute.xlu0 %2239
      %2241 = vrot.lane.b32.xlu0 %v2167, 32
      %v2242 = vpop.permute.xlu0 %2241
      %2243 = vrot.lane.b32.xlu0 %v2168, 32
      %v2244 = vpop.permute.xlu0 %2243
      %2245 = vrot.lane.b32.xlu0 %v2169, 32
      %v2246 = vpop.permute.xlu0 %2245
      %2247 = vrot.lane.b32.xlu0 %v2170, 32
      %v2248 = vpop.permute.xlu0 %2247
      %2249 = vrot.lane.b32.xlu0 %v2171, 32
      %v2250 = vpop.permute.xlu0 %2249
      %2251 = vrot.lane.b32.xlu0 %v2172, 32
      %v2252 = vpop.permute.xlu0 %2251
      %2253 = vrot.lane.b32.xlu0 %v2173, 32
      %v2254 = vpop.permute.xlu0 %2253
      %2255 = vrot.lane.b32.xlu0 %v2174, 32
      %v2256 = vpop.permute.xlu0 %2255
      %2257 = vrot.lane.b32.xlu0 %v2175, 32
      %v2258 = vpop.permute.xlu0 %2257
      %2259 = vrot.lane.b32.xlu0 %v2176, 32
      %v2260 = vpop.permute.xlu0 %2259
      %2261 = vrot.lane.b32.xlu0 %v2177, 32
      %v2262 = vpop.permute.xlu0 %2261
      %2263 = vrot.lane.b32.xlu0 %v2178, 32
      %v2264 = vpop.permute.xlu0 %2263
      %2265 = vrot.lane.b32.xlu0 %v2179, 32
      %v2266 = vpop.permute.xlu0 %2265
      %2267 = vrot.lane.b32.xlu0 %v2180, 32
      %v2268 = vpop.permute.xlu0 %2267
      %2269 = vrot.lane.b32.xlu0 %v2181, 32
      %v2270 = vpop.permute.xlu0 %2269
      %2271 = vrot.lane.b32.xlu0 %v2182, 32
      %v2272 = vpop.permute.xlu0 %2271
      %2273 = vrot.lane.b32.xlu0 %v2183, 32
      %v2274 = vpop.permute.xlu0 %2273
      %2275 = vrot.lane.b32.xlu0 %v2184, 32
      %v2276 = vpop.permute.xlu0 %2275
      %2277 = vrot.lane.b32.xlu0 %v2185, 32
      %v2278 = vpop.permute.xlu0 %2277
      %2279 = vrot.lane.b32.xlu0 %v2186, 32
      %v2280 = vpop.permute.xlu0 %2279
      %2281 = vrot.lane.b32.xlu0 %v2187, 32
      %v2282 = vpop.permute.xlu0 %2281
      %2283 = vrot.lane.b32.xlu0 %v2188, 32
      %v2284 = vpop.permute.xlu0 %2283
      %vm2317 = vcmask 290048
      %2318 = vst.msk [vmem:[#allocation3] sm:$0xf] %vm2317, %v2222
      %2319 = vst.msk [vmem:[#allocation3 + $0x4] sm:$0xf] %vm2317, %v2224
      %2320 = vst.msk [vmem:[#allocation3 + $0x8] sm:$0xf] %vm2317, %v2226
      %2321 = vst.msk [vmem:[#allocation3 + $0xc] sm:$0xf] %vm2317, %v2228
      %2322 = vst.msk [vmem:[#allocation3 + $0x10] sm:$0xf] %vm2317, %v2230
      %2323 = vst.msk [vmem:[#allocation3 + $0x14] sm:$0xf] %vm2317, %v2232
      %2324 = vst.msk [vmem:[#allocation3 + $0x18] sm:$0xf] %vm2317, %v2234
      %2325 = vst.msk [vmem:[#allocation3 + $0x1c] sm:$0xf] %vm2317, %v2236
      %2326 = vst.msk [vmem:[#allocation3 + $0x20] sm:$0xf] %vm2317, %v2238
      %2327 = vst.msk [vmem:[#allocation3 + $0x24] sm:$0xf] %vm2317, %v2240
      %2328 = vst.msk [vmem:[#allocation3 + $0x28] sm:$0xf] %vm2317, %v2242
      %2329 = vst.msk [vmem:[#allocation3 + $0x2c] sm:$0xf] %vm2317, %v2244
      %2330 = vst.msk [vmem:[#allocation3 + $0x30] sm:$0xf] %vm2317, %v2246
      %2331 = vst.msk [vmem:[#allocation3 + $0x34] sm:$0xf] %vm2317, %v2248
      %2332 = vst.msk [vmem:[#allocation3 + $0x38] sm:$0xf] %vm2317, %v2250
      %2333 = vst.msk [vmem:[#allocation3 + $0x3c] sm:$0xf] %vm2317, %v2252
      %2334 = vst.msk [vmem:[#allocation3 + $0x40] sm:$0xf] %vm2317, %v2254
      %2335 = vst.msk [vmem:[#allocation3 + $0x44] sm:$0xf] %vm2317, %v2256
      %2336 = vst.msk [vmem:[#allocation3 + $0x48] sm:$0xf] %vm2317, %v2258
      %2337 = vst.msk [vmem:[#allocation3 + $0x4c] sm:$0xf] %vm2317, %v2260
      %2338 = vst.msk [vmem:[#allocation3 + $0x50] sm:$0xf] %vm2317, %v2262
      %2339 = vst.msk [vmem:[#allocation3 + $0x54] sm:$0xf] %vm2317, %v2264
      %2340 = vst.msk [vmem:[#allocation3 + $0x58] sm:$0xf] %vm2317, %v2266
      %2341 = vst.msk [vmem:[#allocation3 + $0x5c] sm:$0xf] %vm2317, %v2268
      %2342 = vst.msk [vmem:[#allocation3 + $0x60] sm:$0xf] %vm2317, %v2270
      %2343 = vst.msk [vmem:[#allocation3 + $0x64] sm:$0xf] %vm2317, %v2272
      %2344 = vst.msk [vmem:[#allocation3 + $0x68] sm:$0xf] %vm2317, %v2274
      %2345 = vst.msk [vmem:[#allocation3 + $0x6c] sm:$0xf] %vm2317, %v2276
      %2346 = vst.msk [vmem:[#allocation3 + $0x70] sm:$0xf] %vm2317, %v2278
      %2347 = vst.msk [vmem:[#allocation3 + $0x74] sm:$0xf] %vm2317, %v2280
      %2348 = vst.msk [vmem:[#allocation3 + $0x78] sm:$0xf] %vm2317, %v2282
      %2349 = vst.msk [vmem:[#allocation3 + $0x7c] sm:$0xf] %vm2317, %v2284
      %v2350 = vld [vmem:[#allocation3] sm:$0xf]
      %v2351 = vld [vmem:[#allocation3 + $0x4] sm:$0xf]
      %v2352 = vld [vmem:[#allocation3 + $0x8] sm:$0xf]
      %v2353 = vld [vmem:[#allocation3 + $0xc] sm:$0xf]
      %v2354 = vld [vmem:[#allocation3 + $0x10] sm:$0xf]
      %v2355 = vld [vmem:[#allocation3 + $0x14] sm:$0xf]
      %v2356 = vld [vmem:[#allocation3 + $0x18] sm:$0xf]
      %v2357 = vld [vmem:[#allocation3 + $0x1c] sm:$0xf]
      %v2358 = vld [vmem:[#allocation3 + $0x20] sm:$0xf]
      %v2359 = vld [vmem:[#allocation3 + $0x24] sm:$0xf]
      %v2360 = vld [vmem:[#allocation3 + $0x28] sm:$0xf]
      %v2361 = vld [vmem:[#allocation3 + $0x2c] sm:$0xf]
      %v2362 = vld [vmem:[#allocation3 + $0x30] sm:$0xf]
      %v2363 = vld [vmem:[#allocation3 + $0x34] sm:$0xf]
      %v2364 = vld [vmem:[#allocation3 + $0x38] sm:$0xf]
      %v2365 = vld [vmem:[#allocation3 + $0x3c] sm:$0xf]
      %v2366 = vld [vmem:[#allocation3 + $0x40] sm:$0xf]
      %v2367 = vld [vmem:[#allocation3 + $0x44] sm:$0xf]
      %v2368 = vld [vmem:[#allocation3 + $0x48] sm:$0xf]
      %v2369 = vld [vmem:[#allocation3 + $0x4c] sm:$0xf]
      %v2370 = vld [vmem:[#allocation3 + $0x50] sm:$0xf]
      %v2371 = vld [vmem:[#allocation3 + $0x54] sm:$0xf]
      %v2372 = vld [vmem:[#allocation3 + $0x58] sm:$0xf]
      %v2373 = vld [vmem:[#allocation3 + $0x5c] sm:$0xf]
      %v2374 = vld [vmem:[#allocation3 + $0x60] sm:$0xf]
      %v2375 = vld [vmem:[#allocation3 + $0x64] sm:$0xf]
      %v2376 = vld [vmem:[#allocation3 + $0x68] sm:$0xf]
      %v2377 = vld [vmem:[#allocation3 + $0x6c] sm:$0xf]
      %v2378 = vld [vmem:[#allocation3 + $0x70] sm:$0xf]
      %v2379 = vld [vmem:[#allocation3 + $0x74] sm:$0xf]
      %v2380 = vld [vmem:[#allocation3 + $0x78] sm:$0xf]
      %v2381 = vld [vmem:[#allocation3 + $0x7c] sm:$0xf]
      %v2382 = vld [vmem:[%s3] sm:$0xf]
      %v2383 = vld [vmem:[%s3 + $0x4] sm:$0xf]
      %v2384 = vld [vmem:[%s3 + $0x8] sm:$0xf]
      %v2385 = vld [vmem:[%s3 + $0xc] sm:$0xf]
      %v2386 = vld [vmem:[%s3 + $0x10] sm:$0x3]
      %v2419 = vunpack.c.l.b16 %v2350
      %v2420 = vunpack.c.l.b16 %v2351
      %v2421 = vunpack.c.l.b16 %v2352
      %v2422 = vunpack.c.l.b16 %v2353
      %v2423 = vunpack.c.l.b16 %v2354
      %v2424 = vunpack.c.l.b16 %v2355
      %v2425 = vunpack.c.l.b16 %v2356
      %v2426 = vunpack.c.l.b16 %v2357
      %v2427 = vunpack.c.l.b16 %v2358
      %v2428 = vunpack.c.l.b16 %v2359
      %v2429 = vunpack.c.l.b16 %v2360
      %v2430 = vunpack.c.l.b16 %v2361
      %v2431 = vunpack.c.l.b16 %v2362
      %v2432 = vunpack.c.l.b16 %v2363
      %v2433 = vunpack.c.l.b16 %v2364
      %v2434 = vunpack.c.l.b16 %v2365
      %v2435 = vunpack.c.l.b16 %v2366
      %v2436 = vunpack.c.l.b16 %v2367
      %v2437 = vunpack.c.l.b16 %v2368
      %v2438 = vunpack.c.l.b16 %v2369
      %v2439 = vunpack.c.l.b16 %v2370
      %v2440 = vunpack.c.l.b16 %v2371
      %v2441 = vunpack.c.l.b16 %v2372
      %v2442 = vunpack.c.l.b16 %v2373
      %v2443 = vunpack.c.l.b16 %v2374
      %v2444 = vunpack.c.l.b16 %v2375
      %v2445 = vunpack.c.l.b16 %v2376
      %v2446 = vunpack.c.l.b16 %v2377
      %v2447 = vunpack.c.l.b16 %v2378
      %v2448 = vunpack.c.l.b16 %v2379
      %v2449 = vunpack.c.l.b16 %v2380
      %v2450 = vunpack.c.l.b16 %v2381
      %v2451 = vpack.c.b16 %v2420, %v2419
      %v2452 = vpack.c.b16 %v2422, %v2421
      %v2453 = vpack.c.b16 %v2424, %v2423
      %v2454 = vpack.c.b16 %v2426, %v2425
      %v2455 = vpack.c.b16 %v2428, %v2427
      %v2456 = vpack.c.b16 %v2430, %v2429
      %v2457 = vpack.c.b16 %v2432, %v2431
      %v2458 = vpack.c.b16 %v2434, %v2433
      %v2459 = vpack.c.b16 %v2436, %v2435
      %v2460 = vpack.c.b16 %v2438, %v2437
      %v2461 = vpack.c.b16 %v2440, %v2439
      %v2462 = vpack.c.b16 %v2442, %v2441
      %v2463 = vpack.c.b16 %v2444, %v2443
      %v2464 = vpack.c.b16 %v2446, %v2445
      %v2465 = vpack.c.b16 %v2448, %v2447
      %v2466 = vpack.c.b16 %v2450, %v2449
      %v2472 = vunpack.c.l.b16 %v2382
      %v2473 = vunpack.c.l.b16 %v2383
      %v2474 = vunpack.c.l.b16 %v2384
      %v2475 = vunpack.c.l.b16 %v2385
      %v2476 = vunpack.c.l.b16 %v2386
      %v2477 = vpack.c.b16 %v2473, %v2472
      %v2478 = vpack.c.b16 %v2475, %v2474
      %v2479 = vpack.c.b16 %v2476, %v2476
      %vm2482 = vcmask 293888
      %v2484 = vsel %vm2482, %v2451, 0
      %v2487 = vsel %vm2482, %v2452, 0
      %v2490 = vsel %vm2482, %v2453, 0
      %v2493 = vsel %vm2482, %v2454, 0
      %v2496 = vsel %vm2482, %v2455, 0
      %v2499 = vsel %vm2482, %v2456, 0
      %v2502 = vsel %vm2482, %v2457, 0
      %v2505 = vsel %vm2482, %v2458, 0
      %v2508 = vsel %vm2482, %v2459, 0
      %v2511 = vsel %vm2482, %v2460, 0
      %v2514 = vsel %vm2482, %v2461, 0
      %v2517 = vsel %vm2482, %v2462, 0
      %v2520 = vsel %vm2482, %v2463, 0
      %v2523 = vsel %vm2482, %v2464, 0
      %v2526 = vsel %vm2482, %v2465, 0
      %v2529 = vsel %vm2482, %v2466, 0
      %vm2531 = vcmask 1041408
      %v2533 = vsel %vm2531, %v2479, 0
      %2535 = vmatpush.bf16.msra.mxu0 0
      %2536 = vmatpush.bf16.msra.mxu0 0
      %2537 = vmatpush.bf16.msra.mxu0 0
      %2538 = vmatpush.bf16.msra.mxu0 0
      %2539 = vmatpush.bf16.msra.mxu0 0
      %2540 = vmatpush.bf16.msra.mxu0 %v2533
      %2541 = vmatpush.bf16.msra.mxu0 %v2478
      %2542 = vmatpush.bf16.msra.mxu0 %v2477
      %2543 = vmatmul.bf16.gmra.mxu0 %v2484
      %v2544 = vpop.f32.mrf.mxu0
      %v2545 = vadd.f32 0.0, %v2544
      %v2546 = vpop.f32.mrf.mxu0
      %v2547 = vadd.f32 0.0, %v2546
      %2548 = vmatmul.bf16.gmra.mxu0 %v2487
      %v2549 = vpop.f32.mrf.mxu0
      %v2550 = vadd.f32 0.0, %v2549
      %v2551 = vpop.f32.mrf.mxu0
      %v2552 = vadd.f32 0.0, %v2551
      %2553 = vmatmul.bf16.gmra.mxu0 %v2490
      %v2554 = vpop.f32.mrf.mxu0
      %v2555 = vadd.f32 0.0, %v2554
      %v2556 = vpop.f32.mrf.mxu0
      %v2557 = vadd.f32 0.0, %v2556
      %2558 = vmatmul.bf16.gmra.mxu0 %v2493
      %v2559 = vpop.f32.mrf.mxu0
      %v2560 = vadd.f32 0.0, %v2559
      %v2561 = vpop.f32.mrf.mxu0
      %v2562 = vadd.f32 0.0, %v2561
      %2563 = vmatmul.bf16.gmra.mxu0 %v2496
      %v2564 = vpop.f32.mrf.mxu0
      %v2565 = vadd.f32 0.0, %v2564
      %v2566 = vpop.f32.mrf.mxu0
      %v2567 = vadd.f32 0.0, %v2566
      %2568 = vmatmul.bf16.gmra.mxu0 %v2499
      %v2569 = vpop.f32.mrf.mxu0
      %v2570 = vadd.f32 0.0, %v2569
      %v2571 = vpop.f32.mrf.mxu0
      %v2572 = vadd.f32 0.0, %v2571
      %2573 = vmatmul.bf16.gmra.mxu0 %v2502
      %v2574 = vpop.f32.mrf.mxu0
      %v2575 = vadd.f32 0.0, %v2574
      %v2576 = vpop.f32.mrf.mxu0
      %v2577 = vadd.f32 0.0, %v2576
      %2578 = vmatmul.bf16.gmra.mxu0 %v2505
      %v2579 = vpop.f32.mrf.mxu0
      %v2580 = vadd.f32 0.0, %v2579
      %v2581 = vpop.f32.mrf.mxu0
      %v2582 = vadd.f32 0.0, %v2581
      %2583 = vmatmul.bf16.gmra.mxu0 %v2508
      %v2584 = vpop.f32.mrf.mxu0
      %v2585 = vadd.f32 0.0, %v2584
      %v2586 = vpop.f32.mrf.mxu0
      %v2587 = vadd.f32 0.0, %v2586
      %2588 = vmatmul.bf16.gmra.mxu0 %v2511
      %v2589 = vpop.f32.mrf.mxu0
      %v2590 = vadd.f32 0.0, %v2589
      %v2591 = vpop.f32.mrf.mxu0
      %v2592 = vadd.f32 0.0, %v2591
      %2593 = vmatmul.bf16.gmra.mxu0 %v2514
      %v2594 = vpop.f32.mrf.mxu0
      %v2595 = vadd.f32 0.0, %v2594
      %v2596 = vpop.f32.mrf.mxu0
      %v2597 = vadd.f32 0.0, %v2596
      %2598 = vmatmul.bf16.gmra.mxu0 %v2517
      %v2599 = vpop.f32.mrf.mxu0
      %v2600 = vadd.f32 0.0, %v2599
      %v2601 = vpop.f32.mrf.mxu0
      %v2602 = vadd.f32 0.0, %v2601
      %2603 = vmatmul.bf16.gmra.mxu0 %v2520
      %v2604 = vpop.f32.mrf.mxu0
      %v2605 = vadd.f32 0.0, %v2604
      %v2606 = vpop.f32.mrf.mxu0
      %v2607 = vadd.f32 0.0, %v2606
      %2608 = vmatmul.bf16.gmra.mxu0 %v2523
      %v2609 = vpop.f32.mrf.mxu0
      %v2610 = vadd.f32 0.0, %v2609
      %v2611 = vpop.f32.mrf.mxu0
      %v2612 = vadd.f32 0.0, %v2611
      %2613 = vmatmul.bf16.gmra.mxu0 %v2526
      %v2614 = vpop.f32.mrf.mxu0
      %v2615 = vadd.f32 0.0, %v2614
      %v2616 = vpop.f32.mrf.mxu0
      %v2617 = vadd.f32 0.0, %v2616
      %2618 = vmatmul.bf16.gmra.mxu0 %v2529
      %v2619 = vpop.f32.mrf.mxu0
      %v2620 = vadd.f32 0.0, %v2619
      %v2621 = vpop.f32.mrf.mxu0
      %v2622 = vadd.f32 0.0, %v2621
      %2623 = vdwg.mxu0
      %2624 = vst.msk [vmem:[%s231] sm:$0xff] %vm237, %v2545
      %2625 = vst.msk [vmem:[%s231 + $0x8] sm:$0xff] %vm237, %v2547
      %2626 = vst.msk [vmem:[%s231 + $0x10] sm:$0xff] %vm237, %v2550
      %2627 = vst.msk [vmem:[%s231 + $0x18] sm:$0xff] %vm237, %v2552
      %2628 = vst.msk [vmem:[%s231 + $0x20] sm:$0xff] %vm237, %v2555
      %2629 = vst.msk [vmem:[%s231 + $0x28] sm:$0xff] %vm237, %v2557
      %2630 = vst.msk [vmem:[%s231 + $0x30] sm:$0xff] %vm237, %v2560
      %2631 = vst.msk [vmem:[%s231 + $0x38] sm:$0xff] %vm237, %v2562
      %2632 = vst.msk [vmem:[%s231 + $0x40] sm:$0xff] %vm237, %v2565
      %2633 = vst.msk [vmem:[%s231 + $0x48] sm:$0xff] %vm237, %v2567
      %2634 = vst.msk [vmem:[%s231 + $0x50] sm:$0xff] %vm237, %v2570
      %2635 = vst.msk [vmem:[%s231 + $0x58] sm:$0xff] %vm237, %v2572
      %2636 = vst.msk [vmem:[%s231 + $0x60] sm:$0xff] %vm237, %v2575
      %2637 = vst.msk [vmem:[%s231 + $0x68] sm:$0xff] %vm237, %v2577
      %2638 = vst.msk [vmem:[%s231 + $0x70] sm:$0xff] %vm237, %v2580
      %2639 = vst.msk [vmem:[%s231 + $0x78] sm:$0xff] %vm237, %v2582
      %2640 = vst.msk [vmem:[%s231 + $0x80] sm:$0xff] %vm237, %v2585
      %2641 = vst.msk [vmem:[%s231 + $0x88] sm:$0xff] %vm237, %v2587
      %2642 = vst.msk [vmem:[%s231 + $0x90] sm:$0xff] %vm237, %v2590
      %2643 = vst.msk [vmem:[%s231 + $0x98] sm:$0xff] %vm237, %v2592
      %2644 = vst.msk [vmem:[%s231 + $0xa0] sm:$0xff] %vm237, %v2595
      %2645 = vst.msk [vmem:[%s231 + $0xa8] sm:$0xff] %vm237, %v2597
      %2646 = vst.msk [vmem:[%s231 + $0xb0] sm:$0xff] %vm237, %v2600
      %2647 = vst.msk [vmem:[%s231 + $0xb8] sm:$0xff] %vm237, %v2602
      %2648 = vst.msk [vmem:[%s231 + $0xc0] sm:$0xff] %vm237, %v2605
      %2649 = vst.msk [vmem:[%s231 + $0xc8] sm:$0xff] %vm237, %v2607
      %2650 = vst.msk [vmem:[%s231 + $0xd0] sm:$0xff] %vm237, %v2610
      %2651 = vst.msk [vmem:[%s231 + $0xd8] sm:$0xff] %vm237, %v2612
      %2652 = vst.msk [vmem:[%s231 + $0xe0] sm:$0xff] %vm237, %v2615
      %2653 = vst.msk [vmem:[%s231 + $0xe8] sm:$0xff] %vm237, %v2617
      %2654 = vst.msk [vmem:[%s231 + $0xf0] sm:$0xff] %vm237, %v2620
      %2655 = vst.msk [vmem:[%s231 + $0xf8] sm:$0xff] %vm237, %v2622
      %v2656 = vsel %vm237, %v2545, 0.0
      %v2657 = vsel %vm237, %v2547, 0.0
      %v2658 = vadd.f32 %v2656, %v2657
      %v2659 = vsel %vm237, %v2550, 0.0
      %v2660 = vadd.f32 %v2658, %v2659
      %v2661 = vsel %vm237, %v2552, 0.0
      %v2662 = vadd.f32 %v2660, %v2661
      %v2663 = vsel %vm237, %v2555, 0.0
      %v2664 = vadd.f32 %v2662, %v2663
      %v2665 = vsel %vm237, %v2557, 0.0
      %v2666 = vadd.f32 %v2664, %v2665
      %v2667 = vsel %vm237, %v2560, 0.0
      %v2668 = vadd.f32 %v2666, %v2667
      %v2669 = vsel %vm237, %v2562, 0.0
      %v2670 = vadd.f32 %v2668, %v2669
      %v2671 = vsel %vm237, %v2565, 0.0
      %v2672 = vadd.f32 %v2670, %v2671
      %v2673 = vsel %vm237, %v2567, 0.0
      %v2674 = vadd.f32 %v2672, %v2673
      %v2675 = vsel %vm237, %v2570, 0.0
      %v2676 = vadd.f32 %v2674, %v2675
      %v2677 = vsel %vm237, %v2572, 0.0
      %v2678 = vadd.f32 %v2676, %v2677
      %v2679 = vsel %vm237, %v2575, 0.0
      %v2680 = vadd.f32 %v2678, %v2679
      %v2681 = vsel %vm237, %v2577, 0.0
      %v2682 = vadd.f32 %v2680, %v2681
      %v2683 = vsel %vm237, %v2580, 0.0
      %v2684 = vadd.f32 %v2682, %v2683
      %v2685 = vsel %vm237, %v2582, 0.0
      %v2686 = vadd.f32 %v2684, %v2685
      %v2687 = vsel %vm237, %v2585, 0.0
      %v2688 = vadd.f32 %v2686, %v2687
      %v2689 = vsel %vm237, %v2587, 0.0
      %v2690 = vadd.f32 %v2688, %v2689
      %v2691 = vsel %vm237, %v2590, 0.0
      %v2692 = vadd.f32 %v2690, %v2691
      %v2693 = vsel %vm237, %v2592, 0.0
      %v2694 = vadd.f32 %v2692, %v2693
      %v2695 = vsel %vm237, %v2595, 0.0
      %v2696 = vadd.f32 %v2694, %v2695
      %v2697 = vsel %vm237, %v2597, 0.0
      %v2698 = vadd.f32 %v2696, %v2697
      %v2699 = vsel %vm237, %v2600, 0.0
      %v2700 = vadd.f32 %v2698, %v2699
      %v2701 = vsel %vm237, %v2602, 0.0
      %v2702 = vadd.f32 %v2700, %v2701
      %v2703 = vsel %vm237, %v2605, 0.0
      %v2704 = vadd.f32 %v2702, %v2703
      %v2705 = vsel %vm237, %v2607, 0.0
      %v2706 = vadd.f32 %v2704, %v2705
      %v2707 = vsel %vm237, %v2610, 0.0
      %v2708 = vadd.f32 %v2706, %v2707
      %v2709 = vsel %vm237, %v2612, 0.0
      %v2710 = vadd.f32 %v2708, %v2709
      %v2711 = vsel %vm237, %v2615, 0.0
      %v2712 = vadd.f32 %v2710, %v2711
      %v2713 = vsel %vm237, %v2617, 0.0
      %v2714 = vadd.f32 %v2712, %v2713
      %v2715 = vsel %vm237, %v2620, 0.0
      %v2716 = vadd.f32 %v2714, %v2715
      %v2717 = vsel %vm237, %v2622, 0.0
      %v2718 = vadd.f32 %v2716, %v2717
      %v2719 = vrot.slane %v2718, 4
      %v2720 = vadd.f32 %v2718, %v2719
      %v2721 = vrot.slane %v2720, 2
      %v2722 = vadd.f32 %v2720, %v2721
      %v2723 = vrot.slane %v2722, 1
      %v2724 = vadd.f32 %v2722, %v2723
      %v2725 = vmul.f32 %v2545, %v2545
      %v2726 = vmul.f32 %v2547, %v2547
      %v2727 = vmul.f32 %v2550, %v2550
      %v2728 = vmul.f32 %v2552, %v2552
      %v2729 = vmul.f32 %v2555, %v2555
      %v2730 = vmul.f32 %v2557, %v2557
      %v2731 = vmul.f32 %v2560, %v2560
      %v2732 = vmul.f32 %v2562, %v2562
      %v2733 = vmul.f32 %v2565, %v2565
      %v2734 = vmul.f32 %v2567, %v2567
      %v2735 = vmul.f32 %v2570, %v2570
      %v2736 = vmul.f32 %v2572, %v2572
      %v2737 = vmul.f32 %v2575, %v2575
      %v2738 = vmul.f32 %v2577, %v2577
      %v2739 = vmul.f32 %v2580, %v2580
      %v2740 = vmul.f32 %v2582, %v2582
      %v2741 = vmul.f32 %v2585, %v2585
      %v2742 = vmul.f32 %v2587, %v2587
      %v2743 = vmul.f32 %v2590, %v2590
      %v2744 = vmul.f32 %v2592, %v2592
      %v2745 = vmul.f32 %v2595, %v2595
      %v2746 = vmul.f32 %v2597, %v2597
      %v2747 = vmul.f32 %v2600, %v2600
      %v2748 = vmul.f32 %v2602, %v2602
      %v2749 = vmul.f32 %v2605, %v2605
      %v2750 = vmul.f32 %v2607, %v2607
      %v2751 = vmul.f32 %v2610, %v2610
      %v2752 = vmul.f32 %v2612, %v2612
      %v2753 = vmul.f32 %v2615, %v2615
      %v2754 = vmul.f32 %v2617, %v2617
      %v2755 = vmul.f32 %v2620, %v2620
      %v2756 = vmul.f32 %v2622, %v2622
      %v2757 = vsel %vm237, %v2725, 0.0
      %v2758 = vsel %vm237, %v2726, 0.0
      %v2759 = vadd.f32 %v2757, %v2758
      %v2760 = vsel %vm237, %v2727, 0.0
      %v2761 = vadd.f32 %v2759, %v2760
      %v2762 = vsel %vm237, %v2728, 0.0
      %v2763 = vadd.f32 %v2761, %v2762
      %v2764 = vsel %vm237, %v2729, 0.0
      %v2765 = vadd.f32 %v2763, %v2764
      %v2766 = vsel %vm237, %v2730, 0.0
      %v2767 = vadd.f32 %v2765, %v2766
      %v2768 = vsel %vm237, %v2731, 0.0
      %v2769 = vadd.f32 %v2767, %v2768
      %v2770 = vsel %vm237, %v2732, 0.0
      %v2771 = vadd.f32 %v2769, %v2770
      %v2772 = vsel %vm237, %v2733, 0.0
      %v2773 = vadd.f32 %v2771, %v2772
      %v2774 = vsel %vm237, %v2734, 0.0
      %v2775 = vadd.f32 %v2773, %v2774
      %v2776 = vsel %vm237, %v2735, 0.0
      %v2777 = vadd.f32 %v2775, %v2776
      %v2778 = vsel %vm237, %v2736, 0.0
      %v2779 = vadd.f32 %v2777, %v2778
      %v2780 = vsel %vm237, %v2737, 0.0
      %v2781 = vadd.f32 %v2779, %v2780
      %v2782 = vsel %vm237, %v2738, 0.0
      %v2783 = vadd.f32 %v2781, %v2782
      %v2784 = vsel %vm237, %v2739, 0.0
      %v2785 = vadd.f32 %v2783, %v2784
      %v2786 = vsel %vm237, %v2740, 0.0
      %v2787 = vadd.f32 %v2785, %v2786
      %v2788 = vsel %vm237, %v2741, 0.0
      %v2789 = vadd.f32 %v2787, %v2788
      %v2790 = vsel %vm237, %v2742, 0.0
      %v2791 = vadd.f32 %v2789, %v2790
      %v2792 = vsel %vm237, %v2743, 0.0
      %v2793 = vadd.f32 %v2791, %v2792
      %v2794 = vsel %vm237, %v2744, 0.0
      %v2795 = vadd.f32 %v2793, %v2794
      %v2796 = vsel %vm237, %v2745, 0.0
      %v2797 = vadd.f32 %v2795, %v2796
      %v2798 = vsel %vm237, %v2746, 0.0
      %v2799 = vadd.f32 %v2797, %v2798
      %v2800 = vsel %vm237, %v2747, 0.0
      %v2801 = vadd.f32 %v2799, %v2800
      %v2802 = vsel %vm237, %v2748, 0.0
      %v2803 = vadd.f32 %v2801, %v2802
      %v2804 = vsel %vm237, %v2749, 0.0
      %v2805 = vadd.f32 %v2803, %v2804
      %v2806 = vsel %vm237, %v2750, 0.0
      %v2807 = vadd.f32 %v2805, %v2806
      %v2808 = vsel %vm237, %v2751, 0.0
      %v2809 = vadd.f32 %v2807, %v2808
      %v2810 = vsel %vm237, %v2752, 0.0
      %v2811 = vadd.f32 %v2809, %v2810
      %v2812 = vsel %vm237, %v2753, 0.0
      %v2813 = vadd.f32 %v2811, %v2812
      %v2814 = vsel %vm237, %v2754, 0.0
      %v2815 = vadd.f32 %v2813, %v2814
      %v2816 = vsel %vm237, %v2755, 0.0
      %v2817 = vadd.f32 %v2815, %v2816
      %v2818 = vsel %vm237, %v2756, 0.0
      %v2819 = vadd.f32 %v2817, %v2818
      %v2820 = vrot.slane %v2819, 4
      %v2821 = vadd.f32 %v2819, %v2820
      %v2822 = vrot.slane %v2821, 2
      %v2823 = vadd.f32 %v2821, %v2822
      %v2824 = vrot.slane %v2823, 1
      %v2825 = vadd.f32 %v2823, %v2824
      %vm2826 = vcmask 1040384
      %v2827 = vsel %vm2826, %v2724, %v2825
      %2828 = vst.msk [vmem:[%s235] sm:$0x3] %vm240, %v2827
      %p2829 = scmp.lt.s32.totalorder %s17, 1
      %s2830 = scalar_select %p2829, %s17, 1
      %s2831 = smul.addr %s2830, 32
      %s2832 = smul.addr %s2831, 8
      %s2833 = scalar_lea.vmem %s4, %s2832
      %p2834 = scmp.lt.s32.totalorder %s17, 1
      %s2835 = scalar_select %p2834, %s17, 1
      %s2836 = smul.addr %s2835, 2
      %s2837 = scalar_lea.vmem %s5, %s2836
      // Predicated region
      $region37: #{basic_block_forward.4} parent=35 // pred_check
        %p2838 = pneg %p124
      $region38: #{basic_block_forward.4} parent=35 // pred_check_branch
        %2840 = sbr.rel (%p2838) target = $region40
      $region39: #{basic_block_forward.4} parent=35 // pred_region
        _
      $region40: #{basic_block_forward.4} parent=35 // pred_fallthru
        _
      // Predicated region
      $region41: #{basic_block_forward.4} parent=35 // pred_check
        %p2841 = pneg %p150
      $region42: #{basic_block_forward.4} parent=35 // pred_check_branch
        %2843 = sbr.rel (%p2841) target = $region44
      $region43: #{basic_block_forward.4} parent=35 // pred_region
        _
      $region44: #{basic_block_forward.4} parent=35 // pred_fallthru
        _
    $region36: #{basic_block_forward.4} parent=5 // pred_fallthru
      _
    %p2844 = scmp.le.s32.totalorder 2, %s12
    // Predicated region
    $region45: #{basic_block_forward.4} parent=5 // pred_check
      %p2845 = pneg %p2844
    $region46: #{basic_block_forward.4} parent=5 // pred_check_branch
      %2847 = sbr.rel (%p2845) target = $region48
    $region47: #{basic_block_forward.4} parent=5 // pred_region
      %s2848 = ssub.s32 %s12, 2
      // Predicated region
      $region49: #{basic_block_forward.4} parent=47 // pred_check
        %p2849 = pneg %p130
      $region50: #{basic_block_forward.4} parent=47 // pred_check_branch
        %2851 = sbr.rel (%p2849) target = $region52
      $region51: #{basic_block_forward.4} parent=47 // pred_region
        %p2852 = scmp.lt.s32.totalorder %s18, 1
        %s2853 = scalar_select %p2852, %s18, 1
        %s2854 = smul.addr %s2853, 32
        %s2855 = smul.addr %s2854, 8
        %s2856 = scalar_lea.vmem %s4, %s2855
      $region52: #{basic_block_forward.4} parent=47 // pred_fallthru
        _
      // Predicated region
      $region53: #{basic_block_forward.4} parent=47 // pred_check
        %p2857 = pneg %p156
      $region54: #{basic_block_forward.4} parent=47 // pred_check_branch
        %2859 = sbr.rel (%p2857) target = $region56
      $region55: #{basic_block_forward.4} parent=47 // pred_region
        %p2860 = scmp.lt.s32.totalorder %s18, 1
        %s2861 = scalar_select %p2860, %s18, 1
        %s2862 = smul.addr %s2861, 2
        %s2863 = scalar_lea.vmem %s5, %s2862
      $region56: #{basic_block_forward.4} parent=47 // pred_fallthru
        _
    $region48: #{basic_block_forward.4} parent=5 // pred_fallthru
      _
  $region6: #{basic_block_forward.4} parent=0 // loop_footer
    %s16 = sadd.s32 1, %s12
  $region7: #{basic_block_forward.4} parent=0 // loop_footer_branch
    %11 = sbr.rel target = $region3
  $region8: #{basic_block_forward.4} parent=0 // loop_exit
    _

</llo_original>
